<compile_context>
chip_gen: v7x
topology: tpu7x:2x2x1
jax: 0.10.0
libtpu: 0.0.40
codegen_flags: <defaults>
</compile_context>

<pallas_src>
import functools

import jax
import jax.numpy as jnp
from jax.experimental import pallas as pl
from jax.experimental.pallas import tpu as pltpu


def _origin_kernel(scale_ref, cgh_ref, tre_ref, tim_ref, out_ref, u_ref,
                   *, depth_num, half_k, compute_dtype, precision):
    # grid = (M_tiles, N_tiles); N is innermost ("arbitrary"), M is "parallel".
    # scale_ref : SMEM (D,)        scalar-prefetched scale_factor
    # cgh_ref   : VMEM (1, TM, W)  phase tile (same block for every N tile)
    # tre_ref   : VMEM (2W, TN)    stacked [ t_re ; -t_im ]
    # tim_ref   : VMEM (2W, TN)    stacked [ t_im ;  t_re ]
    # out_ref   : VMEM (D, TM, TN)
    # u_ref     : VMEM (TM, 2W)    scratch holding [cos(phase) | sin(phase)]

    # Hoist the transcendentals out of the N loop: fill U once per M tile.
    @pl.when(pl.program_id(1) == 0)
    def _fill_u():
        phase = cgh_ref[0]                                    # (TM, W) f32
        u_ref[:, :half_k] = jnp.cos(phase).astype(compute_dtype)
        u_ref[:, half_k:] = jnp.sin(phase).astype(compute_dtype)

    u = u_ref[...]                                            # (TM, 2W)

    # Complex matmul exp(i*phase) @ T as two stacked real MXU matmuls (K = 2W).
    o_re = jnp.dot(u, tre_ref[...], preferred_element_type=jnp.float32,
                   precision=precision)
    o_im = jnp.dot(u, tim_ref[...], preferred_element_type=jnp.float32,
                   precision=precision)

    # torch.abs of a complex tensor -> magnitude (VPU mul/add + EUP sqrt).
    mag = jnp.sqrt(o_re * o_re + o_im * o_im)                 # (TM, TN) f32

    # scale_factor (D,1,1) * A (1,1,H,W): per-depth scalar * tile.  `mag` is
    # computed once; each store is a full lane-dense (TM, TN) write (D small).
    for d in range(depth_num):
        out_ref[d] = scale_ref[d] * mag


def origin_model_forward(cgh, t_re, t_im, scale_factor, *, tm=128, tn=256,
                         compute_dtype=jnp.float32, precision=None):
    """cgh: (1,H,W) f32; t_re/t_im: (W,W) f32; scale_factor: (D,) f32.

    Returns (1, D, H, W) f32, matching the PyTorch broadcast result.
    `compute_dtype=jnp.bfloat16` is the fast path for the matmul operands on
    v6e/v7x (f32 accumulation is kept via preferred_element_type)."""
    _, H, W = cgh.shape
    D = scale_factor.shape[0]

    # Tile sizes: fall back to the full extent if it does not divide evenly
    # (keeps the (8,128) block constraint satisfied via the "full dim" rule).
    tm = tm if (H % tm == 0) else H
    tn = tn if (W % tn == 0) else W
    gm, gn = H // tm, W // tn

    # Stack the complex transfer matrix once (wrapper-side) so the kernel does
    # 2 instead of 4 MXU matmuls, with contraction depth K = 2W.
    t_stack_re = jnp.concatenate([t_re, -t_im], axis=0).astype(compute_dtype)  # (2W, W)
    t_stack_im = jnp.concatenate([t_im, t_re], axis=0).astype(compute_dtype)   # (2W, W)

    kernel = functools.partial(
        _origin_kernel, depth_num=D, half_k=W,
        compute_dtype=compute_dtype, precision=precision)

    grid_spec = pltpu.PrefetchScalarGridSpec(
        num_scalar_prefetch=1,                       # scale_factor -> SMEM
        grid=(gm, gn),                               # N innermost: U reuse
        in_specs=[
            pl.BlockSpec((1, tm, W), lambda i, j, s: (0, i, 0)),
            pl.BlockSpec((2 * W, tn), lambda i, j, s: (0, j)),
            pl.BlockSpec((2 * W, tn), lambda i, j, s: (0, j)),
        ],
        out_specs=pl.BlockSpec((D, tm, tn), lambda i, j, s: (0, i, j)),
        scratch_shapes=[pltpu.VMEM((tm, 2 * W), compute_dtype)],
    )

    # Rough VMEM budget: double-buffered inputs/outputs + U scratch.  Default
    # tiles keep this far under v7x's 64 MiB VMEM; give the compiler headroom.
    isz = jnp.dtype(compute_dtype).itemsize
    vmem_est = (2 * tm * W * 4                        # cgh blocks (f32)
                + 2 * 2 * (2 * W) * tn * isz          # T_RE / T_IM blocks
                + 2 * D * tm * tn * 4                 # output blocks (f32)
                + tm * 2 * W * isz)                   # U scratch
    vmem_limit = max(int(1.5 * vmem_est), 32 * 1024 * 1024)

    out = pl.pallas_call(
        kernel,
        out_shape=jax.ShapeDtypeStruct((D, H, W), jnp.float32),
        grid_spec=grid_spec,
        compiler_params=pltpu.CompilerParams(
            dimension_semantics=("parallel", "arbitrary"),
            vmem_limit_bytes=vmem_limit),
    )(scale_factor, cgh, t_stack_re, t_stack_im)

    return out.reshape(1, D, H, W)       # == (scale * |Model(CGH)|.unsqueeze(1))


def _reference(cgh, t_re, t_im, scale_factor):
    phase = cgh[0]
    u_re = jnp.cos(phase)
    u_im = jnp.sin(phase)
    hp = jax.lax.Precision.HIGHEST
    o_re = jnp.dot(u_re, t_re, precision=hp) - jnp.dot(u_im, t_im, precision=hp)
    o_im = jnp.dot(u_re, t_im, precision=hp) + jnp.dot(u_im, t_re, precision=hp)
    mag = jnp.sqrt(o_re * o_re + o_im * o_im)          # |Model(CGH)|, (H, W)
    A = mag[None, None]                                # unsqueeze -> (1,1,H,W)
    return scale_factor[:, None, None] * A             # (D,1,1)*(1,1,H,W)


if __name__ == "__main__":
    # Small shapes consistent with the module: res_target=(256,256), depth_num=4
    # (big enough that tm=tn=128 gives a real (2,2) grid, exercising the
    #  pipelined tiling and the cos/sin hoisting across N tiles).
    H, W, D = 256, 256, 4
    key = jax.random.PRNGKey(0)
    k_cgh, k_tre, k_tim = jax.random.split(key, 3)

    # Parameters per __init__: CGH ~ randn((1,*res_target)); scale_factor is
    # (D,1,1) ones at init — stored flat (D,) here and made non-uniform but
    # deterministic so the per-depth broadcast path is actually tested.
    cgh = jax.random.normal(k_cgh, (1, H, W), dtype=jnp.float32)
    scale_factor = jnp.linspace(0.5, 2.0, D, dtype=jnp.float32)

    # Synthetic complex transfer matrix standing in for the external Model.
    t_re = jax.random.normal(k_tre, (W, W), dtype=jnp.float32) / jnp.sqrt(W)
    t_im = jax.random.normal(k_tim, (W, W), dtype=jnp.float32) / jnp.sqrt(W)

    out = origin_model_forward(cgh, t_re, t_im, scale_factor, tm=128, tn=128)
    out = jax.block_until_ready(out)

    ref = _reference(cgh, t_re, t_im, scale_factor)
    assert out.shape == (1, D, H, W), out.shape
    # Tolerance 5e-3: the kernel uses the MXU's default f32 matmul precision
    # while the reference uses Precision.HIGHEST, and K = 2W = 512 here.
    assert jnp.allclose(out, ref, rtol=5e-3, atol=5e-3), float(
        jnp.max(jnp.abs(out - ref)))

    print("KERNEL_OK")
</pallas_src>

<mosaic_0001>
module attributes {stable_mosaic.version = 11 : i64} {
  func.func @_origin_kernel(%arg0: i32, %arg1: i32, %arg2: memref<4xf32, #tpu.memory_space<smem>>, %arg3: memref<1x128x256xf32, #tpu.memory_space<vmem>>, %arg4: memref<512x128xf32, #tpu.memory_space<vmem>>, %arg5: memref<512x128xf32, #tpu.memory_space<vmem>>, %arg6: memref<4x128x128xf32, #tpu.memory_space<vmem>>, %arg7: memref<128x512xf32, #tpu.memory_space<vmem>>) attributes {dimension_semantics = [#tpu.dimension_semantics<parallel>, #tpu.dimension_semantics<arbitrary>], iteration_bounds = array<i64: 2, 2>, scalar_prefetch = 1 : i64, scratch_operands = 1 : i64, tpu.core_type = #tpu.core_type<tc>, window_params = [{transform_indices = @transform_0, window_bounds = array<i64: 1, 128, 256>}, {transform_indices = @transform_1, window_bounds = array<i64: 512, 128>}, {transform_indices = @transform_2, window_bounds = array<i64: 512, 128>}, {transform_indices = @transform_3, window_bounds = array<i64: 4, 128, 128>}]} {
    %c0_i32 = arith.constant 0 : i32
    %0 = arith.cmpi eq, %arg1, %c0_i32 : i32
    %1 = arith.extui %0 : i1 to i32
    %c0_i32_0 = arith.constant 0 : i32
    %2 = arith.cmpi ne, %1, %c0_i32_0 : i32
    scf.if %2 {
      %c0_20 = arith.constant 0 : index
      %c0_21 = arith.constant 0 : index
      %c0_22 = arith.constant 0 : index
      %36 = vector.load %arg3[%c0_20, %c0_21, %c0_22] : memref<1x128x256xf32, #tpu.memory_space<vmem>>, vector<1x128x256xf32>
      %37 = vector.shape_cast %36 : vector<1x128x256xf32> to vector<128x256xf32>
      %38 = math.cos %37 : vector<128x256xf32>
      %c0_23 = arith.constant 0 : index
      %c0_24 = arith.constant 0 : index
      %39 = vector.load %arg7[%c0_23, %c0_24] : memref<128x512xf32, #tpu.memory_space<vmem>>, vector<128x256xf32>
      tpu.vector_store %arg7[%c0_23, %c0_24], %38 {strides = array<i32>} : memref<128x512xf32, #tpu.memory_space<vmem>>, vector<128x256xf32>,
      %40 = math.sin %37 : vector<128x256xf32>
      %c0_25 = arith.constant 0 : index
      %c256 = arith.constant 256 : index
      %41 = vector.load %arg7[%c0_25, %c256] : memref<128x512xf32, #tpu.memory_space<vmem>>, vector<128x256xf32>
      tpu.vector_store %arg7[%c0_25, %c256], %40 {strides = array<i32>} : memref<128x512xf32, #tpu.memory_space<vmem>>, vector<128x256xf32>,
    } else {
    }
    %c0 = arith.constant 0 : index
    %c0_1 = arith.constant 0 : index
    %3 = vector.load %arg7[%c0, %c0_1] : memref<128x512xf32, #tpu.memory_space<vmem>>, vector<128x512xf32>
    %c0_2 = arith.constant 0 : index
    %c0_3 = arith.constant 0 : index
    %4 = vector.load %arg4[%c0_2, %c0_3] : memref<512x128xf32, #tpu.memory_space<vmem>>, vector<512x128xf32>
    %cst = arith.constant dense<0.000000e+00> : vector<128x128xf32>
    %5 = tpu.matmul %3, %4, %cst {dimension_numbers = #tpu.dot_dimension_numbers<[1], [0], [0], [1], [0, 0, 1, 1], [], []>} : vector<128x512xf32>, vector<512x128xf32>, vector<128x128xf32> -> vector<128x128xf32>
    %c0_4 = arith.constant 0 : index
    %c0_5 = arith.constant 0 : index
    %6 = vector.load %arg5[%c0_4, %c0_5] : memref<512x128xf32, #tpu.memory_space<vmem>>, vector<512x128xf32>
    %cst_6 = arith.constant dense<0.000000e+00> : vector<128x128xf32>
    %7 = tpu.matmul %3, %6, %cst_6 {dimension_numbers = #tpu.dot_dimension_numbers<[1], [0], [0], [1], [0, 0, 1, 1], [], []>} : vector<128x512xf32>, vector<512x128xf32>, vector<128x128xf32> -> vector<128x128xf32>
    %8 = arith.mulf %5, %5 : vector<128x128xf32>
    %9 = arith.mulf %7, %7 : vector<128x128xf32>
    %10 = arith.addf %8, %9 : vector<128x128xf32>
    %11 = math.sqrt %10 : vector<128x128xf32>
    %c0_7 = arith.constant 0 : index
    %12 = memref.load %arg2[%c0_7] : memref<4xf32, #tpu.memory_space<smem>>
    %13 = vector.broadcast %12 : f32 to vector<128x128xf32>
    %14 = arith.mulf %13, %11 : vector<128x128xf32>
    %c0_8 = arith.constant 0 : index
    %c0_9 = arith.constant 0 : index
    %c0_10 = arith.constant 0 : index
    %15 = vector.load %arg6[%c0_8, %c0_9, %c0_10] : memref<4x128x128xf32, #tpu.memory_space<vmem>>, vector<1x128x128xf32>
    %16 = vector.shape_cast %15 : vector<1x128x128xf32> to vector<128x128xf32>
    %17 = vector.shape_cast %14 : vector<128x128xf32> to vector<1x128x128xf32>
    tpu.vector_store %arg6[%c0_8, %c0_9, %c0_10], %17 {strides = array<i32>} : memref<4x128x128xf32, #tpu.memory_space<vmem>>, vector<1x128x128xf32>,
    %c1 = arith.constant 1 : index
    %18 = memref.load %arg2[%c1] : memref<4xf32, #tpu.memory_space<smem>>
    %19 = vector.broadcast %18 : f32 to vector<128x128xf32>
    %20 = arith.mulf %19, %11 : vector<128x128xf32>
    %c1_11 = arith.constant 1 : index
    %c0_12 = arith.constant 0 : index
    %c0_13 = arith.constant 0 : index
    %21 = vector.load %arg6[%c1_11, %c0_12, %c0_13] : memref<4x128x128xf32, #tpu.memory_space<vmem>>, vector<1x128x128xf32>
    %22 = vector.shape_cast %21 : vector<1x128x128xf32> to vector<128x128xf32>
    %23 = vector.shape_cast %20 : vector<128x128xf32> to vector<1x128x128xf32>
    tpu.vector_store %arg6[%c1_11, %c0_12, %c0_13], %23 {strides = array<i32>} : memref<4x128x128xf32, #tpu.memory_space<vmem>>, vector<1x128x128xf32>,
    %c2 = arith.constant 2 : index
    %24 = memref.load %arg2[%c2] : memref<4xf32, #tpu.memory_space<smem>>
    %25 = vector.broadcast %24 : f32 to vector<128x128xf32>
    %26 = arith.mulf %25, %11 : vector<128x128xf32>
    %c2_14 = arith.constant 2 : index
    %c0_15 = arith.constant 0 : index
    %c0_16 = arith.constant 0 : index
    %27 = vector.load %arg6[%c2_14, %c0_15, %c0_16] : memref<4x128x128xf32, #tpu.memory_space<vmem>>, vector<1x128x128xf32>
    %28 = vector.shape_cast %27 : vector<1x128x128xf32> to vector<128x128xf32>
    %29 = vector.shape_cast %26 : vector<128x128xf32> to vector<1x128x128xf32>
    tpu.vector_store %arg6[%c2_14, %c0_15, %c0_16], %29 {strides = array<i32>} : memref<4x128x128xf32, #tpu.memory_space<vmem>>, vector<1x128x128xf32>,
    %c3 = arith.constant 3 : index
    %30 = memref.load %arg2[%c3] : memref<4xf32, #tpu.memory_space<smem>>
    %31 = vector.broadcast %30 : f32 to vector<128x128xf32>
    %32 = arith.mulf %31, %11 : vector<128x128xf32>
    %c3_17 = arith.constant 3 : index
    %c0_18 = arith.constant 0 : index
    %c0_19 = arith.constant 0 : index
    %33 = vector.load %arg6[%c3_17, %c0_18, %c0_19] : memref<4x128x128xf32, #tpu.memory_space<vmem>>, vector<1x128x128xf32>
    %34 = vector.shape_cast %33 : vector<1x128x128xf32> to vector<128x128xf32>
    %35 = vector.shape_cast %32 : vector<128x128xf32> to vector<1x128x128xf32>
    tpu.vector_store %arg6[%c3_17, %c0_18, %c0_19], %35 {strides = array<i32>} : memref<4x128x128xf32, #tpu.memory_space<vmem>>, vector<1x128x128xf32>,
    return
  }
  func.func @transform_0(%arg0: i32, %arg1: i32, %arg2: memref<4xf32, #tpu.memory_space<smem>>) -> (i32, i32, i32) {
    %c0_i32 = arith.constant 0 : i32
    %c0_i32_0 = arith.constant 0 : i32
    %c0_i32_1 = arith.constant 0 : i32
    return %c0_i32, %arg0, %c0_i32_0 : i32, i32, i32
  }
  func.func @transform_1(%arg0: i32, %arg1: i32, %arg2: memref<4xf32, #tpu.memory_space<smem>>) -> (i32, i32) {
    %c0_i32 = arith.constant 0 : i32
    %c0_i32_0 = arith.constant 0 : i32
    return %c0_i32, %arg1 : i32, i32
  }
  func.func @transform_2(%arg0: i32, %arg1: i32, %arg2: memref<4xf32, #tpu.memory_space<smem>>) -> (i32, i32) {
    %c0_i32 = arith.constant 0 : i32
    %c0_i32_0 = arith.constant 0 : i32
    return %c0_i32, %arg1 : i32, i32
  }
  func.func @transform_3(%arg0: i32, %arg1: i32, %arg2: memref<4xf32, #tpu.memory_space<smem>>) -> (i32, i32, i32) {
    %c0_i32 = arith.constant 0 : i32
    %c0_i32_0 = arith.constant 0 : i32
    return %c0_i32, %arg0, %arg1 : i32, i32, i32
  }
}

</mosaic_0001>

<llo_original>
// kernel: tpu_custom_call.1
$region0: #{tpu_custom_call.1}
  #allocation0 [shape = 'u32[]', space=smem, size = 0x4, offset = 0x4, fixed_abs, tag = 'smem constant byte address 0x4 - core index']
  #allocation1 [shape = 'u32[144,128]{1,0:T(1,128)}', space=vmem, size = 0x12000, scoped, tag = 'internal scratch']
  #allocation2 [shape = 'f32[128,512]{1,0:T(8,128)}', space=vmem, size = 0x40000, scoped, tag = 'scratch operand']
  #allocation3 [shape = 's32[1]{0}', space=sflag, size = 0x4, scoped, tag = 'scoped memory for tpu_custom_call.1']
  #allocation4 [shape = 'u8[512]{0}', space=smem, size = 0x200, scoped, tag = 'prefetched SMEM operand 0']
  #allocation12 [shape = 's32[]', space=sflag, size = 0x4, offset = 0, fixed_abs, tag = 'sflag constant byte address 0x0 - dummy sync flag']
  %s0 = inlined_call_operand.hbm [shape: f32[4], index: 0, kind: input, shape index: {}]
  %s1 = inlined_call_operand.hbm [shape: f32[1,256,256], index: 1, kind: input, shape index: {}]
  %s2 = inlined_call_operand.hbm [shape: f32[512,256], index: 2, kind: input, shape index: {}]
  %s3 = inlined_call_operand.hbm [shape: f32[512,256], index: 3, kind: input, shape index: {}]
  %s4 = inlined_call_operand.hbm [shape: f32[4,256,256], index: 4, kind: output, shape index: {}]
  %s5 = sld [smem:[#allocation0]]
  $region61: #{tpu_custom_call.1} parent=0
    _
  %s7 = ssub.s32 1, %s5
  %s8 = scalar_select 0, %s7, %s5
  %10 = dma.hbm_to_smem %s0, 16, [#allocation4], [#allocation3]
  %11 = dma.done [#allocation3], 16
  %12 = sfence
  $region1: #{tpu_custom_call.1} parent=0
    #allocation5 [shape = 'u8[262144]{0}', space=vmem, size = 0x40000, scoped, tag = 'input window, operand 1']
    #allocation6 [shape = 's32[2]{0}', space=sflag, size = 0x8, scoped, tag = 'scoped memory for tpu_custom_call.1']
    #allocation7 [shape = 's32[2]{0}', space=sflag, size = 0x8, scoped, tag = 'scoped memory for tpu_custom_call.1']
    #allocation8 [shape = 'u8[524288]{0}', space=vmem, size = 0x80000, scoped, tag = 'input window, operand 2']
    #allocation9 [shape = 's32[2]{0}', space=sflag, size = 0x8, scoped, tag = 'scoped memory for tpu_custom_call.1']
    #allocation10 [shape = 'u8[524288]{0}', space=vmem, size = 0x80000, scoped, tag = 'input window, operand 3']
    #allocation11 [shape = 'u8[524288]{0}', space=vmem, size = 0x80000, scoped, tag = 'output window, operand 0']
    %13 = vsyncpa [#allocation6], 0
    %s14 = scalar_lea.sflag [#allocation6], 1
    %15 = vsyncpa %s14, 0
    %16 = vsyncpa [#allocation9], 0
    %s17 = scalar_lea.sflag [#allocation9], 1
    %18 = vsyncpa %s17, 0
    %19 = vsyncpa [#allocation7], 0
    %s20 = scalar_lea.sflag [#allocation7], 1
    %21 = vsyncpa %s20, 0
    loop: start=0, step=1, limit=6
    $region2: #{tpu_custom_call.1} parent=1 // loop_pre_header
      _
    $region3: #{tpu_custom_call.1} parent=1 // loop_header
      %s23 = sphi 0, %s27
      %p24 = scmp.ge.s32.totalorder %s23, 6
      %s30 = sphi 0, %s42
      %s31 = sphi 0, %s38
      %s32 = sphi 0, %s30
      %s33 = sphi 0, %s31
      %s34 = sphi 0, %s32
      %s35 = sphi 0, %s33
      %s45 = sphi 0, %s47
      %s48 = sphi 0, %s45
      %s49 = sphi 0, %s48
      %s65 = sphi 0, %s49
      %s71 = sphi 0, %s73
      %s74 = sphi 0, %s71
      %s75 = sphi 0, %s74
      %s91 = sphi 0, %s75
      %s97 = sphi 0, %s99
      %s100 = sphi 0, %s97
      %s101 = sphi 0, %s100
      %s117 = sphi 0, %s101
      %s125 = sphi 0, %s127
      %s128 = sphi 0, %s125
      %s129 = sphi 0, %s128
      %s145 = sphi 0, %s129
    $region4: #{tpu_custom_call.1} parent=1 // loop_header_branch
      %26 = sbr.rel (%p24) target = $region8
    $region5: #{tpu_custom_call.1} parent=1 // loop_body
      %s28 = ssub.s32 %s23, 1
      %s29 = ssub.s32 %s23, 2
      %s36 = sadd.s32 1, %s31
      %p37 = scmp.ge.s32.totalorder %s36, 2
      %s38 = scalar_select %p37, 0, %s36
      %s39 = sadd.s32 1, %s30
      %s40 = scalar_select %p37, %s39, %s30
      %p41 = scmp.ge.s32.totalorder %s40, 2
      %s42 = scalar_select %p41, 0, %s40
      %s43 = ssub.s32 %s30, %s42
      %p44 = scmp.eq.s32.totalorder %s43, 0
      %s46 = sadd.s32 %s45, 1
      %s47 = scalar_select %p44, %s45, %s46
      %p50 = pneg %p44
      %p51 = scmp.eq.s32.totalorder %s23, 3
      %p52 = por %p50, %p51
      %p53 = scmp.ne.s32.totalorder %s45, %s48
      %p54 = scmp.eq.s32.totalorder %s23, 0
      %p55 = por %p53, %p54
      %p56 = scmp.ne.s32.totalorder %s45, %s48
      %p57 = scmp.eq.s32.totalorder %s28, 3
      %p58 = por %p56, %p57
      %p59 = scmp.ne.s32.totalorder %s48, %s49
      %p60 = scmp.eq.s32.totalorder %s28, 0
      %p61 = por %p59, %p60
      %p62 = scmp.ne.s32.totalorder %s48, %s49
      %p63 = scmp.eq.s32.totalorder %s29, 3
      %p64 = por %p62, %p63
      %p66 = scmp.ne.s32.totalorder %s49, %s65
      %p67 = scmp.eq.s32.totalorder %s29, 0
      %p68 = por %p66, %p67
      %s69 = ssub.s32 %s31, %s38
      %p70 = scmp.eq.s32.totalorder %s69, 0
      %s72 = sadd.s32 %s71, 1
      %s73 = scalar_select %p70, %s71, %s72
      %p76 = pneg %p70
      %p77 = scmp.eq.s32.totalorder %s23, 3
      %p78 = por %p76, %p77
      %p79 = scmp.ne.s32.totalorder %s71, %s74
      %p80 = scmp.eq.s32.totalorder %s23, 0
      %p81 = por %p79, %p80
      %p82 = scmp.ne.s32.totalorder %s71, %s74
      %p83 = scmp.eq.s32.totalorder %s28, 3
      %p84 = por %p82, %p83
      %p85 = scmp.ne.s32.totalorder %s74, %s75
      %p86 = scmp.eq.s32.totalorder %s28, 0
      %p87 = por %p85, %p86
      %p88 = scmp.ne.s32.totalorder %s74, %s75
      %p89 = scmp.eq.s32.totalorder %s29, 3
      %p90 = por %p88, %p89
      %p92 = scmp.ne.s32.totalorder %s75, %s91
      %p93 = scmp.eq.s32.totalorder %s29, 0
      %p94 = por %p92, %p93
      %s95 = ssub.s32 %s31, %s38
      %p96 = scmp.eq.s32.totalorder %s95, 0
      %s98 = sadd.s32 %s97, 1
      %s99 = scalar_select %p96, %s97, %s98
      %p102 = pneg %p96
      %p103 = scmp.eq.s32.totalorder %s23, 3
      %p104 = por %p102, %p103
      %p105 = scmp.ne.s32.totalorder %s97, %s100
      %p106 = scmp.eq.s32.totalorder %s23, 0
      %p107 = por %p105, %p106
      %p108 = scmp.ne.s32.totalorder %s97, %s100
      %p109 = scmp.eq.s32.totalorder %s28, 3
      %p110 = por %p108, %p109
      %p111 = scmp.ne.s32.totalorder %s100, %s101
      %p112 = scmp.eq.s32.totalorder %s28, 0
      %p113 = por %p111, %p112
      %p114 = scmp.ne.s32.totalorder %s100, %s101
      %p115 = scmp.eq.s32.totalorder %s29, 3
      %p116 = por %p114, %p115
      %p118 = scmp.ne.s32.totalorder %s101, %s117
      %p119 = scmp.eq.s32.totalorder %s29, 0
      %p120 = por %p118, %p119
      %s121 = ssub.s32 %s30, %s42
      %s122 = ssub.s32 %s31, %s38
      %s123 = sor.u32 %s121, %s122
      %p124 = scmp.eq.s32.totalorder %s123, 0
      %s126 = sadd.s32 %s125, 1
      %s127 = scalar_select %p124, %s125, %s126
      %p130 = pneg %p124
      %p131 = scmp.eq.s32.totalorder %s23, 3
      %p132 = por %p130, %p131
      %p133 = scmp.ne.s32.totalorder %s125, %s128
      %p134 = scmp.eq.s32.totalorder %s23, 0
      %p135 = por %p133, %p134
      %p136 = scmp.ne.s32.totalorder %s125, %s128
      %p137 = scmp.eq.s32.totalorder %s28, 3
      %p138 = por %p136, %p137
      %p139 = scmp.ne.s32.totalorder %s128, %s129
      %p140 = scmp.eq.s32.totalorder %s28, 0
      %p141 = por %p139, %p140
      %p142 = scmp.ne.s32.totalorder %s128, %s129
      %p143 = scmp.eq.s32.totalorder %s29, 3
      %p144 = por %p142, %p143
      %p146 = scmp.ne.s32.totalorder %s129, %s145
      %p147 = scmp.eq.s32.totalorder %s29, 0
      %p148 = por %p146, %p147
      %p149 = scmp.le.s32.totalorder 1, %s23
      %p150 = scmp.lt.s32.totalorder %s23, 5
      %p151 = pnand %p149, %p150
      %p152 = pneg %p151
      // Predicated region
      $region9: #{tpu_custom_call.1} parent=5 // pred_check
        _
      $region10: #{tpu_custom_call.1} parent=5 // pred_check_branch
        %154 = sbr.rel (%p151) target = $region12
      $region11: #{tpu_custom_call.1} parent=5 // pred_region
        %s155 = ssub.s32 %s23, 1
      $region12: #{tpu_custom_call.1} parent=5 // pred_fallthru
        _
      %p156 = scmp.lt.s32.totalorder %s23, 4
      // Predicated region
      $region13: #{tpu_custom_call.1} parent=5 // pred_check
        %p157 = pneg %p156
      $region14: #{tpu_custom_call.1} parent=5 // pred_check_branch
        %159 = sbr.rel (%p157) target = $region16
      $region15: #{tpu_custom_call.1} parent=5 // pred_region
        // Predicated region
        $region17: #{tpu_custom_call.1} parent=15 // pred_check
          %p160 = pneg %p55
        $region18: #{tpu_custom_call.1} parent=15 // pred_check_branch
          %162 = sbr.rel (%p160) target = $region20
        $region19: #{tpu_custom_call.1} parent=15 // pred_region
          %s163 = sand.u32 %s45, 1
          %s164 = scalar_lea.sflag [#allocation6], %s163
          %s165 = sand.u32 %s45, 1
          %s166 = smul.addr %s165, 256
          %s167 = scalar_lea.vmem [#allocation5], %s166
          %s168 = smul.u32 16, %s30
          %s170 = ssub.s32 4096, 4096
          %171 = vsyncadd %s164, %s170
          %s172 = smul.addr %s168, 2
          %s173 = smul.addr %s172, 128
          %s174 = scalar_lea.hbm %s1, %s173
          %s175 = sshll.u32 %s167, 4
          %s176 = int_to_ptr.vmem [resolvable:$true] %s175
          %181 = dma.hbm_to_vmem [thread:$0]  %s174, 4096, %s176, %s164, 256, 256, 16
        $region20: #{tpu_custom_call.1} parent=15 // pred_fallthru
          _
        // Predicated region
        $region21: #{tpu_custom_call.1} parent=15 // pred_check
          %p182 = pneg %p81
        $region22: #{tpu_custom_call.1} parent=15 // pred_check_branch
          %184 = sbr.rel (%p182) target = $region24
        $region23: #{tpu_custom_call.1} parent=15 // pred_region
          %s185 = sand.u32 %s23, 1
          %s186 = scalar_lea.sflag [#allocation9], %s185
          %s187 = sand.u32 %s71, 1
          %s188 = smul.addr %s187, 512
          %s189 = scalar_lea.vmem [#allocation8], %s188
          %s191 = ssub.s32 8192, 8192
          %192 = vsyncadd %s186, %s191
          %s193 = smul.addr %s31, 128
          %s194 = scalar_lea.hbm %s2, %s193
          %s195 = sshll.u32 %s189, 4
          %s196 = int_to_ptr.vmem [resolvable:$true] %s195
          %201 = dma.hbm_to_vmem [thread:$0]  %s194, 8192, %s196, %s186, 256, 128, 8
        $region24: #{tpu_custom_call.1} parent=15 // pred_fallthru
          _
        // Predicated region
        $region25: #{tpu_custom_call.1} parent=15 // pred_check
          %p202 = pneg %p107
        $region26: #{tpu_custom_call.1} parent=15 // pred_check_branch
          %204 = sbr.rel (%p202) target = $region28
        $region27: #{tpu_custom_call.1} parent=15 // pred_region
          %s205 = sand.u32 %s23, 1
          %s206 = scalar_lea.sflag [#allocation9], %s205
          %s207 = sand.u32 %s97, 1
          %s208 = smul.addr %s207, 512
          %s209 = scalar_lea.vmem [#allocation10], %s208
          %s211 = ssub.s32 8192, 8192
          %212 = vsyncadd %s206, %s211
          %s213 = smul.addr %s31, 128
          %s214 = scalar_lea.hbm %s3, %s213
          %s215 = sshll.u32 %s209, 4
          %s216 = int_to_ptr.vmem [resolvable:$true] %s215
          %221 = dma.hbm_to_vmem [thread:$0]  %s214, 8192, %s216, %s206, 256, 128, 8
        $region28: #{tpu_custom_call.1} parent=15 // pred_fallthru
          _
      $region16: #{tpu_custom_call.1} parent=5 // pred_fallthru
        _
      %p222 = scmp.le.s32.totalorder 1, %s23
      %p223 = scmp.lt.s32.totalorder %s23, 5
      %p224 = pnand %p222, %p223
      %p225 = pneg %p224
      // Predicated region
      $region29: #{tpu_custom_call.1} parent=5 // pred_check
        _
      $region30: #{tpu_custom_call.1} parent=5 // pred_check_branch
        %227 = sbr.rel (%p224) target = $region32
      $region31: #{tpu_custom_call.1} parent=5 // pred_region
        %s228 = ssub.s32 %s23, 1
        %s229 = sand.u32 %s48, 1
        %s230 = scalar_lea.sflag [#allocation6], %s229
        %s231 = sand.u32 %s48, 1
        %s232 = smul.addr %s231, 256
        %s233 = scalar_lea.vmem [#allocation5], %s232
        // Predicated region
        $region33: #{tpu_custom_call.1} parent=31 // pred_check
          %p234 = pneg %p61
        $region34: #{tpu_custom_call.1} parent=31 // pred_check_branch
          %236 = sbr.rel (%p234) target = $region36
        $region35: #{tpu_custom_call.1} parent=31 // pred_region
          %237 = dma.done %s230, 4096
        $region36: #{tpu_custom_call.1} parent=31 // pred_fallthru
          _
        %s238 = sand.u32 %s28, 1
        %s239 = scalar_lea.sflag [#allocation9], %s238
        %s240 = sand.u32 %s74, 1
        %s241 = smul.addr %s240, 512
        %s242 = scalar_lea.vmem [#allocation8], %s241
        // Predicated region
        $region37: #{tpu_custom_call.1} parent=31 // pred_check
          %p243 = pneg %p87
        $region38: #{tpu_custom_call.1} parent=31 // pred_check_branch
          %245 = sbr.rel (%p243) target = $region40
        $region39: #{tpu_custom_call.1} parent=31 // pred_region
          %246 = dma.done %s239, 8192
        $region40: #{tpu_custom_call.1} parent=31 // pred_fallthru
          _
        %s247 = sand.u32 %s28, 1
        %s248 = scalar_lea.sflag [#allocation9], %s247
        %s249 = sand.u32 %s100, 1
        %s250 = smul.addr %s249, 512
        %s251 = scalar_lea.vmem [#allocation10], %s250
        // Predicated region
        $region41: #{tpu_custom_call.1} parent=31 // pred_check
          %p252 = pneg %p113
        $region42: #{tpu_custom_call.1} parent=31 // pred_check_branch
          %254 = sbr.rel (%p252) target = $region44
        $region43: #{tpu_custom_call.1} parent=31 // pred_region
          %255 = dma.done %s248, 8192
        $region44: #{tpu_custom_call.1} parent=31 // pred_fallthru
          _
        %s256 = sand.u32 %s48, 1
        %s257 = scalar_lea.sflag [#allocation6], %s256
        %s258 = sand.u32 %s48, 1
        %s259 = smul.addr %s258, 256
        %s260 = scalar_lea.vmem [#allocation5], %s259
        %p261 = pneg %p61
        %p262 = pneg %p58
        %s263 = sand.u32 %s28, 1
        %s264 = scalar_lea.sflag [#allocation9], %s263
        %s265 = sand.u32 %s74, 1
        %s266 = smul.addr %s265, 512
        %s267 = scalar_lea.vmem [#allocation8], %s266
        %p268 = pneg %p87
        %p269 = pneg %p84
        %s270 = sand.u32 %s28, 1
        %s271 = scalar_lea.sflag [#allocation9], %s270
        %s272 = sand.u32 %s100, 1
        %s273 = smul.addr %s272, 512
        %s274 = scalar_lea.vmem [#allocation10], %s273
        %p275 = pneg %p113
        %p276 = pneg %p110
        %p277 = pneg %p141
        %p278 = pneg %p138
        %s279 = sand.u32 %s128, 1
        %s280 = scalar_lea.sflag [#allocation7], %s279
        %s281 = sand.u32 %s128, 1
        %s282 = smul.addr %s281, 512
        %s283 = scalar_lea.vmem [#allocation11], %s282
        %s284 = smul.u32 16, %s32
        %s285 = smul.u32 16, %s32
        %p286 = scmp.eq.s32.totalorder %s33, 0
        // Predicated region
        $region45: #{tpu_custom_call.1} parent=31 // pred_check
          %p287 = pneg %p286
        $region46: #{tpu_custom_call.1} parent=31 // pred_check_branch
          %289 = sbr.rel (%p287) target = $region48
        $region47: #{tpu_custom_call.1} parent=31 // pred_region
          %v290 = vld [vmem:[%s233] sm:$0xff]
          %v291 = vld [vmem:[%s233 + $0x8] sm:$0xff]
          %v292 = vld [vmem:[%s233 + $0x10] sm:$0xff]
          %v293 = vld [vmem:[%s233 + $0x18] sm:$0xff]
          %v294 = vld [vmem:[%s233 + $0x20] sm:$0xff]
          %v295 = vld [vmem:[%s233 + $0x28] sm:$0xff]
          %v296 = vld [vmem:[%s233 + $0x30] sm:$0xff]
          %v297 = vld [vmem:[%s233 + $0x38] sm:$0xff]
          %v298 = vld [vmem:[%s233 + $0x40] sm:$0xff]
          %v299 = vld [vmem:[%s233 + $0x48] sm:$0xff]
          %v300 = vld [vmem:[%s233 + $0x50] sm:$0xff]
          %v301 = vld [vmem:[%s233 + $0x58] sm:$0xff]
          %v302 = vld [vmem:[%s233 + $0x60] sm:$0xff]
          %v303 = vld [vmem:[%s233 + $0x68] sm:$0xff]
          %v304 = vld [vmem:[%s233 + $0x70] sm:$0xff]
          %v305 = vld [vmem:[%s233 + $0x78] sm:$0xff]
          %v306 = vld [vmem:[%s233 + $0x80] sm:$0xff]
          %v307 = vld [vmem:[%s233 + $0x88] sm:$0xff]
          %v308 = vld [vmem:[%s233 + $0x90] sm:$0xff]
          %v309 = vld [vmem:[%s233 + $0x98] sm:$0xff]
          %v310 = vld [vmem:[%s233 + $0xa0] sm:$0xff]
          %v311 = vld [vmem:[%s233 + $0xa8] sm:$0xff]
          %v312 = vld [vmem:[%s233 + $0xb0] sm:$0xff]
          %v313 = vld [vmem:[%s233 + $0xb8] sm:$0xff]
          %v314 = vld [vmem:[%s233 + $0xc0] sm:$0xff]
          %v315 = vld [vmem:[%s233 + $0xc8] sm:$0xff]
          %v316 = vld [vmem:[%s233 + $0xd0] sm:$0xff]
          %v317 = vld [vmem:[%s233 + $0xd8] sm:$0xff]
          %v318 = vld [vmem:[%s233 + $0xe0] sm:$0xff]
          %v319 = vld [vmem:[%s233 + $0xe8] sm:$0xff]
          %v320 = vld [vmem:[%s233 + $0xf0] sm:$0xff]
          %v321 = vld [vmem:[%s233 + $0xf8] sm:$0xff]
          %v322 = vand.u32 2147483647, %v290
          %vm323 = vcmp.le.f32.partialorder %v322, 0.7853982
          %vm324 = vcmp.lt.s32.totalorder %v290, 0
          %v325 = vand.u32 %v290, 2139095040
          %v326 = vshrl.u32 %v325, 23
          %v327 = vsub.s32 %v326, 127
          %v328 = vand.u32 2147483647, %v290
          %v329 = vand.u32 %v328, 8388607
          %v330 = vor.u32 %v329, 8388608
          %v331 = vsub.s32 0, %v330
          %v332 = vadd.s32 %v327, 1
          %vm333 = vcmp.gt.s32.totalorder %v332, 0
          %v334 = vsel %vm333, %v332, 0
          %v335 = vshrl.u32 %v334, 5
          %v336 = vand.u32 %v334, 31
          %v337 = vsub.s32 32, %v336
          %v338 = vshrl.u32 683565275, %v337
          %v339 = vshll.u32 683565275, %v336
          %v340 = vshrl.u32 2475754826, %v337
          %v341 = vor.u32 %v339, %v340
          %v342 = vshll.u32 2475754826, %v336
          %v343 = vshrl.u32 2131351028, %v337
          %v344 = vor.u32 %v342, %v343
          %v345 = vshll.u32 2131351028, %v336
          %v346 = vshrl.u32 2102212464, %v337
          %v347 = vor.u32 %v345, %v346
          %v348 = vshll.u32 2102212464, %v336
          %v349 = vshrl.u32 920167782, %v337
          %v350 = vor.u32 %v348, %v349
          %v351 = vshll.u32 920167782, %v336
          %v352 = vshrl.u32 1326507024, %v337
          %v353 = vor.u32 %v351, %v352
          %vm354 = vcmp.lt.s32.totalorder %v335, 1
          %vm355 = vcmp.lt.s32.totalorder %v335, 2
          %vm356 = vcmp.lt.s32.totalorder %v335, 3
          %vm357 = vcmp.lt.s32.totalorder %v335, 4
          %v358 = vsel %vm354, %v338, %v341
          %v359 = vsel %vm357, %v347, 2102212464
          %v360 = vsel %vm356, %v344, %v359
          %v361 = vsel %vm355, %v358, %v360
          %v362 = vsel %vm354, %v341, %v344
          %v363 = vsel %vm357, %v350, 920167782
          %v364 = vsel %vm356, %v347, %v363
          %v365 = vsel %vm355, %v362, %v364
          %v366 = vsel %vm354, %v344, %v347
          %v367 = vsel %vm357, %v353, 1326507024
          %v368 = vsel %vm356, %v350, %v367
          %v369 = vsel %vm355, %v366, %v368
          %v370 = vshll.u32 %v330, 8
          %v371 = vmul.u32.u64.compose %v370, %v369
          %v372 = vextract.low.u32 %v371
          %v373 = vextract.high.u32 %v371
          %v374 = vmul.u32.u64.compose %v370, %v365
          %v375 = vextract.low.u32 %v374
          %v376 = vextract.high.u32 %v374
          %v377 = vmul.u32 %v370, %v361
          %v378 = vadd.s32 %v373, %v375
          %vm379 = vc.u32 %v373, %v375
          %v380 = vadd.s32 %v376, 1
          %v381 = vsel %vm379, %v380, %v376
          %v382 = vadd.s32 %v377, %v381
          %v383 = vadd.s32 %v382, 536870912
          %v384 = vshrl.u32 %v383, 30
          %v385 = vshll.u32 %v384, 30
          %v386 = vsub.s32 %v382, %v385
          %vm387 = vcmp.lt.s32.totalorder %v386, 0
          %v388 = vsub.s32 0, %v386
          %v389 = vsel %vm387, %v388, %v386
          %v390 = vclz %v389
          %v391 = vsub.s32 %v390, 2
          %vm392 = vcmp.gt.s32.totalorder 0, %v391
          %v393 = vsel %vm392, 0, %v391
          %v394 = vsub.s32 32, %v393
          %v395 = vshll.u32 %v386, %v393
          %v396 = vshrl.u32 %v378, %v394
          %v397 = vor.u32 %v395, %v396
          %v398 = vsub.s32 4294967266, %v393
          %v399 = vadd.s32 %v398, 127
          %v400 = vshll.u32 %v399, 23
          %v401 = vor.u32 4788187, %v400
          %v402 = vand.u32 2147483647, %v401
          %v404 = vcvt.s32.f32 %v397
          %v405 = vmul.f32 %v404, %v402
          %v406 = vxor.u32 %v405, 2147483648
          %v407 = vsel %vm324, %v406, %v405
          %v408 = vsub.s32 4, %v384
          %v409 = vsel %vm324, %v408, %v384
          %v410 = vsel %vm323, %v290, %v407
          %v411 = vsel %vm323, 0, %v409
          %v412 = vcosq.f32.pop %v410
          %v413 = vsinq.f32.pop %v410
          %vm414 = vweird.f32 %v290
          %v415 = vand.u32 %v411, 3
          %vm416 = vcmp.lt.s32.totalorder %v415, 2
          %vm417 = vcmp.eq.s32.totalorder %v415, 0
          %v418 = vxor.u32 %v413, 2147483648
          %v419 = vsel %vm417, %v412, %v418
          %vm420 = vcmp.eq.s32.totalorder %v415, 2
          %v421 = vxor.u32 %v412, 2147483648
          %v422 = vsel %vm420, %v421, %v413
          %v423 = vsel %vm416, %v419, %v422
          %v424 = vsel %vm414, nan, %v423
          %v425 = vand.u32 2147483647, %v291
          %vm426 = vcmp.le.f32.partialorder %v425, 0.7853982
          %vm427 = vcmp.lt.s32.totalorder %v291, 0
          %v428 = vand.u32 %v291, 2139095040
          %v429 = vshrl.u32 %v428, 23
          %v430 = vsub.s32 %v429, 127
          %v431 = vand.u32 2147483647, %v291
          %v432 = vand.u32 %v431, 8388607
          %v433 = vor.u32 %v432, 8388608
          %v434 = vsub.s32 0, %v433
          %v435 = vadd.s32 %v430, 1
          %vm436 = vcmp.gt.s32.totalorder %v435, 0
          %v437 = vsel %vm436, %v435, 0
          %v438 = vshrl.u32 %v437, 5
          %v439 = vand.u32 %v437, 31
          %v440 = vsub.s32 32, %v439
          %v441 = vshrl.u32 683565275, %v440
          %v442 = vshll.u32 683565275, %v439
          %v443 = vshrl.u32 2475754826, %v440
          %v444 = vor.u32 %v442, %v443
          %v445 = vshll.u32 2475754826, %v439
          %v446 = vshrl.u32 2131351028, %v440
          %v447 = vor.u32 %v445, %v446
          %v448 = vshll.u32 2131351028, %v439
          %v449 = vshrl.u32 2102212464, %v440
          %v450 = vor.u32 %v448, %v449
          %v451 = vshll.u32 2102212464, %v439
          %v452 = vshrl.u32 920167782, %v440
          %v453 = vor.u32 %v451, %v452
          %v454 = vshll.u32 920167782, %v439
          %v455 = vshrl.u32 1326507024, %v440
          %v456 = vor.u32 %v454, %v455
          %vm457 = vcmp.lt.s32.totalorder %v438, 1
          %vm458 = vcmp.lt.s32.totalorder %v438, 2
          %vm459 = vcmp.lt.s32.totalorder %v438, 3
          %vm460 = vcmp.lt.s32.totalorder %v438, 4
          %v461 = vsel %vm457, %v441, %v444
          %v462 = vsel %vm460, %v450, 2102212464
          %v463 = vsel %vm459, %v447, %v462
          %v464 = vsel %vm458, %v461, %v463
          %v465 = vsel %vm457, %v444, %v447
          %v466 = vsel %vm460, %v453, 920167782
          %v467 = vsel %vm459, %v450, %v466
          %v468 = vsel %vm458, %v465, %v467
          %v469 = vsel %vm457, %v447, %v450
          %v470 = vsel %vm460, %v456, 1326507024
          %v471 = vsel %vm459, %v453, %v470
          %v472 = vsel %vm458, %v469, %v471
          %v473 = vshll.u32 %v433, 8
          %v474 = vmul.u32.u64.compose %v473, %v472
          %v475 = vextract.low.u32 %v474
          %v476 = vextract.high.u32 %v474
          %v477 = vmul.u32.u64.compose %v473, %v468
          %v478 = vextract.low.u32 %v477
          %v479 = vextract.high.u32 %v477
          %v480 = vmul.u32 %v473, %v464
          %v481 = vadd.s32 %v476, %v478
          %vm482 = vc.u32 %v476, %v478
          %v483 = vadd.s32 %v479, 1
          %v484 = vsel %vm482, %v483, %v479
          %v485 = vadd.s32 %v480, %v484
          %v486 = vadd.s32 %v485, 536870912
          %v487 = vshrl.u32 %v486, 30
          %v488 = vshll.u32 %v487, 30
          %v489 = vsub.s32 %v485, %v488
          %vm490 = vcmp.lt.s32.totalorder %v489, 0
          %v491 = vsub.s32 0, %v489
          %v492 = vsel %vm490, %v491, %v489
          %v493 = vclz %v492
          %v494 = vsub.s32 %v493, 2
          %vm495 = vcmp.gt.s32.totalorder 0, %v494
          %v496 = vsel %vm495, 0, %v494
          %v497 = vsub.s32 32, %v496
          %v498 = vshll.u32 %v489, %v496
          %v499 = vshrl.u32 %v481, %v497
          %v500 = vor.u32 %v498, %v499
          %v501 = vsub.s32 4294967266, %v496
          %v502 = vadd.s32 %v501, 127
          %v503 = vshll.u32 %v502, 23
          %v504 = vor.u32 4788187, %v503
          %v505 = vand.u32 2147483647, %v504
          %v507 = vcvt.s32.f32 %v500
          %v508 = vmul.f32 %v507, %v505
          %v509 = vxor.u32 %v508, 2147483648
          %v510 = vsel %vm427, %v509, %v508
          %v511 = vsub.s32 4, %v487
          %v512 = vsel %vm427, %v511, %v487
          %v513 = vsel %vm426, %v291, %v510
          %v514 = vsel %vm426, 0, %v512
          %v515 = vcosq.f32.pop %v513
          %v516 = vsinq.f32.pop %v513
          %vm517 = vweird.f32 %v291
          %v518 = vand.u32 %v514, 3
          %vm519 = vcmp.lt.s32.totalorder %v518, 2
          %vm520 = vcmp.eq.s32.totalorder %v518, 0
          %v521 = vxor.u32 %v516, 2147483648
          %v522 = vsel %vm520, %v515, %v521
          %vm523 = vcmp.eq.s32.totalorder %v518, 2
          %v524 = vxor.u32 %v515, 2147483648
          %v525 = vsel %vm523, %v524, %v516
          %v526 = vsel %vm519, %v522, %v525
          %v527 = vsel %vm517, nan, %v526
          %v528 = vand.u32 2147483647, %v292
          %vm529 = vcmp.le.f32.partialorder %v528, 0.7853982
          %vm530 = vcmp.lt.s32.totalorder %v292, 0
          %v531 = vand.u32 %v292, 2139095040
          %v532 = vshrl.u32 %v531, 23
          %v533 = vsub.s32 %v532, 127
          %v534 = vand.u32 2147483647, %v292
          %v535 = vand.u32 %v534, 8388607
          %v536 = vor.u32 %v535, 8388608
          %v537 = vsub.s32 0, %v536
          %v538 = vadd.s32 %v533, 1
          %vm539 = vcmp.gt.s32.totalorder %v538, 0
          %v540 = vsel %vm539, %v538, 0
          %v541 = vshrl.u32 %v540, 5
          %v542 = vand.u32 %v540, 31
          %v543 = vsub.s32 32, %v542
          %v544 = vshrl.u32 683565275, %v543
          %v545 = vshll.u32 683565275, %v542
          %v546 = vshrl.u32 2475754826, %v543
          %v547 = vor.u32 %v545, %v546
          %v548 = vshll.u32 2475754826, %v542
          %v549 = vshrl.u32 2131351028, %v543
          %v550 = vor.u32 %v548, %v549
          %v551 = vshll.u32 2131351028, %v542
          %v552 = vshrl.u32 2102212464, %v543
          %v553 = vor.u32 %v551, %v552
          %v554 = vshll.u32 2102212464, %v542
          %v555 = vshrl.u32 920167782, %v543
          %v556 = vor.u32 %v554, %v555
          %v557 = vshll.u32 920167782, %v542
          %v558 = vshrl.u32 1326507024, %v543
          %v559 = vor.u32 %v557, %v558
          %vm560 = vcmp.lt.s32.totalorder %v541, 1
          %vm561 = vcmp.lt.s32.totalorder %v541, 2
          %vm562 = vcmp.lt.s32.totalorder %v541, 3
          %vm563 = vcmp.lt.s32.totalorder %v541, 4
          %v564 = vsel %vm560, %v544, %v547
          %v565 = vsel %vm563, %v553, 2102212464
          %v566 = vsel %vm562, %v550, %v565
          %v567 = vsel %vm561, %v564, %v566
          %v568 = vsel %vm560, %v547, %v550
          %v569 = vsel %vm563, %v556, 920167782
          %v570 = vsel %vm562, %v553, %v569
          %v571 = vsel %vm561, %v568, %v570
          %v572 = vsel %vm560, %v550, %v553
          %v573 = vsel %vm563, %v559, 1326507024
          %v574 = vsel %vm562, %v556, %v573
          %v575 = vsel %vm561, %v572, %v574
          %v576 = vshll.u32 %v536, 8
          %v577 = vmul.u32.u64.compose %v576, %v575
          %v578 = vextract.low.u32 %v577
          %v579 = vextract.high.u32 %v577
          %v580 = vmul.u32.u64.compose %v576, %v571
          %v581 = vextract.low.u32 %v580
          %v582 = vextract.high.u32 %v580
          %v583 = vmul.u32 %v576, %v567
          %v584 = vadd.s32 %v579, %v581
          %vm585 = vc.u32 %v579, %v581
          %v586 = vadd.s32 %v582, 1
          %v587 = vsel %vm585, %v586, %v582
          %v588 = vadd.s32 %v583, %v587
          %v589 = vadd.s32 %v588, 536870912
          %v590 = vshrl.u32 %v589, 30
          %v591 = vshll.u32 %v590, 30
          %v592 = vsub.s32 %v588, %v591
          %vm593 = vcmp.lt.s32.totalorder %v592, 0
          %v594 = vsub.s32 0, %v592
          %v595 = vsel %vm593, %v594, %v592
          %v596 = vclz %v595
          %v597 = vsub.s32 %v596, 2
          %vm598 = vcmp.gt.s32.totalorder 0, %v597
          %v599 = vsel %vm598, 0, %v597
          %v600 = vsub.s32 32, %v599
          %v601 = vshll.u32 %v592, %v599
          %v602 = vshrl.u32 %v584, %v600
          %v603 = vor.u32 %v601, %v602
          %v604 = vsub.s32 4294967266, %v599
          %v605 = vadd.s32 %v604, 127
          %v606 = vshll.u32 %v605, 23
          %v607 = vor.u32 4788187, %v606
          %v608 = vand.u32 2147483647, %v607
          %v610 = vcvt.s32.f32 %v603
          %v611 = vmul.f32 %v610, %v608
          %v612 = vxor.u32 %v611, 2147483648
          %v613 = vsel %vm530, %v612, %v611
          %v614 = vsub.s32 4, %v590
          %v615 = vsel %vm530, %v614, %v590
          %v616 = vsel %vm529, %v292, %v613
          %v617 = vsel %vm529, 0, %v615
          %v618 = vcosq.f32.pop %v616
          %v619 = vsinq.f32.pop %v616
          %vm620 = vweird.f32 %v292
          %v621 = vand.u32 %v617, 3
          %vm622 = vcmp.lt.s32.totalorder %v621, 2
          %vm623 = vcmp.eq.s32.totalorder %v621, 0
          %v624 = vxor.u32 %v619, 2147483648
          %v625 = vsel %vm623, %v618, %v624
          %vm626 = vcmp.eq.s32.totalorder %v621, 2
          %v627 = vxor.u32 %v618, 2147483648
          %v628 = vsel %vm626, %v627, %v619
          %v629 = vsel %vm622, %v625, %v628
          %v630 = vsel %vm620, nan, %v629
          %v631 = vand.u32 2147483647, %v293
          %vm632 = vcmp.le.f32.partialorder %v631, 0.7853982
          %vm633 = vcmp.lt.s32.totalorder %v293, 0
          %v634 = vand.u32 %v293, 2139095040
          %v635 = vshrl.u32 %v634, 23
          %v636 = vsub.s32 %v635, 127
          %v637 = vand.u32 2147483647, %v293
          %v638 = vand.u32 %v637, 8388607
          %v639 = vor.u32 %v638, 8388608
          %v640 = vsub.s32 0, %v639
          %v641 = vadd.s32 %v636, 1
          %vm642 = vcmp.gt.s32.totalorder %v641, 0
          %v643 = vsel %vm642, %v641, 0
          %v644 = vshrl.u32 %v643, 5
          %v645 = vand.u32 %v643, 31
          %v646 = vsub.s32 32, %v645
          %v647 = vshrl.u32 683565275, %v646
          %v648 = vshll.u32 683565275, %v645
          %v649 = vshrl.u32 2475754826, %v646
          %v650 = vor.u32 %v648, %v649
          %v651 = vshll.u32 2475754826, %v645
          %v652 = vshrl.u32 2131351028, %v646
          %v653 = vor.u32 %v651, %v652
          %v654 = vshll.u32 2131351028, %v645
          %v655 = vshrl.u32 2102212464, %v646
          %v656 = vor.u32 %v654, %v655
          %v657 = vshll.u32 2102212464, %v645
          %v658 = vshrl.u32 920167782, %v646
          %v659 = vor.u32 %v657, %v658
          %v660 = vshll.u32 920167782, %v645
          %v661 = vshrl.u32 1326507024, %v646
          %v662 = vor.u32 %v660, %v661
          %vm663 = vcmp.lt.s32.totalorder %v644, 1
          %vm664 = vcmp.lt.s32.totalorder %v644, 2
          %vm665 = vcmp.lt.s32.totalorder %v644, 3
          %vm666 = vcmp.lt.s32.totalorder %v644, 4
          %v667 = vsel %vm663, %v647, %v650
          %v668 = vsel %vm666, %v656, 2102212464
          %v669 = vsel %vm665, %v653, %v668
          %v670 = vsel %vm664, %v667, %v669
          %v671 = vsel %vm663, %v650, %v653
          %v672 = vsel %vm666, %v659, 920167782
          %v673 = vsel %vm665, %v656, %v672
          %v674 = vsel %vm664, %v671, %v673
          %v675 = vsel %vm663, %v653, %v656
          %v676 = vsel %vm666, %v662, 1326507024
          %v677 = vsel %vm665, %v659, %v676
          %v678 = vsel %vm664, %v675, %v677
          %v679 = vshll.u32 %v639, 8
          %v680 = vmul.u32.u64.compose %v679, %v678
          %v681 = vextract.low.u32 %v680
          %v682 = vextract.high.u32 %v680
          %v683 = vmul.u32.u64.compose %v679, %v674
          %v684 = vextract.low.u32 %v683
          %v685 = vextract.high.u32 %v683
          %v686 = vmul.u32 %v679, %v670
          %v687 = vadd.s32 %v682, %v684
          %vm688 = vc.u32 %v682, %v684
          %v689 = vadd.s32 %v685, 1
          %v690 = vsel %vm688, %v689, %v685
          %v691 = vadd.s32 %v686, %v690
          %v692 = vadd.s32 %v691, 536870912
          %v693 = vshrl.u32 %v692, 30
          %v694 = vshll.u32 %v693, 30
          %v695 = vsub.s32 %v691, %v694
          %vm696 = vcmp.lt.s32.totalorder %v695, 0
          %v697 = vsub.s32 0, %v695
          %v698 = vsel %vm696, %v697, %v695
          %v699 = vclz %v698
          %v700 = vsub.s32 %v699, 2
          %vm701 = vcmp.gt.s32.totalorder 0, %v700
          %v702 = vsel %vm701, 0, %v700
          %v703 = vsub.s32 32, %v702
          %v704 = vshll.u32 %v695, %v702
          %v705 = vshrl.u32 %v687, %v703
          %v706 = vor.u32 %v704, %v705
          %v707 = vsub.s32 4294967266, %v702
          %v708 = vadd.s32 %v707, 127
          %v709 = vshll.u32 %v708, 23
          %v710 = vor.u32 4788187, %v709
          %v711 = vand.u32 2147483647, %v710
          %v713 = vcvt.s32.f32 %v706
          %v714 = vmul.f32 %v713, %v711
          %v715 = vxor.u32 %v714, 2147483648
          %v716 = vsel %vm633, %v715, %v714
          %v717 = vsub.s32 4, %v693
          %v718 = vsel %vm633, %v717, %v693
          %v719 = vsel %vm632, %v293, %v716
          %v720 = vsel %vm632, 0, %v718
          %v721 = vcosq.f32.pop %v719
          %v722 = vsinq.f32.pop %v719
          %vm723 = vweird.f32 %v293
          %v724 = vand.u32 %v720, 3
          %vm725 = vcmp.lt.s32.totalorder %v724, 2
          %vm726 = vcmp.eq.s32.totalorder %v724, 0
          %v727 = vxor.u32 %v722, 2147483648
          %v728 = vsel %vm726, %v721, %v727
          %vm729 = vcmp.eq.s32.totalorder %v724, 2
          %v730 = vxor.u32 %v721, 2147483648
          %v731 = vsel %vm729, %v730, %v722
          %v732 = vsel %vm725, %v728, %v731
          %v733 = vsel %vm723, nan, %v732
          %v734 = vand.u32 2147483647, %v294
          %vm735 = vcmp.le.f32.partialorder %v734, 0.7853982
          %vm736 = vcmp.lt.s32.totalorder %v294, 0
          %v737 = vand.u32 %v294, 2139095040
          %v738 = vshrl.u32 %v737, 23
          %v739 = vsub.s32 %v738, 127
          %v740 = vand.u32 2147483647, %v294
          %v741 = vand.u32 %v740, 8388607
          %v742 = vor.u32 %v741, 8388608
          %v743 = vsub.s32 0, %v742
          %v744 = vadd.s32 %v739, 1
          %vm745 = vcmp.gt.s32.totalorder %v744, 0
          %v746 = vsel %vm745, %v744, 0
          %v747 = vshrl.u32 %v746, 5
          %v748 = vand.u32 %v746, 31
          %v749 = vsub.s32 32, %v748
          %v750 = vshrl.u32 683565275, %v749
          %v751 = vshll.u32 683565275, %v748
          %v752 = vshrl.u32 2475754826, %v749
          %v753 = vor.u32 %v751, %v752
          %v754 = vshll.u32 2475754826, %v748
          %v755 = vshrl.u32 2131351028, %v749
          %v756 = vor.u32 %v754, %v755
          %v757 = vshll.u32 2131351028, %v748
          %v758 = vshrl.u32 2102212464, %v749
          %v759 = vor.u32 %v757, %v758
          %v760 = vshll.u32 2102212464, %v748
          %v761 = vshrl.u32 920167782, %v749
          %v762 = vor.u32 %v760, %v761
          %v763 = vshll.u32 920167782, %v748
          %v764 = vshrl.u32 1326507024, %v749
          %v765 = vor.u32 %v763, %v764
          %vm766 = vcmp.lt.s32.totalorder %v747, 1
          %vm767 = vcmp.lt.s32.totalorder %v747, 2
          %vm768 = vcmp.lt.s32.totalorder %v747, 3
          %vm769 = vcmp.lt.s32.totalorder %v747, 4
          %v770 = vsel %vm766, %v750, %v753
          %v771 = vsel %vm769, %v759, 2102212464
          %v772 = vsel %vm768, %v756, %v771
          %v773 = vsel %vm767, %v770, %v772
          %v774 = vsel %vm766, %v753, %v756
          %v775 = vsel %vm769, %v762, 920167782
          %v776 = vsel %vm768, %v759, %v775
          %v777 = vsel %vm767, %v774, %v776
          %v778 = vsel %vm766, %v756, %v759
          %v779 = vsel %vm769, %v765, 1326507024
          %v780 = vsel %vm768, %v762, %v779
          %v781 = vsel %vm767, %v778, %v780
          %v782 = vshll.u32 %v742, 8
          %v783 = vmul.u32.u64.compose %v782, %v781
          %v784 = vextract.low.u32 %v783
          %v785 = vextract.high.u32 %v783
          %v786 = vmul.u32.u64.compose %v782, %v777
          %v787 = vextract.low.u32 %v786
          %v788 = vextract.high.u32 %v786
          %v789 = vmul.u32 %v782, %v773
          %v790 = vadd.s32 %v785, %v787
          %vm791 = vc.u32 %v785, %v787
          %v792 = vadd.s32 %v788, 1
          %v793 = vsel %vm791, %v792, %v788
          %v794 = vadd.s32 %v789, %v793
          %v795 = vadd.s32 %v794, 536870912
          %v796 = vshrl.u32 %v795, 30
          %v797 = vshll.u32 %v796, 30
          %v798 = vsub.s32 %v794, %v797
          %vm799 = vcmp.lt.s32.totalorder %v798, 0
          %v800 = vsub.s32 0, %v798
          %v801 = vsel %vm799, %v800, %v798
          %v802 = vclz %v801
          %v803 = vsub.s32 %v802, 2
          %vm804 = vcmp.gt.s32.totalorder 0, %v803
          %v805 = vsel %vm804, 0, %v803
          %v806 = vsub.s32 32, %v805
          %v807 = vshll.u32 %v798, %v805
          %v808 = vshrl.u32 %v790, %v806
          %v809 = vor.u32 %v807, %v808
          %v810 = vsub.s32 4294967266, %v805
          %v811 = vadd.s32 %v810, 127
          %v812 = vshll.u32 %v811, 23
          %v813 = vor.u32 4788187, %v812
          %v814 = vand.u32 2147483647, %v813
          %v816 = vcvt.s32.f32 %v809
          %v817 = vmul.f32 %v816, %v814
          %v818 = vxor.u32 %v817, 2147483648
          %v819 = vsel %vm736, %v818, %v817
          %v820 = vsub.s32 4, %v796
          %v821 = vsel %vm736, %v820, %v796
          %v822 = vsel %vm735, %v294, %v819
          %v823 = vsel %vm735, 0, %v821
          %v824 = vcosq.f32.pop %v822
          %v825 = vsinq.f32.pop %v822
          %vm826 = vweird.f32 %v294
          %v827 = vand.u32 %v823, 3
          %vm828 = vcmp.lt.s32.totalorder %v827, 2
          %vm829 = vcmp.eq.s32.totalorder %v827, 0
          %v830 = vxor.u32 %v825, 2147483648
          %v831 = vsel %vm829, %v824, %v830
          %vm832 = vcmp.eq.s32.totalorder %v827, 2
          %v833 = vxor.u32 %v824, 2147483648
          %v834 = vsel %vm832, %v833, %v825
          %v835 = vsel %vm828, %v831, %v834
          %v836 = vsel %vm826, nan, %v835
          %v837 = vand.u32 2147483647, %v295
          %vm838 = vcmp.le.f32.partialorder %v837, 0.7853982
          %vm839 = vcmp.lt.s32.totalorder %v295, 0
          %v840 = vand.u32 %v295, 2139095040
          %v841 = vshrl.u32 %v840, 23
          %v842 = vsub.s32 %v841, 127
          %v843 = vand.u32 2147483647, %v295
          %v844 = vand.u32 %v843, 8388607
          %v845 = vor.u32 %v844, 8388608
          %v846 = vsub.s32 0, %v845
          %v847 = vadd.s32 %v842, 1
          %vm848 = vcmp.gt.s32.totalorder %v847, 0
          %v849 = vsel %vm848, %v847, 0
          %v850 = vshrl.u32 %v849, 5
          %v851 = vand.u32 %v849, 31
          %v852 = vsub.s32 32, %v851
          %v853 = vshrl.u32 683565275, %v852
          %v854 = vshll.u32 683565275, %v851
          %v855 = vshrl.u32 2475754826, %v852
          %v856 = vor.u32 %v854, %v855
          %v857 = vshll.u32 2475754826, %v851
          %v858 = vshrl.u32 2131351028, %v852
          %v859 = vor.u32 %v857, %v858
          %v860 = vshll.u32 2131351028, %v851
          %v861 = vshrl.u32 2102212464, %v852
          %v862 = vor.u32 %v860, %v861
          %v863 = vshll.u32 2102212464, %v851
          %v864 = vshrl.u32 920167782, %v852
          %v865 = vor.u32 %v863, %v864
          %v866 = vshll.u32 920167782, %v851
          %v867 = vshrl.u32 1326507024, %v852
          %v868 = vor.u32 %v866, %v867
          %vm869 = vcmp.lt.s32.totalorder %v850, 1
          %vm870 = vcmp.lt.s32.totalorder %v850, 2
          %vm871 = vcmp.lt.s32.totalorder %v850, 3
          %vm872 = vcmp.lt.s32.totalorder %v850, 4
          %v873 = vsel %vm869, %v853, %v856
          %v874 = vsel %vm872, %v862, 2102212464
          %v875 = vsel %vm871, %v859, %v874
          %v876 = vsel %vm870, %v873, %v875
          %v877 = vsel %vm869, %v856, %v859
          %v878 = vsel %vm872, %v865, 920167782
          %v879 = vsel %vm871, %v862, %v878
          %v880 = vsel %vm870, %v877, %v879
          %v881 = vsel %vm869, %v859, %v862
          %v882 = vsel %vm872, %v868, 1326507024
          %v883 = vsel %vm871, %v865, %v882
          %v884 = vsel %vm870, %v881, %v883
          %v885 = vshll.u32 %v845, 8
          %v886 = vmul.u32.u64.compose %v885, %v884
          %v887 = vextract.low.u32 %v886
          %v888 = vextract.high.u32 %v886
          %v889 = vmul.u32.u64.compose %v885, %v880
          %v890 = vextract.low.u32 %v889
          %v891 = vextract.high.u32 %v889
          %v892 = vmul.u32 %v885, %v876
          %v893 = vadd.s32 %v888, %v890
          %vm894 = vc.u32 %v888, %v890
          %v895 = vadd.s32 %v891, 1
          %v896 = vsel %vm894, %v895, %v891
          %v897 = vadd.s32 %v892, %v896
          %v898 = vadd.s32 %v897, 536870912
          %v899 = vshrl.u32 %v898, 30
          %v900 = vshll.u32 %v899, 30
          %v901 = vsub.s32 %v897, %v900
          %vm902 = vcmp.lt.s32.totalorder %v901, 0
          %v903 = vsub.s32 0, %v901
          %v904 = vsel %vm902, %v903, %v901
          %v905 = vclz %v904
          %v906 = vsub.s32 %v905, 2
          %vm907 = vcmp.gt.s32.totalorder 0, %v906
          %v908 = vsel %vm907, 0, %v906
          %v909 = vsub.s32 32, %v908
          %v910 = vshll.u32 %v901, %v908
          %v911 = vshrl.u32 %v893, %v909
          %v912 = vor.u32 %v910, %v911
          %v913 = vsub.s32 4294967266, %v908
          %v914 = vadd.s32 %v913, 127
          %v915 = vshll.u32 %v914, 23
          %v916 = vor.u32 4788187, %v915
          %v917 = vand.u32 2147483647, %v916
          %v919 = vcvt.s32.f32 %v912
          %v920 = vmul.f32 %v919, %v917
          %v921 = vxor.u32 %v920, 2147483648
          %v922 = vsel %vm839, %v921, %v920
          %v923 = vsub.s32 4, %v899
          %v924 = vsel %vm839, %v923, %v899
          %v925 = vsel %vm838, %v295, %v922
          %v926 = vsel %vm838, 0, %v924
          %v927 = vcosq.f32.pop %v925
          %v928 = vsinq.f32.pop %v925
          %vm929 = vweird.f32 %v295
          %v930 = vand.u32 %v926, 3
          %vm931 = vcmp.lt.s32.totalorder %v930, 2
          %vm932 = vcmp.eq.s32.totalorder %v930, 0
          %v933 = vxor.u32 %v928, 2147483648
          %v934 = vsel %vm932, %v927, %v933
          %vm935 = vcmp.eq.s32.totalorder %v930, 2
          %v936 = vxor.u32 %v927, 2147483648
          %v937 = vsel %vm935, %v936, %v928
          %v938 = vsel %vm931, %v934, %v937
          %v939 = vsel %vm929, nan, %v938
          %v940 = vand.u32 2147483647, %v296
          %vm941 = vcmp.le.f32.partialorder %v940, 0.7853982
          %vm942 = vcmp.lt.s32.totalorder %v296, 0
          %v943 = vand.u32 %v296, 2139095040
          %v944 = vshrl.u32 %v943, 23
          %v945 = vsub.s32 %v944, 127
          %v946 = vand.u32 2147483647, %v296
          %v947 = vand.u32 %v946, 8388607
          %v948 = vor.u32 %v947, 8388608
          %v949 = vsub.s32 0, %v948
          %v950 = vadd.s32 %v945, 1
          %vm951 = vcmp.gt.s32.totalorder %v950, 0
          %v952 = vsel %vm951, %v950, 0
          %v953 = vshrl.u32 %v952, 5
          %v954 = vand.u32 %v952, 31
          %v955 = vsub.s32 32, %v954
          %v956 = vshrl.u32 683565275, %v955
          %v957 = vshll.u32 683565275, %v954
          %v958 = vshrl.u32 2475754826, %v955
          %v959 = vor.u32 %v957, %v958
          %v960 = vshll.u32 2475754826, %v954
          %v961 = vshrl.u32 2131351028, %v955
          %v962 = vor.u32 %v960, %v961
          %v963 = vshll.u32 2131351028, %v954
          %v964 = vshrl.u32 2102212464, %v955
          %v965 = vor.u32 %v963, %v964
          %v966 = vshll.u32 2102212464, %v954
          %v967 = vshrl.u32 920167782, %v955
          %v968 = vor.u32 %v966, %v967
          %v969 = vshll.u32 920167782, %v954
          %v970 = vshrl.u32 1326507024, %v955
          %v971 = vor.u32 %v969, %v970
          %vm972 = vcmp.lt.s32.totalorder %v953, 1
          %vm973 = vcmp.lt.s32.totalorder %v953, 2
          %vm974 = vcmp.lt.s32.totalorder %v953, 3
          %vm975 = vcmp.lt.s32.totalorder %v953, 4
          %v976 = vsel %vm972, %v956, %v959
          %v977 = vsel %vm975, %v965, 2102212464
          %v978 = vsel %vm974, %v962, %v977
          %v979 = vsel %vm973, %v976, %v978
          %v980 = vsel %vm972, %v959, %v962
          %v981 = vsel %vm975, %v968, 920167782
          %v982 = vsel %vm974, %v965, %v981
          %v983 = vsel %vm973, %v980, %v982
          %v984 = vsel %vm972, %v962, %v965
          %v985 = vsel %vm975, %v971, 1326507024
          %v986 = vsel %vm974, %v968, %v985
          %v987 = vsel %vm973, %v984, %v986
          %v988 = vshll.u32 %v948, 8
          %v989 = vmul.u32.u64.compose %v988, %v987
          %v990 = vextract.low.u32 %v989
          %v991 = vextract.high.u32 %v989
          %v992 = vmul.u32.u64.compose %v988, %v983
          %v993 = vextract.low.u32 %v992
          %v994 = vextract.high.u32 %v992
          %v995 = vmul.u32 %v988, %v979
          %v996 = vadd.s32 %v991, %v993
          %vm997 = vc.u32 %v991, %v993
          %v998 = vadd.s32 %v994, 1
          %v999 = vsel %vm997, %v998, %v994
          %v1000 = vadd.s32 %v995, %v999
          %v1001 = vadd.s32 %v1000, 536870912
          %v1002 = vshrl.u32 %v1001, 30
          %v1003 = vshll.u32 %v1002, 30
          %v1004 = vsub.s32 %v1000, %v1003
          %vm1005 = vcmp.lt.s32.totalorder %v1004, 0
          %v1006 = vsub.s32 0, %v1004
          %v1007 = vsel %vm1005, %v1006, %v1004
          %v1008 = vclz %v1007
          %v1009 = vsub.s32 %v1008, 2
          %vm1010 = vcmp.gt.s32.totalorder 0, %v1009
          %v1011 = vsel %vm1010, 0, %v1009
          %v1012 = vsub.s32 32, %v1011
          %v1013 = vshll.u32 %v1004, %v1011
          %v1014 = vshrl.u32 %v996, %v1012
          %v1015 = vor.u32 %v1013, %v1014
          %v1016 = vsub.s32 4294967266, %v1011
          %v1017 = vadd.s32 %v1016, 127
          %v1018 = vshll.u32 %v1017, 23
          %v1019 = vor.u32 4788187, %v1018
          %v1020 = vand.u32 2147483647, %v1019
          %v1022 = vcvt.s32.f32 %v1015
          %v1023 = vmul.f32 %v1022, %v1020
          %v1024 = vxor.u32 %v1023, 2147483648
          %v1025 = vsel %vm942, %v1024, %v1023
          %v1026 = vsub.s32 4, %v1002
          %v1027 = vsel %vm942, %v1026, %v1002
          %v1028 = vsel %vm941, %v296, %v1025
          %v1029 = vsel %vm941, 0, %v1027
          %v1030 = vcosq.f32.pop %v1028
          %v1031 = vsinq.f32.pop %v1028
          %vm1032 = vweird.f32 %v296
          %v1033 = vand.u32 %v1029, 3
          %vm1034 = vcmp.lt.s32.totalorder %v1033, 2
          %vm1035 = vcmp.eq.s32.totalorder %v1033, 0
          %v1036 = vxor.u32 %v1031, 2147483648
          %v1037 = vsel %vm1035, %v1030, %v1036
          %vm1038 = vcmp.eq.s32.totalorder %v1033, 2
          %v1039 = vxor.u32 %v1030, 2147483648
          %v1040 = vsel %vm1038, %v1039, %v1031
          %v1041 = vsel %vm1034, %v1037, %v1040
          %v1042 = vsel %vm1032, nan, %v1041
          %v1043 = vand.u32 2147483647, %v297
          %vm1044 = vcmp.le.f32.partialorder %v1043, 0.7853982
          %vm1045 = vcmp.lt.s32.totalorder %v297, 0
          %v1046 = vand.u32 %v297, 2139095040
          %v1047 = vshrl.u32 %v1046, 23
          %v1048 = vsub.s32 %v1047, 127
          %v1049 = vand.u32 2147483647, %v297
          %v1050 = vand.u32 %v1049, 8388607
          %v1051 = vor.u32 %v1050, 8388608
          %v1052 = vsub.s32 0, %v1051
          %v1053 = vadd.s32 %v1048, 1
          %vm1054 = vcmp.gt.s32.totalorder %v1053, 0
          %v1055 = vsel %vm1054, %v1053, 0
          %v1056 = vshrl.u32 %v1055, 5
          %v1057 = vand.u32 %v1055, 31
          %v1058 = vsub.s32 32, %v1057
          %v1059 = vshrl.u32 683565275, %v1058
          %v1060 = vshll.u32 683565275, %v1057
          %v1061 = vshrl.u32 2475754826, %v1058
          %v1062 = vor.u32 %v1060, %v1061
          %v1063 = vshll.u32 2475754826, %v1057
          %v1064 = vshrl.u32 2131351028, %v1058
          %v1065 = vor.u32 %v1063, %v1064
          %v1066 = vshll.u32 2131351028, %v1057
          %v1067 = vshrl.u32 2102212464, %v1058
          %v1068 = vor.u32 %v1066, %v1067
          %v1069 = vshll.u32 2102212464, %v1057
          %v1070 = vshrl.u32 920167782, %v1058
          %v1071 = vor.u32 %v1069, %v1070
          %v1072 = vshll.u32 920167782, %v1057
          %v1073 = vshrl.u32 1326507024, %v1058
          %v1074 = vor.u32 %v1072, %v1073
          %vm1075 = vcmp.lt.s32.totalorder %v1056, 1
          %vm1076 = vcmp.lt.s32.totalorder %v1056, 2
          %vm1077 = vcmp.lt.s32.totalorder %v1056, 3
          %vm1078 = vcmp.lt.s32.totalorder %v1056, 4
          %v1079 = vsel %vm1075, %v1059, %v1062
          %v1080 = vsel %vm1078, %v1068, 2102212464
          %v1081 = vsel %vm1077, %v1065, %v1080
          %v1082 = vsel %vm1076, %v1079, %v1081
          %v1083 = vsel %vm1075, %v1062, %v1065
          %v1084 = vsel %vm1078, %v1071, 920167782
          %v1085 = vsel %vm1077, %v1068, %v1084
          %v1086 = vsel %vm1076, %v1083, %v1085
          %v1087 = vsel %vm1075, %v1065, %v1068
          %v1088 = vsel %vm1078, %v1074, 1326507024
          %v1089 = vsel %vm1077, %v1071, %v1088
          %v1090 = vsel %vm1076, %v1087, %v1089
          %v1091 = vshll.u32 %v1051, 8
          %v1092 = vmul.u32.u64.compose %v1091, %v1090
          %v1093 = vextract.low.u32 %v1092
          %v1094 = vextract.high.u32 %v1092
          %v1095 = vmul.u32.u64.compose %v1091, %v1086
          %v1096 = vextract.low.u32 %v1095
          %v1097 = vextract.high.u32 %v1095
          %v1098 = vmul.u32 %v1091, %v1082
          %v1099 = vadd.s32 %v1094, %v1096
          %vm1100 = vc.u32 %v1094, %v1096
          %v1101 = vadd.s32 %v1097, 1
          %v1102 = vsel %vm1100, %v1101, %v1097
          %v1103 = vadd.s32 %v1098, %v1102
          %v1104 = vadd.s32 %v1103, 536870912
          %v1105 = vshrl.u32 %v1104, 30
          %v1106 = vshll.u32 %v1105, 30
          %v1107 = vsub.s32 %v1103, %v1106
          %vm1108 = vcmp.lt.s32.totalorder %v1107, 0
          %v1109 = vsub.s32 0, %v1107
          %v1110 = vsel %vm1108, %v1109, %v1107
          %v1111 = vclz %v1110
          %v1112 = vsub.s32 %v1111, 2
          %vm1113 = vcmp.gt.s32.totalorder 0, %v1112
          %v1114 = vsel %vm1113, 0, %v1112
          %v1115 = vsub.s32 32, %v1114
          %v1116 = vshll.u32 %v1107, %v1114
          %v1117 = vshrl.u32 %v1099, %v1115
          %v1118 = vor.u32 %v1116, %v1117
          %v1119 = vsub.s32 4294967266, %v1114
          %v1120 = vadd.s32 %v1119, 127
          %v1121 = vshll.u32 %v1120, 23
          %v1122 = vor.u32 4788187, %v1121
          %v1123 = vand.u32 2147483647, %v1122
          %v1125 = vcvt.s32.f32 %v1118
          %v1126 = vmul.f32 %v1125, %v1123
          %v1127 = vxor.u32 %v1126, 2147483648
          %v1128 = vsel %vm1045, %v1127, %v1126
          %v1129 = vsub.s32 4, %v1105
          %v1130 = vsel %vm1045, %v1129, %v1105
          %v1131 = vsel %vm1044, %v297, %v1128
          %v1132 = vsel %vm1044, 0, %v1130
          %v1133 = vcosq.f32.pop %v1131
          %v1134 = vsinq.f32.pop %v1131
          %vm1135 = vweird.f32 %v297
          %v1136 = vand.u32 %v1132, 3
          %vm1137 = vcmp.lt.s32.totalorder %v1136, 2
          %vm1138 = vcmp.eq.s32.totalorder %v1136, 0
          %v1139 = vxor.u32 %v1134, 2147483648
          %v1140 = vsel %vm1138, %v1133, %v1139
          %vm1141 = vcmp.eq.s32.totalorder %v1136, 2
          %v1142 = vxor.u32 %v1133, 2147483648
          %v1143 = vsel %vm1141, %v1142, %v1134
          %v1144 = vsel %vm1137, %v1140, %v1143
          %v1145 = vsel %vm1135, nan, %v1144
          %v1146 = vand.u32 2147483647, %v298
          %vm1147 = vcmp.le.f32.partialorder %v1146, 0.7853982
          %vm1148 = vcmp.lt.s32.totalorder %v298, 0
          %v1149 = vand.u32 %v298, 2139095040
          %v1150 = vshrl.u32 %v1149, 23
          %v1151 = vsub.s32 %v1150, 127
          %v1152 = vand.u32 2147483647, %v298
          %v1153 = vand.u32 %v1152, 8388607
          %v1154 = vor.u32 %v1153, 8388608
          %v1155 = vsub.s32 0, %v1154
          %v1156 = vadd.s32 %v1151, 1
          %vm1157 = vcmp.gt.s32.totalorder %v1156, 0
          %v1158 = vsel %vm1157, %v1156, 0
          %v1159 = vshrl.u32 %v1158, 5
          %v1160 = vand.u32 %v1158, 31
          %v1161 = vsub.s32 32, %v1160
          %v1162 = vshrl.u32 683565275, %v1161
          %v1163 = vshll.u32 683565275, %v1160
          %v1164 = vshrl.u32 2475754826, %v1161
          %v1165 = vor.u32 %v1163, %v1164
          %v1166 = vshll.u32 2475754826, %v1160
          %v1167 = vshrl.u32 2131351028, %v1161
          %v1168 = vor.u32 %v1166, %v1167
          %v1169 = vshll.u32 2131351028, %v1160
          %v1170 = vshrl.u32 2102212464, %v1161
          %v1171 = vor.u32 %v1169, %v1170
          %v1172 = vshll.u32 2102212464, %v1160
          %v1173 = vshrl.u32 920167782, %v1161
          %v1174 = vor.u32 %v1172, %v1173
          %v1175 = vshll.u32 920167782, %v1160
          %v1176 = vshrl.u32 1326507024, %v1161
          %v1177 = vor.u32 %v1175, %v1176
          %vm1178 = vcmp.lt.s32.totalorder %v1159, 1
          %vm1179 = vcmp.lt.s32.totalorder %v1159, 2
          %vm1180 = vcmp.lt.s32.totalorder %v1159, 3
          %vm1181 = vcmp.lt.s32.totalorder %v1159, 4
          %v1182 = vsel %vm1178, %v1162, %v1165
          %v1183 = vsel %vm1181, %v1171, 2102212464
          %v1184 = vsel %vm1180, %v1168, %v1183
          %v1185 = vsel %vm1179, %v1182, %v1184
          %v1186 = vsel %vm1178, %v1165, %v1168
          %v1187 = vsel %vm1181, %v1174, 920167782
          %v1188 = vsel %vm1180, %v1171, %v1187
          %v1189 = vsel %vm1179, %v1186, %v1188
          %v1190 = vsel %vm1178, %v1168, %v1171
          %v1191 = vsel %vm1181, %v1177, 1326507024
          %v1192 = vsel %vm1180, %v1174, %v1191
          %v1193 = vsel %vm1179, %v1190, %v1192
          %v1194 = vshll.u32 %v1154, 8
          %v1195 = vmul.u32.u64.compose %v1194, %v1193
          %v1196 = vextract.low.u32 %v1195
          %v1197 = vextract.high.u32 %v1195
          %v1198 = vmul.u32.u64.compose %v1194, %v1189
          %v1199 = vextract.low.u32 %v1198
          %v1200 = vextract.high.u32 %v1198
          %v1201 = vmul.u32 %v1194, %v1185
          %v1202 = vadd.s32 %v1197, %v1199
          %vm1203 = vc.u32 %v1197, %v1199
          %v1204 = vadd.s32 %v1200, 1
          %v1205 = vsel %vm1203, %v1204, %v1200
          %v1206 = vadd.s32 %v1201, %v1205
          %v1207 = vadd.s32 %v1206, 536870912
          %v1208 = vshrl.u32 %v1207, 30
          %v1209 = vshll.u32 %v1208, 30
          %v1210 = vsub.s32 %v1206, %v1209
          %vm1211 = vcmp.lt.s32.totalorder %v1210, 0
          %v1212 = vsub.s32 0, %v1210
          %v1213 = vsel %vm1211, %v1212, %v1210
          %v1214 = vclz %v1213
          %v1215 = vsub.s32 %v1214, 2
          %vm1216 = vcmp.gt.s32.totalorder 0, %v1215
          %v1217 = vsel %vm1216, 0, %v1215
          %v1218 = vsub.s32 32, %v1217
          %v1219 = vshll.u32 %v1210, %v1217
          %v1220 = vshrl.u32 %v1202, %v1218
          %v1221 = vor.u32 %v1219, %v1220
          %v1222 = vsub.s32 4294967266, %v1217
          %v1223 = vadd.s32 %v1222, 127
          %v1224 = vshll.u32 %v1223, 23
          %v1225 = vor.u32 4788187, %v1224
          %v1226 = vand.u32 2147483647, %v1225
          %v1228 = vcvt.s32.f32 %v1221
          %v1229 = vmul.f32 %v1228, %v1226
          %v1230 = vxor.u32 %v1229, 2147483648
          %v1231 = vsel %vm1148, %v1230, %v1229
          %v1232 = vsub.s32 4, %v1208
          %v1233 = vsel %vm1148, %v1232, %v1208
          %v1234 = vsel %vm1147, %v298, %v1231
          %v1235 = vsel %vm1147, 0, %v1233
          %v1236 = vcosq.f32.pop %v1234
          %v1237 = vsinq.f32.pop %v1234
          %vm1238 = vweird.f32 %v298
          %v1239 = vand.u32 %v1235, 3
          %vm1240 = vcmp.lt.s32.totalorder %v1239, 2
          %vm1241 = vcmp.eq.s32.totalorder %v1239, 0
          %v1242 = vxor.u32 %v1237, 2147483648
          %v1243 = vsel %vm1241, %v1236, %v1242
          %vm1244 = vcmp.eq.s32.totalorder %v1239, 2
          %v1245 = vxor.u32 %v1236, 2147483648
          %v1246 = vsel %vm1244, %v1245, %v1237
          %v1247 = vsel %vm1240, %v1243, %v1246
          %v1248 = vsel %vm1238, nan, %v1247
          %v1249 = vand.u32 2147483647, %v299
          %vm1250 = vcmp.le.f32.partialorder %v1249, 0.7853982
          %vm1251 = vcmp.lt.s32.totalorder %v299, 0
          %v1252 = vand.u32 %v299, 2139095040
          %v1253 = vshrl.u32 %v1252, 23
          %v1254 = vsub.s32 %v1253, 127
          %v1255 = vand.u32 2147483647, %v299
          %v1256 = vand.u32 %v1255, 8388607
          %v1257 = vor.u32 %v1256, 8388608
          %v1258 = vsub.s32 0, %v1257
          %v1259 = vadd.s32 %v1254, 1
          %vm1260 = vcmp.gt.s32.totalorder %v1259, 0
          %v1261 = vsel %vm1260, %v1259, 0
          %v1262 = vshrl.u32 %v1261, 5
          %v1263 = vand.u32 %v1261, 31
          %v1264 = vsub.s32 32, %v1263
          %v1265 = vshrl.u32 683565275, %v1264
          %v1266 = vshll.u32 683565275, %v1263
          %v1267 = vshrl.u32 2475754826, %v1264
          %v1268 = vor.u32 %v1266, %v1267
          %v1269 = vshll.u32 2475754826, %v1263
          %v1270 = vshrl.u32 2131351028, %v1264
          %v1271 = vor.u32 %v1269, %v1270
          %v1272 = vshll.u32 2131351028, %v1263
          %v1273 = vshrl.u32 2102212464, %v1264
          %v1274 = vor.u32 %v1272, %v1273
          %v1275 = vshll.u32 2102212464, %v1263
          %v1276 = vshrl.u32 920167782, %v1264
          %v1277 = vor.u32 %v1275, %v1276
          %v1278 = vshll.u32 920167782, %v1263
          %v1279 = vshrl.u32 1326507024, %v1264
          %v1280 = vor.u32 %v1278, %v1279
          %vm1281 = vcmp.lt.s32.totalorder %v1262, 1
          %vm1282 = vcmp.lt.s32.totalorder %v1262, 2
          %vm1283 = vcmp.lt.s32.totalorder %v1262, 3
          %vm1284 = vcmp.lt.s32.totalorder %v1262, 4
          %v1285 = vsel %vm1281, %v1265, %v1268
          %v1286 = vsel %vm1284, %v1274, 2102212464
          %v1287 = vsel %vm1283, %v1271, %v1286
          %v1288 = vsel %vm1282, %v1285, %v1287
          %v1289 = vsel %vm1281, %v1268, %v1271
          %v1290 = vsel %vm1284, %v1277, 920167782
          %v1291 = vsel %vm1283, %v1274, %v1290
          %v1292 = vsel %vm1282, %v1289, %v1291
          %v1293 = vsel %vm1281, %v1271, %v1274
          %v1294 = vsel %vm1284, %v1280, 1326507024
          %v1295 = vsel %vm1283, %v1277, %v1294
          %v1296 = vsel %vm1282, %v1293, %v1295
          %v1297 = vshll.u32 %v1257, 8
          %v1298 = vmul.u32.u64.compose %v1297, %v1296
          %v1299 = vextract.low.u32 %v1298
          %v1300 = vextract.high.u32 %v1298
          %v1301 = vmul.u32.u64.compose %v1297, %v1292
          %v1302 = vextract.low.u32 %v1301
          %v1303 = vextract.high.u32 %v1301
          %v1304 = vmul.u32 %v1297, %v1288
          %v1305 = vadd.s32 %v1300, %v1302
          %vm1306 = vc.u32 %v1300, %v1302
          %v1307 = vadd.s32 %v1303, 1
          %v1308 = vsel %vm1306, %v1307, %v1303
          %v1309 = vadd.s32 %v1304, %v1308
          %v1310 = vadd.s32 %v1309, 536870912
          %v1311 = vshrl.u32 %v1310, 30
          %v1312 = vshll.u32 %v1311, 30
          %v1313 = vsub.s32 %v1309, %v1312
          %vm1314 = vcmp.lt.s32.totalorder %v1313, 0
          %v1315 = vsub.s32 0, %v1313
          %v1316 = vsel %vm1314, %v1315, %v1313
          %v1317 = vclz %v1316
          %v1318 = vsub.s32 %v1317, 2
          %vm1319 = vcmp.gt.s32.totalorder 0, %v1318
          %v1320 = vsel %vm1319, 0, %v1318
          %v1321 = vsub.s32 32, %v1320
          %v1322 = vshll.u32 %v1313, %v1320
          %v1323 = vshrl.u32 %v1305, %v1321
          %v1324 = vor.u32 %v1322, %v1323
          %v1325 = vsub.s32 4294967266, %v1320
          %v1326 = vadd.s32 %v1325, 127
          %v1327 = vshll.u32 %v1326, 23
          %v1328 = vor.u32 4788187, %v1327
          %v1329 = vand.u32 2147483647, %v1328
          %v1331 = vcvt.s32.f32 %v1324
          %v1332 = vmul.f32 %v1331, %v1329
          %v1333 = vxor.u32 %v1332, 2147483648
          %v1334 = vsel %vm1251, %v1333, %v1332
          %v1335 = vsub.s32 4, %v1311
          %v1336 = vsel %vm1251, %v1335, %v1311
          %v1337 = vsel %vm1250, %v299, %v1334
          %v1338 = vsel %vm1250, 0, %v1336
          %v1339 = vcosq.f32.pop %v1337
          %v1340 = vsinq.f32.pop %v1337
          %vm1341 = vweird.f32 %v299
          %v1342 = vand.u32 %v1338, 3
          %vm1343 = vcmp.lt.s32.totalorder %v1342, 2
          %vm1344 = vcmp.eq.s32.totalorder %v1342, 0
          %v1345 = vxor.u32 %v1340, 2147483648
          %v1346 = vsel %vm1344, %v1339, %v1345
          %vm1347 = vcmp.eq.s32.totalorder %v1342, 2
          %v1348 = vxor.u32 %v1339, 2147483648
          %v1349 = vsel %vm1347, %v1348, %v1340
          %v1350 = vsel %vm1343, %v1346, %v1349
          %v1351 = vsel %vm1341, nan, %v1350
          %v1352 = vand.u32 2147483647, %v300
          %vm1353 = vcmp.le.f32.partialorder %v1352, 0.7853982
          %vm1354 = vcmp.lt.s32.totalorder %v300, 0
          %v1355 = vand.u32 %v300, 2139095040
          %v1356 = vshrl.u32 %v1355, 23
          %v1357 = vsub.s32 %v1356, 127
          %v1358 = vand.u32 2147483647, %v300
          %v1359 = vand.u32 %v1358, 8388607
          %v1360 = vor.u32 %v1359, 8388608
          %v1361 = vsub.s32 0, %v1360
          %v1362 = vadd.s32 %v1357, 1
          %vm1363 = vcmp.gt.s32.totalorder %v1362, 0
          %v1364 = vsel %vm1363, %v1362, 0
          %v1365 = vshrl.u32 %v1364, 5
          %v1366 = vand.u32 %v1364, 31
          %v1367 = vsub.s32 32, %v1366
          %v1368 = vshrl.u32 683565275, %v1367
          %v1369 = vshll.u32 683565275, %v1366
          %v1370 = vshrl.u32 2475754826, %v1367
          %v1371 = vor.u32 %v1369, %v1370
          %v1372 = vshll.u32 2475754826, %v1366
          %v1373 = vshrl.u32 2131351028, %v1367
          %v1374 = vor.u32 %v1372, %v1373
          %v1375 = vshll.u32 2131351028, %v1366
          %v1376 = vshrl.u32 2102212464, %v1367
          %v1377 = vor.u32 %v1375, %v1376
          %v1378 = vshll.u32 2102212464, %v1366
          %v1379 = vshrl.u32 920167782, %v1367
          %v1380 = vor.u32 %v1378, %v1379
          %v1381 = vshll.u32 920167782, %v1366
          %v1382 = vshrl.u32 1326507024, %v1367
          %v1383 = vor.u32 %v1381, %v1382
          %vm1384 = vcmp.lt.s32.totalorder %v1365, 1
          %vm1385 = vcmp.lt.s32.totalorder %v1365, 2
          %vm1386 = vcmp.lt.s32.totalorder %v1365, 3
          %vm1387 = vcmp.lt.s32.totalorder %v1365, 4
          %v1388 = vsel %vm1384, %v1368, %v1371
          %v1389 = vsel %vm1387, %v1377, 2102212464
          %v1390 = vsel %vm1386, %v1374, %v1389
          %v1391 = vsel %vm1385, %v1388, %v1390
          %v1392 = vsel %vm1384, %v1371, %v1374
          %v1393 = vsel %vm1387, %v1380, 920167782
          %v1394 = vsel %vm1386, %v1377, %v1393
          %v1395 = vsel %vm1385, %v1392, %v1394
          %v1396 = vsel %vm1384, %v1374, %v1377
          %v1397 = vsel %vm1387, %v1383, 1326507024
          %v1398 = vsel %vm1386, %v1380, %v1397
          %v1399 = vsel %vm1385, %v1396, %v1398
          %v1400 = vshll.u32 %v1360, 8
          %v1401 = vmul.u32.u64.compose %v1400, %v1399
          %v1402 = vextract.low.u32 %v1401
          %v1403 = vextract.high.u32 %v1401
          %v1404 = vmul.u32.u64.compose %v1400, %v1395
          %v1405 = vextract.low.u32 %v1404
          %v1406 = vextract.high.u32 %v1404
          %v1407 = vmul.u32 %v1400, %v1391
          %v1408 = vadd.s32 %v1403, %v1405
          %vm1409 = vc.u32 %v1403, %v1405
          %v1410 = vadd.s32 %v1406, 1
          %v1411 = vsel %vm1409, %v1410, %v1406
          %v1412 = vadd.s32 %v1407, %v1411
          %v1413 = vadd.s32 %v1412, 536870912
          %v1414 = vshrl.u32 %v1413, 30
          %v1415 = vshll.u32 %v1414, 30
          %v1416 = vsub.s32 %v1412, %v1415
          %vm1417 = vcmp.lt.s32.totalorder %v1416, 0
          %v1418 = vsub.s32 0, %v1416
          %v1419 = vsel %vm1417, %v1418, %v1416
          %v1420 = vclz %v1419
          %v1421 = vsub.s32 %v1420, 2
          %vm1422 = vcmp.gt.s32.totalorder 0, %v1421
          %v1423 = vsel %vm1422, 0, %v1421
          %v1424 = vsub.s32 32, %v1423
          %v1425 = vshll.u32 %v1416, %v1423
          %v1426 = vshrl.u32 %v1408, %v1424
          %v1427 = vor.u32 %v1425, %v1426
          %v1428 = vsub.s32 4294967266, %v1423
          %v1429 = vadd.s32 %v1428, 127
          %v1430 = vshll.u32 %v1429, 23
          %v1431 = vor.u32 4788187, %v1430
          %v1432 = vand.u32 2147483647, %v1431
          %v1434 = vcvt.s32.f32 %v1427
          %v1435 = vmul.f32 %v1434, %v1432
          %v1436 = vxor.u32 %v1435, 2147483648
          %v1437 = vsel %vm1354, %v1436, %v1435
          %v1438 = vsub.s32 4, %v1414
          %v1439 = vsel %vm1354, %v1438, %v1414
          %v1440 = vsel %vm1353, %v300, %v1437
          %v1441 = vsel %vm1353, 0, %v1439
          %v1442 = vcosq.f32.pop %v1440
          %v1443 = vsinq.f32.pop %v1440
          %vm1444 = vweird.f32 %v300
          %v1445 = vand.u32 %v1441, 3
          %vm1446 = vcmp.lt.s32.totalorder %v1445, 2
          %vm1447 = vcmp.eq.s32.totalorder %v1445, 0
          %v1448 = vxor.u32 %v1443, 2147483648
          %v1449 = vsel %vm1447, %v1442, %v1448
          %vm1450 = vcmp.eq.s32.totalorder %v1445, 2
          %v1451 = vxor.u32 %v1442, 2147483648
          %v1452 = vsel %vm1450, %v1451, %v1443
          %v1453 = vsel %vm1446, %v1449, %v1452
          %v1454 = vsel %vm1444, nan, %v1453
          %v1455 = vand.u32 2147483647, %v301
          %vm1456 = vcmp.le.f32.partialorder %v1455, 0.7853982
          %vm1457 = vcmp.lt.s32.totalorder %v301, 0
          %v1458 = vand.u32 %v301, 2139095040
          %v1459 = vshrl.u32 %v1458, 23
          %v1460 = vsub.s32 %v1459, 127
          %v1461 = vand.u32 2147483647, %v301
          %v1462 = vand.u32 %v1461, 8388607
          %v1463 = vor.u32 %v1462, 8388608
          %v1464 = vsub.s32 0, %v1463
          %v1465 = vadd.s32 %v1460, 1
          %vm1466 = vcmp.gt.s32.totalorder %v1465, 0
          %v1467 = vsel %vm1466, %v1465, 0
          %v1468 = vshrl.u32 %v1467, 5
          %v1469 = vand.u32 %v1467, 31
          %v1470 = vsub.s32 32, %v1469
          %v1471 = vshrl.u32 683565275, %v1470
          %v1472 = vshll.u32 683565275, %v1469
          %v1473 = vshrl.u32 2475754826, %v1470
          %v1474 = vor.u32 %v1472, %v1473
          %v1475 = vshll.u32 2475754826, %v1469
          %v1476 = vshrl.u32 2131351028, %v1470
          %v1477 = vor.u32 %v1475, %v1476
          %v1478 = vshll.u32 2131351028, %v1469
          %v1479 = vshrl.u32 2102212464, %v1470
          %v1480 = vor.u32 %v1478, %v1479
          %v1481 = vshll.u32 2102212464, %v1469
          %v1482 = vshrl.u32 920167782, %v1470
          %v1483 = vor.u32 %v1481, %v1482
          %v1484 = vshll.u32 920167782, %v1469
          %v1485 = vshrl.u32 1326507024, %v1470
          %v1486 = vor.u32 %v1484, %v1485
          %vm1487 = vcmp.lt.s32.totalorder %v1468, 1
          %vm1488 = vcmp.lt.s32.totalorder %v1468, 2
          %vm1489 = vcmp.lt.s32.totalorder %v1468, 3
          %vm1490 = vcmp.lt.s32.totalorder %v1468, 4
          %v1491 = vsel %vm1487, %v1471, %v1474
          %v1492 = vsel %vm1490, %v1480, 2102212464
          %v1493 = vsel %vm1489, %v1477, %v1492
          %v1494 = vsel %vm1488, %v1491, %v1493
          %v1495 = vsel %vm1487, %v1474, %v1477
          %v1496 = vsel %vm1490, %v1483, 920167782
          %v1497 = vsel %vm1489, %v1480, %v1496
          %v1498 = vsel %vm1488, %v1495, %v1497
          %v1499 = vsel %vm1487, %v1477, %v1480
          %v1500 = vsel %vm1490, %v1486, 1326507024
          %v1501 = vsel %vm1489, %v1483, %v1500
          %v1502 = vsel %vm1488, %v1499, %v1501
          %v1503 = vshll.u32 %v1463, 8
          %v1504 = vmul.u32.u64.compose %v1503, %v1502
          %v1505 = vextract.low.u32 %v1504
          %v1506 = vextract.high.u32 %v1504
          %v1507 = vmul.u32.u64.compose %v1503, %v1498
          %v1508 = vextract.low.u32 %v1507
          %v1509 = vextract.high.u32 %v1507
          %v1510 = vmul.u32 %v1503, %v1494
          %v1511 = vadd.s32 %v1506, %v1508
          %vm1512 = vc.u32 %v1506, %v1508
          %v1513 = vadd.s32 %v1509, 1
          %v1514 = vsel %vm1512, %v1513, %v1509
          %v1515 = vadd.s32 %v1510, %v1514
          %v1516 = vadd.s32 %v1515, 536870912
          %v1517 = vshrl.u32 %v1516, 30
          %v1518 = vshll.u32 %v1517, 30
          %v1519 = vsub.s32 %v1515, %v1518
          %vm1520 = vcmp.lt.s32.totalorder %v1519, 0
          %v1521 = vsub.s32 0, %v1519
          %v1522 = vsel %vm1520, %v1521, %v1519
          %v1523 = vclz %v1522
          %v1524 = vsub.s32 %v1523, 2
          %vm1525 = vcmp.gt.s32.totalorder 0, %v1524
          %v1526 = vsel %vm1525, 0, %v1524
          %v1527 = vsub.s32 32, %v1526
          %v1528 = vshll.u32 %v1519, %v1526
          %v1529 = vshrl.u32 %v1511, %v1527
          %v1530 = vor.u32 %v1528, %v1529
          %v1531 = vsub.s32 4294967266, %v1526
          %v1532 = vadd.s32 %v1531, 127
          %v1533 = vshll.u32 %v1532, 23
          %v1534 = vor.u32 4788187, %v1533
          %v1535 = vand.u32 2147483647, %v1534
          %v1537 = vcvt.s32.f32 %v1530
          %v1538 = vmul.f32 %v1537, %v1535
          %v1539 = vxor.u32 %v1538, 2147483648
          %v1540 = vsel %vm1457, %v1539, %v1538
          %v1541 = vsub.s32 4, %v1517
          %v1542 = vsel %vm1457, %v1541, %v1517
          %v1543 = vsel %vm1456, %v301, %v1540
          %v1544 = vsel %vm1456, 0, %v1542
          %v1545 = vcosq.f32.pop %v1543
          %v1546 = vsinq.f32.pop %v1543
          %vm1547 = vweird.f32 %v301
          %v1548 = vand.u32 %v1544, 3
          %vm1549 = vcmp.lt.s32.totalorder %v1548, 2
          %vm1550 = vcmp.eq.s32.totalorder %v1548, 0
          %v1551 = vxor.u32 %v1546, 2147483648
          %v1552 = vsel %vm1550, %v1545, %v1551
          %vm1553 = vcmp.eq.s32.totalorder %v1548, 2
          %v1554 = vxor.u32 %v1545, 2147483648
          %v1555 = vsel %vm1553, %v1554, %v1546
          %v1556 = vsel %vm1549, %v1552, %v1555
          %v1557 = vsel %vm1547, nan, %v1556
          %v1558 = vand.u32 2147483647, %v302
          %vm1559 = vcmp.le.f32.partialorder %v1558, 0.7853982
          %vm1560 = vcmp.lt.s32.totalorder %v302, 0
          %v1561 = vand.u32 %v302, 2139095040
          %v1562 = vshrl.u32 %v1561, 23
          %v1563 = vsub.s32 %v1562, 127
          %v1564 = vand.u32 2147483647, %v302
          %v1565 = vand.u32 %v1564, 8388607
          %v1566 = vor.u32 %v1565, 8388608
          %v1567 = vsub.s32 0, %v1566
          %v1568 = vadd.s32 %v1563, 1
          %vm1569 = vcmp.gt.s32.totalorder %v1568, 0
          %v1570 = vsel %vm1569, %v1568, 0
          %v1571 = vshrl.u32 %v1570, 5
          %v1572 = vand.u32 %v1570, 31
          %v1573 = vsub.s32 32, %v1572
          %v1574 = vshrl.u32 683565275, %v1573
          %v1575 = vshll.u32 683565275, %v1572
          %v1576 = vshrl.u32 2475754826, %v1573
          %v1577 = vor.u32 %v1575, %v1576
          %v1578 = vshll.u32 2475754826, %v1572
          %v1579 = vshrl.u32 2131351028, %v1573
          %v1580 = vor.u32 %v1578, %v1579
          %v1581 = vshll.u32 2131351028, %v1572
          %v1582 = vshrl.u32 2102212464, %v1573
          %v1583 = vor.u32 %v1581, %v1582
          %v1584 = vshll.u32 2102212464, %v1572
          %v1585 = vshrl.u32 920167782, %v1573
          %v1586 = vor.u32 %v1584, %v1585
          %v1587 = vshll.u32 920167782, %v1572
          %v1588 = vshrl.u32 1326507024, %v1573
          %v1589 = vor.u32 %v1587, %v1588
          %vm1590 = vcmp.lt.s32.totalorder %v1571, 1
          %vm1591 = vcmp.lt.s32.totalorder %v1571, 2
          %vm1592 = vcmp.lt.s32.totalorder %v1571, 3
          %vm1593 = vcmp.lt.s32.totalorder %v1571, 4
          %v1594 = vsel %vm1590, %v1574, %v1577
          %v1595 = vsel %vm1593, %v1583, 2102212464
          %v1596 = vsel %vm1592, %v1580, %v1595
          %v1597 = vsel %vm1591, %v1594, %v1596
          %v1598 = vsel %vm1590, %v1577, %v1580
          %v1599 = vsel %vm1593, %v1586, 920167782
          %v1600 = vsel %vm1592, %v1583, %v1599
          %v1601 = vsel %vm1591, %v1598, %v1600
          %v1602 = vsel %vm1590, %v1580, %v1583
          %v1603 = vsel %vm1593, %v1589, 1326507024
          %v1604 = vsel %vm1592, %v1586, %v1603
          %v1605 = vsel %vm1591, %v1602, %v1604
          %v1606 = vshll.u32 %v1566, 8
          %v1607 = vmul.u32.u64.compose %v1606, %v1605
          %v1608 = vextract.low.u32 %v1607
          %v1609 = vextract.high.u32 %v1607
          %v1610 = vmul.u32.u64.compose %v1606, %v1601
          %v1611 = vextract.low.u32 %v1610
          %v1612 = vextract.high.u32 %v1610
          %v1613 = vmul.u32 %v1606, %v1597
          %v1614 = vadd.s32 %v1609, %v1611
          %vm1615 = vc.u32 %v1609, %v1611
          %v1616 = vadd.s32 %v1612, 1
          %v1617 = vsel %vm1615, %v1616, %v1612
          %v1618 = vadd.s32 %v1613, %v1617
          %v1619 = vadd.s32 %v1618, 536870912
          %v1620 = vshrl.u32 %v1619, 30
          %v1621 = vshll.u32 %v1620, 30
          %v1622 = vsub.s32 %v1618, %v1621
          %vm1623 = vcmp.lt.s32.totalorder %v1622, 0
          %v1624 = vsub.s32 0, %v1622
          %v1625 = vsel %vm1623, %v1624, %v1622
          %v1626 = vclz %v1625
          %v1627 = vsub.s32 %v1626, 2
          %vm1628 = vcmp.gt.s32.totalorder 0, %v1627
          %v1629 = vsel %vm1628, 0, %v1627
          %v1630 = vsub.s32 32, %v1629
          %v1631 = vshll.u32 %v1622, %v1629
          %v1632 = vshrl.u32 %v1614, %v1630
          %v1633 = vor.u32 %v1631, %v1632
          %v1634 = vsub.s32 4294967266, %v1629
          %v1635 = vadd.s32 %v1634, 127
          %v1636 = vshll.u32 %v1635, 23
          %v1637 = vor.u32 4788187, %v1636
          %v1638 = vand.u32 2147483647, %v1637
          %v1640 = vcvt.s32.f32 %v1633
          %v1641 = vmul.f32 %v1640, %v1638
          %v1642 = vxor.u32 %v1641, 2147483648
          %v1643 = vsel %vm1560, %v1642, %v1641
          %v1644 = vsub.s32 4, %v1620
          %v1645 = vsel %vm1560, %v1644, %v1620
          %v1646 = vsel %vm1559, %v302, %v1643
          %v1647 = vsel %vm1559, 0, %v1645
          %v1648 = vcosq.f32.pop %v1646
          %v1649 = vsinq.f32.pop %v1646
          %vm1650 = vweird.f32 %v302
          %v1651 = vand.u32 %v1647, 3
          %vm1652 = vcmp.lt.s32.totalorder %v1651, 2
          %vm1653 = vcmp.eq.s32.totalorder %v1651, 0
          %v1654 = vxor.u32 %v1649, 2147483648
          %v1655 = vsel %vm1653, %v1648, %v1654
          %vm1656 = vcmp.eq.s32.totalorder %v1651, 2
          %v1657 = vxor.u32 %v1648, 2147483648
          %v1658 = vsel %vm1656, %v1657, %v1649
          %v1659 = vsel %vm1652, %v1655, %v1658
          %v1660 = vsel %vm1650, nan, %v1659
          %v1661 = vand.u32 2147483647, %v303
          %vm1662 = vcmp.le.f32.partialorder %v1661, 0.7853982
          %vm1663 = vcmp.lt.s32.totalorder %v303, 0
          %v1664 = vand.u32 %v303, 2139095040
          %v1665 = vshrl.u32 %v1664, 23
          %v1666 = vsub.s32 %v1665, 127
          %v1667 = vand.u32 2147483647, %v303
          %v1668 = vand.u32 %v1667, 8388607
          %v1669 = vor.u32 %v1668, 8388608
          %v1670 = vsub.s32 0, %v1669
          %v1671 = vadd.s32 %v1666, 1
          %vm1672 = vcmp.gt.s32.totalorder %v1671, 0
          %v1673 = vsel %vm1672, %v1671, 0
          %v1674 = vshrl.u32 %v1673, 5
          %v1675 = vand.u32 %v1673, 31
          %v1676 = vsub.s32 32, %v1675
          %v1677 = vshrl.u32 683565275, %v1676
          %v1678 = vshll.u32 683565275, %v1675
          %v1679 = vshrl.u32 2475754826, %v1676
          %v1680 = vor.u32 %v1678, %v1679
          %v1681 = vshll.u32 2475754826, %v1675
          %v1682 = vshrl.u32 2131351028, %v1676
          %v1683 = vor.u32 %v1681, %v1682
          %v1684 = vshll.u32 2131351028, %v1675
          %v1685 = vshrl.u32 2102212464, %v1676
          %v1686 = vor.u32 %v1684, %v1685
          %v1687 = vshll.u32 2102212464, %v1675
          %v1688 = vshrl.u32 920167782, %v1676
          %v1689 = vor.u32 %v1687, %v1688
          %v1690 = vshll.u32 920167782, %v1675
          %v1691 = vshrl.u32 1326507024, %v1676
          %v1692 = vor.u32 %v1690, %v1691
          %vm1693 = vcmp.lt.s32.totalorder %v1674, 1
          %vm1694 = vcmp.lt.s32.totalorder %v1674, 2
          %vm1695 = vcmp.lt.s32.totalorder %v1674, 3
          %vm1696 = vcmp.lt.s32.totalorder %v1674, 4
          %v1697 = vsel %vm1693, %v1677, %v1680
          %v1698 = vsel %vm1696, %v1686, 2102212464
          %v1699 = vsel %vm1695, %v1683, %v1698
          %v1700 = vsel %vm1694, %v1697, %v1699
          %v1701 = vsel %vm1693, %v1680, %v1683
          %v1702 = vsel %vm1696, %v1689, 920167782
          %v1703 = vsel %vm1695, %v1686, %v1702
          %v1704 = vsel %vm1694, %v1701, %v1703
          %v1705 = vsel %vm1693, %v1683, %v1686
          %v1706 = vsel %vm1696, %v1692, 1326507024
          %v1707 = vsel %vm1695, %v1689, %v1706
          %v1708 = vsel %vm1694, %v1705, %v1707
          %v1709 = vshll.u32 %v1669, 8
          %v1710 = vmul.u32.u64.compose %v1709, %v1708
          %v1711 = vextract.low.u32 %v1710
          %v1712 = vextract.high.u32 %v1710
          %v1713 = vmul.u32.u64.compose %v1709, %v1704
          %v1714 = vextract.low.u32 %v1713
          %v1715 = vextract.high.u32 %v1713
          %v1716 = vmul.u32 %v1709, %v1700
          %v1717 = vadd.s32 %v1712, %v1714
          %vm1718 = vc.u32 %v1712, %v1714
          %v1719 = vadd.s32 %v1715, 1
          %v1720 = vsel %vm1718, %v1719, %v1715
          %v1721 = vadd.s32 %v1716, %v1720
          %v1722 = vadd.s32 %v1721, 536870912
          %v1723 = vshrl.u32 %v1722, 30
          %v1724 = vshll.u32 %v1723, 30
          %v1725 = vsub.s32 %v1721, %v1724
          %vm1726 = vcmp.lt.s32.totalorder %v1725, 0
          %v1727 = vsub.s32 0, %v1725
          %v1728 = vsel %vm1726, %v1727, %v1725
          %v1729 = vclz %v1728
          %v1730 = vsub.s32 %v1729, 2
          %vm1731 = vcmp.gt.s32.totalorder 0, %v1730
          %v1732 = vsel %vm1731, 0, %v1730
          %v1733 = vsub.s32 32, %v1732
          %v1734 = vshll.u32 %v1725, %v1732
          %v1735 = vshrl.u32 %v1717, %v1733
          %v1736 = vor.u32 %v1734, %v1735
          %v1737 = vsub.s32 4294967266, %v1732
          %v1738 = vadd.s32 %v1737, 127
          %v1739 = vshll.u32 %v1738, 23
          %v1740 = vor.u32 4788187, %v1739
          %v1741 = vand.u32 2147483647, %v1740
          %v1743 = vcvt.s32.f32 %v1736
          %v1744 = vmul.f32 %v1743, %v1741
          %v1745 = vxor.u32 %v1744, 2147483648
          %v1746 = vsel %vm1663, %v1745, %v1744
          %v1747 = vsub.s32 4, %v1723
          %v1748 = vsel %vm1663, %v1747, %v1723
          %v1749 = vsel %vm1662, %v303, %v1746
          %v1750 = vsel %vm1662, 0, %v1748
          %v1751 = vcosq.f32.pop %v1749
          %v1752 = vsinq.f32.pop %v1749
          %vm1753 = vweird.f32 %v303
          %v1754 = vand.u32 %v1750, 3
          %vm1755 = vcmp.lt.s32.totalorder %v1754, 2
          %vm1756 = vcmp.eq.s32.totalorder %v1754, 0
          %v1757 = vxor.u32 %v1752, 2147483648
          %v1758 = vsel %vm1756, %v1751, %v1757
          %vm1759 = vcmp.eq.s32.totalorder %v1754, 2
          %v1760 = vxor.u32 %v1751, 2147483648
          %v1761 = vsel %vm1759, %v1760, %v1752
          %v1762 = vsel %vm1755, %v1758, %v1761
          %v1763 = vsel %vm1753, nan, %v1762
          %v1764 = vand.u32 2147483647, %v304
          %vm1765 = vcmp.le.f32.partialorder %v1764, 0.7853982
          %vm1766 = vcmp.lt.s32.totalorder %v304, 0
          %v1767 = vand.u32 %v304, 2139095040
          %v1768 = vshrl.u32 %v1767, 23
          %v1769 = vsub.s32 %v1768, 127
          %v1770 = vand.u32 2147483647, %v304
          %v1771 = vand.u32 %v1770, 8388607
          %v1772 = vor.u32 %v1771, 8388608
          %v1773 = vsub.s32 0, %v1772
          %v1774 = vadd.s32 %v1769, 1
          %vm1775 = vcmp.gt.s32.totalorder %v1774, 0
          %v1776 = vsel %vm1775, %v1774, 0
          %v1777 = vshrl.u32 %v1776, 5
          %v1778 = vand.u32 %v1776, 31
          %v1779 = vsub.s32 32, %v1778
          %v1780 = vshrl.u32 683565275, %v1779
          %v1781 = vshll.u32 683565275, %v1778
          %v1782 = vshrl.u32 2475754826, %v1779
          %v1783 = vor.u32 %v1781, %v1782
          %v1784 = vshll.u32 2475754826, %v1778
          %v1785 = vshrl.u32 2131351028, %v1779
          %v1786 = vor.u32 %v1784, %v1785
          %v1787 = vshll.u32 2131351028, %v1778
          %v1788 = vshrl.u32 2102212464, %v1779
          %v1789 = vor.u32 %v1787, %v1788
          %v1790 = vshll.u32 2102212464, %v1778
          %v1791 = vshrl.u32 920167782, %v1779
          %v1792 = vor.u32 %v1790, %v1791
          %v1793 = vshll.u32 920167782, %v1778
          %v1794 = vshrl.u32 1326507024, %v1779
          %v1795 = vor.u32 %v1793, %v1794
          %vm1796 = vcmp.lt.s32.totalorder %v1777, 1
          %vm1797 = vcmp.lt.s32.totalorder %v1777, 2
          %vm1798 = vcmp.lt.s32.totalorder %v1777, 3
          %vm1799 = vcmp.lt.s32.totalorder %v1777, 4
          %v1800 = vsel %vm1796, %v1780, %v1783
          %v1801 = vsel %vm1799, %v1789, 2102212464
          %v1802 = vsel %vm1798, %v1786, %v1801
          %v1803 = vsel %vm1797, %v1800, %v1802
          %v1804 = vsel %vm1796, %v1783, %v1786
          %v1805 = vsel %vm1799, %v1792, 920167782
          %v1806 = vsel %vm1798, %v1789, %v1805
          %v1807 = vsel %vm1797, %v1804, %v1806
          %v1808 = vsel %vm1796, %v1786, %v1789
          %v1809 = vsel %vm1799, %v1795, 1326507024
          %v1810 = vsel %vm1798, %v1792, %v1809
          %v1811 = vsel %vm1797, %v1808, %v1810
          %v1812 = vshll.u32 %v1772, 8
          %v1813 = vmul.u32.u64.compose %v1812, %v1811
          %v1814 = vextract.low.u32 %v1813
          %v1815 = vextract.high.u32 %v1813
          %v1816 = vmul.u32.u64.compose %v1812, %v1807
          %v1817 = vextract.low.u32 %v1816
          %v1818 = vextract.high.u32 %v1816
          %v1819 = vmul.u32 %v1812, %v1803
          %v1820 = vadd.s32 %v1815, %v1817
          %vm1821 = vc.u32 %v1815, %v1817
          %v1822 = vadd.s32 %v1818, 1
          %v1823 = vsel %vm1821, %v1822, %v1818
          %v1824 = vadd.s32 %v1819, %v1823
          %v1825 = vadd.s32 %v1824, 536870912
          %v1826 = vshrl.u32 %v1825, 30
          %v1827 = vshll.u32 %v1826, 30
          %v1828 = vsub.s32 %v1824, %v1827
          %vm1829 = vcmp.lt.s32.totalorder %v1828, 0
          %v1830 = vsub.s32 0, %v1828
          %v1831 = vsel %vm1829, %v1830, %v1828
          %v1832 = vclz %v1831
          %v1833 = vsub.s32 %v1832, 2
          %vm1834 = vcmp.gt.s32.totalorder 0, %v1833
          %v1835 = vsel %vm1834, 0, %v1833
          %v1836 = vsub.s32 32, %v1835
          %v1837 = vshll.u32 %v1828, %v1835
          %v1838 = vshrl.u32 %v1820, %v1836
          %v1839 = vor.u32 %v1837, %v1838
          %v1840 = vsub.s32 4294967266, %v1835
          %v1841 = vadd.s32 %v1840, 127
          %v1842 = vshll.u32 %v1841, 23
          %v1843 = vor.u32 4788187, %v1842
          %v1844 = vand.u32 2147483647, %v1843
          %v1846 = vcvt.s32.f32 %v1839
          %v1847 = vmul.f32 %v1846, %v1844
          %v1848 = vxor.u32 %v1847, 2147483648
          %v1849 = vsel %vm1766, %v1848, %v1847
          %v1850 = vsub.s32 4, %v1826
          %v1851 = vsel %vm1766, %v1850, %v1826
          %v1852 = vsel %vm1765, %v304, %v1849
          %v1853 = vsel %vm1765, 0, %v1851
          %v1854 = vcosq.f32.pop %v1852
          %v1855 = vsinq.f32.pop %v1852
          %vm1856 = vweird.f32 %v304
          %v1857 = vand.u32 %v1853, 3
          %vm1858 = vcmp.lt.s32.totalorder %v1857, 2
          %vm1859 = vcmp.eq.s32.totalorder %v1857, 0
          %v1860 = vxor.u32 %v1855, 2147483648
          %v1861 = vsel %vm1859, %v1854, %v1860
          %vm1862 = vcmp.eq.s32.totalorder %v1857, 2
          %v1863 = vxor.u32 %v1854, 2147483648
          %v1864 = vsel %vm1862, %v1863, %v1855
          %v1865 = vsel %vm1858, %v1861, %v1864
          %v1866 = vsel %vm1856, nan, %v1865
          %v1867 = vand.u32 2147483647, %v305
          %vm1868 = vcmp.le.f32.partialorder %v1867, 0.7853982
          %vm1869 = vcmp.lt.s32.totalorder %v305, 0
          %v1870 = vand.u32 %v305, 2139095040
          %v1871 = vshrl.u32 %v1870, 23
          %v1872 = vsub.s32 %v1871, 127
          %v1873 = vand.u32 2147483647, %v305
          %v1874 = vand.u32 %v1873, 8388607
          %v1875 = vor.u32 %v1874, 8388608
          %v1876 = vsub.s32 0, %v1875
          %v1877 = vadd.s32 %v1872, 1
          %vm1878 = vcmp.gt.s32.totalorder %v1877, 0
          %v1879 = vsel %vm1878, %v1877, 0
          %v1880 = vshrl.u32 %v1879, 5
          %v1881 = vand.u32 %v1879, 31
          %v1882 = vsub.s32 32, %v1881
          %v1883 = vshrl.u32 683565275, %v1882
          %v1884 = vshll.u32 683565275, %v1881
          %v1885 = vshrl.u32 2475754826, %v1882
          %v1886 = vor.u32 %v1884, %v1885
          %v1887 = vshll.u32 2475754826, %v1881
          %v1888 = vshrl.u32 2131351028, %v1882
          %v1889 = vor.u32 %v1887, %v1888
          %v1890 = vshll.u32 2131351028, %v1881
          %v1891 = vshrl.u32 2102212464, %v1882
          %v1892 = vor.u32 %v1890, %v1891
          %v1893 = vshll.u32 2102212464, %v1881
          %v1894 = vshrl.u32 920167782, %v1882
          %v1895 = vor.u32 %v1893, %v1894
          %v1896 = vshll.u32 920167782, %v1881
          %v1897 = vshrl.u32 1326507024, %v1882
          %v1898 = vor.u32 %v1896, %v1897
          %vm1899 = vcmp.lt.s32.totalorder %v1880, 1
          %vm1900 = vcmp.lt.s32.totalorder %v1880, 2
          %vm1901 = vcmp.lt.s32.totalorder %v1880, 3
          %vm1902 = vcmp.lt.s32.totalorder %v1880, 4
          %v1903 = vsel %vm1899, %v1883, %v1886
          %v1904 = vsel %vm1902, %v1892, 2102212464
          %v1905 = vsel %vm1901, %v1889, %v1904
          %v1906 = vsel %vm1900, %v1903, %v1905
          %v1907 = vsel %vm1899, %v1886, %v1889
          %v1908 = vsel %vm1902, %v1895, 920167782
          %v1909 = vsel %vm1901, %v1892, %v1908
          %v1910 = vsel %vm1900, %v1907, %v1909
          %v1911 = vsel %vm1899, %v1889, %v1892
          %v1912 = vsel %vm1902, %v1898, 1326507024
          %v1913 = vsel %vm1901, %v1895, %v1912
          %v1914 = vsel %vm1900, %v1911, %v1913
          %v1915 = vshll.u32 %v1875, 8
          %v1916 = vmul.u32.u64.compose %v1915, %v1914
          %v1917 = vextract.low.u32 %v1916
          %v1918 = vextract.high.u32 %v1916
          %v1919 = vmul.u32.u64.compose %v1915, %v1910
          %v1920 = vextract.low.u32 %v1919
          %v1921 = vextract.high.u32 %v1919
          %v1922 = vmul.u32 %v1915, %v1906
          %v1923 = vadd.s32 %v1918, %v1920
          %vm1924 = vc.u32 %v1918, %v1920
          %v1925 = vadd.s32 %v1921, 1
          %v1926 = vsel %vm1924, %v1925, %v1921
          %v1927 = vadd.s32 %v1922, %v1926
          %v1928 = vadd.s32 %v1927, 536870912
          %v1929 = vshrl.u32 %v1928, 30
          %v1930 = vshll.u32 %v1929, 30
          %v1931 = vsub.s32 %v1927, %v1930
          %vm1932 = vcmp.lt.s32.totalorder %v1931, 0
          %v1933 = vsub.s32 0, %v1931
          %v1934 = vsel %vm1932, %v1933, %v1931
          %v1935 = vclz %v1934
          %v1936 = vsub.s32 %v1935, 2
          %vm1937 = vcmp.gt.s32.totalorder 0, %v1936
          %v1938 = vsel %vm1937, 0, %v1936
          %v1939 = vsub.s32 32, %v1938
          %v1940 = vshll.u32 %v1931, %v1938
          %v1941 = vshrl.u32 %v1923, %v1939
          %v1942 = vor.u32 %v1940, %v1941
          %v1943 = vsub.s32 4294967266, %v1938
          %v1944 = vadd.s32 %v1943, 127
          %v1945 = vshll.u32 %v1944, 23
          %v1946 = vor.u32 4788187, %v1945
          %v1947 = vand.u32 2147483647, %v1946
          %v1949 = vcvt.s32.f32 %v1942
          %v1950 = vmul.f32 %v1949, %v1947
          %v1951 = vxor.u32 %v1950, 2147483648
          %v1952 = vsel %vm1869, %v1951, %v1950
          %v1953 = vsub.s32 4, %v1929
          %v1954 = vsel %vm1869, %v1953, %v1929
          %v1955 = vsel %vm1868, %v305, %v1952
          %v1956 = vsel %vm1868, 0, %v1954
          %v1957 = vcosq.f32.pop %v1955
          %v1958 = vsinq.f32.pop %v1955
          %vm1959 = vweird.f32 %v305
          %v1960 = vand.u32 %v1956, 3
          %vm1961 = vcmp.lt.s32.totalorder %v1960, 2
          %vm1962 = vcmp.eq.s32.totalorder %v1960, 0
          %v1963 = vxor.u32 %v1958, 2147483648
          %v1964 = vsel %vm1962, %v1957, %v1963
          %vm1965 = vcmp.eq.s32.totalorder %v1960, 2
          %v1966 = vxor.u32 %v1957, 2147483648
          %v1967 = vsel %vm1965, %v1966, %v1958
          %v1968 = vsel %vm1961, %v1964, %v1967
          %v1969 = vsel %vm1959, nan, %v1968
          %v1970 = vand.u32 2147483647, %v306
          %vm1971 = vcmp.le.f32.partialorder %v1970, 0.7853982
          %vm1972 = vcmp.lt.s32.totalorder %v306, 0
          %v1973 = vand.u32 %v306, 2139095040
          %v1974 = vshrl.u32 %v1973, 23
          %v1975 = vsub.s32 %v1974, 127
          %v1976 = vand.u32 2147483647, %v306
          %v1977 = vand.u32 %v1976, 8388607
          %v1978 = vor.u32 %v1977, 8388608
          %v1979 = vsub.s32 0, %v1978
          %v1980 = vadd.s32 %v1975, 1
          %vm1981 = vcmp.gt.s32.totalorder %v1980, 0
          %v1982 = vsel %vm1981, %v1980, 0
          %v1983 = vshrl.u32 %v1982, 5
          %v1984 = vand.u32 %v1982, 31
          %v1985 = vsub.s32 32, %v1984
          %v1986 = vshrl.u32 683565275, %v1985
          %v1987 = vshll.u32 683565275, %v1984
          %v1988 = vshrl.u32 2475754826, %v1985
          %v1989 = vor.u32 %v1987, %v1988
          %v1990 = vshll.u32 2475754826, %v1984
          %v1991 = vshrl.u32 2131351028, %v1985
          %v1992 = vor.u32 %v1990, %v1991
          %v1993 = vshll.u32 2131351028, %v1984
          %v1994 = vshrl.u32 2102212464, %v1985
          %v1995 = vor.u32 %v1993, %v1994
          %v1996 = vshll.u32 2102212464, %v1984
          %v1997 = vshrl.u32 920167782, %v1985
          %v1998 = vor.u32 %v1996, %v1997
          %v1999 = vshll.u32 920167782, %v1984
          %v2000 = vshrl.u32 1326507024, %v1985
          %v2001 = vor.u32 %v1999, %v2000
          %vm2002 = vcmp.lt.s32.totalorder %v1983, 1
          %vm2003 = vcmp.lt.s32.totalorder %v1983, 2
          %vm2004 = vcmp.lt.s32.totalorder %v1983, 3
          %vm2005 = vcmp.lt.s32.totalorder %v1983, 4
          %v2006 = vsel %vm2002, %v1986, %v1989
          %v2007 = vsel %vm2005, %v1995, 2102212464
          %v2008 = vsel %vm2004, %v1992, %v2007
          %v2009 = vsel %vm2003, %v2006, %v2008
          %v2010 = vsel %vm2002, %v1989, %v1992
          %v2011 = vsel %vm2005, %v1998, 920167782
          %v2012 = vsel %vm2004, %v1995, %v2011
          %v2013 = vsel %vm2003, %v2010, %v2012
          %v2014 = vsel %vm2002, %v1992, %v1995
          %v2015 = vsel %vm2005, %v2001, 1326507024
          %v2016 = vsel %vm2004, %v1998, %v2015
          %v2017 = vsel %vm2003, %v2014, %v2016
          %v2018 = vshll.u32 %v1978, 8
          %v2019 = vmul.u32.u64.compose %v2018, %v2017
          %v2020 = vextract.low.u32 %v2019
          %v2021 = vextract.high.u32 %v2019
          %v2022 = vmul.u32.u64.compose %v2018, %v2013
          %v2023 = vextract.low.u32 %v2022
          %v2024 = vextract.high.u32 %v2022
          %v2025 = vmul.u32 %v2018, %v2009
          %v2026 = vadd.s32 %v2021, %v2023
          %vm2027 = vc.u32 %v2021, %v2023
          %v2028 = vadd.s32 %v2024, 1
          %v2029 = vsel %vm2027, %v2028, %v2024
          %v2030 = vadd.s32 %v2025, %v2029
          %v2031 = vadd.s32 %v2030, 536870912
          %v2032 = vshrl.u32 %v2031, 30
          %v2033 = vshll.u32 %v2032, 30
          %v2034 = vsub.s32 %v2030, %v2033
          %vm2035 = vcmp.lt.s32.totalorder %v2034, 0
          %v2036 = vsub.s32 0, %v2034
          %v2037 = vsel %vm2035, %v2036, %v2034
          %v2038 = vclz %v2037
          %v2039 = vsub.s32 %v2038, 2
          %vm2040 = vcmp.gt.s32.totalorder 0, %v2039
          %v2041 = vsel %vm2040, 0, %v2039
          %v2042 = vsub.s32 32, %v2041
          %v2043 = vshll.u32 %v2034, %v2041
          %v2044 = vshrl.u32 %v2026, %v2042
          %v2045 = vor.u32 %v2043, %v2044
          %v2046 = vsub.s32 4294967266, %v2041
          %v2047 = vadd.s32 %v2046, 127
          %v2048 = vshll.u32 %v2047, 23
          %v2049 = vor.u32 4788187, %v2048
          %v2050 = vand.u32 2147483647, %v2049
          %v2052 = vcvt.s32.f32 %v2045
          %v2053 = vmul.f32 %v2052, %v2050
          %v2054 = vxor.u32 %v2053, 2147483648
          %v2055 = vsel %vm1972, %v2054, %v2053
          %v2056 = vsub.s32 4, %v2032
          %v2057 = vsel %vm1972, %v2056, %v2032
          %v2058 = vsel %vm1971, %v306, %v2055
          %v2059 = vsel %vm1971, 0, %v2057
          %v2060 = vcosq.f32.pop %v2058
          %v2061 = vsinq.f32.pop %v2058
          %vm2062 = vweird.f32 %v306
          %v2063 = vand.u32 %v2059, 3
          %vm2064 = vcmp.lt.s32.totalorder %v2063, 2
          %vm2065 = vcmp.eq.s32.totalorder %v2063, 0
          %v2066 = vxor.u32 %v2061, 2147483648
          %v2067 = vsel %vm2065, %v2060, %v2066
          %vm2068 = vcmp.eq.s32.totalorder %v2063, 2
          %v2069 = vxor.u32 %v2060, 2147483648
          %v2070 = vsel %vm2068, %v2069, %v2061
          %v2071 = vsel %vm2064, %v2067, %v2070
          %v2072 = vsel %vm2062, nan, %v2071
          %v2073 = vand.u32 2147483647, %v307
          %vm2074 = vcmp.le.f32.partialorder %v2073, 0.7853982
          %vm2075 = vcmp.lt.s32.totalorder %v307, 0
          %v2076 = vand.u32 %v307, 2139095040
          %v2077 = vshrl.u32 %v2076, 23
          %v2078 = vsub.s32 %v2077, 127
          %v2079 = vand.u32 2147483647, %v307
          %v2080 = vand.u32 %v2079, 8388607
          %v2081 = vor.u32 %v2080, 8388608
          %v2082 = vsub.s32 0, %v2081
          %v2083 = vadd.s32 %v2078, 1
          %vm2084 = vcmp.gt.s32.totalorder %v2083, 0
          %v2085 = vsel %vm2084, %v2083, 0
          %v2086 = vshrl.u32 %v2085, 5
          %v2087 = vand.u32 %v2085, 31
          %v2088 = vsub.s32 32, %v2087
          %v2089 = vshrl.u32 683565275, %v2088
          %v2090 = vshll.u32 683565275, %v2087
          %v2091 = vshrl.u32 2475754826, %v2088
          %v2092 = vor.u32 %v2090, %v2091
          %v2093 = vshll.u32 2475754826, %v2087
          %v2094 = vshrl.u32 2131351028, %v2088
          %v2095 = vor.u32 %v2093, %v2094
          %v2096 = vshll.u32 2131351028, %v2087
          %v2097 = vshrl.u32 2102212464, %v2088
          %v2098 = vor.u32 %v2096, %v2097
          %v2099 = vshll.u32 2102212464, %v2087
          %v2100 = vshrl.u32 920167782, %v2088
          %v2101 = vor.u32 %v2099, %v2100
          %v2102 = vshll.u32 920167782, %v2087
          %v2103 = vshrl.u32 1326507024, %v2088
          %v2104 = vor.u32 %v2102, %v2103
          %vm2105 = vcmp.lt.s32.totalorder %v2086, 1
          %vm2106 = vcmp.lt.s32.totalorder %v2086, 2
          %vm2107 = vcmp.lt.s32.totalorder %v2086, 3
          %vm2108 = vcmp.lt.s32.totalorder %v2086, 4
          %v2109 = vsel %vm2105, %v2089, %v2092
          %v2110 = vsel %vm2108, %v2098, 2102212464
          %v2111 = vsel %vm2107, %v2095, %v2110
          %v2112 = vsel %vm2106, %v2109, %v2111
          %v2113 = vsel %vm2105, %v2092, %v2095
          %v2114 = vsel %vm2108, %v2101, 920167782
          %v2115 = vsel %vm2107, %v2098, %v2114
          %v2116 = vsel %vm2106, %v2113, %v2115
          %v2117 = vsel %vm2105, %v2095, %v2098
          %v2118 = vsel %vm2108, %v2104, 1326507024
          %v2119 = vsel %vm2107, %v2101, %v2118
          %v2120 = vsel %vm2106, %v2117, %v2119
          %v2121 = vshll.u32 %v2081, 8
          %v2122 = vmul.u32.u64.compose %v2121, %v2120
          %v2123 = vextract.low.u32 %v2122
          %v2124 = vextract.high.u32 %v2122
          %v2125 = vmul.u32.u64.compose %v2121, %v2116
          %v2126 = vextract.low.u32 %v2125
          %v2127 = vextract.high.u32 %v2125
          %v2128 = vmul.u32 %v2121, %v2112
          %v2129 = vadd.s32 %v2124, %v2126
          %vm2130 = vc.u32 %v2124, %v2126
          %v2131 = vadd.s32 %v2127, 1
          %v2132 = vsel %vm2130, %v2131, %v2127
          %v2133 = vadd.s32 %v2128, %v2132
          %v2134 = vadd.s32 %v2133, 536870912
          %v2135 = vshrl.u32 %v2134, 30
          %v2136 = vshll.u32 %v2135, 30
          %v2137 = vsub.s32 %v2133, %v2136
          %vm2138 = vcmp.lt.s32.totalorder %v2137, 0
          %v2139 = vsub.s32 0, %v2137
          %v2140 = vsel %vm2138, %v2139, %v2137
          %v2141 = vclz %v2140
          %v2142 = vsub.s32 %v2141, 2
          %vm2143 = vcmp.gt.s32.totalorder 0, %v2142
          %v2144 = vsel %vm2143, 0, %v2142
          %v2145 = vsub.s32 32, %v2144
          %v2146 = vshll.u32 %v2137, %v2144
          %v2147 = vshrl.u32 %v2129, %v2145
          %v2148 = vor.u32 %v2146, %v2147
          %v2149 = vsub.s32 4294967266, %v2144
          %v2150 = vadd.s32 %v2149, 127
          %v2151 = vshll.u32 %v2150, 23
          %v2152 = vor.u32 4788187, %v2151
          %v2153 = vand.u32 2147483647, %v2152
          %v2155 = vcvt.s32.f32 %v2148
          %v2156 = vmul.f32 %v2155, %v2153
          %v2157 = vxor.u32 %v2156, 2147483648
          %v2158 = vsel %vm2075, %v2157, %v2156
          %v2159 = vsub.s32 4, %v2135
          %v2160 = vsel %vm2075, %v2159, %v2135
          %v2161 = vsel %vm2074, %v307, %v2158
          %v2162 = vsel %vm2074, 0, %v2160
          %v2163 = vcosq.f32.pop %v2161
          %v2164 = vsinq.f32.pop %v2161
          %vm2165 = vweird.f32 %v307
          %v2166 = vand.u32 %v2162, 3
          %vm2167 = vcmp.lt.s32.totalorder %v2166, 2
          %vm2168 = vcmp.eq.s32.totalorder %v2166, 0
          %v2169 = vxor.u32 %v2164, 2147483648
          %v2170 = vsel %vm2168, %v2163, %v2169
          %vm2171 = vcmp.eq.s32.totalorder %v2166, 2
          %v2172 = vxor.u32 %v2163, 2147483648
          %v2173 = vsel %vm2171, %v2172, %v2164
          %v2174 = vsel %vm2167, %v2170, %v2173
          %v2175 = vsel %vm2165, nan, %v2174
          %v2176 = vand.u32 2147483647, %v308
          %vm2177 = vcmp.le.f32.partialorder %v2176, 0.7853982
          %vm2178 = vcmp.lt.s32.totalorder %v308, 0
          %v2179 = vand.u32 %v308, 2139095040
          %v2180 = vshrl.u32 %v2179, 23
          %v2181 = vsub.s32 %v2180, 127
          %v2182 = vand.u32 2147483647, %v308
          %v2183 = vand.u32 %v2182, 8388607
          %v2184 = vor.u32 %v2183, 8388608
          %v2185 = vsub.s32 0, %v2184
          %v2186 = vadd.s32 %v2181, 1
          %vm2187 = vcmp.gt.s32.totalorder %v2186, 0
          %v2188 = vsel %vm2187, %v2186, 0
          %v2189 = vshrl.u32 %v2188, 5
          %v2190 = vand.u32 %v2188, 31
          %v2191 = vsub.s32 32, %v2190
          %v2192 = vshrl.u32 683565275, %v2191
          %v2193 = vshll.u32 683565275, %v2190
          %v2194 = vshrl.u32 2475754826, %v2191
          %v2195 = vor.u32 %v2193, %v2194
          %v2196 = vshll.u32 2475754826, %v2190
          %v2197 = vshrl.u32 2131351028, %v2191
          %v2198 = vor.u32 %v2196, %v2197
          %v2199 = vshll.u32 2131351028, %v2190
          %v2200 = vshrl.u32 2102212464, %v2191
          %v2201 = vor.u32 %v2199, %v2200
          %v2202 = vshll.u32 2102212464, %v2190
          %v2203 = vshrl.u32 920167782, %v2191
          %v2204 = vor.u32 %v2202, %v2203
          %v2205 = vshll.u32 920167782, %v2190
          %v2206 = vshrl.u32 1326507024, %v2191
          %v2207 = vor.u32 %v2205, %v2206
          %vm2208 = vcmp.lt.s32.totalorder %v2189, 1
          %vm2209 = vcmp.lt.s32.totalorder %v2189, 2
          %vm2210 = vcmp.lt.s32.totalorder %v2189, 3
          %vm2211 = vcmp.lt.s32.totalorder %v2189, 4
          %v2212 = vsel %vm2208, %v2192, %v2195
          %v2213 = vsel %vm2211, %v2201, 2102212464
          %v2214 = vsel %vm2210, %v2198, %v2213
          %v2215 = vsel %vm2209, %v2212, %v2214
          %v2216 = vsel %vm2208, %v2195, %v2198
          %v2217 = vsel %vm2211, %v2204, 920167782
          %v2218 = vsel %vm2210, %v2201, %v2217
          %v2219 = vsel %vm2209, %v2216, %v2218
          %v2220 = vsel %vm2208, %v2198, %v2201
          %v2221 = vsel %vm2211, %v2207, 1326507024
          %v2222 = vsel %vm2210, %v2204, %v2221
          %v2223 = vsel %vm2209, %v2220, %v2222
          %v2224 = vshll.u32 %v2184, 8
          %v2225 = vmul.u32.u64.compose %v2224, %v2223
          %v2226 = vextract.low.u32 %v2225
          %v2227 = vextract.high.u32 %v2225
          %v2228 = vmul.u32.u64.compose %v2224, %v2219
          %v2229 = vextract.low.u32 %v2228
          %v2230 = vextract.high.u32 %v2228
          %v2231 = vmul.u32 %v2224, %v2215
          %v2232 = vadd.s32 %v2227, %v2229
          %vm2233 = vc.u32 %v2227, %v2229
          %v2234 = vadd.s32 %v2230, 1
          %v2235 = vsel %vm2233, %v2234, %v2230
          %v2236 = vadd.s32 %v2231, %v2235
          %v2237 = vadd.s32 %v2236, 536870912
          %v2238 = vshrl.u32 %v2237, 30
          %v2239 = vshll.u32 %v2238, 30
          %v2240 = vsub.s32 %v2236, %v2239
          %vm2241 = vcmp.lt.s32.totalorder %v2240, 0
          %v2242 = vsub.s32 0, %v2240
          %v2243 = vsel %vm2241, %v2242, %v2240
          %v2244 = vclz %v2243
          %v2245 = vsub.s32 %v2244, 2
          %vm2246 = vcmp.gt.s32.totalorder 0, %v2245
          %v2247 = vsel %vm2246, 0, %v2245
          %v2248 = vsub.s32 32, %v2247
          %v2249 = vshll.u32 %v2240, %v2247
          %v2250 = vshrl.u32 %v2232, %v2248
          %v2251 = vor.u32 %v2249, %v2250
          %v2252 = vsub.s32 4294967266, %v2247
          %v2253 = vadd.s32 %v2252, 127
          %v2254 = vshll.u32 %v2253, 23
          %v2255 = vor.u32 4788187, %v2254
          %v2256 = vand.u32 2147483647, %v2255
          %v2258 = vcvt.s32.f32 %v2251
          %v2259 = vmul.f32 %v2258, %v2256
          %v2260 = vxor.u32 %v2259, 2147483648
          %v2261 = vsel %vm2178, %v2260, %v2259
          %v2262 = vsub.s32 4, %v2238
          %v2263 = vsel %vm2178, %v2262, %v2238
          %v2264 = vsel %vm2177, %v308, %v2261
          %v2265 = vsel %vm2177, 0, %v2263
          %v2266 = vcosq.f32.pop %v2264
          %v2267 = vsinq.f32.pop %v2264
          %vm2268 = vweird.f32 %v308
          %v2269 = vand.u32 %v2265, 3
          %vm2270 = vcmp.lt.s32.totalorder %v2269, 2
          %vm2271 = vcmp.eq.s32.totalorder %v2269, 0
          %v2272 = vxor.u32 %v2267, 2147483648
          %v2273 = vsel %vm2271, %v2266, %v2272
          %vm2274 = vcmp.eq.s32.totalorder %v2269, 2
          %v2275 = vxor.u32 %v2266, 2147483648
          %v2276 = vsel %vm2274, %v2275, %v2267
          %v2277 = vsel %vm2270, %v2273, %v2276
          %v2278 = vsel %vm2268, nan, %v2277
          %v2279 = vand.u32 2147483647, %v309
          %vm2280 = vcmp.le.f32.partialorder %v2279, 0.7853982
          %vm2281 = vcmp.lt.s32.totalorder %v309, 0
          %v2282 = vand.u32 %v309, 2139095040
          %v2283 = vshrl.u32 %v2282, 23
          %v2284 = vsub.s32 %v2283, 127
          %v2285 = vand.u32 2147483647, %v309
          %v2286 = vand.u32 %v2285, 8388607
          %v2287 = vor.u32 %v2286, 8388608
          %v2288 = vsub.s32 0, %v2287
          %v2289 = vadd.s32 %v2284, 1
          %vm2290 = vcmp.gt.s32.totalorder %v2289, 0
          %v2291 = vsel %vm2290, %v2289, 0
          %v2292 = vshrl.u32 %v2291, 5
          %v2293 = vand.u32 %v2291, 31
          %v2294 = vsub.s32 32, %v2293
          %v2295 = vshrl.u32 683565275, %v2294
          %v2296 = vshll.u32 683565275, %v2293
          %v2297 = vshrl.u32 2475754826, %v2294
          %v2298 = vor.u32 %v2296, %v2297
          %v2299 = vshll.u32 2475754826, %v2293
          %v2300 = vshrl.u32 2131351028, %v2294
          %v2301 = vor.u32 %v2299, %v2300
          %v2302 = vshll.u32 2131351028, %v2293
          %v2303 = vshrl.u32 2102212464, %v2294
          %v2304 = vor.u32 %v2302, %v2303
          %v2305 = vshll.u32 2102212464, %v2293
          %v2306 = vshrl.u32 920167782, %v2294
          %v2307 = vor.u32 %v2305, %v2306
          %v2308 = vshll.u32 920167782, %v2293
          %v2309 = vshrl.u32 1326507024, %v2294
          %v2310 = vor.u32 %v2308, %v2309
          %vm2311 = vcmp.lt.s32.totalorder %v2292, 1
          %vm2312 = vcmp.lt.s32.totalorder %v2292, 2
          %vm2313 = vcmp.lt.s32.totalorder %v2292, 3
          %vm2314 = vcmp.lt.s32.totalorder %v2292, 4
          %v2315 = vsel %vm2311, %v2295, %v2298
          %v2316 = vsel %vm2314, %v2304, 2102212464
          %v2317 = vsel %vm2313, %v2301, %v2316
          %v2318 = vsel %vm2312, %v2315, %v2317
          %v2319 = vsel %vm2311, %v2298, %v2301
          %v2320 = vsel %vm2314, %v2307, 920167782
          %v2321 = vsel %vm2313, %v2304, %v2320
          %v2322 = vsel %vm2312, %v2319, %v2321
          %v2323 = vsel %vm2311, %v2301, %v2304
          %v2324 = vsel %vm2314, %v2310, 1326507024
          %v2325 = vsel %vm2313, %v2307, %v2324
          %v2326 = vsel %vm2312, %v2323, %v2325
          %v2327 = vshll.u32 %v2287, 8
          %v2328 = vmul.u32.u64.compose %v2327, %v2326
          %v2329 = vextract.low.u32 %v2328
          %v2330 = vextract.high.u32 %v2328
          %v2331 = vmul.u32.u64.compose %v2327, %v2322
          %v2332 = vextract.low.u32 %v2331
          %v2333 = vextract.high.u32 %v2331
          %v2334 = vmul.u32 %v2327, %v2318
          %v2335 = vadd.s32 %v2330, %v2332
          %vm2336 = vc.u32 %v2330, %v2332
          %v2337 = vadd.s32 %v2333, 1
          %v2338 = vsel %vm2336, %v2337, %v2333
          %v2339 = vadd.s32 %v2334, %v2338
          %v2340 = vadd.s32 %v2339, 536870912
          %v2341 = vshrl.u32 %v2340, 30
          %v2342 = vshll.u32 %v2341, 30
          %v2343 = vsub.s32 %v2339, %v2342
          %vm2344 = vcmp.lt.s32.totalorder %v2343, 0
          %v2345 = vsub.s32 0, %v2343
          %v2346 = vsel %vm2344, %v2345, %v2343
          %v2347 = vclz %v2346
          %v2348 = vsub.s32 %v2347, 2
          %vm2349 = vcmp.gt.s32.totalorder 0, %v2348
          %v2350 = vsel %vm2349, 0, %v2348
          %v2351 = vsub.s32 32, %v2350
          %v2352 = vshll.u32 %v2343, %v2350
          %v2353 = vshrl.u32 %v2335, %v2351
          %v2354 = vor.u32 %v2352, %v2353
          %v2355 = vsub.s32 4294967266, %v2350
          %v2356 = vadd.s32 %v2355, 127
          %v2357 = vshll.u32 %v2356, 23
          %v2358 = vor.u32 4788187, %v2357
          %v2359 = vand.u32 2147483647, %v2358
          %v2361 = vcvt.s32.f32 %v2354
          %v2362 = vmul.f32 %v2361, %v2359
          %v2363 = vxor.u32 %v2362, 2147483648
          %v2364 = vsel %vm2281, %v2363, %v2362
          %v2365 = vsub.s32 4, %v2341
          %v2366 = vsel %vm2281, %v2365, %v2341
          %v2367 = vsel %vm2280, %v309, %v2364
          %v2368 = vsel %vm2280, 0, %v2366
          %v2369 = vcosq.f32.pop %v2367
          %v2370 = vsinq.f32.pop %v2367
          %vm2371 = vweird.f32 %v309
          %v2372 = vand.u32 %v2368, 3
          %vm2373 = vcmp.lt.s32.totalorder %v2372, 2
          %vm2374 = vcmp.eq.s32.totalorder %v2372, 0
          %v2375 = vxor.u32 %v2370, 2147483648
          %v2376 = vsel %vm2374, %v2369, %v2375
          %vm2377 = vcmp.eq.s32.totalorder %v2372, 2
          %v2378 = vxor.u32 %v2369, 2147483648
          %v2379 = vsel %vm2377, %v2378, %v2370
          %v2380 = vsel %vm2373, %v2376, %v2379
          %v2381 = vsel %vm2371, nan, %v2380
          %v2382 = vand.u32 2147483647, %v310
          %vm2383 = vcmp.le.f32.partialorder %v2382, 0.7853982
          %vm2384 = vcmp.lt.s32.totalorder %v310, 0
          %v2385 = vand.u32 %v310, 2139095040
          %v2386 = vshrl.u32 %v2385, 23
          %v2387 = vsub.s32 %v2386, 127
          %v2388 = vand.u32 2147483647, %v310
          %v2389 = vand.u32 %v2388, 8388607
          %v2390 = vor.u32 %v2389, 8388608
          %v2391 = vsub.s32 0, %v2390
          %v2392 = vadd.s32 %v2387, 1
          %vm2393 = vcmp.gt.s32.totalorder %v2392, 0
          %v2394 = vsel %vm2393, %v2392, 0
          %v2395 = vshrl.u32 %v2394, 5
          %v2396 = vand.u32 %v2394, 31
          %v2397 = vsub.s32 32, %v2396
          %v2398 = vshrl.u32 683565275, %v2397
          %v2399 = vshll.u32 683565275, %v2396
          %v2400 = vshrl.u32 2475754826, %v2397
          %v2401 = vor.u32 %v2399, %v2400
          %v2402 = vshll.u32 2475754826, %v2396
          %v2403 = vshrl.u32 2131351028, %v2397
          %v2404 = vor.u32 %v2402, %v2403
          %v2405 = vshll.u32 2131351028, %v2396
          %v2406 = vshrl.u32 2102212464, %v2397
          %v2407 = vor.u32 %v2405, %v2406
          %v2408 = vshll.u32 2102212464, %v2396
          %v2409 = vshrl.u32 920167782, %v2397
          %v2410 = vor.u32 %v2408, %v2409
          %v2411 = vshll.u32 920167782, %v2396
          %v2412 = vshrl.u32 1326507024, %v2397
          %v2413 = vor.u32 %v2411, %v2412
          %vm2414 = vcmp.lt.s32.totalorder %v2395, 1
          %vm2415 = vcmp.lt.s32.totalorder %v2395, 2
          %vm2416 = vcmp.lt.s32.totalorder %v2395, 3
          %vm2417 = vcmp.lt.s32.totalorder %v2395, 4
          %v2418 = vsel %vm2414, %v2398, %v2401
          %v2419 = vsel %vm2417, %v2407, 2102212464
          %v2420 = vsel %vm2416, %v2404, %v2419
          %v2421 = vsel %vm2415, %v2418, %v2420
          %v2422 = vsel %vm2414, %v2401, %v2404
          %v2423 = vsel %vm2417, %v2410, 920167782
          %v2424 = vsel %vm2416, %v2407, %v2423
          %v2425 = vsel %vm2415, %v2422, %v2424
          %v2426 = vsel %vm2414, %v2404, %v2407
          %v2427 = vsel %vm2417, %v2413, 1326507024
          %v2428 = vsel %vm2416, %v2410, %v2427
          %v2429 = vsel %vm2415, %v2426, %v2428
          %v2430 = vshll.u32 %v2390, 8
          %v2431 = vmul.u32.u64.compose %v2430, %v2429
          %v2432 = vextract.low.u32 %v2431
          %v2433 = vextract.high.u32 %v2431
          %v2434 = vmul.u32.u64.compose %v2430, %v2425
          %v2435 = vextract.low.u32 %v2434
          %v2436 = vextract.high.u32 %v2434
          %v2437 = vmul.u32 %v2430, %v2421
          %v2438 = vadd.s32 %v2433, %v2435
          %vm2439 = vc.u32 %v2433, %v2435
          %v2440 = vadd.s32 %v2436, 1
          %v2441 = vsel %vm2439, %v2440, %v2436
          %v2442 = vadd.s32 %v2437, %v2441
          %v2443 = vadd.s32 %v2442, 536870912
          %v2444 = vshrl.u32 %v2443, 30
          %v2445 = vshll.u32 %v2444, 30
          %v2446 = vsub.s32 %v2442, %v2445
          %vm2447 = vcmp.lt.s32.totalorder %v2446, 0
          %v2448 = vsub.s32 0, %v2446
          %v2449 = vsel %vm2447, %v2448, %v2446
          %v2450 = vclz %v2449
          %v2451 = vsub.s32 %v2450, 2
          %vm2452 = vcmp.gt.s32.totalorder 0, %v2451
          %v2453 = vsel %vm2452, 0, %v2451
          %v2454 = vsub.s32 32, %v2453
          %v2455 = vshll.u32 %v2446, %v2453
          %v2456 = vshrl.u32 %v2438, %v2454
          %v2457 = vor.u32 %v2455, %v2456
          %v2458 = vsub.s32 4294967266, %v2453
          %v2459 = vadd.s32 %v2458, 127
          %v2460 = vshll.u32 %v2459, 23
          %v2461 = vor.u32 4788187, %v2460
          %v2462 = vand.u32 2147483647, %v2461
          %v2464 = vcvt.s32.f32 %v2457
          %v2465 = vmul.f32 %v2464, %v2462
          %v2466 = vxor.u32 %v2465, 2147483648
          %v2467 = vsel %vm2384, %v2466, %v2465
          %v2468 = vsub.s32 4, %v2444
          %v2469 = vsel %vm2384, %v2468, %v2444
          %v2470 = vsel %vm2383, %v310, %v2467
          %v2471 = vsel %vm2383, 0, %v2469
          %v2472 = vcosq.f32.pop %v2470
          %v2473 = vsinq.f32.pop %v2470
          %vm2474 = vweird.f32 %v310
          %v2475 = vand.u32 %v2471, 3
          %vm2476 = vcmp.lt.s32.totalorder %v2475, 2
          %vm2477 = vcmp.eq.s32.totalorder %v2475, 0
          %v2478 = vxor.u32 %v2473, 2147483648
          %v2479 = vsel %vm2477, %v2472, %v2478
          %vm2480 = vcmp.eq.s32.totalorder %v2475, 2
          %v2481 = vxor.u32 %v2472, 2147483648
          %v2482 = vsel %vm2480, %v2481, %v2473
          %v2483 = vsel %vm2476, %v2479, %v2482
          %v2484 = vsel %vm2474, nan, %v2483
          %v2485 = vand.u32 2147483647, %v311
          %vm2486 = vcmp.le.f32.partialorder %v2485, 0.7853982
          %vm2487 = vcmp.lt.s32.totalorder %v311, 0
          %v2488 = vand.u32 %v311, 2139095040
          %v2489 = vshrl.u32 %v2488, 23
          %v2490 = vsub.s32 %v2489, 127
          %v2491 = vand.u32 2147483647, %v311
          %v2492 = vand.u32 %v2491, 8388607
          %v2493 = vor.u32 %v2492, 8388608
          %v2494 = vsub.s32 0, %v2493
          %v2495 = vadd.s32 %v2490, 1
          %vm2496 = vcmp.gt.s32.totalorder %v2495, 0
          %v2497 = vsel %vm2496, %v2495, 0
          %v2498 = vshrl.u32 %v2497, 5
          %v2499 = vand.u32 %v2497, 31
          %v2500 = vsub.s32 32, %v2499
          %v2501 = vshrl.u32 683565275, %v2500
          %v2502 = vshll.u32 683565275, %v2499
          %v2503 = vshrl.u32 2475754826, %v2500
          %v2504 = vor.u32 %v2502, %v2503
          %v2505 = vshll.u32 2475754826, %v2499
          %v2506 = vshrl.u32 2131351028, %v2500
          %v2507 = vor.u32 %v2505, %v2506
          %v2508 = vshll.u32 2131351028, %v2499
          %v2509 = vshrl.u32 2102212464, %v2500
          %v2510 = vor.u32 %v2508, %v2509
          %v2511 = vshll.u32 2102212464, %v2499
          %v2512 = vshrl.u32 920167782, %v2500
          %v2513 = vor.u32 %v2511, %v2512
          %v2514 = vshll.u32 920167782, %v2499
          %v2515 = vshrl.u32 1326507024, %v2500
          %v2516 = vor.u32 %v2514, %v2515
          %vm2517 = vcmp.lt.s32.totalorder %v2498, 1
          %vm2518 = vcmp.lt.s32.totalorder %v2498, 2
          %vm2519 = vcmp.lt.s32.totalorder %v2498, 3
          %vm2520 = vcmp.lt.s32.totalorder %v2498, 4
          %v2521 = vsel %vm2517, %v2501, %v2504
          %v2522 = vsel %vm2520, %v2510, 2102212464
          %v2523 = vsel %vm2519, %v2507, %v2522
          %v2524 = vsel %vm2518, %v2521, %v2523
          %v2525 = vsel %vm2517, %v2504, %v2507
          %v2526 = vsel %vm2520, %v2513, 920167782
          %v2527 = vsel %vm2519, %v2510, %v2526
          %v2528 = vsel %vm2518, %v2525, %v2527
          %v2529 = vsel %vm2517, %v2507, %v2510
          %v2530 = vsel %vm2520, %v2516, 1326507024
          %v2531 = vsel %vm2519, %v2513, %v2530
          %v2532 = vsel %vm2518, %v2529, %v2531
          %v2533 = vshll.u32 %v2493, 8
          %v2534 = vmul.u32.u64.compose %v2533, %v2532
          %v2535 = vextract.low.u32 %v2534
          %v2536 = vextract.high.u32 %v2534
          %v2537 = vmul.u32.u64.compose %v2533, %v2528
          %v2538 = vextract.low.u32 %v2537
          %v2539 = vextract.high.u32 %v2537
          %v2540 = vmul.u32 %v2533, %v2524
          %v2541 = vadd.s32 %v2536, %v2538
          %vm2542 = vc.u32 %v2536, %v2538
          %v2543 = vadd.s32 %v2539, 1
          %v2544 = vsel %vm2542, %v2543, %v2539
          %v2545 = vadd.s32 %v2540, %v2544
          %v2546 = vadd.s32 %v2545, 536870912
          %v2547 = vshrl.u32 %v2546, 30
          %v2548 = vshll.u32 %v2547, 30
          %v2549 = vsub.s32 %v2545, %v2548
          %vm2550 = vcmp.lt.s32.totalorder %v2549, 0
          %v2551 = vsub.s32 0, %v2549
          %v2552 = vsel %vm2550, %v2551, %v2549
          %v2553 = vclz %v2552
          %v2554 = vsub.s32 %v2553, 2
          %vm2555 = vcmp.gt.s32.totalorder 0, %v2554
          %v2556 = vsel %vm2555, 0, %v2554
          %v2557 = vsub.s32 32, %v2556
          %v2558 = vshll.u32 %v2549, %v2556
          %v2559 = vshrl.u32 %v2541, %v2557
          %v2560 = vor.u32 %v2558, %v2559
          %v2561 = vsub.s32 4294967266, %v2556
          %v2562 = vadd.s32 %v2561, 127
          %v2563 = vshll.u32 %v2562, 23
          %v2564 = vor.u32 4788187, %v2563
          %v2565 = vand.u32 2147483647, %v2564
          %v2567 = vcvt.s32.f32 %v2560
          %v2568 = vmul.f32 %v2567, %v2565
          %v2569 = vxor.u32 %v2568, 2147483648
          %v2570 = vsel %vm2487, %v2569, %v2568
          %v2571 = vsub.s32 4, %v2547
          %v2572 = vsel %vm2487, %v2571, %v2547
          %v2573 = vsel %vm2486, %v311, %v2570
          %v2574 = vsel %vm2486, 0, %v2572
          %v2575 = vcosq.f32.pop %v2573
          %v2576 = vsinq.f32.pop %v2573
          %vm2577 = vweird.f32 %v311
          %v2578 = vand.u32 %v2574, 3
          %vm2579 = vcmp.lt.s32.totalorder %v2578, 2
          %vm2580 = vcmp.eq.s32.totalorder %v2578, 0
          %v2581 = vxor.u32 %v2576, 2147483648
          %v2582 = vsel %vm2580, %v2575, %v2581
          %vm2583 = vcmp.eq.s32.totalorder %v2578, 2
          %v2584 = vxor.u32 %v2575, 2147483648
          %v2585 = vsel %vm2583, %v2584, %v2576
          %v2586 = vsel %vm2579, %v2582, %v2585
          %v2587 = vsel %vm2577, nan, %v2586
          %v2588 = vand.u32 2147483647, %v312
          %vm2589 = vcmp.le.f32.partialorder %v2588, 0.7853982
          %vm2590 = vcmp.lt.s32.totalorder %v312, 0
          %v2591 = vand.u32 %v312, 2139095040
          %v2592 = vshrl.u32 %v2591, 23
          %v2593 = vsub.s32 %v2592, 127
          %v2594 = vand.u32 2147483647, %v312
          %v2595 = vand.u32 %v2594, 8388607
          %v2596 = vor.u32 %v2595, 8388608
          %v2597 = vsub.s32 0, %v2596
          %v2598 = vadd.s32 %v2593, 1
          %vm2599 = vcmp.gt.s32.totalorder %v2598, 0
          %v2600 = vsel %vm2599, %v2598, 0
          %v2601 = vshrl.u32 %v2600, 5
          %v2602 = vand.u32 %v2600, 31
          %v2603 = vsub.s32 32, %v2602
          %v2604 = vshrl.u32 683565275, %v2603
          %v2605 = vshll.u32 683565275, %v2602
          %v2606 = vshrl.u32 2475754826, %v2603
          %v2607 = vor.u32 %v2605, %v2606
          %v2608 = vshll.u32 2475754826, %v2602
          %v2609 = vshrl.u32 2131351028, %v2603
          %v2610 = vor.u32 %v2608, %v2609
          %v2611 = vshll.u32 2131351028, %v2602
          %v2612 = vshrl.u32 2102212464, %v2603
          %v2613 = vor.u32 %v2611, %v2612
          %v2614 = vshll.u32 2102212464, %v2602
          %v2615 = vshrl.u32 920167782, %v2603
          %v2616 = vor.u32 %v2614, %v2615
          %v2617 = vshll.u32 920167782, %v2602
          %v2618 = vshrl.u32 1326507024, %v2603
          %v2619 = vor.u32 %v2617, %v2618
          %vm2620 = vcmp.lt.s32.totalorder %v2601, 1
          %vm2621 = vcmp.lt.s32.totalorder %v2601, 2
          %vm2622 = vcmp.lt.s32.totalorder %v2601, 3
          %vm2623 = vcmp.lt.s32.totalorder %v2601, 4
          %v2624 = vsel %vm2620, %v2604, %v2607
          %v2625 = vsel %vm2623, %v2613, 2102212464
          %v2626 = vsel %vm2622, %v2610, %v2625
          %v2627 = vsel %vm2621, %v2624, %v2626
          %v2628 = vsel %vm2620, %v2607, %v2610
          %v2629 = vsel %vm2623, %v2616, 920167782
          %v2630 = vsel %vm2622, %v2613, %v2629
          %v2631 = vsel %vm2621, %v2628, %v2630
          %v2632 = vsel %vm2620, %v2610, %v2613
          %v2633 = vsel %vm2623, %v2619, 1326507024
          %v2634 = vsel %vm2622, %v2616, %v2633
          %v2635 = vsel %vm2621, %v2632, %v2634
          %v2636 = vshll.u32 %v2596, 8
          %v2637 = vmul.u32.u64.compose %v2636, %v2635
          %v2638 = vextract.low.u32 %v2637
          %v2639 = vextract.high.u32 %v2637
          %v2640 = vmul.u32.u64.compose %v2636, %v2631
          %v2641 = vextract.low.u32 %v2640
          %v2642 = vextract.high.u32 %v2640
          %v2643 = vmul.u32 %v2636, %v2627
          %v2644 = vadd.s32 %v2639, %v2641
          %vm2645 = vc.u32 %v2639, %v2641
          %v2646 = vadd.s32 %v2642, 1
          %v2647 = vsel %vm2645, %v2646, %v2642
          %v2648 = vadd.s32 %v2643, %v2647
          %v2649 = vadd.s32 %v2648, 536870912
          %v2650 = vshrl.u32 %v2649, 30
          %v2651 = vshll.u32 %v2650, 30
          %v2652 = vsub.s32 %v2648, %v2651
          %vm2653 = vcmp.lt.s32.totalorder %v2652, 0
          %v2654 = vsub.s32 0, %v2652
          %v2655 = vsel %vm2653, %v2654, %v2652
          %v2656 = vclz %v2655
          %v2657 = vsub.s32 %v2656, 2
          %vm2658 = vcmp.gt.s32.totalorder 0, %v2657
          %v2659 = vsel %vm2658, 0, %v2657
          %v2660 = vsub.s32 32, %v2659
          %v2661 = vshll.u32 %v2652, %v2659
          %v2662 = vshrl.u32 %v2644, %v2660
          %v2663 = vor.u32 %v2661, %v2662
          %v2664 = vsub.s32 4294967266, %v2659
          %v2665 = vadd.s32 %v2664, 127
          %v2666 = vshll.u32 %v2665, 23
          %v2667 = vor.u32 4788187, %v2666
          %v2668 = vand.u32 2147483647, %v2667
          %v2670 = vcvt.s32.f32 %v2663
          %v2671 = vmul.f32 %v2670, %v2668
          %v2672 = vxor.u32 %v2671, 2147483648
          %v2673 = vsel %vm2590, %v2672, %v2671
          %v2674 = vsub.s32 4, %v2650
          %v2675 = vsel %vm2590, %v2674, %v2650
          %v2676 = vsel %vm2589, %v312, %v2673
          %v2677 = vsel %vm2589, 0, %v2675
          %v2678 = vcosq.f32.pop %v2676
          %v2679 = vsinq.f32.pop %v2676
          %vm2680 = vweird.f32 %v312
          %v2681 = vand.u32 %v2677, 3
          %vm2682 = vcmp.lt.s32.totalorder %v2681, 2
          %vm2683 = vcmp.eq.s32.totalorder %v2681, 0
          %v2684 = vxor.u32 %v2679, 2147483648
          %v2685 = vsel %vm2683, %v2678, %v2684
          %vm2686 = vcmp.eq.s32.totalorder %v2681, 2
          %v2687 = vxor.u32 %v2678, 2147483648
          %v2688 = vsel %vm2686, %v2687, %v2679
          %v2689 = vsel %vm2682, %v2685, %v2688
          %v2690 = vsel %vm2680, nan, %v2689
          %v2691 = vand.u32 2147483647, %v313
          %vm2692 = vcmp.le.f32.partialorder %v2691, 0.7853982
          %vm2693 = vcmp.lt.s32.totalorder %v313, 0
          %v2694 = vand.u32 %v313, 2139095040
          %v2695 = vshrl.u32 %v2694, 23
          %v2696 = vsub.s32 %v2695, 127
          %v2697 = vand.u32 2147483647, %v313
          %v2698 = vand.u32 %v2697, 8388607
          %v2699 = vor.u32 %v2698, 8388608
          %v2700 = vsub.s32 0, %v2699
          %v2701 = vadd.s32 %v2696, 1
          %vm2702 = vcmp.gt.s32.totalorder %v2701, 0
          %v2703 = vsel %vm2702, %v2701, 0
          %v2704 = vshrl.u32 %v2703, 5
          %v2705 = vand.u32 %v2703, 31
          %v2706 = vsub.s32 32, %v2705
          %v2707 = vshrl.u32 683565275, %v2706
          %v2708 = vshll.u32 683565275, %v2705
          %v2709 = vshrl.u32 2475754826, %v2706
          %v2710 = vor.u32 %v2708, %v2709
          %v2711 = vshll.u32 2475754826, %v2705
          %v2712 = vshrl.u32 2131351028, %v2706
          %v2713 = vor.u32 %v2711, %v2712
          %v2714 = vshll.u32 2131351028, %v2705
          %v2715 = vshrl.u32 2102212464, %v2706
          %v2716 = vor.u32 %v2714, %v2715
          %v2717 = vshll.u32 2102212464, %v2705
          %v2718 = vshrl.u32 920167782, %v2706
          %v2719 = vor.u32 %v2717, %v2718
          %v2720 = vshll.u32 920167782, %v2705
          %v2721 = vshrl.u32 1326507024, %v2706
          %v2722 = vor.u32 %v2720, %v2721
          %vm2723 = vcmp.lt.s32.totalorder %v2704, 1
          %vm2724 = vcmp.lt.s32.totalorder %v2704, 2
          %vm2725 = vcmp.lt.s32.totalorder %v2704, 3
          %vm2726 = vcmp.lt.s32.totalorder %v2704, 4
          %v2727 = vsel %vm2723, %v2707, %v2710
          %v2728 = vsel %vm2726, %v2716, 2102212464
          %v2729 = vsel %vm2725, %v2713, %v2728
          %v2730 = vsel %vm2724, %v2727, %v2729
          %v2731 = vsel %vm2723, %v2710, %v2713
          %v2732 = vsel %vm2726, %v2719, 920167782
          %v2733 = vsel %vm2725, %v2716, %v2732
          %v2734 = vsel %vm2724, %v2731, %v2733
          %v2735 = vsel %vm2723, %v2713, %v2716
          %v2736 = vsel %vm2726, %v2722, 1326507024
          %v2737 = vsel %vm2725, %v2719, %v2736
          %v2738 = vsel %vm2724, %v2735, %v2737
          %v2739 = vshll.u32 %v2699, 8
          %v2740 = vmul.u32.u64.compose %v2739, %v2738
          %v2741 = vextract.low.u32 %v2740
          %v2742 = vextract.high.u32 %v2740
          %v2743 = vmul.u32.u64.compose %v2739, %v2734
          %v2744 = vextract.low.u32 %v2743
          %v2745 = vextract.high.u32 %v2743
          %v2746 = vmul.u32 %v2739, %v2730
          %v2747 = vadd.s32 %v2742, %v2744
          %vm2748 = vc.u32 %v2742, %v2744
          %v2749 = vadd.s32 %v2745, 1
          %v2750 = vsel %vm2748, %v2749, %v2745
          %v2751 = vadd.s32 %v2746, %v2750
          %v2752 = vadd.s32 %v2751, 536870912
          %v2753 = vshrl.u32 %v2752, 30
          %v2754 = vshll.u32 %v2753, 30
          %v2755 = vsub.s32 %v2751, %v2754
          %vm2756 = vcmp.lt.s32.totalorder %v2755, 0
          %v2757 = vsub.s32 0, %v2755
          %v2758 = vsel %vm2756, %v2757, %v2755
          %v2759 = vclz %v2758
          %v2760 = vsub.s32 %v2759, 2
          %vm2761 = vcmp.gt.s32.totalorder 0, %v2760
          %v2762 = vsel %vm2761, 0, %v2760
          %v2763 = vsub.s32 32, %v2762
          %v2764 = vshll.u32 %v2755, %v2762
          %v2765 = vshrl.u32 %v2747, %v2763
          %v2766 = vor.u32 %v2764, %v2765
          %v2767 = vsub.s32 4294967266, %v2762
          %v2768 = vadd.s32 %v2767, 127
          %v2769 = vshll.u32 %v2768, 23
          %v2770 = vor.u32 4788187, %v2769
          %v2771 = vand.u32 2147483647, %v2770
          %v2773 = vcvt.s32.f32 %v2766
          %v2774 = vmul.f32 %v2773, %v2771
          %v2775 = vxor.u32 %v2774, 2147483648
          %v2776 = vsel %vm2693, %v2775, %v2774
          %v2777 = vsub.s32 4, %v2753
          %v2778 = vsel %vm2693, %v2777, %v2753
          %v2779 = vsel %vm2692, %v313, %v2776
          %v2780 = vsel %vm2692, 0, %v2778
          %v2781 = vcosq.f32.pop %v2779
          %v2782 = vsinq.f32.pop %v2779
          %vm2783 = vweird.f32 %v313
          %v2784 = vand.u32 %v2780, 3
          %vm2785 = vcmp.lt.s32.totalorder %v2784, 2
          %vm2786 = vcmp.eq.s32.totalorder %v2784, 0
          %v2787 = vxor.u32 %v2782, 2147483648
          %v2788 = vsel %vm2786, %v2781, %v2787
          %vm2789 = vcmp.eq.s32.totalorder %v2784, 2
          %v2790 = vxor.u32 %v2781, 2147483648
          %v2791 = vsel %vm2789, %v2790, %v2782
          %v2792 = vsel %vm2785, %v2788, %v2791
          %v2793 = vsel %vm2783, nan, %v2792
          %v2794 = vand.u32 2147483647, %v314
          %vm2795 = vcmp.le.f32.partialorder %v2794, 0.7853982
          %vm2796 = vcmp.lt.s32.totalorder %v314, 0
          %v2797 = vand.u32 %v314, 2139095040
          %v2798 = vshrl.u32 %v2797, 23
          %v2799 = vsub.s32 %v2798, 127
          %v2800 = vand.u32 2147483647, %v314
          %v2801 = vand.u32 %v2800, 8388607
          %v2802 = vor.u32 %v2801, 8388608
          %v2803 = vsub.s32 0, %v2802
          %v2804 = vadd.s32 %v2799, 1
          %vm2805 = vcmp.gt.s32.totalorder %v2804, 0
          %v2806 = vsel %vm2805, %v2804, 0
          %v2807 = vshrl.u32 %v2806, 5
          %v2808 = vand.u32 %v2806, 31
          %v2809 = vsub.s32 32, %v2808
          %v2810 = vshrl.u32 683565275, %v2809
          %v2811 = vshll.u32 683565275, %v2808
          %v2812 = vshrl.u32 2475754826, %v2809
          %v2813 = vor.u32 %v2811, %v2812
          %v2814 = vshll.u32 2475754826, %v2808
          %v2815 = vshrl.u32 2131351028, %v2809
          %v2816 = vor.u32 %v2814, %v2815
          %v2817 = vshll.u32 2131351028, %v2808
          %v2818 = vshrl.u32 2102212464, %v2809
          %v2819 = vor.u32 %v2817, %v2818
          %v2820 = vshll.u32 2102212464, %v2808
          %v2821 = vshrl.u32 920167782, %v2809
          %v2822 = vor.u32 %v2820, %v2821
          %v2823 = vshll.u32 920167782, %v2808
          %v2824 = vshrl.u32 1326507024, %v2809
          %v2825 = vor.u32 %v2823, %v2824
          %vm2826 = vcmp.lt.s32.totalorder %v2807, 1
          %vm2827 = vcmp.lt.s32.totalorder %v2807, 2
          %vm2828 = vcmp.lt.s32.totalorder %v2807, 3
          %vm2829 = vcmp.lt.s32.totalorder %v2807, 4
          %v2830 = vsel %vm2826, %v2810, %v2813
          %v2831 = vsel %vm2829, %v2819, 2102212464
          %v2832 = vsel %vm2828, %v2816, %v2831
          %v2833 = vsel %vm2827, %v2830, %v2832
          %v2834 = vsel %vm2826, %v2813, %v2816
          %v2835 = vsel %vm2829, %v2822, 920167782
          %v2836 = vsel %vm2828, %v2819, %v2835
          %v2837 = vsel %vm2827, %v2834, %v2836
          %v2838 = vsel %vm2826, %v2816, %v2819
          %v2839 = vsel %vm2829, %v2825, 1326507024
          %v2840 = vsel %vm2828, %v2822, %v2839
          %v2841 = vsel %vm2827, %v2838, %v2840
          %v2842 = vshll.u32 %v2802, 8
          %v2843 = vmul.u32.u64.compose %v2842, %v2841
          %v2844 = vextract.low.u32 %v2843
          %v2845 = vextract.high.u32 %v2843
          %v2846 = vmul.u32.u64.compose %v2842, %v2837
          %v2847 = vextract.low.u32 %v2846
          %v2848 = vextract.high.u32 %v2846
          %v2849 = vmul.u32 %v2842, %v2833
          %v2850 = vadd.s32 %v2845, %v2847
          %vm2851 = vc.u32 %v2845, %v2847
          %v2852 = vadd.s32 %v2848, 1
          %v2853 = vsel %vm2851, %v2852, %v2848
          %v2854 = vadd.s32 %v2849, %v2853
          %v2855 = vadd.s32 %v2854, 536870912
          %v2856 = vshrl.u32 %v2855, 30
          %v2857 = vshll.u32 %v2856, 30
          %v2858 = vsub.s32 %v2854, %v2857
          %vm2859 = vcmp.lt.s32.totalorder %v2858, 0
          %v2860 = vsub.s32 0, %v2858
          %v2861 = vsel %vm2859, %v2860, %v2858
          %v2862 = vclz %v2861
          %v2863 = vsub.s32 %v2862, 2
          %vm2864 = vcmp.gt.s32.totalorder 0, %v2863
          %v2865 = vsel %vm2864, 0, %v2863
          %v2866 = vsub.s32 32, %v2865
          %v2867 = vshll.u32 %v2858, %v2865
          %v2868 = vshrl.u32 %v2850, %v2866
          %v2869 = vor.u32 %v2867, %v2868
          %v2870 = vsub.s32 4294967266, %v2865
          %v2871 = vadd.s32 %v2870, 127
          %v2872 = vshll.u32 %v2871, 23
          %v2873 = vor.u32 4788187, %v2872
          %v2874 = vand.u32 2147483647, %v2873
          %v2876 = vcvt.s32.f32 %v2869
          %v2877 = vmul.f32 %v2876, %v2874
          %v2878 = vxor.u32 %v2877, 2147483648
          %v2879 = vsel %vm2796, %v2878, %v2877
          %v2880 = vsub.s32 4, %v2856
          %v2881 = vsel %vm2796, %v2880, %v2856
          %v2882 = vsel %vm2795, %v314, %v2879
          %v2883 = vsel %vm2795, 0, %v2881
          %v2884 = vcosq.f32.pop %v2882
          %v2885 = vsinq.f32.pop %v2882
          %vm2886 = vweird.f32 %v314
          %v2887 = vand.u32 %v2883, 3
          %vm2888 = vcmp.lt.s32.totalorder %v2887, 2
          %vm2889 = vcmp.eq.s32.totalorder %v2887, 0
          %v2890 = vxor.u32 %v2885, 2147483648
          %v2891 = vsel %vm2889, %v2884, %v2890
          %vm2892 = vcmp.eq.s32.totalorder %v2887, 2
          %v2893 = vxor.u32 %v2884, 2147483648
          %v2894 = vsel %vm2892, %v2893, %v2885
          %v2895 = vsel %vm2888, %v2891, %v2894
          %v2896 = vsel %vm2886, nan, %v2895
          %v2897 = vand.u32 2147483647, %v315
          %vm2898 = vcmp.le.f32.partialorder %v2897, 0.7853982
          %vm2899 = vcmp.lt.s32.totalorder %v315, 0
          %v2900 = vand.u32 %v315, 2139095040
          %v2901 = vshrl.u32 %v2900, 23
          %v2902 = vsub.s32 %v2901, 127
          %v2903 = vand.u32 2147483647, %v315
          %v2904 = vand.u32 %v2903, 8388607
          %v2905 = vor.u32 %v2904, 8388608
          %v2906 = vsub.s32 0, %v2905
          %v2907 = vadd.s32 %v2902, 1
          %vm2908 = vcmp.gt.s32.totalorder %v2907, 0
          %v2909 = vsel %vm2908, %v2907, 0
          %v2910 = vshrl.u32 %v2909, 5
          %v2911 = vand.u32 %v2909, 31
          %v2912 = vsub.s32 32, %v2911
          %v2913 = vshrl.u32 683565275, %v2912
          %v2914 = vshll.u32 683565275, %v2911
          %v2915 = vshrl.u32 2475754826, %v2912
          %v2916 = vor.u32 %v2914, %v2915
          %v2917 = vshll.u32 2475754826, %v2911
          %v2918 = vshrl.u32 2131351028, %v2912
          %v2919 = vor.u32 %v2917, %v2918
          %v2920 = vshll.u32 2131351028, %v2911
          %v2921 = vshrl.u32 2102212464, %v2912
          %v2922 = vor.u32 %v2920, %v2921
          %v2923 = vshll.u32 2102212464, %v2911
          %v2924 = vshrl.u32 920167782, %v2912
          %v2925 = vor.u32 %v2923, %v2924
          %v2926 = vshll.u32 920167782, %v2911
          %v2927 = vshrl.u32 1326507024, %v2912
          %v2928 = vor.u32 %v2926, %v2927
          %vm2929 = vcmp.lt.s32.totalorder %v2910, 1
          %vm2930 = vcmp.lt.s32.totalorder %v2910, 2
          %vm2931 = vcmp.lt.s32.totalorder %v2910, 3
          %vm2932 = vcmp.lt.s32.totalorder %v2910, 4
          %v2933 = vsel %vm2929, %v2913, %v2916
          %v2934 = vsel %vm2932, %v2922, 2102212464
          %v2935 = vsel %vm2931, %v2919, %v2934
          %v2936 = vsel %vm2930, %v2933, %v2935
          %v2937 = vsel %vm2929, %v2916, %v2919
          %v2938 = vsel %vm2932, %v2925, 920167782
          %v2939 = vsel %vm2931, %v2922, %v2938
          %v2940 = vsel %vm2930, %v2937, %v2939
          %v2941 = vsel %vm2929, %v2919, %v2922
          %v2942 = vsel %vm2932, %v2928, 1326507024
          %v2943 = vsel %vm2931, %v2925, %v2942
          %v2944 = vsel %vm2930, %v2941, %v2943
          %v2945 = vshll.u32 %v2905, 8
          %v2946 = vmul.u32.u64.compose %v2945, %v2944
          %v2947 = vextract.low.u32 %v2946
          %v2948 = vextract.high.u32 %v2946
          %v2949 = vmul.u32.u64.compose %v2945, %v2940
          %v2950 = vextract.low.u32 %v2949
          %v2951 = vextract.high.u32 %v2949
          %v2952 = vmul.u32 %v2945, %v2936
          %v2953 = vadd.s32 %v2948, %v2950
          %vm2954 = vc.u32 %v2948, %v2950
          %v2955 = vadd.s32 %v2951, 1
          %v2956 = vsel %vm2954, %v2955, %v2951
          %v2957 = vadd.s32 %v2952, %v2956
          %v2958 = vadd.s32 %v2957, 536870912
          %v2959 = vshrl.u32 %v2958, 30
          %v2960 = vshll.u32 %v2959, 30
          %v2961 = vsub.s32 %v2957, %v2960
          %vm2962 = vcmp.lt.s32.totalorder %v2961, 0
          %v2963 = vsub.s32 0, %v2961
          %v2964 = vsel %vm2962, %v2963, %v2961
          %v2965 = vclz %v2964
          %v2966 = vsub.s32 %v2965, 2
          %vm2967 = vcmp.gt.s32.totalorder 0, %v2966
          %v2968 = vsel %vm2967, 0, %v2966
          %v2969 = vsub.s32 32, %v2968
          %v2970 = vshll.u32 %v2961, %v2968
          %v2971 = vshrl.u32 %v2953, %v2969
          %v2972 = vor.u32 %v2970, %v2971
          %v2973 = vsub.s32 4294967266, %v2968
          %v2974 = vadd.s32 %v2973, 127
          %v2975 = vshll.u32 %v2974, 23
          %v2976 = vor.u32 4788187, %v2975
          %v2977 = vand.u32 2147483647, %v2976
          %v2979 = vcvt.s32.f32 %v2972
          %v2980 = vmul.f32 %v2979, %v2977
          %v2981 = vxor.u32 %v2980, 2147483648
          %v2982 = vsel %vm2899, %v2981, %v2980
          %v2983 = vsub.s32 4, %v2959
          %v2984 = vsel %vm2899, %v2983, %v2959
          %v2985 = vsel %vm2898, %v315, %v2982
          %v2986 = vsel %vm2898, 0, %v2984
          %v2987 = vcosq.f32.pop %v2985
          %v2988 = vsinq.f32.pop %v2985
          %vm2989 = vweird.f32 %v315
          %v2990 = vand.u32 %v2986, 3
          %vm2991 = vcmp.lt.s32.totalorder %v2990, 2
          %vm2992 = vcmp.eq.s32.totalorder %v2990, 0
          %v2993 = vxor.u32 %v2988, 2147483648
          %v2994 = vsel %vm2992, %v2987, %v2993
          %vm2995 = vcmp.eq.s32.totalorder %v2990, 2
          %v2996 = vxor.u32 %v2987, 2147483648
          %v2997 = vsel %vm2995, %v2996, %v2988
          %v2998 = vsel %vm2991, %v2994, %v2997
          %v2999 = vsel %vm2989, nan, %v2998
          %v3000 = vand.u32 2147483647, %v316
          %vm3001 = vcmp.le.f32.partialorder %v3000, 0.7853982
          %vm3002 = vcmp.lt.s32.totalorder %v316, 0
          %v3003 = vand.u32 %v316, 2139095040
          %v3004 = vshrl.u32 %v3003, 23
          %v3005 = vsub.s32 %v3004, 127
          %v3006 = vand.u32 2147483647, %v316
          %v3007 = vand.u32 %v3006, 8388607
          %v3008 = vor.u32 %v3007, 8388608
          %v3009 = vsub.s32 0, %v3008
          %v3010 = vadd.s32 %v3005, 1
          %vm3011 = vcmp.gt.s32.totalorder %v3010, 0
          %v3012 = vsel %vm3011, %v3010, 0
          %v3013 = vshrl.u32 %v3012, 5
          %v3014 = vand.u32 %v3012, 31
          %v3015 = vsub.s32 32, %v3014
          %v3016 = vshrl.u32 683565275, %v3015
          %v3017 = vshll.u32 683565275, %v3014
          %v3018 = vshrl.u32 2475754826, %v3015
          %v3019 = vor.u32 %v3017, %v3018
          %v3020 = vshll.u32 2475754826, %v3014
          %v3021 = vshrl.u32 2131351028, %v3015
          %v3022 = vor.u32 %v3020, %v3021
          %v3023 = vshll.u32 2131351028, %v3014
          %v3024 = vshrl.u32 2102212464, %v3015
          %v3025 = vor.u32 %v3023, %v3024
          %v3026 = vshll.u32 2102212464, %v3014
          %v3027 = vshrl.u32 920167782, %v3015
          %v3028 = vor.u32 %v3026, %v3027
          %v3029 = vshll.u32 920167782, %v3014
          %v3030 = vshrl.u32 1326507024, %v3015
          %v3031 = vor.u32 %v3029, %v3030
          %vm3032 = vcmp.lt.s32.totalorder %v3013, 1
          %vm3033 = vcmp.lt.s32.totalorder %v3013, 2
          %vm3034 = vcmp.lt.s32.totalorder %v3013, 3
          %vm3035 = vcmp.lt.s32.totalorder %v3013, 4
          %v3036 = vsel %vm3032, %v3016, %v3019
          %v3037 = vsel %vm3035, %v3025, 2102212464
          %v3038 = vsel %vm3034, %v3022, %v3037
          %v3039 = vsel %vm3033, %v3036, %v3038
          %v3040 = vsel %vm3032, %v3019, %v3022
          %v3041 = vsel %vm3035, %v3028, 920167782
          %v3042 = vsel %vm3034, %v3025, %v3041
          %v3043 = vsel %vm3033, %v3040, %v3042
          %v3044 = vsel %vm3032, %v3022, %v3025
          %v3045 = vsel %vm3035, %v3031, 1326507024
          %v3046 = vsel %vm3034, %v3028, %v3045
          %v3047 = vsel %vm3033, %v3044, %v3046
          %v3048 = vshll.u32 %v3008, 8
          %v3049 = vmul.u32.u64.compose %v3048, %v3047
          %v3050 = vextract.low.u32 %v3049
          %v3051 = vextract.high.u32 %v3049
          %v3052 = vmul.u32.u64.compose %v3048, %v3043
          %v3053 = vextract.low.u32 %v3052
          %v3054 = vextract.high.u32 %v3052
          %v3055 = vmul.u32 %v3048, %v3039
          %v3056 = vadd.s32 %v3051, %v3053
          %vm3057 = vc.u32 %v3051, %v3053
          %v3058 = vadd.s32 %v3054, 1
          %v3059 = vsel %vm3057, %v3058, %v3054
          %v3060 = vadd.s32 %v3055, %v3059
          %v3061 = vadd.s32 %v3060, 536870912
          %v3062 = vshrl.u32 %v3061, 30
          %v3063 = vshll.u32 %v3062, 30
          %v3064 = vsub.s32 %v3060, %v3063
          %vm3065 = vcmp.lt.s32.totalorder %v3064, 0
          %v3066 = vsub.s32 0, %v3064
          %v3067 = vsel %vm3065, %v3066, %v3064
          %v3068 = vclz %v3067
          %v3069 = vsub.s32 %v3068, 2
          %vm3070 = vcmp.gt.s32.totalorder 0, %v3069
          %v3071 = vsel %vm3070, 0, %v3069
          %v3072 = vsub.s32 32, %v3071
          %v3073 = vshll.u32 %v3064, %v3071
          %v3074 = vshrl.u32 %v3056, %v3072
          %v3075 = vor.u32 %v3073, %v3074
          %v3076 = vsub.s32 4294967266, %v3071
          %v3077 = vadd.s32 %v3076, 127
          %v3078 = vshll.u32 %v3077, 23
          %v3079 = vor.u32 4788187, %v3078
          %v3080 = vand.u32 2147483647, %v3079
          %v3082 = vcvt.s32.f32 %v3075
          %v3083 = vmul.f32 %v3082, %v3080
          %v3084 = vxor.u32 %v3083, 2147483648
          %v3085 = vsel %vm3002, %v3084, %v3083
          %v3086 = vsub.s32 4, %v3062
          %v3087 = vsel %vm3002, %v3086, %v3062
          %v3088 = vsel %vm3001, %v316, %v3085
          %v3089 = vsel %vm3001, 0, %v3087
          %v3090 = vcosq.f32.pop %v3088
          %v3091 = vsinq.f32.pop %v3088
          %vm3092 = vweird.f32 %v316
          %v3093 = vand.u32 %v3089, 3
          %vm3094 = vcmp.lt.s32.totalorder %v3093, 2
          %vm3095 = vcmp.eq.s32.totalorder %v3093, 0
          %v3096 = vxor.u32 %v3091, 2147483648
          %v3097 = vsel %vm3095, %v3090, %v3096
          %vm3098 = vcmp.eq.s32.totalorder %v3093, 2
          %v3099 = vxor.u32 %v3090, 2147483648
          %v3100 = vsel %vm3098, %v3099, %v3091
          %v3101 = vsel %vm3094, %v3097, %v3100
          %v3102 = vsel %vm3092, nan, %v3101
          %v3103 = vand.u32 2147483647, %v317
          %vm3104 = vcmp.le.f32.partialorder %v3103, 0.7853982
          %vm3105 = vcmp.lt.s32.totalorder %v317, 0
          %v3106 = vand.u32 %v317, 2139095040
          %v3107 = vshrl.u32 %v3106, 23
          %v3108 = vsub.s32 %v3107, 127
          %v3109 = vand.u32 2147483647, %v317
          %v3110 = vand.u32 %v3109, 8388607
          %v3111 = vor.u32 %v3110, 8388608
          %v3112 = vsub.s32 0, %v3111
          %v3113 = vadd.s32 %v3108, 1
          %vm3114 = vcmp.gt.s32.totalorder %v3113, 0
          %v3115 = vsel %vm3114, %v3113, 0
          %v3116 = vshrl.u32 %v3115, 5
          %v3117 = vand.u32 %v3115, 31
          %v3118 = vsub.s32 32, %v3117
          %v3119 = vshrl.u32 683565275, %v3118
          %v3120 = vshll.u32 683565275, %v3117
          %v3121 = vshrl.u32 2475754826, %v3118
          %v3122 = vor.u32 %v3120, %v3121
          %v3123 = vshll.u32 2475754826, %v3117
          %v3124 = vshrl.u32 2131351028, %v3118
          %v3125 = vor.u32 %v3123, %v3124
          %v3126 = vshll.u32 2131351028, %v3117
          %v3127 = vshrl.u32 2102212464, %v3118
          %v3128 = vor.u32 %v3126, %v3127
          %v3129 = vshll.u32 2102212464, %v3117
          %v3130 = vshrl.u32 920167782, %v3118
          %v3131 = vor.u32 %v3129, %v3130
          %v3132 = vshll.u32 920167782, %v3117
          %v3133 = vshrl.u32 1326507024, %v3118
          %v3134 = vor.u32 %v3132, %v3133
          %vm3135 = vcmp.lt.s32.totalorder %v3116, 1
          %vm3136 = vcmp.lt.s32.totalorder %v3116, 2
          %vm3137 = vcmp.lt.s32.totalorder %v3116, 3
          %vm3138 = vcmp.lt.s32.totalorder %v3116, 4
          %v3139 = vsel %vm3135, %v3119, %v3122
          %v3140 = vsel %vm3138, %v3128, 2102212464
          %v3141 = vsel %vm3137, %v3125, %v3140
          %v3142 = vsel %vm3136, %v3139, %v3141
          %v3143 = vsel %vm3135, %v3122, %v3125
          %v3144 = vsel %vm3138, %v3131, 920167782
          %v3145 = vsel %vm3137, %v3128, %v3144
          %v3146 = vsel %vm3136, %v3143, %v3145
          %v3147 = vsel %vm3135, %v3125, %v3128
          %v3148 = vsel %vm3138, %v3134, 1326507024
          %v3149 = vsel %vm3137, %v3131, %v3148
          %v3150 = vsel %vm3136, %v3147, %v3149
          %v3151 = vshll.u32 %v3111, 8
          %v3152 = vmul.u32.u64.compose %v3151, %v3150
          %v3153 = vextract.low.u32 %v3152
          %v3154 = vextract.high.u32 %v3152
          %v3155 = vmul.u32.u64.compose %v3151, %v3146
          %v3156 = vextract.low.u32 %v3155
          %v3157 = vextract.high.u32 %v3155
          %v3158 = vmul.u32 %v3151, %v3142
          %v3159 = vadd.s32 %v3154, %v3156
          %vm3160 = vc.u32 %v3154, %v3156
          %v3161 = vadd.s32 %v3157, 1
          %v3162 = vsel %vm3160, %v3161, %v3157
          %v3163 = vadd.s32 %v3158, %v3162
          %v3164 = vadd.s32 %v3163, 536870912
          %v3165 = vshrl.u32 %v3164, 30
          %v3166 = vshll.u32 %v3165, 30
          %v3167 = vsub.s32 %v3163, %v3166
          %vm3168 = vcmp.lt.s32.totalorder %v3167, 0
          %v3169 = vsub.s32 0, %v3167
          %v3170 = vsel %vm3168, %v3169, %v3167
          %v3171 = vclz %v3170
          %v3172 = vsub.s32 %v3171, 2
          %vm3173 = vcmp.gt.s32.totalorder 0, %v3172
          %v3174 = vsel %vm3173, 0, %v3172
          %v3175 = vsub.s32 32, %v3174
          %v3176 = vshll.u32 %v3167, %v3174
          %v3177 = vshrl.u32 %v3159, %v3175
          %v3178 = vor.u32 %v3176, %v3177
          %v3179 = vsub.s32 4294967266, %v3174
          %v3180 = vadd.s32 %v3179, 127
          %v3181 = vshll.u32 %v3180, 23
          %v3182 = vor.u32 4788187, %v3181
          %v3183 = vand.u32 2147483647, %v3182
          %v3185 = vcvt.s32.f32 %v3178
          %v3186 = vmul.f32 %v3185, %v3183
          %v3187 = vxor.u32 %v3186, 2147483648
          %v3188 = vsel %vm3105, %v3187, %v3186
          %v3189 = vsub.s32 4, %v3165
          %v3190 = vsel %vm3105, %v3189, %v3165
          %v3191 = vsel %vm3104, %v317, %v3188
          %v3192 = vsel %vm3104, 0, %v3190
          %v3193 = vcosq.f32.pop %v3191
          %v3194 = vsinq.f32.pop %v3191
          %vm3195 = vweird.f32 %v317
          %v3196 = vand.u32 %v3192, 3
          %vm3197 = vcmp.lt.s32.totalorder %v3196, 2
          %vm3198 = vcmp.eq.s32.totalorder %v3196, 0
          %v3199 = vxor.u32 %v3194, 2147483648
          %v3200 = vsel %vm3198, %v3193, %v3199
          %vm3201 = vcmp.eq.s32.totalorder %v3196, 2
          %v3202 = vxor.u32 %v3193, 2147483648
          %v3203 = vsel %vm3201, %v3202, %v3194
          %v3204 = vsel %vm3197, %v3200, %v3203
          %v3205 = vsel %vm3195, nan, %v3204
          %v3206 = vand.u32 2147483647, %v318
          %vm3207 = vcmp.le.f32.partialorder %v3206, 0.7853982
          %vm3208 = vcmp.lt.s32.totalorder %v318, 0
          %v3209 = vand.u32 %v318, 2139095040
          %v3210 = vshrl.u32 %v3209, 23
          %v3211 = vsub.s32 %v3210, 127
          %v3212 = vand.u32 2147483647, %v318
          %v3213 = vand.u32 %v3212, 8388607
          %v3214 = vor.u32 %v3213, 8388608
          %v3215 = vsub.s32 0, %v3214
          %v3216 = vadd.s32 %v3211, 1
          %vm3217 = vcmp.gt.s32.totalorder %v3216, 0
          %v3218 = vsel %vm3217, %v3216, 0
          %v3219 = vshrl.u32 %v3218, 5
          %v3220 = vand.u32 %v3218, 31
          %v3221 = vsub.s32 32, %v3220
          %v3222 = vshrl.u32 683565275, %v3221
          %v3223 = vshll.u32 683565275, %v3220
          %v3224 = vshrl.u32 2475754826, %v3221
          %v3225 = vor.u32 %v3223, %v3224
          %v3226 = vshll.u32 2475754826, %v3220
          %v3227 = vshrl.u32 2131351028, %v3221
          %v3228 = vor.u32 %v3226, %v3227
          %v3229 = vshll.u32 2131351028, %v3220
          %v3230 = vshrl.u32 2102212464, %v3221
          %v3231 = vor.u32 %v3229, %v3230
          %v3232 = vshll.u32 2102212464, %v3220
          %v3233 = vshrl.u32 920167782, %v3221
          %v3234 = vor.u32 %v3232, %v3233
          %v3235 = vshll.u32 920167782, %v3220
          %v3236 = vshrl.u32 1326507024, %v3221
          %v3237 = vor.u32 %v3235, %v3236
          %vm3238 = vcmp.lt.s32.totalorder %v3219, 1
          %vm3239 = vcmp.lt.s32.totalorder %v3219, 2
          %vm3240 = vcmp.lt.s32.totalorder %v3219, 3
          %vm3241 = vcmp.lt.s32.totalorder %v3219, 4
          %v3242 = vsel %vm3238, %v3222, %v3225
          %v3243 = vsel %vm3241, %v3231, 2102212464
          %v3244 = vsel %vm3240, %v3228, %v3243
          %v3245 = vsel %vm3239, %v3242, %v3244
          %v3246 = vsel %vm3238, %v3225, %v3228
          %v3247 = vsel %vm3241, %v3234, 920167782
          %v3248 = vsel %vm3240, %v3231, %v3247
          %v3249 = vsel %vm3239, %v3246, %v3248
          %v3250 = vsel %vm3238, %v3228, %v3231
          %v3251 = vsel %vm3241, %v3237, 1326507024
          %v3252 = vsel %vm3240, %v3234, %v3251
          %v3253 = vsel %vm3239, %v3250, %v3252
          %v3254 = vshll.u32 %v3214, 8
          %v3255 = vmul.u32.u64.compose %v3254, %v3253
          %v3256 = vextract.low.u32 %v3255
          %v3257 = vextract.high.u32 %v3255
          %v3258 = vmul.u32.u64.compose %v3254, %v3249
          %v3259 = vextract.low.u32 %v3258
          %v3260 = vextract.high.u32 %v3258
          %v3261 = vmul.u32 %v3254, %v3245
          %v3262 = vadd.s32 %v3257, %v3259
          %vm3263 = vc.u32 %v3257, %v3259
          %v3264 = vadd.s32 %v3260, 1
          %v3265 = vsel %vm3263, %v3264, %v3260
          %v3266 = vadd.s32 %v3261, %v3265
          %v3267 = vadd.s32 %v3266, 536870912
          %v3268 = vshrl.u32 %v3267, 30
          %v3269 = vshll.u32 %v3268, 30
          %v3270 = vsub.s32 %v3266, %v3269
          %vm3271 = vcmp.lt.s32.totalorder %v3270, 0
          %v3272 = vsub.s32 0, %v3270
          %v3273 = vsel %vm3271, %v3272, %v3270
          %v3274 = vclz %v3273
          %v3275 = vsub.s32 %v3274, 2
          %vm3276 = vcmp.gt.s32.totalorder 0, %v3275
          %v3277 = vsel %vm3276, 0, %v3275
          %v3278 = vsub.s32 32, %v3277
          %v3279 = vshll.u32 %v3270, %v3277
          %v3280 = vshrl.u32 %v3262, %v3278
          %v3281 = vor.u32 %v3279, %v3280
          %v3282 = vsub.s32 4294967266, %v3277
          %v3283 = vadd.s32 %v3282, 127
          %v3284 = vshll.u32 %v3283, 23
          %v3285 = vor.u32 4788187, %v3284
          %v3286 = vand.u32 2147483647, %v3285
          %v3288 = vcvt.s32.f32 %v3281
          %v3289 = vmul.f32 %v3288, %v3286
          %v3290 = vxor.u32 %v3289, 2147483648
          %v3291 = vsel %vm3208, %v3290, %v3289
          %v3292 = vsub.s32 4, %v3268
          %v3293 = vsel %vm3208, %v3292, %v3268
          %v3294 = vsel %vm3207, %v318, %v3291
          %v3295 = vsel %vm3207, 0, %v3293
          %v3296 = vcosq.f32.pop %v3294
          %v3297 = vsinq.f32.pop %v3294
          %vm3298 = vweird.f32 %v318
          %v3299 = vand.u32 %v3295, 3
          %vm3300 = vcmp.lt.s32.totalorder %v3299, 2
          %vm3301 = vcmp.eq.s32.totalorder %v3299, 0
          %v3302 = vxor.u32 %v3297, 2147483648
          %v3303 = vsel %vm3301, %v3296, %v3302
          %vm3304 = vcmp.eq.s32.totalorder %v3299, 2
          %v3305 = vxor.u32 %v3296, 2147483648
          %v3306 = vsel %vm3304, %v3305, %v3297
          %v3307 = vsel %vm3300, %v3303, %v3306
          %v3308 = vsel %vm3298, nan, %v3307
          %v3309 = vand.u32 2147483647, %v319
          %vm3310 = vcmp.le.f32.partialorder %v3309, 0.7853982
          %vm3311 = vcmp.lt.s32.totalorder %v319, 0
          %v3312 = vand.u32 %v319, 2139095040
          %v3313 = vshrl.u32 %v3312, 23
          %v3314 = vsub.s32 %v3313, 127
          %v3315 = vand.u32 2147483647, %v319
          %v3316 = vand.u32 %v3315, 8388607
          %v3317 = vor.u32 %v3316, 8388608
          %v3318 = vsub.s32 0, %v3317
          %v3319 = vadd.s32 %v3314, 1
          %vm3320 = vcmp.gt.s32.totalorder %v3319, 0
          %v3321 = vsel %vm3320, %v3319, 0
          %v3322 = vshrl.u32 %v3321, 5
          %v3323 = vand.u32 %v3321, 31
          %v3324 = vsub.s32 32, %v3323
          %v3325 = vshrl.u32 683565275, %v3324
          %v3326 = vshll.u32 683565275, %v3323
          %v3327 = vshrl.u32 2475754826, %v3324
          %v3328 = vor.u32 %v3326, %v3327
          %v3329 = vshll.u32 2475754826, %v3323
          %v3330 = vshrl.u32 2131351028, %v3324
          %v3331 = vor.u32 %v3329, %v3330
          %v3332 = vshll.u32 2131351028, %v3323
          %v3333 = vshrl.u32 2102212464, %v3324
          %v3334 = vor.u32 %v3332, %v3333
          %v3335 = vshll.u32 2102212464, %v3323
          %v3336 = vshrl.u32 920167782, %v3324
          %v3337 = vor.u32 %v3335, %v3336
          %v3338 = vshll.u32 920167782, %v3323
          %v3339 = vshrl.u32 1326507024, %v3324
          %v3340 = vor.u32 %v3338, %v3339
          %vm3341 = vcmp.lt.s32.totalorder %v3322, 1
          %vm3342 = vcmp.lt.s32.totalorder %v3322, 2
          %vm3343 = vcmp.lt.s32.totalorder %v3322, 3
          %vm3344 = vcmp.lt.s32.totalorder %v3322, 4
          %v3345 = vsel %vm3341, %v3325, %v3328
          %v3346 = vsel %vm3344, %v3334, 2102212464
          %v3347 = vsel %vm3343, %v3331, %v3346
          %v3348 = vsel %vm3342, %v3345, %v3347
          %v3349 = vsel %vm3341, %v3328, %v3331
          %v3350 = vsel %vm3344, %v3337, 920167782
          %v3351 = vsel %vm3343, %v3334, %v3350
          %v3352 = vsel %vm3342, %v3349, %v3351
          %v3353 = vsel %vm3341, %v3331, %v3334
          %v3354 = vsel %vm3344, %v3340, 1326507024
          %v3355 = vsel %vm3343, %v3337, %v3354
          %v3356 = vsel %vm3342, %v3353, %v3355
          %v3357 = vshll.u32 %v3317, 8
          %v3358 = vmul.u32.u64.compose %v3357, %v3356
          %v3359 = vextract.low.u32 %v3358
          %v3360 = vextract.high.u32 %v3358
          %v3361 = vmul.u32.u64.compose %v3357, %v3352
          %v3362 = vextract.low.u32 %v3361
          %v3363 = vextract.high.u32 %v3361
          %v3364 = vmul.u32 %v3357, %v3348
          %v3365 = vadd.s32 %v3360, %v3362
          %vm3366 = vc.u32 %v3360, %v3362
          %v3367 = vadd.s32 %v3363, 1
          %v3368 = vsel %vm3366, %v3367, %v3363
          %v3369 = vadd.s32 %v3364, %v3368
          %v3370 = vadd.s32 %v3369, 536870912
          %v3371 = vshrl.u32 %v3370, 30
          %v3372 = vshll.u32 %v3371, 30
          %v3373 = vsub.s32 %v3369, %v3372
          %vm3374 = vcmp.lt.s32.totalorder %v3373, 0
          %v3375 = vsub.s32 0, %v3373
          %v3376 = vsel %vm3374, %v3375, %v3373
          %v3377 = vclz %v3376
          %v3378 = vsub.s32 %v3377, 2
          %vm3379 = vcmp.gt.s32.totalorder 0, %v3378
          %v3380 = vsel %vm3379, 0, %v3378
          %v3381 = vsub.s32 32, %v3380
          %v3382 = vshll.u32 %v3373, %v3380
          %v3383 = vshrl.u32 %v3365, %v3381
          %v3384 = vor.u32 %v3382, %v3383
          %v3385 = vsub.s32 4294967266, %v3380
          %v3386 = vadd.s32 %v3385, 127
          %v3387 = vshll.u32 %v3386, 23
          %v3388 = vor.u32 4788187, %v3387
          %v3389 = vand.u32 2147483647, %v3388
          %v3391 = vcvt.s32.f32 %v3384
          %v3392 = vmul.f32 %v3391, %v3389
          %v3393 = vxor.u32 %v3392, 2147483648
          %v3394 = vsel %vm3311, %v3393, %v3392
          %v3395 = vsub.s32 4, %v3371
          %v3396 = vsel %vm3311, %v3395, %v3371
          %v3397 = vsel %vm3310, %v319, %v3394
          %v3398 = vsel %vm3310, 0, %v3396
          %v3399 = vcosq.f32.pop %v3397
          %v3400 = vsinq.f32.pop %v3397
          %vm3401 = vweird.f32 %v319
          %v3402 = vand.u32 %v3398, 3
          %vm3403 = vcmp.lt.s32.totalorder %v3402, 2
          %vm3404 = vcmp.eq.s32.totalorder %v3402, 0
          %v3405 = vxor.u32 %v3400, 2147483648
          %v3406 = vsel %vm3404, %v3399, %v3405
          %vm3407 = vcmp.eq.s32.totalorder %v3402, 2
          %v3408 = vxor.u32 %v3399, 2147483648
          %v3409 = vsel %vm3407, %v3408, %v3400
          %v3410 = vsel %vm3403, %v3406, %v3409
          %v3411 = vsel %vm3401, nan, %v3410
          %v3412 = vand.u32 2147483647, %v320
          %vm3413 = vcmp.le.f32.partialorder %v3412, 0.7853982
          %vm3414 = vcmp.lt.s32.totalorder %v320, 0
          %v3415 = vand.u32 %v320, 2139095040
          %v3416 = vshrl.u32 %v3415, 23
          %v3417 = vsub.s32 %v3416, 127
          %v3418 = vand.u32 2147483647, %v320
          %v3419 = vand.u32 %v3418, 8388607
          %v3420 = vor.u32 %v3419, 8388608
          %v3421 = vsub.s32 0, %v3420
          %v3422 = vadd.s32 %v3417, 1
          %vm3423 = vcmp.gt.s32.totalorder %v3422, 0
          %v3424 = vsel %vm3423, %v3422, 0
          %v3425 = vshrl.u32 %v3424, 5
          %v3426 = vand.u32 %v3424, 31
          %v3427 = vsub.s32 32, %v3426
          %v3428 = vshrl.u32 683565275, %v3427
          %v3429 = vshll.u32 683565275, %v3426
          %v3430 = vshrl.u32 2475754826, %v3427
          %v3431 = vor.u32 %v3429, %v3430
          %v3432 = vshll.u32 2475754826, %v3426
          %v3433 = vshrl.u32 2131351028, %v3427
          %v3434 = vor.u32 %v3432, %v3433
          %v3435 = vshll.u32 2131351028, %v3426
          %v3436 = vshrl.u32 2102212464, %v3427
          %v3437 = vor.u32 %v3435, %v3436
          %v3438 = vshll.u32 2102212464, %v3426
          %v3439 = vshrl.u32 920167782, %v3427
          %v3440 = vor.u32 %v3438, %v3439
          %v3441 = vshll.u32 920167782, %v3426
          %v3442 = vshrl.u32 1326507024, %v3427
          %v3443 = vor.u32 %v3441, %v3442
          %vm3444 = vcmp.lt.s32.totalorder %v3425, 1
          %vm3445 = vcmp.lt.s32.totalorder %v3425, 2
          %vm3446 = vcmp.lt.s32.totalorder %v3425, 3
          %vm3447 = vcmp.lt.s32.totalorder %v3425, 4
          %v3448 = vsel %vm3444, %v3428, %v3431
          %v3449 = vsel %vm3447, %v3437, 2102212464
          %v3450 = vsel %vm3446, %v3434, %v3449
          %v3451 = vsel %vm3445, %v3448, %v3450
          %v3452 = vsel %vm3444, %v3431, %v3434
          %v3453 = vsel %vm3447, %v3440, 920167782
          %v3454 = vsel %vm3446, %v3437, %v3453
          %v3455 = vsel %vm3445, %v3452, %v3454
          %v3456 = vsel %vm3444, %v3434, %v3437
          %v3457 = vsel %vm3447, %v3443, 1326507024
          %v3458 = vsel %vm3446, %v3440, %v3457
          %v3459 = vsel %vm3445, %v3456, %v3458
          %v3460 = vshll.u32 %v3420, 8
          %v3461 = vmul.u32.u64.compose %v3460, %v3459
          %v3462 = vextract.low.u32 %v3461
          %v3463 = vextract.high.u32 %v3461
          %v3464 = vmul.u32.u64.compose %v3460, %v3455
          %v3465 = vextract.low.u32 %v3464
          %v3466 = vextract.high.u32 %v3464
          %v3467 = vmul.u32 %v3460, %v3451
          %v3468 = vadd.s32 %v3463, %v3465
          %vm3469 = vc.u32 %v3463, %v3465
          %v3470 = vadd.s32 %v3466, 1
          %v3471 = vsel %vm3469, %v3470, %v3466
          %v3472 = vadd.s32 %v3467, %v3471
          %v3473 = vadd.s32 %v3472, 536870912
          %v3474 = vshrl.u32 %v3473, 30
          %v3475 = vshll.u32 %v3474, 30
          %v3476 = vsub.s32 %v3472, %v3475
          %vm3477 = vcmp.lt.s32.totalorder %v3476, 0
          %v3478 = vsub.s32 0, %v3476
          %v3479 = vsel %vm3477, %v3478, %v3476
          %v3480 = vclz %v3479
          %v3481 = vsub.s32 %v3480, 2
          %vm3482 = vcmp.gt.s32.totalorder 0, %v3481
          %v3483 = vsel %vm3482, 0, %v3481
          %v3484 = vsub.s32 32, %v3483
          %v3485 = vshll.u32 %v3476, %v3483
          %v3486 = vshrl.u32 %v3468, %v3484
          %v3487 = vor.u32 %v3485, %v3486
          %v3488 = vsub.s32 4294967266, %v3483
          %v3489 = vadd.s32 %v3488, 127
          %v3490 = vshll.u32 %v3489, 23
          %v3491 = vor.u32 4788187, %v3490
          %v3492 = vand.u32 2147483647, %v3491
          %v3494 = vcvt.s32.f32 %v3487
          %v3495 = vmul.f32 %v3494, %v3492
          %v3496 = vxor.u32 %v3495, 2147483648
          %v3497 = vsel %vm3414, %v3496, %v3495
          %v3498 = vsub.s32 4, %v3474
          %v3499 = vsel %vm3414, %v3498, %v3474
          %v3500 = vsel %vm3413, %v320, %v3497
          %v3501 = vsel %vm3413, 0, %v3499
          %v3502 = vcosq.f32.pop %v3500
          %v3503 = vsinq.f32.pop %v3500
          %vm3504 = vweird.f32 %v320
          %v3505 = vand.u32 %v3501, 3
          %vm3506 = vcmp.lt.s32.totalorder %v3505, 2
          %vm3507 = vcmp.eq.s32.totalorder %v3505, 0
          %v3508 = vxor.u32 %v3503, 2147483648
          %v3509 = vsel %vm3507, %v3502, %v3508
          %vm3510 = vcmp.eq.s32.totalorder %v3505, 2
          %v3511 = vxor.u32 %v3502, 2147483648
          %v3512 = vsel %vm3510, %v3511, %v3503
          %v3513 = vsel %vm3506, %v3509, %v3512
          %v3514 = vsel %vm3504, nan, %v3513
          %v3515 = vand.u32 2147483647, %v321
          %vm3516 = vcmp.le.f32.partialorder %v3515, 0.7853982
          %vm3517 = vcmp.lt.s32.totalorder %v321, 0
          %v3518 = vand.u32 %v321, 2139095040
          %v3519 = vshrl.u32 %v3518, 23
          %v3520 = vsub.s32 %v3519, 127
          %v3521 = vand.u32 2147483647, %v321
          %v3522 = vand.u32 %v3521, 8388607
          %v3523 = vor.u32 %v3522, 8388608
          %v3524 = vsub.s32 0, %v3523
          %v3525 = vadd.s32 %v3520, 1
          %vm3526 = vcmp.gt.s32.totalorder %v3525, 0
          %v3527 = vsel %vm3526, %v3525, 0
          %v3528 = vshrl.u32 %v3527, 5
          %v3529 = vand.u32 %v3527, 31
          %v3530 = vsub.s32 32, %v3529
          %v3531 = vshrl.u32 683565275, %v3530
          %v3532 = vshll.u32 683565275, %v3529
          %v3533 = vshrl.u32 2475754826, %v3530
          %v3534 = vor.u32 %v3532, %v3533
          %v3535 = vshll.u32 2475754826, %v3529
          %v3536 = vshrl.u32 2131351028, %v3530
          %v3537 = vor.u32 %v3535, %v3536
          %v3538 = vshll.u32 2131351028, %v3529
          %v3539 = vshrl.u32 2102212464, %v3530
          %v3540 = vor.u32 %v3538, %v3539
          %v3541 = vshll.u32 2102212464, %v3529
          %v3542 = vshrl.u32 920167782, %v3530
          %v3543 = vor.u32 %v3541, %v3542
          %v3544 = vshll.u32 920167782, %v3529
          %v3545 = vshrl.u32 1326507024, %v3530
          %v3546 = vor.u32 %v3544, %v3545
          %vm3547 = vcmp.lt.s32.totalorder %v3528, 1
          %vm3548 = vcmp.lt.s32.totalorder %v3528, 2
          %vm3549 = vcmp.lt.s32.totalorder %v3528, 3
          %vm3550 = vcmp.lt.s32.totalorder %v3528, 4
          %v3551 = vsel %vm3547, %v3531, %v3534
          %v3552 = vsel %vm3550, %v3540, 2102212464
          %v3553 = vsel %vm3549, %v3537, %v3552
          %v3554 = vsel %vm3548, %v3551, %v3553
          %v3555 = vsel %vm3547, %v3534, %v3537
          %v3556 = vsel %vm3550, %v3543, 920167782
          %v3557 = vsel %vm3549, %v3540, %v3556
          %v3558 = vsel %vm3548, %v3555, %v3557
          %v3559 = vsel %vm3547, %v3537, %v3540
          %v3560 = vsel %vm3550, %v3546, 1326507024
          %v3561 = vsel %vm3549, %v3543, %v3560
          %v3562 = vsel %vm3548, %v3559, %v3561
          %v3563 = vshll.u32 %v3523, 8
          %v3564 = vmul.u32.u64.compose %v3563, %v3562
          %v3565 = vextract.low.u32 %v3564
          %v3566 = vextract.high.u32 %v3564
          %v3567 = vmul.u32.u64.compose %v3563, %v3558
          %v3568 = vextract.low.u32 %v3567
          %v3569 = vextract.high.u32 %v3567
          %v3570 = vmul.u32 %v3563, %v3554
          %v3571 = vadd.s32 %v3566, %v3568
          %vm3572 = vc.u32 %v3566, %v3568
          %v3573 = vadd.s32 %v3569, 1
          %v3574 = vsel %vm3572, %v3573, %v3569
          %v3575 = vadd.s32 %v3570, %v3574
          %v3576 = vadd.s32 %v3575, 536870912
          %v3577 = vshrl.u32 %v3576, 30
          %v3578 = vshll.u32 %v3577, 30
          %v3579 = vsub.s32 %v3575, %v3578
          %vm3580 = vcmp.lt.s32.totalorder %v3579, 0
          %v3581 = vsub.s32 0, %v3579
          %v3582 = vsel %vm3580, %v3581, %v3579
          %v3583 = vclz %v3582
          %v3584 = vsub.s32 %v3583, 2
          %vm3585 = vcmp.gt.s32.totalorder 0, %v3584
          %v3586 = vsel %vm3585, 0, %v3584
          %v3587 = vsub.s32 32, %v3586
          %v3588 = vshll.u32 %v3579, %v3586
          %v3589 = vshrl.u32 %v3571, %v3587
          %v3590 = vor.u32 %v3588, %v3589
          %v3591 = vsub.s32 4294967266, %v3586
          %v3592 = vadd.s32 %v3591, 127
          %v3593 = vshll.u32 %v3592, 23
          %v3594 = vor.u32 4788187, %v3593
          %v3595 = vand.u32 2147483647, %v3594
          %v3597 = vcvt.s32.f32 %v3590
          %v3598 = vmul.f32 %v3597, %v3595
          %v3599 = vxor.u32 %v3598, 2147483648
          %v3600 = vsel %vm3517, %v3599, %v3598
          %v3601 = vsub.s32 4, %v3577
          %v3602 = vsel %vm3517, %v3601, %v3577
          %v3603 = vsel %vm3516, %v321, %v3600
          %v3604 = vsel %vm3516, 0, %v3602
          %v3605 = vcosq.f32.pop %v3603
          %v3606 = vsinq.f32.pop %v3603
          %vm3607 = vweird.f32 %v321
          %v3608 = vand.u32 %v3604, 3
          %vm3609 = vcmp.lt.s32.totalorder %v3608, 2
          %vm3610 = vcmp.eq.s32.totalorder %v3608, 0
          %v3611 = vxor.u32 %v3606, 2147483648
          %v3612 = vsel %vm3610, %v3605, %v3611
          %vm3613 = vcmp.eq.s32.totalorder %v3608, 2
          %v3614 = vxor.u32 %v3605, 2147483648
          %v3615 = vsel %vm3613, %v3614, %v3606
          %v3616 = vsel %vm3609, %v3612, %v3615
          %v3617 = vsel %vm3607, nan, %v3616
          %3618 = vst [vmem:[#allocation2] sm:$0xff] %v424
          %3619 = vst [vmem:[#allocation2 + $0x8] sm:$0xff] %v527
          %3620 = vst [vmem:[#allocation2 + $0x20] sm:$0xff] %v630
          %3621 = vst [vmem:[#allocation2 + $0x28] sm:$0xff] %v733
          %3622 = vst [vmem:[#allocation2 + $0x40] sm:$0xff] %v836
          %3623 = vst [vmem:[#allocation2 + $0x48] sm:$0xff] %v939
          %3624 = vst [vmem:[#allocation2 + $0x60] sm:$0xff] %v1042
          %3625 = vst [vmem:[#allocation2 + $0x68] sm:$0xff] %v1145
          %3626 = vst [vmem:[#allocation2 + $0x80] sm:$0xff] %v1248
          %3627 = vst [vmem:[#allocation2 + $0x88] sm:$0xff] %v1351
          %3628 = vst [vmem:[#allocation2 + $0xa0] sm:$0xff] %v1454
          %3629 = vst [vmem:[#allocation2 + $0xa8] sm:$0xff] %v1557
          %3630 = vst [vmem:[#allocation2 + $0xc0] sm:$0xff] %v1660
          %3631 = vst [vmem:[#allocation2 + $0xc8] sm:$0xff] %v1763
          %3632 = vst [vmem:[#allocation2 + $0xe0] sm:$0xff] %v1866
          %3633 = vst [vmem:[#allocation2 + $0xe8] sm:$0xff] %v1969
          %3634 = vst [vmem:[#allocation2 + $0x100] sm:$0xff] %v2072
          %3635 = vst [vmem:[#allocation2 + $0x108] sm:$0xff] %v2175
          %3636 = vst [vmem:[#allocation2 + $0x120] sm:$0xff] %v2278
          %3637 = vst [vmem:[#allocation2 + $0x128] sm:$0xff] %v2381
          %3638 = vst [vmem:[#allocation2 + $0x140] sm:$0xff] %v2484
          %3639 = vst [vmem:[#allocation2 + $0x148] sm:$0xff] %v2587
          %3640 = vst [vmem:[#allocation2 + $0x160] sm:$0xff] %v2690
          %3641 = vst [vmem:[#allocation2 + $0x168] sm:$0xff] %v2793
          %3642 = vst [vmem:[#allocation2 + $0x180] sm:$0xff] %v2896
          %3643 = vst [vmem:[#allocation2 + $0x188] sm:$0xff] %v2999
          %3644 = vst [vmem:[#allocation2 + $0x1a0] sm:$0xff] %v3102
          %3645 = vst [vmem:[#allocation2 + $0x1a8] sm:$0xff] %v3205
          %3646 = vst [vmem:[#allocation2 + $0x1c0] sm:$0xff] %v3308
          %3647 = vst [vmem:[#allocation2 + $0x1c8] sm:$0xff] %v3411
          %3648 = vst [vmem:[#allocation2 + $0x1e0] sm:$0xff] %v3514
          %3649 = vst [vmem:[#allocation2 + $0x1e8] sm:$0xff] %v3617
          %v3650 = vand.u32 2147483647, %v290
          %vm3651 = vcmp.le.f32.partialorder %v3650, 0.7853982
          %vm3652 = vcmp.lt.s32.totalorder %v290, 0
          %v3653 = vand.u32 %v290, 2139095040
          %v3654 = vshrl.u32 %v3653, 23
          %v3655 = vsub.s32 %v3654, 127
          %v3656 = vand.u32 2147483647, %v290
          %v3657 = vand.u32 %v3656, 8388607
          %v3658 = vor.u32 %v3657, 8388608
          %v3659 = vsub.s32 0, %v3658
          %v3660 = vadd.s32 %v3655, 1
          %vm3661 = vcmp.gt.s32.totalorder %v3660, 0
          %v3662 = vsel %vm3661, %v3660, 0
          %v3663 = vshrl.u32 %v3662, 5
          %v3664 = vand.u32 %v3662, 31
          %v3665 = vsub.s32 32, %v3664
          %v3666 = vshrl.u32 683565275, %v3665
          %v3667 = vshll.u32 683565275, %v3664
          %v3668 = vshrl.u32 2475754826, %v3665
          %v3669 = vor.u32 %v3667, %v3668
          %v3670 = vshll.u32 2475754826, %v3664
          %v3671 = vshrl.u32 2131351028, %v3665
          %v3672 = vor.u32 %v3670, %v3671
          %v3673 = vshll.u32 2131351028, %v3664
          %v3674 = vshrl.u32 2102212464, %v3665
          %v3675 = vor.u32 %v3673, %v3674
          %v3676 = vshll.u32 2102212464, %v3664
          %v3677 = vshrl.u32 920167782, %v3665
          %v3678 = vor.u32 %v3676, %v3677
          %v3679 = vshll.u32 920167782, %v3664
          %v3680 = vshrl.u32 1326507024, %v3665
          %v3681 = vor.u32 %v3679, %v3680
          %vm3682 = vcmp.lt.s32.totalorder %v3663, 1
          %vm3683 = vcmp.lt.s32.totalorder %v3663, 2
          %vm3684 = vcmp.lt.s32.totalorder %v3663, 3
          %vm3685 = vcmp.lt.s32.totalorder %v3663, 4
          %v3686 = vsel %vm3682, %v3666, %v3669
          %v3687 = vsel %vm3685, %v3675, 2102212464
          %v3688 = vsel %vm3684, %v3672, %v3687
          %v3689 = vsel %vm3683, %v3686, %v3688
          %v3690 = vsel %vm3682, %v3669, %v3672
          %v3691 = vsel %vm3685, %v3678, 920167782
          %v3692 = vsel %vm3684, %v3675, %v3691
          %v3693 = vsel %vm3683, %v3690, %v3692
          %v3694 = vsel %vm3682, %v3672, %v3675
          %v3695 = vsel %vm3685, %v3681, 1326507024
          %v3696 = vsel %vm3684, %v3678, %v3695
          %v3697 = vsel %vm3683, %v3694, %v3696
          %v3698 = vshll.u32 %v3658, 8
          %v3699 = vmul.u32.u64.compose %v3698, %v3697
          %v3700 = vextract.low.u32 %v3699
          %v3701 = vextract.high.u32 %v3699
          %v3702 = vmul.u32.u64.compose %v3698, %v3693
          %v3703 = vextract.low.u32 %v3702
          %v3704 = vextract.high.u32 %v3702
          %v3705 = vmul.u32 %v3698, %v3689
          %v3706 = vadd.s32 %v3701, %v3703
          %vm3707 = vc.u32 %v3701, %v3703
          %v3708 = vadd.s32 %v3704, 1
          %v3709 = vsel %vm3707, %v3708, %v3704
          %v3710 = vadd.s32 %v3705, %v3709
          %v3711 = vadd.s32 %v3710, 536870912
          %v3712 = vshrl.u32 %v3711, 30
          %v3713 = vshll.u32 %v3712, 30
          %v3714 = vsub.s32 %v3710, %v3713
          %vm3715 = vcmp.lt.s32.totalorder %v3714, 0
          %v3716 = vsub.s32 0, %v3714
          %v3717 = vsel %vm3715, %v3716, %v3714
          %v3718 = vclz %v3717
          %v3719 = vsub.s32 %v3718, 2
          %vm3720 = vcmp.gt.s32.totalorder 0, %v3719
          %v3721 = vsel %vm3720, 0, %v3719
          %v3722 = vsub.s32 32, %v3721
          %v3723 = vshll.u32 %v3714, %v3721
          %v3724 = vshrl.u32 %v3706, %v3722
          %v3725 = vor.u32 %v3723, %v3724
          %v3726 = vsub.s32 4294967266, %v3721
          %v3727 = vadd.s32 %v3726, 127
          %v3728 = vshll.u32 %v3727, 23
          %v3729 = vor.u32 4788187, %v3728
          %v3730 = vand.u32 2147483647, %v3729
          %v3732 = vcvt.s32.f32 %v3725
          %v3733 = vmul.f32 %v3732, %v3730
          %v3734 = vxor.u32 %v3733, 2147483648
          %v3735 = vsel %vm3652, %v3734, %v3733
          %v3736 = vsub.s32 4, %v3712
          %v3737 = vsel %vm3652, %v3736, %v3712
          %v3738 = vsel %vm3651, %v290, %v3735
          %v3739 = vsel %vm3651, 0, %v3737
          %v3740 = vcosq.f32.pop %v3738
          %v3741 = vsinq.f32.pop %v3738
          %vm3742 = vweird.f32 %v290
          %v3743 = vadd.s32 %v3739, 3
          %v3744 = vand.u32 %v3743, 3
          %vm3745 = vcmp.lt.s32.totalorder %v3744, 2
          %vm3746 = vcmp.eq.s32.totalorder %v3744, 0
          %v3747 = vxor.u32 %v3741, 2147483648
          %v3748 = vsel %vm3746, %v3740, %v3747
          %vm3749 = vcmp.eq.s32.totalorder %v3744, 2
          %v3750 = vxor.u32 %v3740, 2147483648
          %v3751 = vsel %vm3749, %v3750, %v3741
          %v3752 = vsel %vm3745, %v3748, %v3751
          %v3753 = vsel %vm3742, nan, %v3752
          %v3754 = vand.u32 2147483647, %v291
          %vm3755 = vcmp.le.f32.partialorder %v3754, 0.7853982
          %vm3756 = vcmp.lt.s32.totalorder %v291, 0
          %v3757 = vand.u32 %v291, 2139095040
          %v3758 = vshrl.u32 %v3757, 23
          %v3759 = vsub.s32 %v3758, 127
          %v3760 = vand.u32 2147483647, %v291
          %v3761 = vand.u32 %v3760, 8388607
          %v3762 = vor.u32 %v3761, 8388608
          %v3763 = vsub.s32 0, %v3762
          %v3764 = vadd.s32 %v3759, 1
          %vm3765 = vcmp.gt.s32.totalorder %v3764, 0
          %v3766 = vsel %vm3765, %v3764, 0
          %v3767 = vshrl.u32 %v3766, 5
          %v3768 = vand.u32 %v3766, 31
          %v3769 = vsub.s32 32, %v3768
          %v3770 = vshrl.u32 683565275, %v3769
          %v3771 = vshll.u32 683565275, %v3768
          %v3772 = vshrl.u32 2475754826, %v3769
          %v3773 = vor.u32 %v3771, %v3772
          %v3774 = vshll.u32 2475754826, %v3768
          %v3775 = vshrl.u32 2131351028, %v3769
          %v3776 = vor.u32 %v3774, %v3775
          %v3777 = vshll.u32 2131351028, %v3768
          %v3778 = vshrl.u32 2102212464, %v3769
          %v3779 = vor.u32 %v3777, %v3778
          %v3780 = vshll.u32 2102212464, %v3768
          %v3781 = vshrl.u32 920167782, %v3769
          %v3782 = vor.u32 %v3780, %v3781
          %v3783 = vshll.u32 920167782, %v3768
          %v3784 = vshrl.u32 1326507024, %v3769
          %v3785 = vor.u32 %v3783, %v3784
          %vm3786 = vcmp.lt.s32.totalorder %v3767, 1
          %vm3787 = vcmp.lt.s32.totalorder %v3767, 2
          %vm3788 = vcmp.lt.s32.totalorder %v3767, 3
          %vm3789 = vcmp.lt.s32.totalorder %v3767, 4
          %v3790 = vsel %vm3786, %v3770, %v3773
          %v3791 = vsel %vm3789, %v3779, 2102212464
          %v3792 = vsel %vm3788, %v3776, %v3791
          %v3793 = vsel %vm3787, %v3790, %v3792
          %v3794 = vsel %vm3786, %v3773, %v3776
          %v3795 = vsel %vm3789, %v3782, 920167782
          %v3796 = vsel %vm3788, %v3779, %v3795
          %v3797 = vsel %vm3787, %v3794, %v3796
          %v3798 = vsel %vm3786, %v3776, %v3779
          %v3799 = vsel %vm3789, %v3785, 1326507024
          %v3800 = vsel %vm3788, %v3782, %v3799
          %v3801 = vsel %vm3787, %v3798, %v3800
          %v3802 = vshll.u32 %v3762, 8
          %v3803 = vmul.u32.u64.compose %v3802, %v3801
          %v3804 = vextract.low.u32 %v3803
          %v3805 = vextract.high.u32 %v3803
          %v3806 = vmul.u32.u64.compose %v3802, %v3797
          %v3807 = vextract.low.u32 %v3806
          %v3808 = vextract.high.u32 %v3806
          %v3809 = vmul.u32 %v3802, %v3793
          %v3810 = vadd.s32 %v3805, %v3807
          %vm3811 = vc.u32 %v3805, %v3807
          %v3812 = vadd.s32 %v3808, 1
          %v3813 = vsel %vm3811, %v3812, %v3808
          %v3814 = vadd.s32 %v3809, %v3813
          %v3815 = vadd.s32 %v3814, 536870912
          %v3816 = vshrl.u32 %v3815, 30
          %v3817 = vshll.u32 %v3816, 30
          %v3818 = vsub.s32 %v3814, %v3817
          %vm3819 = vcmp.lt.s32.totalorder %v3818, 0
          %v3820 = vsub.s32 0, %v3818
          %v3821 = vsel %vm3819, %v3820, %v3818
          %v3822 = vclz %v3821
          %v3823 = vsub.s32 %v3822, 2
          %vm3824 = vcmp.gt.s32.totalorder 0, %v3823
          %v3825 = vsel %vm3824, 0, %v3823
          %v3826 = vsub.s32 32, %v3825
          %v3827 = vshll.u32 %v3818, %v3825
          %v3828 = vshrl.u32 %v3810, %v3826
          %v3829 = vor.u32 %v3827, %v3828
          %v3830 = vsub.s32 4294967266, %v3825
          %v3831 = vadd.s32 %v3830, 127
          %v3832 = vshll.u32 %v3831, 23
          %v3833 = vor.u32 4788187, %v3832
          %v3834 = vand.u32 2147483647, %v3833
          %v3836 = vcvt.s32.f32 %v3829
          %v3837 = vmul.f32 %v3836, %v3834
          %v3838 = vxor.u32 %v3837, 2147483648
          %v3839 = vsel %vm3756, %v3838, %v3837
          %v3840 = vsub.s32 4, %v3816
          %v3841 = vsel %vm3756, %v3840, %v3816
          %v3842 = vsel %vm3755, %v291, %v3839
          %v3843 = vsel %vm3755, 0, %v3841
          %v3844 = vcosq.f32.pop %v3842
          %v3845 = vsinq.f32.pop %v3842
          %vm3846 = vweird.f32 %v291
          %v3847 = vadd.s32 %v3843, 3
          %v3848 = vand.u32 %v3847, 3
          %vm3849 = vcmp.lt.s32.totalorder %v3848, 2
          %vm3850 = vcmp.eq.s32.totalorder %v3848, 0
          %v3851 = vxor.u32 %v3845, 2147483648
          %v3852 = vsel %vm3850, %v3844, %v3851
          %vm3853 = vcmp.eq.s32.totalorder %v3848, 2
          %v3854 = vxor.u32 %v3844, 2147483648
          %v3855 = vsel %vm3853, %v3854, %v3845
          %v3856 = vsel %vm3849, %v3852, %v3855
          %v3857 = vsel %vm3846, nan, %v3856
          %v3858 = vand.u32 2147483647, %v292
          %vm3859 = vcmp.le.f32.partialorder %v3858, 0.7853982
          %vm3860 = vcmp.lt.s32.totalorder %v292, 0
          %v3861 = vand.u32 %v292, 2139095040
          %v3862 = vshrl.u32 %v3861, 23
          %v3863 = vsub.s32 %v3862, 127
          %v3864 = vand.u32 2147483647, %v292
          %v3865 = vand.u32 %v3864, 8388607
          %v3866 = vor.u32 %v3865, 8388608
          %v3867 = vsub.s32 0, %v3866
          %v3868 = vadd.s32 %v3863, 1
          %vm3869 = vcmp.gt.s32.totalorder %v3868, 0
          %v3870 = vsel %vm3869, %v3868, 0
          %v3871 = vshrl.u32 %v3870, 5
          %v3872 = vand.u32 %v3870, 31
          %v3873 = vsub.s32 32, %v3872
          %v3874 = vshrl.u32 683565275, %v3873
          %v3875 = vshll.u32 683565275, %v3872
          %v3876 = vshrl.u32 2475754826, %v3873
          %v3877 = vor.u32 %v3875, %v3876
          %v3878 = vshll.u32 2475754826, %v3872
          %v3879 = vshrl.u32 2131351028, %v3873
          %v3880 = vor.u32 %v3878, %v3879
          %v3881 = vshll.u32 2131351028, %v3872
          %v3882 = vshrl.u32 2102212464, %v3873
          %v3883 = vor.u32 %v3881, %v3882
          %v3884 = vshll.u32 2102212464, %v3872
          %v3885 = vshrl.u32 920167782, %v3873
          %v3886 = vor.u32 %v3884, %v3885
          %v3887 = vshll.u32 920167782, %v3872
          %v3888 = vshrl.u32 1326507024, %v3873
          %v3889 = vor.u32 %v3887, %v3888
          %vm3890 = vcmp.lt.s32.totalorder %v3871, 1
          %vm3891 = vcmp.lt.s32.totalorder %v3871, 2
          %vm3892 = vcmp.lt.s32.totalorder %v3871, 3
          %vm3893 = vcmp.lt.s32.totalorder %v3871, 4
          %v3894 = vsel %vm3890, %v3874, %v3877
          %v3895 = vsel %vm3893, %v3883, 2102212464
          %v3896 = vsel %vm3892, %v3880, %v3895
          %v3897 = vsel %vm3891, %v3894, %v3896
          %v3898 = vsel %vm3890, %v3877, %v3880
          %v3899 = vsel %vm3893, %v3886, 920167782
          %v3900 = vsel %vm3892, %v3883, %v3899
          %v3901 = vsel %vm3891, %v3898, %v3900
          %v3902 = vsel %vm3890, %v3880, %v3883
          %v3903 = vsel %vm3893, %v3889, 1326507024
          %v3904 = vsel %vm3892, %v3886, %v3903
          %v3905 = vsel %vm3891, %v3902, %v3904
          %v3906 = vshll.u32 %v3866, 8
          %v3907 = vmul.u32.u64.compose %v3906, %v3905
          %v3908 = vextract.low.u32 %v3907
          %v3909 = vextract.high.u32 %v3907
          %v3910 = vmul.u32.u64.compose %v3906, %v3901
          %v3911 = vextract.low.u32 %v3910
          %v3912 = vextract.high.u32 %v3910
          %v3913 = vmul.u32 %v3906, %v3897
          %v3914 = vadd.s32 %v3909, %v3911
          %vm3915 = vc.u32 %v3909, %v3911
          %v3916 = vadd.s32 %v3912, 1
          %v3917 = vsel %vm3915, %v3916, %v3912
          %v3918 = vadd.s32 %v3913, %v3917
          %v3919 = vadd.s32 %v3918, 536870912
          %v3920 = vshrl.u32 %v3919, 30
          %v3921 = vshll.u32 %v3920, 30
          %v3922 = vsub.s32 %v3918, %v3921
          %vm3923 = vcmp.lt.s32.totalorder %v3922, 0
          %v3924 = vsub.s32 0, %v3922
          %v3925 = vsel %vm3923, %v3924, %v3922
          %v3926 = vclz %v3925
          %v3927 = vsub.s32 %v3926, 2
          %vm3928 = vcmp.gt.s32.totalorder 0, %v3927
          %v3929 = vsel %vm3928, 0, %v3927
          %v3930 = vsub.s32 32, %v3929
          %v3931 = vshll.u32 %v3922, %v3929
          %v3932 = vshrl.u32 %v3914, %v3930
          %v3933 = vor.u32 %v3931, %v3932
          %v3934 = vsub.s32 4294967266, %v3929
          %v3935 = vadd.s32 %v3934, 127
          %v3936 = vshll.u32 %v3935, 23
          %v3937 = vor.u32 4788187, %v3936
          %v3938 = vand.u32 2147483647, %v3937
          %v3940 = vcvt.s32.f32 %v3933
          %v3941 = vmul.f32 %v3940, %v3938
          %v3942 = vxor.u32 %v3941, 2147483648
          %v3943 = vsel %vm3860, %v3942, %v3941
          %v3944 = vsub.s32 4, %v3920
          %v3945 = vsel %vm3860, %v3944, %v3920
          %v3946 = vsel %vm3859, %v292, %v3943
          %v3947 = vsel %vm3859, 0, %v3945
          %v3948 = vcosq.f32.pop %v3946
          %v3949 = vsinq.f32.pop %v3946
          %vm3950 = vweird.f32 %v292
          %v3951 = vadd.s32 %v3947, 3
          %v3952 = vand.u32 %v3951, 3
          %vm3953 = vcmp.lt.s32.totalorder %v3952, 2
          %vm3954 = vcmp.eq.s32.totalorder %v3952, 0
          %v3955 = vxor.u32 %v3949, 2147483648
          %v3956 = vsel %vm3954, %v3948, %v3955
          %vm3957 = vcmp.eq.s32.totalorder %v3952, 2
          %v3958 = vxor.u32 %v3948, 2147483648
          %v3959 = vsel %vm3957, %v3958, %v3949
          %v3960 = vsel %vm3953, %v3956, %v3959
          %v3961 = vsel %vm3950, nan, %v3960
          %v3962 = vand.u32 2147483647, %v293
          %vm3963 = vcmp.le.f32.partialorder %v3962, 0.7853982
          %vm3964 = vcmp.lt.s32.totalorder %v293, 0
          %v3965 = vand.u32 %v293, 2139095040
          %v3966 = vshrl.u32 %v3965, 23
          %v3967 = vsub.s32 %v3966, 127
          %v3968 = vand.u32 2147483647, %v293
          %v3969 = vand.u32 %v3968, 8388607
          %v3970 = vor.u32 %v3969, 8388608
          %v3971 = vsub.s32 0, %v3970
          %v3972 = vadd.s32 %v3967, 1
          %vm3973 = vcmp.gt.s32.totalorder %v3972, 0
          %v3974 = vsel %vm3973, %v3972, 0
          %v3975 = vshrl.u32 %v3974, 5
          %v3976 = vand.u32 %v3974, 31
          %v3977 = vsub.s32 32, %v3976
          %v3978 = vshrl.u32 683565275, %v3977
          %v3979 = vshll.u32 683565275, %v3976
          %v3980 = vshrl.u32 2475754826, %v3977
          %v3981 = vor.u32 %v3979, %v3980
          %v3982 = vshll.u32 2475754826, %v3976
          %v3983 = vshrl.u32 2131351028, %v3977
          %v3984 = vor.u32 %v3982, %v3983
          %v3985 = vshll.u32 2131351028, %v3976
          %v3986 = vshrl.u32 2102212464, %v3977
          %v3987 = vor.u32 %v3985, %v3986
          %v3988 = vshll.u32 2102212464, %v3976
          %v3989 = vshrl.u32 920167782, %v3977
          %v3990 = vor.u32 %v3988, %v3989
          %v3991 = vshll.u32 920167782, %v3976
          %v3992 = vshrl.u32 1326507024, %v3977
          %v3993 = vor.u32 %v3991, %v3992
          %vm3994 = vcmp.lt.s32.totalorder %v3975, 1
          %vm3995 = vcmp.lt.s32.totalorder %v3975, 2
          %vm3996 = vcmp.lt.s32.totalorder %v3975, 3
          %vm3997 = vcmp.lt.s32.totalorder %v3975, 4
          %v3998 = vsel %vm3994, %v3978, %v3981
          %v3999 = vsel %vm3997, %v3987, 2102212464
          %v4000 = vsel %vm3996, %v3984, %v3999
          %v4001 = vsel %vm3995, %v3998, %v4000
          %v4002 = vsel %vm3994, %v3981, %v3984
          %v4003 = vsel %vm3997, %v3990, 920167782
          %v4004 = vsel %vm3996, %v3987, %v4003
          %v4005 = vsel %vm3995, %v4002, %v4004
          %v4006 = vsel %vm3994, %v3984, %v3987
          %v4007 = vsel %vm3997, %v3993, 1326507024
          %v4008 = vsel %vm3996, %v3990, %v4007
          %v4009 = vsel %vm3995, %v4006, %v4008
          %v4010 = vshll.u32 %v3970, 8
          %v4011 = vmul.u32.u64.compose %v4010, %v4009
          %v4012 = vextract.low.u32 %v4011
          %v4013 = vextract.high.u32 %v4011
          %v4014 = vmul.u32.u64.compose %v4010, %v4005
          %v4015 = vextract.low.u32 %v4014
          %v4016 = vextract.high.u32 %v4014
          %v4017 = vmul.u32 %v4010, %v4001
          %v4018 = vadd.s32 %v4013, %v4015
          %vm4019 = vc.u32 %v4013, %v4015
          %v4020 = vadd.s32 %v4016, 1
          %v4021 = vsel %vm4019, %v4020, %v4016
          %v4022 = vadd.s32 %v4017, %v4021
          %v4023 = vadd.s32 %v4022, 536870912
          %v4024 = vshrl.u32 %v4023, 30
          %v4025 = vshll.u32 %v4024, 30
          %v4026 = vsub.s32 %v4022, %v4025
          %vm4027 = vcmp.lt.s32.totalorder %v4026, 0
          %v4028 = vsub.s32 0, %v4026
          %v4029 = vsel %vm4027, %v4028, %v4026
          %v4030 = vclz %v4029
          %v4031 = vsub.s32 %v4030, 2
          %vm4032 = vcmp.gt.s32.totalorder 0, %v4031
          %v4033 = vsel %vm4032, 0, %v4031
          %v4034 = vsub.s32 32, %v4033
          %v4035 = vshll.u32 %v4026, %v4033
          %v4036 = vshrl.u32 %v4018, %v4034
          %v4037 = vor.u32 %v4035, %v4036
          %v4038 = vsub.s32 4294967266, %v4033
          %v4039 = vadd.s32 %v4038, 127
          %v4040 = vshll.u32 %v4039, 23
          %v4041 = vor.u32 4788187, %v4040
          %v4042 = vand.u32 2147483647, %v4041
          %v4044 = vcvt.s32.f32 %v4037
          %v4045 = vmul.f32 %v4044, %v4042
          %v4046 = vxor.u32 %v4045, 2147483648
          %v4047 = vsel %vm3964, %v4046, %v4045
          %v4048 = vsub.s32 4, %v4024
          %v4049 = vsel %vm3964, %v4048, %v4024
          %v4050 = vsel %vm3963, %v293, %v4047
          %v4051 = vsel %vm3963, 0, %v4049
          %v4052 = vcosq.f32.pop %v4050
          %v4053 = vsinq.f32.pop %v4050
          %vm4054 = vweird.f32 %v293
          %v4055 = vadd.s32 %v4051, 3
          %v4056 = vand.u32 %v4055, 3
          %vm4057 = vcmp.lt.s32.totalorder %v4056, 2
          %vm4058 = vcmp.eq.s32.totalorder %v4056, 0
          %v4059 = vxor.u32 %v4053, 2147483648
          %v4060 = vsel %vm4058, %v4052, %v4059
          %vm4061 = vcmp.eq.s32.totalorder %v4056, 2
          %v4062 = vxor.u32 %v4052, 2147483648
          %v4063 = vsel %vm4061, %v4062, %v4053
          %v4064 = vsel %vm4057, %v4060, %v4063
          %v4065 = vsel %vm4054, nan, %v4064
          %v4066 = vand.u32 2147483647, %v294
          %vm4067 = vcmp.le.f32.partialorder %v4066, 0.7853982
          %vm4068 = vcmp.lt.s32.totalorder %v294, 0
          %v4069 = vand.u32 %v294, 2139095040
          %v4070 = vshrl.u32 %v4069, 23
          %v4071 = vsub.s32 %v4070, 127
          %v4072 = vand.u32 2147483647, %v294
          %v4073 = vand.u32 %v4072, 8388607
          %v4074 = vor.u32 %v4073, 8388608
          %v4075 = vsub.s32 0, %v4074
          %v4076 = vadd.s32 %v4071, 1
          %vm4077 = vcmp.gt.s32.totalorder %v4076, 0
          %v4078 = vsel %vm4077, %v4076, 0
          %v4079 = vshrl.u32 %v4078, 5
          %v4080 = vand.u32 %v4078, 31
          %v4081 = vsub.s32 32, %v4080
          %v4082 = vshrl.u32 683565275, %v4081
          %v4083 = vshll.u32 683565275, %v4080
          %v4084 = vshrl.u32 2475754826, %v4081
          %v4085 = vor.u32 %v4083, %v4084
          %v4086 = vshll.u32 2475754826, %v4080
          %v4087 = vshrl.u32 2131351028, %v4081
          %v4088 = vor.u32 %v4086, %v4087
          %v4089 = vshll.u32 2131351028, %v4080
          %v4090 = vshrl.u32 2102212464, %v4081
          %v4091 = vor.u32 %v4089, %v4090
          %v4092 = vshll.u32 2102212464, %v4080
          %v4093 = vshrl.u32 920167782, %v4081
          %v4094 = vor.u32 %v4092, %v4093
          %v4095 = vshll.u32 920167782, %v4080
          %v4096 = vshrl.u32 1326507024, %v4081
          %v4097 = vor.u32 %v4095, %v4096
          %vm4098 = vcmp.lt.s32.totalorder %v4079, 1
          %vm4099 = vcmp.lt.s32.totalorder %v4079, 2
          %vm4100 = vcmp.lt.s32.totalorder %v4079, 3
          %vm4101 = vcmp.lt.s32.totalorder %v4079, 4
          %v4102 = vsel %vm4098, %v4082, %v4085
          %v4103 = vsel %vm4101, %v4091, 2102212464
          %v4104 = vsel %vm4100, %v4088, %v4103
          %v4105 = vsel %vm4099, %v4102, %v4104
          %v4106 = vsel %vm4098, %v4085, %v4088
          %v4107 = vsel %vm4101, %v4094, 920167782
          %v4108 = vsel %vm4100, %v4091, %v4107
          %v4109 = vsel %vm4099, %v4106, %v4108
          %v4110 = vsel %vm4098, %v4088, %v4091
          %v4111 = vsel %vm4101, %v4097, 1326507024
          %v4112 = vsel %vm4100, %v4094, %v4111
          %v4113 = vsel %vm4099, %v4110, %v4112
          %v4114 = vshll.u32 %v4074, 8
          %v4115 = vmul.u32.u64.compose %v4114, %v4113
          %v4116 = vextract.low.u32 %v4115
          %v4117 = vextract.high.u32 %v4115
          %v4118 = vmul.u32.u64.compose %v4114, %v4109
          %v4119 = vextract.low.u32 %v4118
          %v4120 = vextract.high.u32 %v4118
          %v4121 = vmul.u32 %v4114, %v4105
          %v4122 = vadd.s32 %v4117, %v4119
          %vm4123 = vc.u32 %v4117, %v4119
          %v4124 = vadd.s32 %v4120, 1
          %v4125 = vsel %vm4123, %v4124, %v4120
          %v4126 = vadd.s32 %v4121, %v4125
          %v4127 = vadd.s32 %v4126, 536870912
          %v4128 = vshrl.u32 %v4127, 30
          %v4129 = vshll.u32 %v4128, 30
          %v4130 = vsub.s32 %v4126, %v4129
          %vm4131 = vcmp.lt.s32.totalorder %v4130, 0
          %v4132 = vsub.s32 0, %v4130
          %v4133 = vsel %vm4131, %v4132, %v4130
          %v4134 = vclz %v4133
          %v4135 = vsub.s32 %v4134, 2
          %vm4136 = vcmp.gt.s32.totalorder 0, %v4135
          %v4137 = vsel %vm4136, 0, %v4135
          %v4138 = vsub.s32 32, %v4137
          %v4139 = vshll.u32 %v4130, %v4137
          %v4140 = vshrl.u32 %v4122, %v4138
          %v4141 = vor.u32 %v4139, %v4140
          %v4142 = vsub.s32 4294967266, %v4137
          %v4143 = vadd.s32 %v4142, 127
          %v4144 = vshll.u32 %v4143, 23
          %v4145 = vor.u32 4788187, %v4144
          %v4146 = vand.u32 2147483647, %v4145
          %v4148 = vcvt.s32.f32 %v4141
          %v4149 = vmul.f32 %v4148, %v4146
          %v4150 = vxor.u32 %v4149, 2147483648
          %v4151 = vsel %vm4068, %v4150, %v4149
          %v4152 = vsub.s32 4, %v4128
          %v4153 = vsel %vm4068, %v4152, %v4128
          %v4154 = vsel %vm4067, %v294, %v4151
          %v4155 = vsel %vm4067, 0, %v4153
          %v4156 = vcosq.f32.pop %v4154
          %v4157 = vsinq.f32.pop %v4154
          %vm4158 = vweird.f32 %v294
          %v4159 = vadd.s32 %v4155, 3
          %v4160 = vand.u32 %v4159, 3
          %vm4161 = vcmp.lt.s32.totalorder %v4160, 2
          %vm4162 = vcmp.eq.s32.totalorder %v4160, 0
          %v4163 = vxor.u32 %v4157, 2147483648
          %v4164 = vsel %vm4162, %v4156, %v4163
          %vm4165 = vcmp.eq.s32.totalorder %v4160, 2
          %v4166 = vxor.u32 %v4156, 2147483648
          %v4167 = vsel %vm4165, %v4166, %v4157
          %v4168 = vsel %vm4161, %v4164, %v4167
          %v4169 = vsel %vm4158, nan, %v4168
          %v4170 = vand.u32 2147483647, %v295
          %vm4171 = vcmp.le.f32.partialorder %v4170, 0.7853982
          %vm4172 = vcmp.lt.s32.totalorder %v295, 0
          %v4173 = vand.u32 %v295, 2139095040
          %v4174 = vshrl.u32 %v4173, 23
          %v4175 = vsub.s32 %v4174, 127
          %v4176 = vand.u32 2147483647, %v295
          %v4177 = vand.u32 %v4176, 8388607
          %v4178 = vor.u32 %v4177, 8388608
          %v4179 = vsub.s32 0, %v4178
          %v4180 = vadd.s32 %v4175, 1
          %vm4181 = vcmp.gt.s32.totalorder %v4180, 0
          %v4182 = vsel %vm4181, %v4180, 0
          %v4183 = vshrl.u32 %v4182, 5
          %v4184 = vand.u32 %v4182, 31
          %v4185 = vsub.s32 32, %v4184
          %v4186 = vshrl.u32 683565275, %v4185
          %v4187 = vshll.u32 683565275, %v4184
          %v4188 = vshrl.u32 2475754826, %v4185
          %v4189 = vor.u32 %v4187, %v4188
          %v4190 = vshll.u32 2475754826, %v4184
          %v4191 = vshrl.u32 2131351028, %v4185
          %v4192 = vor.u32 %v4190, %v4191
          %v4193 = vshll.u32 2131351028, %v4184
          %v4194 = vshrl.u32 2102212464, %v4185
          %v4195 = vor.u32 %v4193, %v4194
          %v4196 = vshll.u32 2102212464, %v4184
          %v4197 = vshrl.u32 920167782, %v4185
          %v4198 = vor.u32 %v4196, %v4197
          %v4199 = vshll.u32 920167782, %v4184
          %v4200 = vshrl.u32 1326507024, %v4185
          %v4201 = vor.u32 %v4199, %v4200
          %vm4202 = vcmp.lt.s32.totalorder %v4183, 1
          %vm4203 = vcmp.lt.s32.totalorder %v4183, 2
          %vm4204 = vcmp.lt.s32.totalorder %v4183, 3
          %vm4205 = vcmp.lt.s32.totalorder %v4183, 4
          %v4206 = vsel %vm4202, %v4186, %v4189
          %v4207 = vsel %vm4205, %v4195, 2102212464
          %v4208 = vsel %vm4204, %v4192, %v4207
          %v4209 = vsel %vm4203, %v4206, %v4208
          %v4210 = vsel %vm4202, %v4189, %v4192
          %v4211 = vsel %vm4205, %v4198, 920167782
          %v4212 = vsel %vm4204, %v4195, %v4211
          %v4213 = vsel %vm4203, %v4210, %v4212
          %v4214 = vsel %vm4202, %v4192, %v4195
          %v4215 = vsel %vm4205, %v4201, 1326507024
          %v4216 = vsel %vm4204, %v4198, %v4215
          %v4217 = vsel %vm4203, %v4214, %v4216
          %v4218 = vshll.u32 %v4178, 8
          %v4219 = vmul.u32.u64.compose %v4218, %v4217
          %v4220 = vextract.low.u32 %v4219
          %v4221 = vextract.high.u32 %v4219
          %v4222 = vmul.u32.u64.compose %v4218, %v4213
          %v4223 = vextract.low.u32 %v4222
          %v4224 = vextract.high.u32 %v4222
          %v4225 = vmul.u32 %v4218, %v4209
          %v4226 = vadd.s32 %v4221, %v4223
          %vm4227 = vc.u32 %v4221, %v4223
          %v4228 = vadd.s32 %v4224, 1
          %v4229 = vsel %vm4227, %v4228, %v4224
          %v4230 = vadd.s32 %v4225, %v4229
          %v4231 = vadd.s32 %v4230, 536870912
          %v4232 = vshrl.u32 %v4231, 30
          %v4233 = vshll.u32 %v4232, 30
          %v4234 = vsub.s32 %v4230, %v4233
          %vm4235 = vcmp.lt.s32.totalorder %v4234, 0
          %v4236 = vsub.s32 0, %v4234
          %v4237 = vsel %vm4235, %v4236, %v4234
          %v4238 = vclz %v4237
          %v4239 = vsub.s32 %v4238, 2
          %vm4240 = vcmp.gt.s32.totalorder 0, %v4239
          %v4241 = vsel %vm4240, 0, %v4239
          %v4242 = vsub.s32 32, %v4241
          %v4243 = vshll.u32 %v4234, %v4241
          %v4244 = vshrl.u32 %v4226, %v4242
          %v4245 = vor.u32 %v4243, %v4244
          %v4246 = vsub.s32 4294967266, %v4241
          %v4247 = vadd.s32 %v4246, 127
          %v4248 = vshll.u32 %v4247, 23
          %v4249 = vor.u32 4788187, %v4248
          %v4250 = vand.u32 2147483647, %v4249
          %v4252 = vcvt.s32.f32 %v4245
          %v4253 = vmul.f32 %v4252, %v4250
          %v4254 = vxor.u32 %v4253, 2147483648
          %v4255 = vsel %vm4172, %v4254, %v4253
          %v4256 = vsub.s32 4, %v4232
          %v4257 = vsel %vm4172, %v4256, %v4232
          %v4258 = vsel %vm4171, %v295, %v4255
          %v4259 = vsel %vm4171, 0, %v4257
          %v4260 = vcosq.f32.pop %v4258
          %v4261 = vsinq.f32.pop %v4258
          %vm4262 = vweird.f32 %v295
          %v4263 = vadd.s32 %v4259, 3
          %v4264 = vand.u32 %v4263, 3
          %vm4265 = vcmp.lt.s32.totalorder %v4264, 2
          %vm4266 = vcmp.eq.s32.totalorder %v4264, 0
          %v4267 = vxor.u32 %v4261, 2147483648
          %v4268 = vsel %vm4266, %v4260, %v4267
          %vm4269 = vcmp.eq.s32.totalorder %v4264, 2
          %v4270 = vxor.u32 %v4260, 2147483648
          %v4271 = vsel %vm4269, %v4270, %v4261
          %v4272 = vsel %vm4265, %v4268, %v4271
          %v4273 = vsel %vm4262, nan, %v4272
          %v4274 = vand.u32 2147483647, %v296
          %vm4275 = vcmp.le.f32.partialorder %v4274, 0.7853982
          %vm4276 = vcmp.lt.s32.totalorder %v296, 0
          %v4277 = vand.u32 %v296, 2139095040
          %v4278 = vshrl.u32 %v4277, 23
          %v4279 = vsub.s32 %v4278, 127
          %v4280 = vand.u32 2147483647, %v296
          %v4281 = vand.u32 %v4280, 8388607
          %v4282 = vor.u32 %v4281, 8388608
          %v4283 = vsub.s32 0, %v4282
          %v4284 = vadd.s32 %v4279, 1
          %vm4285 = vcmp.gt.s32.totalorder %v4284, 0
          %v4286 = vsel %vm4285, %v4284, 0
          %v4287 = vshrl.u32 %v4286, 5
          %v4288 = vand.u32 %v4286, 31
          %v4289 = vsub.s32 32, %v4288
          %v4290 = vshrl.u32 683565275, %v4289
          %v4291 = vshll.u32 683565275, %v4288
          %v4292 = vshrl.u32 2475754826, %v4289
          %v4293 = vor.u32 %v4291, %v4292
          %v4294 = vshll.u32 2475754826, %v4288
          %v4295 = vshrl.u32 2131351028, %v4289
          %v4296 = vor.u32 %v4294, %v4295
          %v4297 = vshll.u32 2131351028, %v4288
          %v4298 = vshrl.u32 2102212464, %v4289
          %v4299 = vor.u32 %v4297, %v4298
          %v4300 = vshll.u32 2102212464, %v4288
          %v4301 = vshrl.u32 920167782, %v4289
          %v4302 = vor.u32 %v4300, %v4301
          %v4303 = vshll.u32 920167782, %v4288
          %v4304 = vshrl.u32 1326507024, %v4289
          %v4305 = vor.u32 %v4303, %v4304
          %vm4306 = vcmp.lt.s32.totalorder %v4287, 1
          %vm4307 = vcmp.lt.s32.totalorder %v4287, 2
          %vm4308 = vcmp.lt.s32.totalorder %v4287, 3
          %vm4309 = vcmp.lt.s32.totalorder %v4287, 4
          %v4310 = vsel %vm4306, %v4290, %v4293
          %v4311 = vsel %vm4309, %v4299, 2102212464
          %v4312 = vsel %vm4308, %v4296, %v4311
          %v4313 = vsel %vm4307, %v4310, %v4312
          %v4314 = vsel %vm4306, %v4293, %v4296
          %v4315 = vsel %vm4309, %v4302, 920167782
          %v4316 = vsel %vm4308, %v4299, %v4315
          %v4317 = vsel %vm4307, %v4314, %v4316
          %v4318 = vsel %vm4306, %v4296, %v4299
          %v4319 = vsel %vm4309, %v4305, 1326507024
          %v4320 = vsel %vm4308, %v4302, %v4319
          %v4321 = vsel %vm4307, %v4318, %v4320
          %v4322 = vshll.u32 %v4282, 8
          %v4323 = vmul.u32.u64.compose %v4322, %v4321
          %v4324 = vextract.low.u32 %v4323
          %v4325 = vextract.high.u32 %v4323
          %v4326 = vmul.u32.u64.compose %v4322, %v4317
          %v4327 = vextract.low.u32 %v4326
          %v4328 = vextract.high.u32 %v4326
          %v4329 = vmul.u32 %v4322, %v4313
          %v4330 = vadd.s32 %v4325, %v4327
          %vm4331 = vc.u32 %v4325, %v4327
          %v4332 = vadd.s32 %v4328, 1
          %v4333 = vsel %vm4331, %v4332, %v4328
          %v4334 = vadd.s32 %v4329, %v4333
          %v4335 = vadd.s32 %v4334, 536870912
          %v4336 = vshrl.u32 %v4335, 30
          %v4337 = vshll.u32 %v4336, 30
          %v4338 = vsub.s32 %v4334, %v4337
          %vm4339 = vcmp.lt.s32.totalorder %v4338, 0
          %v4340 = vsub.s32 0, %v4338
          %v4341 = vsel %vm4339, %v4340, %v4338
          %v4342 = vclz %v4341
          %v4343 = vsub.s32 %v4342, 2
          %vm4344 = vcmp.gt.s32.totalorder 0, %v4343
          %v4345 = vsel %vm4344, 0, %v4343
          %v4346 = vsub.s32 32, %v4345
          %v4347 = vshll.u32 %v4338, %v4345
          %v4348 = vshrl.u32 %v4330, %v4346
          %v4349 = vor.u32 %v4347, %v4348
          %v4350 = vsub.s32 4294967266, %v4345
          %v4351 = vadd.s32 %v4350, 127
          %v4352 = vshll.u32 %v4351, 23
          %v4353 = vor.u32 4788187, %v4352
          %v4354 = vand.u32 2147483647, %v4353
          %v4356 = vcvt.s32.f32 %v4349
          %v4357 = vmul.f32 %v4356, %v4354
          %v4358 = vxor.u32 %v4357, 2147483648
          %v4359 = vsel %vm4276, %v4358, %v4357
          %v4360 = vsub.s32 4, %v4336
          %v4361 = vsel %vm4276, %v4360, %v4336
          %v4362 = vsel %vm4275, %v296, %v4359
          %v4363 = vsel %vm4275, 0, %v4361
          %v4364 = vcosq.f32.pop %v4362
          %v4365 = vsinq.f32.pop %v4362
          %vm4366 = vweird.f32 %v296
          %v4367 = vadd.s32 %v4363, 3
          %v4368 = vand.u32 %v4367, 3
          %vm4369 = vcmp.lt.s32.totalorder %v4368, 2
          %vm4370 = vcmp.eq.s32.totalorder %v4368, 0
          %v4371 = vxor.u32 %v4365, 2147483648
          %v4372 = vsel %vm4370, %v4364, %v4371
          %vm4373 = vcmp.eq.s32.totalorder %v4368, 2
          %v4374 = vxor.u32 %v4364, 2147483648
          %v4375 = vsel %vm4373, %v4374, %v4365
          %v4376 = vsel %vm4369, %v4372, %v4375
          %v4377 = vsel %vm4366, nan, %v4376
          %v4378 = vand.u32 2147483647, %v297
          %vm4379 = vcmp.le.f32.partialorder %v4378, 0.7853982
          %vm4380 = vcmp.lt.s32.totalorder %v297, 0
          %v4381 = vand.u32 %v297, 2139095040
          %v4382 = vshrl.u32 %v4381, 23
          %v4383 = vsub.s32 %v4382, 127
          %v4384 = vand.u32 2147483647, %v297
          %v4385 = vand.u32 %v4384, 8388607
          %v4386 = vor.u32 %v4385, 8388608
          %v4387 = vsub.s32 0, %v4386
          %v4388 = vadd.s32 %v4383, 1
          %vm4389 = vcmp.gt.s32.totalorder %v4388, 0
          %v4390 = vsel %vm4389, %v4388, 0
          %v4391 = vshrl.u32 %v4390, 5
          %v4392 = vand.u32 %v4390, 31
          %v4393 = vsub.s32 32, %v4392
          %v4394 = vshrl.u32 683565275, %v4393
          %v4395 = vshll.u32 683565275, %v4392
          %v4396 = vshrl.u32 2475754826, %v4393
          %v4397 = vor.u32 %v4395, %v4396
          %v4398 = vshll.u32 2475754826, %v4392
          %v4399 = vshrl.u32 2131351028, %v4393
          %v4400 = vor.u32 %v4398, %v4399
          %v4401 = vshll.u32 2131351028, %v4392
          %v4402 = vshrl.u32 2102212464, %v4393
          %v4403 = vor.u32 %v4401, %v4402
          %v4404 = vshll.u32 2102212464, %v4392
          %v4405 = vshrl.u32 920167782, %v4393
          %v4406 = vor.u32 %v4404, %v4405
          %v4407 = vshll.u32 920167782, %v4392
          %v4408 = vshrl.u32 1326507024, %v4393
          %v4409 = vor.u32 %v4407, %v4408
          %vm4410 = vcmp.lt.s32.totalorder %v4391, 1
          %vm4411 = vcmp.lt.s32.totalorder %v4391, 2
          %vm4412 = vcmp.lt.s32.totalorder %v4391, 3
          %vm4413 = vcmp.lt.s32.totalorder %v4391, 4
          %v4414 = vsel %vm4410, %v4394, %v4397
          %v4415 = vsel %vm4413, %v4403, 2102212464
          %v4416 = vsel %vm4412, %v4400, %v4415
          %v4417 = vsel %vm4411, %v4414, %v4416
          %v4418 = vsel %vm4410, %v4397, %v4400
          %v4419 = vsel %vm4413, %v4406, 920167782
          %v4420 = vsel %vm4412, %v4403, %v4419
          %v4421 = vsel %vm4411, %v4418, %v4420
          %v4422 = vsel %vm4410, %v4400, %v4403
          %v4423 = vsel %vm4413, %v4409, 1326507024
          %v4424 = vsel %vm4412, %v4406, %v4423
          %v4425 = vsel %vm4411, %v4422, %v4424
          %v4426 = vshll.u32 %v4386, 8
          %v4427 = vmul.u32.u64.compose %v4426, %v4425
          %v4428 = vextract.low.u32 %v4427
          %v4429 = vextract.high.u32 %v4427
          %v4430 = vmul.u32.u64.compose %v4426, %v4421
          %v4431 = vextract.low.u32 %v4430
          %v4432 = vextract.high.u32 %v4430
          %v4433 = vmul.u32 %v4426, %v4417
          %v4434 = vadd.s32 %v4429, %v4431
          %vm4435 = vc.u32 %v4429, %v4431
          %v4436 = vadd.s32 %v4432, 1
          %v4437 = vsel %vm4435, %v4436, %v4432
          %v4438 = vadd.s32 %v4433, %v4437
          %v4439 = vadd.s32 %v4438, 536870912
          %v4440 = vshrl.u32 %v4439, 30
          %v4441 = vshll.u32 %v4440, 30
          %v4442 = vsub.s32 %v4438, %v4441
          %vm4443 = vcmp.lt.s32.totalorder %v4442, 0
          %v4444 = vsub.s32 0, %v4442
          %v4445 = vsel %vm4443, %v4444, %v4442
          %v4446 = vclz %v4445
          %v4447 = vsub.s32 %v4446, 2
          %vm4448 = vcmp.gt.s32.totalorder 0, %v4447
          %v4449 = vsel %vm4448, 0, %v4447
          %v4450 = vsub.s32 32, %v4449
          %v4451 = vshll.u32 %v4442, %v4449
          %v4452 = vshrl.u32 %v4434, %v4450
          %v4453 = vor.u32 %v4451, %v4452
          %v4454 = vsub.s32 4294967266, %v4449
          %v4455 = vadd.s32 %v4454, 127
          %v4456 = vshll.u32 %v4455, 23
          %v4457 = vor.u32 4788187, %v4456
          %v4458 = vand.u32 2147483647, %v4457
          %v4460 = vcvt.s32.f32 %v4453
          %v4461 = vmul.f32 %v4460, %v4458
          %v4462 = vxor.u32 %v4461, 2147483648
          %v4463 = vsel %vm4380, %v4462, %v4461
          %v4464 = vsub.s32 4, %v4440
          %v4465 = vsel %vm4380, %v4464, %v4440
          %v4466 = vsel %vm4379, %v297, %v4463
          %v4467 = vsel %vm4379, 0, %v4465
          %v4468 = vcosq.f32.pop %v4466
          %v4469 = vsinq.f32.pop %v4466
          %vm4470 = vweird.f32 %v297
          %v4471 = vadd.s32 %v4467, 3
          %v4472 = vand.u32 %v4471, 3
          %vm4473 = vcmp.lt.s32.totalorder %v4472, 2
          %vm4474 = vcmp.eq.s32.totalorder %v4472, 0
          %v4475 = vxor.u32 %v4469, 2147483648
          %v4476 = vsel %vm4474, %v4468, %v4475
          %vm4477 = vcmp.eq.s32.totalorder %v4472, 2
          %v4478 = vxor.u32 %v4468, 2147483648
          %v4479 = vsel %vm4477, %v4478, %v4469
          %v4480 = vsel %vm4473, %v4476, %v4479
          %v4481 = vsel %vm4470, nan, %v4480
          %v4482 = vand.u32 2147483647, %v298
          %vm4483 = vcmp.le.f32.partialorder %v4482, 0.7853982
          %vm4484 = vcmp.lt.s32.totalorder %v298, 0
          %v4485 = vand.u32 %v298, 2139095040
          %v4486 = vshrl.u32 %v4485, 23
          %v4487 = vsub.s32 %v4486, 127
          %v4488 = vand.u32 2147483647, %v298
          %v4489 = vand.u32 %v4488, 8388607
          %v4490 = vor.u32 %v4489, 8388608
          %v4491 = vsub.s32 0, %v4490
          %v4492 = vadd.s32 %v4487, 1
          %vm4493 = vcmp.gt.s32.totalorder %v4492, 0
          %v4494 = vsel %vm4493, %v4492, 0
          %v4495 = vshrl.u32 %v4494, 5
          %v4496 = vand.u32 %v4494, 31
          %v4497 = vsub.s32 32, %v4496
          %v4498 = vshrl.u32 683565275, %v4497
          %v4499 = vshll.u32 683565275, %v4496
          %v4500 = vshrl.u32 2475754826, %v4497
          %v4501 = vor.u32 %v4499, %v4500
          %v4502 = vshll.u32 2475754826, %v4496
          %v4503 = vshrl.u32 2131351028, %v4497
          %v4504 = vor.u32 %v4502, %v4503
          %v4505 = vshll.u32 2131351028, %v4496
          %v4506 = vshrl.u32 2102212464, %v4497
          %v4507 = vor.u32 %v4505, %v4506
          %v4508 = vshll.u32 2102212464, %v4496
          %v4509 = vshrl.u32 920167782, %v4497
          %v4510 = vor.u32 %v4508, %v4509
          %v4511 = vshll.u32 920167782, %v4496
          %v4512 = vshrl.u32 1326507024, %v4497
          %v4513 = vor.u32 %v4511, %v4512
          %vm4514 = vcmp.lt.s32.totalorder %v4495, 1
          %vm4515 = vcmp.lt.s32.totalorder %v4495, 2
          %vm4516 = vcmp.lt.s32.totalorder %v4495, 3
          %vm4517 = vcmp.lt.s32.totalorder %v4495, 4
          %v4518 = vsel %vm4514, %v4498, %v4501
          %v4519 = vsel %vm4517, %v4507, 2102212464
          %v4520 = vsel %vm4516, %v4504, %v4519
          %v4521 = vsel %vm4515, %v4518, %v4520
          %v4522 = vsel %vm4514, %v4501, %v4504
          %v4523 = vsel %vm4517, %v4510, 920167782
          %v4524 = vsel %vm4516, %v4507, %v4523
          %v4525 = vsel %vm4515, %v4522, %v4524
          %v4526 = vsel %vm4514, %v4504, %v4507
          %v4527 = vsel %vm4517, %v4513, 1326507024
          %v4528 = vsel %vm4516, %v4510, %v4527
          %v4529 = vsel %vm4515, %v4526, %v4528
          %v4530 = vshll.u32 %v4490, 8
          %v4531 = vmul.u32.u64.compose %v4530, %v4529
          %v4532 = vextract.low.u32 %v4531
          %v4533 = vextract.high.u32 %v4531
          %v4534 = vmul.u32.u64.compose %v4530, %v4525
          %v4535 = vextract.low.u32 %v4534
          %v4536 = vextract.high.u32 %v4534
          %v4537 = vmul.u32 %v4530, %v4521
          %v4538 = vadd.s32 %v4533, %v4535
          %vm4539 = vc.u32 %v4533, %v4535
          %v4540 = vadd.s32 %v4536, 1
          %v4541 = vsel %vm4539, %v4540, %v4536
          %v4542 = vadd.s32 %v4537, %v4541
          %v4543 = vadd.s32 %v4542, 536870912
          %v4544 = vshrl.u32 %v4543, 30
          %v4545 = vshll.u32 %v4544, 30
          %v4546 = vsub.s32 %v4542, %v4545
          %vm4547 = vcmp.lt.s32.totalorder %v4546, 0
          %v4548 = vsub.s32 0, %v4546
          %v4549 = vsel %vm4547, %v4548, %v4546
          %v4550 = vclz %v4549
          %v4551 = vsub.s32 %v4550, 2
          %vm4552 = vcmp.gt.s32.totalorder 0, %v4551
          %v4553 = vsel %vm4552, 0, %v4551
          %v4554 = vsub.s32 32, %v4553
          %v4555 = vshll.u32 %v4546, %v4553
          %v4556 = vshrl.u32 %v4538, %v4554
          %v4557 = vor.u32 %v4555, %v4556
          %v4558 = vsub.s32 4294967266, %v4553
          %v4559 = vadd.s32 %v4558, 127
          %v4560 = vshll.u32 %v4559, 23
          %v4561 = vor.u32 4788187, %v4560
          %v4562 = vand.u32 2147483647, %v4561
          %v4564 = vcvt.s32.f32 %v4557
          %v4565 = vmul.f32 %v4564, %v4562
          %v4566 = vxor.u32 %v4565, 2147483648
          %v4567 = vsel %vm4484, %v4566, %v4565
          %v4568 = vsub.s32 4, %v4544
          %v4569 = vsel %vm4484, %v4568, %v4544
          %v4570 = vsel %vm4483, %v298, %v4567
          %v4571 = vsel %vm4483, 0, %v4569
          %v4572 = vcosq.f32.pop %v4570
          %v4573 = vsinq.f32.pop %v4570
          %vm4574 = vweird.f32 %v298
          %v4575 = vadd.s32 %v4571, 3
          %v4576 = vand.u32 %v4575, 3
          %vm4577 = vcmp.lt.s32.totalorder %v4576, 2
          %vm4578 = vcmp.eq.s32.totalorder %v4576, 0
          %v4579 = vxor.u32 %v4573, 2147483648
          %v4580 = vsel %vm4578, %v4572, %v4579
          %vm4581 = vcmp.eq.s32.totalorder %v4576, 2
          %v4582 = vxor.u32 %v4572, 2147483648
          %v4583 = vsel %vm4581, %v4582, %v4573
          %v4584 = vsel %vm4577, %v4580, %v4583
          %v4585 = vsel %vm4574, nan, %v4584
          %v4586 = vand.u32 2147483647, %v299
          %vm4587 = vcmp.le.f32.partialorder %v4586, 0.7853982
          %vm4588 = vcmp.lt.s32.totalorder %v299, 0
          %v4589 = vand.u32 %v299, 2139095040
          %v4590 = vshrl.u32 %v4589, 23
          %v4591 = vsub.s32 %v4590, 127
          %v4592 = vand.u32 2147483647, %v299
          %v4593 = vand.u32 %v4592, 8388607
          %v4594 = vor.u32 %v4593, 8388608
          %v4595 = vsub.s32 0, %v4594
          %v4596 = vadd.s32 %v4591, 1
          %vm4597 = vcmp.gt.s32.totalorder %v4596, 0
          %v4598 = vsel %vm4597, %v4596, 0
          %v4599 = vshrl.u32 %v4598, 5
          %v4600 = vand.u32 %v4598, 31
          %v4601 = vsub.s32 32, %v4600
          %v4602 = vshrl.u32 683565275, %v4601
          %v4603 = vshll.u32 683565275, %v4600
          %v4604 = vshrl.u32 2475754826, %v4601
          %v4605 = vor.u32 %v4603, %v4604
          %v4606 = vshll.u32 2475754826, %v4600
          %v4607 = vshrl.u32 2131351028, %v4601
          %v4608 = vor.u32 %v4606, %v4607
          %v4609 = vshll.u32 2131351028, %v4600
          %v4610 = vshrl.u32 2102212464, %v4601
          %v4611 = vor.u32 %v4609, %v4610
          %v4612 = vshll.u32 2102212464, %v4600
          %v4613 = vshrl.u32 920167782, %v4601
          %v4614 = vor.u32 %v4612, %v4613
          %v4615 = vshll.u32 920167782, %v4600
          %v4616 = vshrl.u32 1326507024, %v4601
          %v4617 = vor.u32 %v4615, %v4616
          %vm4618 = vcmp.lt.s32.totalorder %v4599, 1
          %vm4619 = vcmp.lt.s32.totalorder %v4599, 2
          %vm4620 = vcmp.lt.s32.totalorder %v4599, 3
          %vm4621 = vcmp.lt.s32.totalorder %v4599, 4
          %v4622 = vsel %vm4618, %v4602, %v4605
          %v4623 = vsel %vm4621, %v4611, 2102212464
          %v4624 = vsel %vm4620, %v4608, %v4623
          %v4625 = vsel %vm4619, %v4622, %v4624
          %v4626 = vsel %vm4618, %v4605, %v4608
          %v4627 = vsel %vm4621, %v4614, 920167782
          %v4628 = vsel %vm4620, %v4611, %v4627
          %v4629 = vsel %vm4619, %v4626, %v4628
          %v4630 = vsel %vm4618, %v4608, %v4611
          %v4631 = vsel %vm4621, %v4617, 1326507024
          %v4632 = vsel %vm4620, %v4614, %v4631
          %v4633 = vsel %vm4619, %v4630, %v4632
          %v4634 = vshll.u32 %v4594, 8
          %v4635 = vmul.u32.u64.compose %v4634, %v4633
          %v4636 = vextract.low.u32 %v4635
          %v4637 = vextract.high.u32 %v4635
          %v4638 = vmul.u32.u64.compose %v4634, %v4629
          %v4639 = vextract.low.u32 %v4638
          %v4640 = vextract.high.u32 %v4638
          %v4641 = vmul.u32 %v4634, %v4625
          %v4642 = vadd.s32 %v4637, %v4639
          %vm4643 = vc.u32 %v4637, %v4639
          %v4644 = vadd.s32 %v4640, 1
          %v4645 = vsel %vm4643, %v4644, %v4640
          %v4646 = vadd.s32 %v4641, %v4645
          %v4647 = vadd.s32 %v4646, 536870912
          %v4648 = vshrl.u32 %v4647, 30
          %v4649 = vshll.u32 %v4648, 30
          %v4650 = vsub.s32 %v4646, %v4649
          %vm4651 = vcmp.lt.s32.totalorder %v4650, 0
          %v4652 = vsub.s32 0, %v4650
          %v4653 = vsel %vm4651, %v4652, %v4650
          %v4654 = vclz %v4653
          %v4655 = vsub.s32 %v4654, 2
          %vm4656 = vcmp.gt.s32.totalorder 0, %v4655
          %v4657 = vsel %vm4656, 0, %v4655
          %v4658 = vsub.s32 32, %v4657
          %v4659 = vshll.u32 %v4650, %v4657
          %v4660 = vshrl.u32 %v4642, %v4658
          %v4661 = vor.u32 %v4659, %v4660
          %v4662 = vsub.s32 4294967266, %v4657
          %v4663 = vadd.s32 %v4662, 127
          %v4664 = vshll.u32 %v4663, 23
          %v4665 = vor.u32 4788187, %v4664
          %v4666 = vand.u32 2147483647, %v4665
          %v4668 = vcvt.s32.f32 %v4661
          %v4669 = vmul.f32 %v4668, %v4666
          %v4670 = vxor.u32 %v4669, 2147483648
          %v4671 = vsel %vm4588, %v4670, %v4669
          %v4672 = vsub.s32 4, %v4648
          %v4673 = vsel %vm4588, %v4672, %v4648
          %v4674 = vsel %vm4587, %v299, %v4671
          %v4675 = vsel %vm4587, 0, %v4673
          %v4676 = vcosq.f32.pop %v4674
          %v4677 = vsinq.f32.pop %v4674
          %vm4678 = vweird.f32 %v299
          %v4679 = vadd.s32 %v4675, 3
          %v4680 = vand.u32 %v4679, 3
          %vm4681 = vcmp.lt.s32.totalorder %v4680, 2
          %vm4682 = vcmp.eq.s32.totalorder %v4680, 0
          %v4683 = vxor.u32 %v4677, 2147483648
          %v4684 = vsel %vm4682, %v4676, %v4683
          %vm4685 = vcmp.eq.s32.totalorder %v4680, 2
          %v4686 = vxor.u32 %v4676, 2147483648
          %v4687 = vsel %vm4685, %v4686, %v4677
          %v4688 = vsel %vm4681, %v4684, %v4687
          %v4689 = vsel %vm4678, nan, %v4688
          %v4690 = vand.u32 2147483647, %v300
          %vm4691 = vcmp.le.f32.partialorder %v4690, 0.7853982
          %vm4692 = vcmp.lt.s32.totalorder %v300, 0
          %v4693 = vand.u32 %v300, 2139095040
          %v4694 = vshrl.u32 %v4693, 23
          %v4695 = vsub.s32 %v4694, 127
          %v4696 = vand.u32 2147483647, %v300
          %v4697 = vand.u32 %v4696, 8388607
          %v4698 = vor.u32 %v4697, 8388608
          %v4699 = vsub.s32 0, %v4698
          %v4700 = vadd.s32 %v4695, 1
          %vm4701 = vcmp.gt.s32.totalorder %v4700, 0
          %v4702 = vsel %vm4701, %v4700, 0
          %v4703 = vshrl.u32 %v4702, 5
          %v4704 = vand.u32 %v4702, 31
          %v4705 = vsub.s32 32, %v4704
          %v4706 = vshrl.u32 683565275, %v4705
          %v4707 = vshll.u32 683565275, %v4704
          %v4708 = vshrl.u32 2475754826, %v4705
          %v4709 = vor.u32 %v4707, %v4708
          %v4710 = vshll.u32 2475754826, %v4704
          %v4711 = vshrl.u32 2131351028, %v4705
          %v4712 = vor.u32 %v4710, %v4711
          %v4713 = vshll.u32 2131351028, %v4704
          %v4714 = vshrl.u32 2102212464, %v4705
          %v4715 = vor.u32 %v4713, %v4714
          %v4716 = vshll.u32 2102212464, %v4704
          %v4717 = vshrl.u32 920167782, %v4705
          %v4718 = vor.u32 %v4716, %v4717
          %v4719 = vshll.u32 920167782, %v4704
          %v4720 = vshrl.u32 1326507024, %v4705
          %v4721 = vor.u32 %v4719, %v4720
          %vm4722 = vcmp.lt.s32.totalorder %v4703, 1
          %vm4723 = vcmp.lt.s32.totalorder %v4703, 2
          %vm4724 = vcmp.lt.s32.totalorder %v4703, 3
          %vm4725 = vcmp.lt.s32.totalorder %v4703, 4
          %v4726 = vsel %vm4722, %v4706, %v4709
          %v4727 = vsel %vm4725, %v4715, 2102212464
          %v4728 = vsel %vm4724, %v4712, %v4727
          %v4729 = vsel %vm4723, %v4726, %v4728
          %v4730 = vsel %vm4722, %v4709, %v4712
          %v4731 = vsel %vm4725, %v4718, 920167782
          %v4732 = vsel %vm4724, %v4715, %v4731
          %v4733 = vsel %vm4723, %v4730, %v4732
          %v4734 = vsel %vm4722, %v4712, %v4715
          %v4735 = vsel %vm4725, %v4721, 1326507024
          %v4736 = vsel %vm4724, %v4718, %v4735
          %v4737 = vsel %vm4723, %v4734, %v4736
          %v4738 = vshll.u32 %v4698, 8
          %v4739 = vmul.u32.u64.compose %v4738, %v4737
          %v4740 = vextract.low.u32 %v4739
          %v4741 = vextract.high.u32 %v4739
          %v4742 = vmul.u32.u64.compose %v4738, %v4733
          %v4743 = vextract.low.u32 %v4742
          %v4744 = vextract.high.u32 %v4742
          %v4745 = vmul.u32 %v4738, %v4729
          %v4746 = vadd.s32 %v4741, %v4743
          %vm4747 = vc.u32 %v4741, %v4743
          %v4748 = vadd.s32 %v4744, 1
          %v4749 = vsel %vm4747, %v4748, %v4744
          %v4750 = vadd.s32 %v4745, %v4749
          %v4751 = vadd.s32 %v4750, 536870912
          %v4752 = vshrl.u32 %v4751, 30
          %v4753 = vshll.u32 %v4752, 30
          %v4754 = vsub.s32 %v4750, %v4753
          %vm4755 = vcmp.lt.s32.totalorder %v4754, 0
          %v4756 = vsub.s32 0, %v4754
          %v4757 = vsel %vm4755, %v4756, %v4754
          %v4758 = vclz %v4757
          %v4759 = vsub.s32 %v4758, 2
          %vm4760 = vcmp.gt.s32.totalorder 0, %v4759
          %v4761 = vsel %vm4760, 0, %v4759
          %v4762 = vsub.s32 32, %v4761
          %v4763 = vshll.u32 %v4754, %v4761
          %v4764 = vshrl.u32 %v4746, %v4762
          %v4765 = vor.u32 %v4763, %v4764
          %v4766 = vsub.s32 4294967266, %v4761
          %v4767 = vadd.s32 %v4766, 127
          %v4768 = vshll.u32 %v4767, 23
          %v4769 = vor.u32 4788187, %v4768
          %v4770 = vand.u32 2147483647, %v4769
          %v4772 = vcvt.s32.f32 %v4765
          %v4773 = vmul.f32 %v4772, %v4770
          %v4774 = vxor.u32 %v4773, 2147483648
          %v4775 = vsel %vm4692, %v4774, %v4773
          %v4776 = vsub.s32 4, %v4752
          %v4777 = vsel %vm4692, %v4776, %v4752
          %v4778 = vsel %vm4691, %v300, %v4775
          %v4779 = vsel %vm4691, 0, %v4777
          %v4780 = vcosq.f32.pop %v4778
          %v4781 = vsinq.f32.pop %v4778
          %vm4782 = vweird.f32 %v300
          %v4783 = vadd.s32 %v4779, 3
          %v4784 = vand.u32 %v4783, 3
          %vm4785 = vcmp.lt.s32.totalorder %v4784, 2
          %vm4786 = vcmp.eq.s32.totalorder %v4784, 0
          %v4787 = vxor.u32 %v4781, 2147483648
          %v4788 = vsel %vm4786, %v4780, %v4787
          %vm4789 = vcmp.eq.s32.totalorder %v4784, 2
          %v4790 = vxor.u32 %v4780, 2147483648
          %v4791 = vsel %vm4789, %v4790, %v4781
          %v4792 = vsel %vm4785, %v4788, %v4791
          %v4793 = vsel %vm4782, nan, %v4792
          %v4794 = vand.u32 2147483647, %v301
          %vm4795 = vcmp.le.f32.partialorder %v4794, 0.7853982
          %vm4796 = vcmp.lt.s32.totalorder %v301, 0
          %v4797 = vand.u32 %v301, 2139095040
          %v4798 = vshrl.u32 %v4797, 23
          %v4799 = vsub.s32 %v4798, 127
          %v4800 = vand.u32 2147483647, %v301
          %v4801 = vand.u32 %v4800, 8388607
          %v4802 = vor.u32 %v4801, 8388608
          %v4803 = vsub.s32 0, %v4802
          %v4804 = vadd.s32 %v4799, 1
          %vm4805 = vcmp.gt.s32.totalorder %v4804, 0
          %v4806 = vsel %vm4805, %v4804, 0
          %v4807 = vshrl.u32 %v4806, 5
          %v4808 = vand.u32 %v4806, 31
          %v4809 = vsub.s32 32, %v4808
          %v4810 = vshrl.u32 683565275, %v4809
          %v4811 = vshll.u32 683565275, %v4808
          %v4812 = vshrl.u32 2475754826, %v4809
          %v4813 = vor.u32 %v4811, %v4812
          %v4814 = vshll.u32 2475754826, %v4808
          %v4815 = vshrl.u32 2131351028, %v4809
          %v4816 = vor.u32 %v4814, %v4815
          %v4817 = vshll.u32 2131351028, %v4808
          %v4818 = vshrl.u32 2102212464, %v4809
          %v4819 = vor.u32 %v4817, %v4818
          %v4820 = vshll.u32 2102212464, %v4808
          %v4821 = vshrl.u32 920167782, %v4809
          %v4822 = vor.u32 %v4820, %v4821
          %v4823 = vshll.u32 920167782, %v4808
          %v4824 = vshrl.u32 1326507024, %v4809
          %v4825 = vor.u32 %v4823, %v4824
          %vm4826 = vcmp.lt.s32.totalorder %v4807, 1
          %vm4827 = vcmp.lt.s32.totalorder %v4807, 2
          %vm4828 = vcmp.lt.s32.totalorder %v4807, 3
          %vm4829 = vcmp.lt.s32.totalorder %v4807, 4
          %v4830 = vsel %vm4826, %v4810, %v4813
          %v4831 = vsel %vm4829, %v4819, 2102212464
          %v4832 = vsel %vm4828, %v4816, %v4831
          %v4833 = vsel %vm4827, %v4830, %v4832
          %v4834 = vsel %vm4826, %v4813, %v4816
          %v4835 = vsel %vm4829, %v4822, 920167782
          %v4836 = vsel %vm4828, %v4819, %v4835
          %v4837 = vsel %vm4827, %v4834, %v4836
          %v4838 = vsel %vm4826, %v4816, %v4819
          %v4839 = vsel %vm4829, %v4825, 1326507024
          %v4840 = vsel %vm4828, %v4822, %v4839
          %v4841 = vsel %vm4827, %v4838, %v4840
          %v4842 = vshll.u32 %v4802, 8
          %v4843 = vmul.u32.u64.compose %v4842, %v4841
          %v4844 = vextract.low.u32 %v4843
          %v4845 = vextract.high.u32 %v4843
          %v4846 = vmul.u32.u64.compose %v4842, %v4837
          %v4847 = vextract.low.u32 %v4846
          %v4848 = vextract.high.u32 %v4846
          %v4849 = vmul.u32 %v4842, %v4833
          %v4850 = vadd.s32 %v4845, %v4847
          %vm4851 = vc.u32 %v4845, %v4847
          %v4852 = vadd.s32 %v4848, 1
          %v4853 = vsel %vm4851, %v4852, %v4848
          %v4854 = vadd.s32 %v4849, %v4853
          %v4855 = vadd.s32 %v4854, 536870912
          %v4856 = vshrl.u32 %v4855, 30
          %v4857 = vshll.u32 %v4856, 30
          %v4858 = vsub.s32 %v4854, %v4857
          %vm4859 = vcmp.lt.s32.totalorder %v4858, 0
          %v4860 = vsub.s32 0, %v4858
          %v4861 = vsel %vm4859, %v4860, %v4858
          %v4862 = vclz %v4861
          %v4863 = vsub.s32 %v4862, 2
          %vm4864 = vcmp.gt.s32.totalorder 0, %v4863
          %v4865 = vsel %vm4864, 0, %v4863
          %v4866 = vsub.s32 32, %v4865
          %v4867 = vshll.u32 %v4858, %v4865
          %v4868 = vshrl.u32 %v4850, %v4866
          %v4869 = vor.u32 %v4867, %v4868
          %v4870 = vsub.s32 4294967266, %v4865
          %v4871 = vadd.s32 %v4870, 127
          %v4872 = vshll.u32 %v4871, 23
          %v4873 = vor.u32 4788187, %v4872
          %v4874 = vand.u32 2147483647, %v4873
          %v4876 = vcvt.s32.f32 %v4869
          %v4877 = vmul.f32 %v4876, %v4874
          %v4878 = vxor.u32 %v4877, 2147483648
          %v4879 = vsel %vm4796, %v4878, %v4877
          %v4880 = vsub.s32 4, %v4856
          %v4881 = vsel %vm4796, %v4880, %v4856
          %v4882 = vsel %vm4795, %v301, %v4879
          %v4883 = vsel %vm4795, 0, %v4881
          %v4884 = vcosq.f32.pop %v4882
          %v4885 = vsinq.f32.pop %v4882
          %vm4886 = vweird.f32 %v301
          %v4887 = vadd.s32 %v4883, 3
          %v4888 = vand.u32 %v4887, 3
          %vm4889 = vcmp.lt.s32.totalorder %v4888, 2
          %vm4890 = vcmp.eq.s32.totalorder %v4888, 0
          %v4891 = vxor.u32 %v4885, 2147483648
          %v4892 = vsel %vm4890, %v4884, %v4891
          %vm4893 = vcmp.eq.s32.totalorder %v4888, 2
          %v4894 = vxor.u32 %v4884, 2147483648
          %v4895 = vsel %vm4893, %v4894, %v4885
          %v4896 = vsel %vm4889, %v4892, %v4895
          %v4897 = vsel %vm4886, nan, %v4896
          %v4898 = vand.u32 2147483647, %v302
          %vm4899 = vcmp.le.f32.partialorder %v4898, 0.7853982
          %vm4900 = vcmp.lt.s32.totalorder %v302, 0
          %v4901 = vand.u32 %v302, 2139095040
          %v4902 = vshrl.u32 %v4901, 23
          %v4903 = vsub.s32 %v4902, 127
          %v4904 = vand.u32 2147483647, %v302
          %v4905 = vand.u32 %v4904, 8388607
          %v4906 = vor.u32 %v4905, 8388608
          %v4907 = vsub.s32 0, %v4906
          %v4908 = vadd.s32 %v4903, 1
          %vm4909 = vcmp.gt.s32.totalorder %v4908, 0
          %v4910 = vsel %vm4909, %v4908, 0
          %v4911 = vshrl.u32 %v4910, 5
          %v4912 = vand.u32 %v4910, 31
          %v4913 = vsub.s32 32, %v4912
          %v4914 = vshrl.u32 683565275, %v4913
          %v4915 = vshll.u32 683565275, %v4912
          %v4916 = vshrl.u32 2475754826, %v4913
          %v4917 = vor.u32 %v4915, %v4916
          %v4918 = vshll.u32 2475754826, %v4912
          %v4919 = vshrl.u32 2131351028, %v4913
          %v4920 = vor.u32 %v4918, %v4919
          %v4921 = vshll.u32 2131351028, %v4912
          %v4922 = vshrl.u32 2102212464, %v4913
          %v4923 = vor.u32 %v4921, %v4922
          %v4924 = vshll.u32 2102212464, %v4912
          %v4925 = vshrl.u32 920167782, %v4913
          %v4926 = vor.u32 %v4924, %v4925
          %v4927 = vshll.u32 920167782, %v4912
          %v4928 = vshrl.u32 1326507024, %v4913
          %v4929 = vor.u32 %v4927, %v4928
          %vm4930 = vcmp.lt.s32.totalorder %v4911, 1
          %vm4931 = vcmp.lt.s32.totalorder %v4911, 2
          %vm4932 = vcmp.lt.s32.totalorder %v4911, 3
          %vm4933 = vcmp.lt.s32.totalorder %v4911, 4
          %v4934 = vsel %vm4930, %v4914, %v4917
          %v4935 = vsel %vm4933, %v4923, 2102212464
          %v4936 = vsel %vm4932, %v4920, %v4935
          %v4937 = vsel %vm4931, %v4934, %v4936
          %v4938 = vsel %vm4930, %v4917, %v4920
          %v4939 = vsel %vm4933, %v4926, 920167782
          %v4940 = vsel %vm4932, %v4923, %v4939
          %v4941 = vsel %vm4931, %v4938, %v4940
          %v4942 = vsel %vm4930, %v4920, %v4923
          %v4943 = vsel %vm4933, %v4929, 1326507024
          %v4944 = vsel %vm4932, %v4926, %v4943
          %v4945 = vsel %vm4931, %v4942, %v4944
          %v4946 = vshll.u32 %v4906, 8
          %v4947 = vmul.u32.u64.compose %v4946, %v4945
          %v4948 = vextract.low.u32 %v4947
          %v4949 = vextract.high.u32 %v4947
          %v4950 = vmul.u32.u64.compose %v4946, %v4941
          %v4951 = vextract.low.u32 %v4950
          %v4952 = vextract.high.u32 %v4950
          %v4953 = vmul.u32 %v4946, %v4937
          %v4954 = vadd.s32 %v4949, %v4951
          %vm4955 = vc.u32 %v4949, %v4951
          %v4956 = vadd.s32 %v4952, 1
          %v4957 = vsel %vm4955, %v4956, %v4952
          %v4958 = vadd.s32 %v4953, %v4957
          %v4959 = vadd.s32 %v4958, 536870912
          %v4960 = vshrl.u32 %v4959, 30
          %v4961 = vshll.u32 %v4960, 30
          %v4962 = vsub.s32 %v4958, %v4961
          %vm4963 = vcmp.lt.s32.totalorder %v4962, 0
          %v4964 = vsub.s32 0, %v4962
          %v4965 = vsel %vm4963, %v4964, %v4962
          %v4966 = vclz %v4965
          %v4967 = vsub.s32 %v4966, 2
          %vm4968 = vcmp.gt.s32.totalorder 0, %v4967
          %v4969 = vsel %vm4968, 0, %v4967
          %v4970 = vsub.s32 32, %v4969
          %v4971 = vshll.u32 %v4962, %v4969
          %v4972 = vshrl.u32 %v4954, %v4970
          %v4973 = vor.u32 %v4971, %v4972
          %v4974 = vsub.s32 4294967266, %v4969
          %v4975 = vadd.s32 %v4974, 127
          %v4976 = vshll.u32 %v4975, 23
          %v4977 = vor.u32 4788187, %v4976
          %v4978 = vand.u32 2147483647, %v4977
          %v4980 = vcvt.s32.f32 %v4973
          %v4981 = vmul.f32 %v4980, %v4978
          %v4982 = vxor.u32 %v4981, 2147483648
          %v4983 = vsel %vm4900, %v4982, %v4981
          %v4984 = vsub.s32 4, %v4960
          %v4985 = vsel %vm4900, %v4984, %v4960
          %v4986 = vsel %vm4899, %v302, %v4983
          %v4987 = vsel %vm4899, 0, %v4985
          %v4988 = vcosq.f32.pop %v4986
          %v4989 = vsinq.f32.pop %v4986
          %vm4990 = vweird.f32 %v302
          %v4991 = vadd.s32 %v4987, 3
          %v4992 = vand.u32 %v4991, 3
          %vm4993 = vcmp.lt.s32.totalorder %v4992, 2
          %vm4994 = vcmp.eq.s32.totalorder %v4992, 0
          %v4995 = vxor.u32 %v4989, 2147483648
          %v4996 = vsel %vm4994, %v4988, %v4995
          %vm4997 = vcmp.eq.s32.totalorder %v4992, 2
          %v4998 = vxor.u32 %v4988, 2147483648
          %v4999 = vsel %vm4997, %v4998, %v4989
          %v5000 = vsel %vm4993, %v4996, %v4999
          %v5001 = vsel %vm4990, nan, %v5000
          %v5002 = vand.u32 2147483647, %v303
          %vm5003 = vcmp.le.f32.partialorder %v5002, 0.7853982
          %vm5004 = vcmp.lt.s32.totalorder %v303, 0
          %v5005 = vand.u32 %v303, 2139095040
          %v5006 = vshrl.u32 %v5005, 23
          %v5007 = vsub.s32 %v5006, 127
          %v5008 = vand.u32 2147483647, %v303
          %v5009 = vand.u32 %v5008, 8388607
          %v5010 = vor.u32 %v5009, 8388608
          %v5011 = vsub.s32 0, %v5010
          %v5012 = vadd.s32 %v5007, 1
          %vm5013 = vcmp.gt.s32.totalorder %v5012, 0
          %v5014 = vsel %vm5013, %v5012, 0
          %v5015 = vshrl.u32 %v5014, 5
          %v5016 = vand.u32 %v5014, 31
          %v5017 = vsub.s32 32, %v5016
          %v5018 = vshrl.u32 683565275, %v5017
          %v5019 = vshll.u32 683565275, %v5016
          %v5020 = vshrl.u32 2475754826, %v5017
          %v5021 = vor.u32 %v5019, %v5020
          %v5022 = vshll.u32 2475754826, %v5016
          %v5023 = vshrl.u32 2131351028, %v5017
          %v5024 = vor.u32 %v5022, %v5023
          %v5025 = vshll.u32 2131351028, %v5016
          %v5026 = vshrl.u32 2102212464, %v5017
          %v5027 = vor.u32 %v5025, %v5026
          %v5028 = vshll.u32 2102212464, %v5016
          %v5029 = vshrl.u32 920167782, %v5017
          %v5030 = vor.u32 %v5028, %v5029
          %v5031 = vshll.u32 920167782, %v5016
          %v5032 = vshrl.u32 1326507024, %v5017
          %v5033 = vor.u32 %v5031, %v5032
          %vm5034 = vcmp.lt.s32.totalorder %v5015, 1
          %vm5035 = vcmp.lt.s32.totalorder %v5015, 2
          %vm5036 = vcmp.lt.s32.totalorder %v5015, 3
          %vm5037 = vcmp.lt.s32.totalorder %v5015, 4
          %v5038 = vsel %vm5034, %v5018, %v5021
          %v5039 = vsel %vm5037, %v5027, 2102212464
          %v5040 = vsel %vm5036, %v5024, %v5039
          %v5041 = vsel %vm5035, %v5038, %v5040
          %v5042 = vsel %vm5034, %v5021, %v5024
          %v5043 = vsel %vm5037, %v5030, 920167782
          %v5044 = vsel %vm5036, %v5027, %v5043
          %v5045 = vsel %vm5035, %v5042, %v5044
          %v5046 = vsel %vm5034, %v5024, %v5027
          %v5047 = vsel %vm5037, %v5033, 1326507024
          %v5048 = vsel %vm5036, %v5030, %v5047
          %v5049 = vsel %vm5035, %v5046, %v5048
          %v5050 = vshll.u32 %v5010, 8
          %v5051 = vmul.u32.u64.compose %v5050, %v5049
          %v5052 = vextract.low.u32 %v5051
          %v5053 = vextract.high.u32 %v5051
          %v5054 = vmul.u32.u64.compose %v5050, %v5045
          %v5055 = vextract.low.u32 %v5054
          %v5056 = vextract.high.u32 %v5054
          %v5057 = vmul.u32 %v5050, %v5041
          %v5058 = vadd.s32 %v5053, %v5055
          %vm5059 = vc.u32 %v5053, %v5055
          %v5060 = vadd.s32 %v5056, 1
          %v5061 = vsel %vm5059, %v5060, %v5056
          %v5062 = vadd.s32 %v5057, %v5061
          %v5063 = vadd.s32 %v5062, 536870912
          %v5064 = vshrl.u32 %v5063, 30
          %v5065 = vshll.u32 %v5064, 30
          %v5066 = vsub.s32 %v5062, %v5065
          %vm5067 = vcmp.lt.s32.totalorder %v5066, 0
          %v5068 = vsub.s32 0, %v5066
          %v5069 = vsel %vm5067, %v5068, %v5066
          %v5070 = vclz %v5069
          %v5071 = vsub.s32 %v5070, 2
          %vm5072 = vcmp.gt.s32.totalorder 0, %v5071
          %v5073 = vsel %vm5072, 0, %v5071
          %v5074 = vsub.s32 32, %v5073
          %v5075 = vshll.u32 %v5066, %v5073
          %v5076 = vshrl.u32 %v5058, %v5074
          %v5077 = vor.u32 %v5075, %v5076
          %v5078 = vsub.s32 4294967266, %v5073
          %v5079 = vadd.s32 %v5078, 127
          %v5080 = vshll.u32 %v5079, 23
          %v5081 = vor.u32 4788187, %v5080
          %v5082 = vand.u32 2147483647, %v5081
          %v5084 = vcvt.s32.f32 %v5077
          %v5085 = vmul.f32 %v5084, %v5082
          %v5086 = vxor.u32 %v5085, 2147483648
          %v5087 = vsel %vm5004, %v5086, %v5085
          %v5088 = vsub.s32 4, %v5064
          %v5089 = vsel %vm5004, %v5088, %v5064
          %v5090 = vsel %vm5003, %v303, %v5087
          %v5091 = vsel %vm5003, 0, %v5089
          %v5092 = vcosq.f32.pop %v5090
          %v5093 = vsinq.f32.pop %v5090
          %vm5094 = vweird.f32 %v303
          %v5095 = vadd.s32 %v5091, 3
          %v5096 = vand.u32 %v5095, 3
          %vm5097 = vcmp.lt.s32.totalorder %v5096, 2
          %vm5098 = vcmp.eq.s32.totalorder %v5096, 0
          %v5099 = vxor.u32 %v5093, 2147483648
          %v5100 = vsel %vm5098, %v5092, %v5099
          %vm5101 = vcmp.eq.s32.totalorder %v5096, 2
          %v5102 = vxor.u32 %v5092, 2147483648
          %v5103 = vsel %vm5101, %v5102, %v5093
          %v5104 = vsel %vm5097, %v5100, %v5103
          %v5105 = vsel %vm5094, nan, %v5104
          %v5106 = vand.u32 2147483647, %v304
          %vm5107 = vcmp.le.f32.partialorder %v5106, 0.7853982
          %vm5108 = vcmp.lt.s32.totalorder %v304, 0
          %v5109 = vand.u32 %v304, 2139095040
          %v5110 = vshrl.u32 %v5109, 23
          %v5111 = vsub.s32 %v5110, 127
          %v5112 = vand.u32 2147483647, %v304
          %v5113 = vand.u32 %v5112, 8388607
          %v5114 = vor.u32 %v5113, 8388608
          %v5115 = vsub.s32 0, %v5114
          %v5116 = vadd.s32 %v5111, 1
          %vm5117 = vcmp.gt.s32.totalorder %v5116, 0
          %v5118 = vsel %vm5117, %v5116, 0
          %v5119 = vshrl.u32 %v5118, 5
          %v5120 = vand.u32 %v5118, 31
          %v5121 = vsub.s32 32, %v5120
          %v5122 = vshrl.u32 683565275, %v5121
          %v5123 = vshll.u32 683565275, %v5120
          %v5124 = vshrl.u32 2475754826, %v5121
          %v5125 = vor.u32 %v5123, %v5124
          %v5126 = vshll.u32 2475754826, %v5120
          %v5127 = vshrl.u32 2131351028, %v5121
          %v5128 = vor.u32 %v5126, %v5127
          %v5129 = vshll.u32 2131351028, %v5120
          %v5130 = vshrl.u32 2102212464, %v5121
          %v5131 = vor.u32 %v5129, %v5130
          %v5132 = vshll.u32 2102212464, %v5120
          %v5133 = vshrl.u32 920167782, %v5121
          %v5134 = vor.u32 %v5132, %v5133
          %v5135 = vshll.u32 920167782, %v5120
          %v5136 = vshrl.u32 1326507024, %v5121
          %v5137 = vor.u32 %v5135, %v5136
          %vm5138 = vcmp.lt.s32.totalorder %v5119, 1
          %vm5139 = vcmp.lt.s32.totalorder %v5119, 2
          %vm5140 = vcmp.lt.s32.totalorder %v5119, 3
          %vm5141 = vcmp.lt.s32.totalorder %v5119, 4
          %v5142 = vsel %vm5138, %v5122, %v5125
          %v5143 = vsel %vm5141, %v5131, 2102212464
          %v5144 = vsel %vm5140, %v5128, %v5143
          %v5145 = vsel %vm5139, %v5142, %v5144
          %v5146 = vsel %vm5138, %v5125, %v5128
          %v5147 = vsel %vm5141, %v5134, 920167782
          %v5148 = vsel %vm5140, %v5131, %v5147
          %v5149 = vsel %vm5139, %v5146, %v5148
          %v5150 = vsel %vm5138, %v5128, %v5131
          %v5151 = vsel %vm5141, %v5137, 1326507024
          %v5152 = vsel %vm5140, %v5134, %v5151
          %v5153 = vsel %vm5139, %v5150, %v5152
          %v5154 = vshll.u32 %v5114, 8
          %v5155 = vmul.u32.u64.compose %v5154, %v5153
          %v5156 = vextract.low.u32 %v5155
          %v5157 = vextract.high.u32 %v5155
          %v5158 = vmul.u32.u64.compose %v5154, %v5149
          %v5159 = vextract.low.u32 %v5158
          %v5160 = vextract.high.u32 %v5158
          %v5161 = vmul.u32 %v5154, %v5145
          %v5162 = vadd.s32 %v5157, %v5159
          %vm5163 = vc.u32 %v5157, %v5159
          %v5164 = vadd.s32 %v5160, 1
          %v5165 = vsel %vm5163, %v5164, %v5160
          %v5166 = vadd.s32 %v5161, %v5165
          %v5167 = vadd.s32 %v5166, 536870912
          %v5168 = vshrl.u32 %v5167, 30
          %v5169 = vshll.u32 %v5168, 30
          %v5170 = vsub.s32 %v5166, %v5169
          %vm5171 = vcmp.lt.s32.totalorder %v5170, 0
          %v5172 = vsub.s32 0, %v5170
          %v5173 = vsel %vm5171, %v5172, %v5170
          %v5174 = vclz %v5173
          %v5175 = vsub.s32 %v5174, 2
          %vm5176 = vcmp.gt.s32.totalorder 0, %v5175
          %v5177 = vsel %vm5176, 0, %v5175
          %v5178 = vsub.s32 32, %v5177
          %v5179 = vshll.u32 %v5170, %v5177
          %v5180 = vshrl.u32 %v5162, %v5178
          %v5181 = vor.u32 %v5179, %v5180
          %v5182 = vsub.s32 4294967266, %v5177
          %v5183 = vadd.s32 %v5182, 127
          %v5184 = vshll.u32 %v5183, 23
          %v5185 = vor.u32 4788187, %v5184
          %v5186 = vand.u32 2147483647, %v5185
          %v5188 = vcvt.s32.f32 %v5181
          %v5189 = vmul.f32 %v5188, %v5186
          %v5190 = vxor.u32 %v5189, 2147483648
          %v5191 = vsel %vm5108, %v5190, %v5189
          %v5192 = vsub.s32 4, %v5168
          %v5193 = vsel %vm5108, %v5192, %v5168
          %v5194 = vsel %vm5107, %v304, %v5191
          %v5195 = vsel %vm5107, 0, %v5193
          %v5196 = vcosq.f32.pop %v5194
          %v5197 = vsinq.f32.pop %v5194
          %vm5198 = vweird.f32 %v304
          %v5199 = vadd.s32 %v5195, 3
          %v5200 = vand.u32 %v5199, 3
          %vm5201 = vcmp.lt.s32.totalorder %v5200, 2
          %vm5202 = vcmp.eq.s32.totalorder %v5200, 0
          %v5203 = vxor.u32 %v5197, 2147483648
          %v5204 = vsel %vm5202, %v5196, %v5203
          %vm5205 = vcmp.eq.s32.totalorder %v5200, 2
          %v5206 = vxor.u32 %v5196, 2147483648
          %v5207 = vsel %vm5205, %v5206, %v5197
          %v5208 = vsel %vm5201, %v5204, %v5207
          %v5209 = vsel %vm5198, nan, %v5208
          %v5210 = vand.u32 2147483647, %v305
          %vm5211 = vcmp.le.f32.partialorder %v5210, 0.7853982
          %vm5212 = vcmp.lt.s32.totalorder %v305, 0
          %v5213 = vand.u32 %v305, 2139095040
          %v5214 = vshrl.u32 %v5213, 23
          %v5215 = vsub.s32 %v5214, 127
          %v5216 = vand.u32 2147483647, %v305
          %v5217 = vand.u32 %v5216, 8388607
          %v5218 = vor.u32 %v5217, 8388608
          %v5219 = vsub.s32 0, %v5218
          %v5220 = vadd.s32 %v5215, 1
          %vm5221 = vcmp.gt.s32.totalorder %v5220, 0
          %v5222 = vsel %vm5221, %v5220, 0
          %v5223 = vshrl.u32 %v5222, 5
          %v5224 = vand.u32 %v5222, 31
          %v5225 = vsub.s32 32, %v5224
          %v5226 = vshrl.u32 683565275, %v5225
          %v5227 = vshll.u32 683565275, %v5224
          %v5228 = vshrl.u32 2475754826, %v5225
          %v5229 = vor.u32 %v5227, %v5228
          %v5230 = vshll.u32 2475754826, %v5224
          %v5231 = vshrl.u32 2131351028, %v5225
          %v5232 = vor.u32 %v5230, %v5231
          %v5233 = vshll.u32 2131351028, %v5224
          %v5234 = vshrl.u32 2102212464, %v5225
          %v5235 = vor.u32 %v5233, %v5234
          %v5236 = vshll.u32 2102212464, %v5224
          %v5237 = vshrl.u32 920167782, %v5225
          %v5238 = vor.u32 %v5236, %v5237
          %v5239 = vshll.u32 920167782, %v5224
          %v5240 = vshrl.u32 1326507024, %v5225
          %v5241 = vor.u32 %v5239, %v5240
          %vm5242 = vcmp.lt.s32.totalorder %v5223, 1
          %vm5243 = vcmp.lt.s32.totalorder %v5223, 2
          %vm5244 = vcmp.lt.s32.totalorder %v5223, 3
          %vm5245 = vcmp.lt.s32.totalorder %v5223, 4
          %v5246 = vsel %vm5242, %v5226, %v5229
          %v5247 = vsel %vm5245, %v5235, 2102212464
          %v5248 = vsel %vm5244, %v5232, %v5247
          %v5249 = vsel %vm5243, %v5246, %v5248
          %v5250 = vsel %vm5242, %v5229, %v5232
          %v5251 = vsel %vm5245, %v5238, 920167782
          %v5252 = vsel %vm5244, %v5235, %v5251
          %v5253 = vsel %vm5243, %v5250, %v5252
          %v5254 = vsel %vm5242, %v5232, %v5235
          %v5255 = vsel %vm5245, %v5241, 1326507024
          %v5256 = vsel %vm5244, %v5238, %v5255
          %v5257 = vsel %vm5243, %v5254, %v5256
          %v5258 = vshll.u32 %v5218, 8
          %v5259 = vmul.u32.u64.compose %v5258, %v5257
          %v5260 = vextract.low.u32 %v5259
          %v5261 = vextract.high.u32 %v5259
          %v5262 = vmul.u32.u64.compose %v5258, %v5253
          %v5263 = vextract.low.u32 %v5262
          %v5264 = vextract.high.u32 %v5262
          %v5265 = vmul.u32 %v5258, %v5249
          %v5266 = vadd.s32 %v5261, %v5263
          %vm5267 = vc.u32 %v5261, %v5263
          %v5268 = vadd.s32 %v5264, 1
          %v5269 = vsel %vm5267, %v5268, %v5264
          %v5270 = vadd.s32 %v5265, %v5269
          %v5271 = vadd.s32 %v5270, 536870912
          %v5272 = vshrl.u32 %v5271, 30
          %v5273 = vshll.u32 %v5272, 30
          %v5274 = vsub.s32 %v5270, %v5273
          %vm5275 = vcmp.lt.s32.totalorder %v5274, 0
          %v5276 = vsub.s32 0, %v5274
          %v5277 = vsel %vm5275, %v5276, %v5274
          %v5278 = vclz %v5277
          %v5279 = vsub.s32 %v5278, 2
          %vm5280 = vcmp.gt.s32.totalorder 0, %v5279
          %v5281 = vsel %vm5280, 0, %v5279
          %v5282 = vsub.s32 32, %v5281
          %v5283 = vshll.u32 %v5274, %v5281
          %v5284 = vshrl.u32 %v5266, %v5282
          %v5285 = vor.u32 %v5283, %v5284
          %v5286 = vsub.s32 4294967266, %v5281
          %v5287 = vadd.s32 %v5286, 127
          %v5288 = vshll.u32 %v5287, 23
          %v5289 = vor.u32 4788187, %v5288
          %v5290 = vand.u32 2147483647, %v5289
          %v5292 = vcvt.s32.f32 %v5285
          %v5293 = vmul.f32 %v5292, %v5290
          %v5294 = vxor.u32 %v5293, 2147483648
          %v5295 = vsel %vm5212, %v5294, %v5293
          %v5296 = vsub.s32 4, %v5272
          %v5297 = vsel %vm5212, %v5296, %v5272
          %v5298 = vsel %vm5211, %v305, %v5295
          %v5299 = vsel %vm5211, 0, %v5297
          %v5300 = vcosq.f32.pop %v5298
          %v5301 = vsinq.f32.pop %v5298
          %vm5302 = vweird.f32 %v305
          %v5303 = vadd.s32 %v5299, 3
          %v5304 = vand.u32 %v5303, 3
          %vm5305 = vcmp.lt.s32.totalorder %v5304, 2
          %vm5306 = vcmp.eq.s32.totalorder %v5304, 0
          %v5307 = vxor.u32 %v5301, 2147483648
          %v5308 = vsel %vm5306, %v5300, %v5307
          %vm5309 = vcmp.eq.s32.totalorder %v5304, 2
          %v5310 = vxor.u32 %v5300, 2147483648
          %v5311 = vsel %vm5309, %v5310, %v5301
          %v5312 = vsel %vm5305, %v5308, %v5311
          %v5313 = vsel %vm5302, nan, %v5312
          %v5314 = vand.u32 2147483647, %v306
          %vm5315 = vcmp.le.f32.partialorder %v5314, 0.7853982
          %vm5316 = vcmp.lt.s32.totalorder %v306, 0
          %v5317 = vand.u32 %v306, 2139095040
          %v5318 = vshrl.u32 %v5317, 23
          %v5319 = vsub.s32 %v5318, 127
          %v5320 = vand.u32 2147483647, %v306
          %v5321 = vand.u32 %v5320, 8388607
          %v5322 = vor.u32 %v5321, 8388608
          %v5323 = vsub.s32 0, %v5322
          %v5324 = vadd.s32 %v5319, 1
          %vm5325 = vcmp.gt.s32.totalorder %v5324, 0
          %v5326 = vsel %vm5325, %v5324, 0
          %v5327 = vshrl.u32 %v5326, 5
          %v5328 = vand.u32 %v5326, 31
          %v5329 = vsub.s32 32, %v5328
          %v5330 = vshrl.u32 683565275, %v5329
          %v5331 = vshll.u32 683565275, %v5328
          %v5332 = vshrl.u32 2475754826, %v5329
          %v5333 = vor.u32 %v5331, %v5332
          %v5334 = vshll.u32 2475754826, %v5328
          %v5335 = vshrl.u32 2131351028, %v5329
          %v5336 = vor.u32 %v5334, %v5335
          %v5337 = vshll.u32 2131351028, %v5328
          %v5338 = vshrl.u32 2102212464, %v5329
          %v5339 = vor.u32 %v5337, %v5338
          %v5340 = vshll.u32 2102212464, %v5328
          %v5341 = vshrl.u32 920167782, %v5329
          %v5342 = vor.u32 %v5340, %v5341
          %v5343 = vshll.u32 920167782, %v5328
          %v5344 = vshrl.u32 1326507024, %v5329
          %v5345 = vor.u32 %v5343, %v5344
          %vm5346 = vcmp.lt.s32.totalorder %v5327, 1
          %vm5347 = vcmp.lt.s32.totalorder %v5327, 2
          %vm5348 = vcmp.lt.s32.totalorder %v5327, 3
          %vm5349 = vcmp.lt.s32.totalorder %v5327, 4
          %v5350 = vsel %vm5346, %v5330, %v5333
          %v5351 = vsel %vm5349, %v5339, 2102212464
          %v5352 = vsel %vm5348, %v5336, %v5351
          %v5353 = vsel %vm5347, %v5350, %v5352
          %v5354 = vsel %vm5346, %v5333, %v5336
          %v5355 = vsel %vm5349, %v5342, 920167782
          %v5356 = vsel %vm5348, %v5339, %v5355
          %v5357 = vsel %vm5347, %v5354, %v5356
          %v5358 = vsel %vm5346, %v5336, %v5339
          %v5359 = vsel %vm5349, %v5345, 1326507024
          %v5360 = vsel %vm5348, %v5342, %v5359
          %v5361 = vsel %vm5347, %v5358, %v5360
          %v5362 = vshll.u32 %v5322, 8
          %v5363 = vmul.u32.u64.compose %v5362, %v5361
          %v5364 = vextract.low.u32 %v5363
          %v5365 = vextract.high.u32 %v5363
          %v5366 = vmul.u32.u64.compose %v5362, %v5357
          %v5367 = vextract.low.u32 %v5366
          %v5368 = vextract.high.u32 %v5366
          %v5369 = vmul.u32 %v5362, %v5353
          %v5370 = vadd.s32 %v5365, %v5367
          %vm5371 = vc.u32 %v5365, %v5367
          %v5372 = vadd.s32 %v5368, 1
          %v5373 = vsel %vm5371, %v5372, %v5368
          %v5374 = vadd.s32 %v5369, %v5373
          %v5375 = vadd.s32 %v5374, 536870912
          %v5376 = vshrl.u32 %v5375, 30
          %v5377 = vshll.u32 %v5376, 30
          %v5378 = vsub.s32 %v5374, %v5377
          %vm5379 = vcmp.lt.s32.totalorder %v5378, 0
          %v5380 = vsub.s32 0, %v5378
          %v5381 = vsel %vm5379, %v5380, %v5378
          %v5382 = vclz %v5381
          %v5383 = vsub.s32 %v5382, 2
          %vm5384 = vcmp.gt.s32.totalorder 0, %v5383
          %v5385 = vsel %vm5384, 0, %v5383
          %v5386 = vsub.s32 32, %v5385
          %v5387 = vshll.u32 %v5378, %v5385
          %v5388 = vshrl.u32 %v5370, %v5386
          %v5389 = vor.u32 %v5387, %v5388
          %v5390 = vsub.s32 4294967266, %v5385
          %v5391 = vadd.s32 %v5390, 127
          %v5392 = vshll.u32 %v5391, 23
          %v5393 = vor.u32 4788187, %v5392
          %v5394 = vand.u32 2147483647, %v5393
          %v5396 = vcvt.s32.f32 %v5389
          %v5397 = vmul.f32 %v5396, %v5394
          %v5398 = vxor.u32 %v5397, 2147483648
          %v5399 = vsel %vm5316, %v5398, %v5397
          %v5400 = vsub.s32 4, %v5376
          %v5401 = vsel %vm5316, %v5400, %v5376
          %v5402 = vsel %vm5315, %v306, %v5399
          %v5403 = vsel %vm5315, 0, %v5401
          %v5404 = vcosq.f32.pop %v5402
          %v5405 = vsinq.f32.pop %v5402
          %vm5406 = vweird.f32 %v306
          %v5407 = vadd.s32 %v5403, 3
          %v5408 = vand.u32 %v5407, 3
          %vm5409 = vcmp.lt.s32.totalorder %v5408, 2
          %vm5410 = vcmp.eq.s32.totalorder %v5408, 0
          %v5411 = vxor.u32 %v5405, 2147483648
          %v5412 = vsel %vm5410, %v5404, %v5411
          %vm5413 = vcmp.eq.s32.totalorder %v5408, 2
          %v5414 = vxor.u32 %v5404, 2147483648
          %v5415 = vsel %vm5413, %v5414, %v5405
          %v5416 = vsel %vm5409, %v5412, %v5415
          %v5417 = vsel %vm5406, nan, %v5416
          %v5418 = vand.u32 2147483647, %v307
          %vm5419 = vcmp.le.f32.partialorder %v5418, 0.7853982
          %vm5420 = vcmp.lt.s32.totalorder %v307, 0
          %v5421 = vand.u32 %v307, 2139095040
          %v5422 = vshrl.u32 %v5421, 23
          %v5423 = vsub.s32 %v5422, 127
          %v5424 = vand.u32 2147483647, %v307
          %v5425 = vand.u32 %v5424, 8388607
          %v5426 = vor.u32 %v5425, 8388608
          %v5427 = vsub.s32 0, %v5426
          %v5428 = vadd.s32 %v5423, 1
          %vm5429 = vcmp.gt.s32.totalorder %v5428, 0
          %v5430 = vsel %vm5429, %v5428, 0
          %v5431 = vshrl.u32 %v5430, 5
          %v5432 = vand.u32 %v5430, 31
          %v5433 = vsub.s32 32, %v5432
          %v5434 = vshrl.u32 683565275, %v5433
          %v5435 = vshll.u32 683565275, %v5432
          %v5436 = vshrl.u32 2475754826, %v5433
          %v5437 = vor.u32 %v5435, %v5436
          %v5438 = vshll.u32 2475754826, %v5432
          %v5439 = vshrl.u32 2131351028, %v5433
          %v5440 = vor.u32 %v5438, %v5439
          %v5441 = vshll.u32 2131351028, %v5432
          %v5442 = vshrl.u32 2102212464, %v5433
          %v5443 = vor.u32 %v5441, %v5442
          %v5444 = vshll.u32 2102212464, %v5432
          %v5445 = vshrl.u32 920167782, %v5433
          %v5446 = vor.u32 %v5444, %v5445
          %v5447 = vshll.u32 920167782, %v5432
          %v5448 = vshrl.u32 1326507024, %v5433
          %v5449 = vor.u32 %v5447, %v5448
          %vm5450 = vcmp.lt.s32.totalorder %v5431, 1
          %vm5451 = vcmp.lt.s32.totalorder %v5431, 2
          %vm5452 = vcmp.lt.s32.totalorder %v5431, 3
          %vm5453 = vcmp.lt.s32.totalorder %v5431, 4
          %v5454 = vsel %vm5450, %v5434, %v5437
          %v5455 = vsel %vm5453, %v5443, 2102212464
          %v5456 = vsel %vm5452, %v5440, %v5455
          %v5457 = vsel %vm5451, %v5454, %v5456
          %v5458 = vsel %vm5450, %v5437, %v5440
          %v5459 = vsel %vm5453, %v5446, 920167782
          %v5460 = vsel %vm5452, %v5443, %v5459
          %v5461 = vsel %vm5451, %v5458, %v5460
          %v5462 = vsel %vm5450, %v5440, %v5443
          %v5463 = vsel %vm5453, %v5449, 1326507024
          %v5464 = vsel %vm5452, %v5446, %v5463
          %v5465 = vsel %vm5451, %v5462, %v5464
          %v5466 = vshll.u32 %v5426, 8
          %v5467 = vmul.u32.u64.compose %v5466, %v5465
          %v5468 = vextract.low.u32 %v5467
          %v5469 = vextract.high.u32 %v5467
          %v5470 = vmul.u32.u64.compose %v5466, %v5461
          %v5471 = vextract.low.u32 %v5470
          %v5472 = vextract.high.u32 %v5470
          %v5473 = vmul.u32 %v5466, %v5457
          %v5474 = vadd.s32 %v5469, %v5471
          %vm5475 = vc.u32 %v5469, %v5471
          %v5476 = vadd.s32 %v5472, 1
          %v5477 = vsel %vm5475, %v5476, %v5472
          %v5478 = vadd.s32 %v5473, %v5477
          %v5479 = vadd.s32 %v5478, 536870912
          %v5480 = vshrl.u32 %v5479, 30
          %v5481 = vshll.u32 %v5480, 30
          %v5482 = vsub.s32 %v5478, %v5481
          %vm5483 = vcmp.lt.s32.totalorder %v5482, 0
          %v5484 = vsub.s32 0, %v5482
          %v5485 = vsel %vm5483, %v5484, %v5482
          %v5486 = vclz %v5485
          %v5487 = vsub.s32 %v5486, 2
          %vm5488 = vcmp.gt.s32.totalorder 0, %v5487
          %v5489 = vsel %vm5488, 0, %v5487
          %v5490 = vsub.s32 32, %v5489
          %v5491 = vshll.u32 %v5482, %v5489
          %v5492 = vshrl.u32 %v5474, %v5490
          %v5493 = vor.u32 %v5491, %v5492
          %v5494 = vsub.s32 4294967266, %v5489
          %v5495 = vadd.s32 %v5494, 127
          %v5496 = vshll.u32 %v5495, 23
          %v5497 = vor.u32 4788187, %v5496
          %v5498 = vand.u32 2147483647, %v5497
          %v5500 = vcvt.s32.f32 %v5493
          %v5501 = vmul.f32 %v5500, %v5498
          %v5502 = vxor.u32 %v5501, 2147483648
          %v5503 = vsel %vm5420, %v5502, %v5501
          %v5504 = vsub.s32 4, %v5480
          %v5505 = vsel %vm5420, %v5504, %v5480
          %v5506 = vsel %vm5419, %v307, %v5503
          %v5507 = vsel %vm5419, 0, %v5505
          %v5508 = vcosq.f32.pop %v5506
          %v5509 = vsinq.f32.pop %v5506
          %vm5510 = vweird.f32 %v307
          %v5511 = vadd.s32 %v5507, 3
          %v5512 = vand.u32 %v5511, 3
          %vm5513 = vcmp.lt.s32.totalorder %v5512, 2
          %vm5514 = vcmp.eq.s32.totalorder %v5512, 0
          %v5515 = vxor.u32 %v5509, 2147483648
          %v5516 = vsel %vm5514, %v5508, %v5515
          %vm5517 = vcmp.eq.s32.totalorder %v5512, 2
          %v5518 = vxor.u32 %v5508, 2147483648
          %v5519 = vsel %vm5517, %v5518, %v5509
          %v5520 = vsel %vm5513, %v5516, %v5519
          %v5521 = vsel %vm5510, nan, %v5520
          %v5522 = vand.u32 2147483647, %v308
          %vm5523 = vcmp.le.f32.partialorder %v5522, 0.7853982
          %vm5524 = vcmp.lt.s32.totalorder %v308, 0
          %v5525 = vand.u32 %v308, 2139095040
          %v5526 = vshrl.u32 %v5525, 23
          %v5527 = vsub.s32 %v5526, 127
          %v5528 = vand.u32 2147483647, %v308
          %v5529 = vand.u32 %v5528, 8388607
          %v5530 = vor.u32 %v5529, 8388608
          %v5531 = vsub.s32 0, %v5530
          %v5532 = vadd.s32 %v5527, 1
          %vm5533 = vcmp.gt.s32.totalorder %v5532, 0
          %v5534 = vsel %vm5533, %v5532, 0
          %v5535 = vshrl.u32 %v5534, 5
          %v5536 = vand.u32 %v5534, 31
          %v5537 = vsub.s32 32, %v5536
          %v5538 = vshrl.u32 683565275, %v5537
          %v5539 = vshll.u32 683565275, %v5536
          %v5540 = vshrl.u32 2475754826, %v5537
          %v5541 = vor.u32 %v5539, %v5540
          %v5542 = vshll.u32 2475754826, %v5536
          %v5543 = vshrl.u32 2131351028, %v5537
          %v5544 = vor.u32 %v5542, %v5543
          %v5545 = vshll.u32 2131351028, %v5536
          %v5546 = vshrl.u32 2102212464, %v5537
          %v5547 = vor.u32 %v5545, %v5546
          %v5548 = vshll.u32 2102212464, %v5536
          %v5549 = vshrl.u32 920167782, %v5537
          %v5550 = vor.u32 %v5548, %v5549
          %v5551 = vshll.u32 920167782, %v5536
          %v5552 = vshrl.u32 1326507024, %v5537
          %v5553 = vor.u32 %v5551, %v5552
          %vm5554 = vcmp.lt.s32.totalorder %v5535, 1
          %vm5555 = vcmp.lt.s32.totalorder %v5535, 2
          %vm5556 = vcmp.lt.s32.totalorder %v5535, 3
          %vm5557 = vcmp.lt.s32.totalorder %v5535, 4
          %v5558 = vsel %vm5554, %v5538, %v5541
          %v5559 = vsel %vm5557, %v5547, 2102212464
          %v5560 = vsel %vm5556, %v5544, %v5559
          %v5561 = vsel %vm5555, %v5558, %v5560
          %v5562 = vsel %vm5554, %v5541, %v5544
          %v5563 = vsel %vm5557, %v5550, 920167782
          %v5564 = vsel %vm5556, %v5547, %v5563
          %v5565 = vsel %vm5555, %v5562, %v5564
          %v5566 = vsel %vm5554, %v5544, %v5547
          %v5567 = vsel %vm5557, %v5553, 1326507024
          %v5568 = vsel %vm5556, %v5550, %v5567
          %v5569 = vsel %vm5555, %v5566, %v5568
          %v5570 = vshll.u32 %v5530, 8
          %v5571 = vmul.u32.u64.compose %v5570, %v5569
          %v5572 = vextract.low.u32 %v5571
          %v5573 = vextract.high.u32 %v5571
          %v5574 = vmul.u32.u64.compose %v5570, %v5565
          %v5575 = vextract.low.u32 %v5574
          %v5576 = vextract.high.u32 %v5574
          %v5577 = vmul.u32 %v5570, %v5561
          %v5578 = vadd.s32 %v5573, %v5575
          %vm5579 = vc.u32 %v5573, %v5575
          %v5580 = vadd.s32 %v5576, 1
          %v5581 = vsel %vm5579, %v5580, %v5576
          %v5582 = vadd.s32 %v5577, %v5581
          %v5583 = vadd.s32 %v5582, 536870912
          %v5584 = vshrl.u32 %v5583, 30
          %v5585 = vshll.u32 %v5584, 30
          %v5586 = vsub.s32 %v5582, %v5585
          %vm5587 = vcmp.lt.s32.totalorder %v5586, 0
          %v5588 = vsub.s32 0, %v5586
          %v5589 = vsel %vm5587, %v5588, %v5586
          %v5590 = vclz %v5589
          %v5591 = vsub.s32 %v5590, 2
          %vm5592 = vcmp.gt.s32.totalorder 0, %v5591
          %v5593 = vsel %vm5592, 0, %v5591
          %v5594 = vsub.s32 32, %v5593
          %v5595 = vshll.u32 %v5586, %v5593
          %v5596 = vshrl.u32 %v5578, %v5594
          %v5597 = vor.u32 %v5595, %v5596
          %v5598 = vsub.s32 4294967266, %v5593
          %v5599 = vadd.s32 %v5598, 127
          %v5600 = vshll.u32 %v5599, 23
          %v5601 = vor.u32 4788187, %v5600
          %v5602 = vand.u32 2147483647, %v5601
          %v5604 = vcvt.s32.f32 %v5597
          %v5605 = vmul.f32 %v5604, %v5602
          %v5606 = vxor.u32 %v5605, 2147483648
          %v5607 = vsel %vm5524, %v5606, %v5605
          %v5608 = vsub.s32 4, %v5584
          %v5609 = vsel %vm5524, %v5608, %v5584
          %v5610 = vsel %vm5523, %v308, %v5607
          %v5611 = vsel %vm5523, 0, %v5609
          %v5612 = vcosq.f32.pop %v5610
          %v5613 = vsinq.f32.pop %v5610
          %vm5614 = vweird.f32 %v308
          %v5615 = vadd.s32 %v5611, 3
          %v5616 = vand.u32 %v5615, 3
          %vm5617 = vcmp.lt.s32.totalorder %v5616, 2
          %vm5618 = vcmp.eq.s32.totalorder %v5616, 0
          %v5619 = vxor.u32 %v5613, 2147483648
          %v5620 = vsel %vm5618, %v5612, %v5619
          %vm5621 = vcmp.eq.s32.totalorder %v5616, 2
          %v5622 = vxor.u32 %v5612, 2147483648
          %v5623 = vsel %vm5621, %v5622, %v5613
          %v5624 = vsel %vm5617, %v5620, %v5623
          %v5625 = vsel %vm5614, nan, %v5624
          %v5626 = vand.u32 2147483647, %v309
          %vm5627 = vcmp.le.f32.partialorder %v5626, 0.7853982
          %vm5628 = vcmp.lt.s32.totalorder %v309, 0
          %v5629 = vand.u32 %v309, 2139095040
          %v5630 = vshrl.u32 %v5629, 23
          %v5631 = vsub.s32 %v5630, 127
          %v5632 = vand.u32 2147483647, %v309
          %v5633 = vand.u32 %v5632, 8388607
          %v5634 = vor.u32 %v5633, 8388608
          %v5635 = vsub.s32 0, %v5634
          %v5636 = vadd.s32 %v5631, 1
          %vm5637 = vcmp.gt.s32.totalorder %v5636, 0
          %v5638 = vsel %vm5637, %v5636, 0
          %v5639 = vshrl.u32 %v5638, 5
          %v5640 = vand.u32 %v5638, 31
          %v5641 = vsub.s32 32, %v5640
          %v5642 = vshrl.u32 683565275, %v5641
          %v5643 = vshll.u32 683565275, %v5640
          %v5644 = vshrl.u32 2475754826, %v5641
          %v5645 = vor.u32 %v5643, %v5644
          %v5646 = vshll.u32 2475754826, %v5640
          %v5647 = vshrl.u32 2131351028, %v5641
          %v5648 = vor.u32 %v5646, %v5647
          %v5649 = vshll.u32 2131351028, %v5640
          %v5650 = vshrl.u32 2102212464, %v5641
          %v5651 = vor.u32 %v5649, %v5650
          %v5652 = vshll.u32 2102212464, %v5640
          %v5653 = vshrl.u32 920167782, %v5641
          %v5654 = vor.u32 %v5652, %v5653
          %v5655 = vshll.u32 920167782, %v5640
          %v5656 = vshrl.u32 1326507024, %v5641
          %v5657 = vor.u32 %v5655, %v5656
          %vm5658 = vcmp.lt.s32.totalorder %v5639, 1
          %vm5659 = vcmp.lt.s32.totalorder %v5639, 2
          %vm5660 = vcmp.lt.s32.totalorder %v5639, 3
          %vm5661 = vcmp.lt.s32.totalorder %v5639, 4
          %v5662 = vsel %vm5658, %v5642, %v5645
          %v5663 = vsel %vm5661, %v5651, 2102212464
          %v5664 = vsel %vm5660, %v5648, %v5663
          %v5665 = vsel %vm5659, %v5662, %v5664
          %v5666 = vsel %vm5658, %v5645, %v5648
          %v5667 = vsel %vm5661, %v5654, 920167782
          %v5668 = vsel %vm5660, %v5651, %v5667
          %v5669 = vsel %vm5659, %v5666, %v5668
          %v5670 = vsel %vm5658, %v5648, %v5651
          %v5671 = vsel %vm5661, %v5657, 1326507024
          %v5672 = vsel %vm5660, %v5654, %v5671
          %v5673 = vsel %vm5659, %v5670, %v5672
          %v5674 = vshll.u32 %v5634, 8
          %v5675 = vmul.u32.u64.compose %v5674, %v5673
          %v5676 = vextract.low.u32 %v5675
          %v5677 = vextract.high.u32 %v5675
          %v5678 = vmul.u32.u64.compose %v5674, %v5669
          %v5679 = vextract.low.u32 %v5678
          %v5680 = vextract.high.u32 %v5678
          %v5681 = vmul.u32 %v5674, %v5665
          %v5682 = vadd.s32 %v5677, %v5679
          %vm5683 = vc.u32 %v5677, %v5679
          %v5684 = vadd.s32 %v5680, 1
          %v5685 = vsel %vm5683, %v5684, %v5680
          %v5686 = vadd.s32 %v5681, %v5685
          %v5687 = vadd.s32 %v5686, 536870912
          %v5688 = vshrl.u32 %v5687, 30
          %v5689 = vshll.u32 %v5688, 30
          %v5690 = vsub.s32 %v5686, %v5689
          %vm5691 = vcmp.lt.s32.totalorder %v5690, 0
          %v5692 = vsub.s32 0, %v5690
          %v5693 = vsel %vm5691, %v5692, %v5690
          %v5694 = vclz %v5693
          %v5695 = vsub.s32 %v5694, 2
          %vm5696 = vcmp.gt.s32.totalorder 0, %v5695
          %v5697 = vsel %vm5696, 0, %v5695
          %v5698 = vsub.s32 32, %v5697
          %v5699 = vshll.u32 %v5690, %v5697
          %v5700 = vshrl.u32 %v5682, %v5698
          %v5701 = vor.u32 %v5699, %v5700
          %v5702 = vsub.s32 4294967266, %v5697
          %v5703 = vadd.s32 %v5702, 127
          %v5704 = vshll.u32 %v5703, 23
          %v5705 = vor.u32 4788187, %v5704
          %v5706 = vand.u32 2147483647, %v5705
          %v5708 = vcvt.s32.f32 %v5701
          %v5709 = vmul.f32 %v5708, %v5706
          %v5710 = vxor.u32 %v5709, 2147483648
          %v5711 = vsel %vm5628, %v5710, %v5709
          %v5712 = vsub.s32 4, %v5688
          %v5713 = vsel %vm5628, %v5712, %v5688
          %v5714 = vsel %vm5627, %v309, %v5711
          %v5715 = vsel %vm5627, 0, %v5713
          %v5716 = vcosq.f32.pop %v5714
          %v5717 = vsinq.f32.pop %v5714
          %vm5718 = vweird.f32 %v309
          %v5719 = vadd.s32 %v5715, 3
          %v5720 = vand.u32 %v5719, 3
          %vm5721 = vcmp.lt.s32.totalorder %v5720, 2
          %vm5722 = vcmp.eq.s32.totalorder %v5720, 0
          %v5723 = vxor.u32 %v5717, 2147483648
          %v5724 = vsel %vm5722, %v5716, %v5723
          %vm5725 = vcmp.eq.s32.totalorder %v5720, 2
          %v5726 = vxor.u32 %v5716, 2147483648
          %v5727 = vsel %vm5725, %v5726, %v5717
          %v5728 = vsel %vm5721, %v5724, %v5727
          %v5729 = vsel %vm5718, nan, %v5728
          %v5730 = vand.u32 2147483647, %v310
          %vm5731 = vcmp.le.f32.partialorder %v5730, 0.7853982
          %vm5732 = vcmp.lt.s32.totalorder %v310, 0
          %v5733 = vand.u32 %v310, 2139095040
          %v5734 = vshrl.u32 %v5733, 23
          %v5735 = vsub.s32 %v5734, 127
          %v5736 = vand.u32 2147483647, %v310
          %v5737 = vand.u32 %v5736, 8388607
          %v5738 = vor.u32 %v5737, 8388608
          %v5739 = vsub.s32 0, %v5738
          %v5740 = vadd.s32 %v5735, 1
          %vm5741 = vcmp.gt.s32.totalorder %v5740, 0
          %v5742 = vsel %vm5741, %v5740, 0
          %v5743 = vshrl.u32 %v5742, 5
          %v5744 = vand.u32 %v5742, 31
          %v5745 = vsub.s32 32, %v5744
          %v5746 = vshrl.u32 683565275, %v5745
          %v5747 = vshll.u32 683565275, %v5744
          %v5748 = vshrl.u32 2475754826, %v5745
          %v5749 = vor.u32 %v5747, %v5748
          %v5750 = vshll.u32 2475754826, %v5744
          %v5751 = vshrl.u32 2131351028, %v5745
          %v5752 = vor.u32 %v5750, %v5751
          %v5753 = vshll.u32 2131351028, %v5744
          %v5754 = vshrl.u32 2102212464, %v5745
          %v5755 = vor.u32 %v5753, %v5754
          %v5756 = vshll.u32 2102212464, %v5744
          %v5757 = vshrl.u32 920167782, %v5745
          %v5758 = vor.u32 %v5756, %v5757
          %v5759 = vshll.u32 920167782, %v5744
          %v5760 = vshrl.u32 1326507024, %v5745
          %v5761 = vor.u32 %v5759, %v5760
          %vm5762 = vcmp.lt.s32.totalorder %v5743, 1
          %vm5763 = vcmp.lt.s32.totalorder %v5743, 2
          %vm5764 = vcmp.lt.s32.totalorder %v5743, 3
          %vm5765 = vcmp.lt.s32.totalorder %v5743, 4
          %v5766 = vsel %vm5762, %v5746, %v5749
          %v5767 = vsel %vm5765, %v5755, 2102212464
          %v5768 = vsel %vm5764, %v5752, %v5767
          %v5769 = vsel %vm5763, %v5766, %v5768
          %v5770 = vsel %vm5762, %v5749, %v5752
          %v5771 = vsel %vm5765, %v5758, 920167782
          %v5772 = vsel %vm5764, %v5755, %v5771
          %v5773 = vsel %vm5763, %v5770, %v5772
          %v5774 = vsel %vm5762, %v5752, %v5755
          %v5775 = vsel %vm5765, %v5761, 1326507024
          %v5776 = vsel %vm5764, %v5758, %v5775
          %v5777 = vsel %vm5763, %v5774, %v5776
          %v5778 = vshll.u32 %v5738, 8
          %v5779 = vmul.u32.u64.compose %v5778, %v5777
          %v5780 = vextract.low.u32 %v5779
          %v5781 = vextract.high.u32 %v5779
          %v5782 = vmul.u32.u64.compose %v5778, %v5773
          %v5783 = vextract.low.u32 %v5782
          %v5784 = vextract.high.u32 %v5782
          %v5785 = vmul.u32 %v5778, %v5769
          %v5786 = vadd.s32 %v5781, %v5783
          %vm5787 = vc.u32 %v5781, %v5783
          %v5788 = vadd.s32 %v5784, 1
          %v5789 = vsel %vm5787, %v5788, %v5784
          %v5790 = vadd.s32 %v5785, %v5789
          %v5791 = vadd.s32 %v5790, 536870912
          %v5792 = vshrl.u32 %v5791, 30
          %v5793 = vshll.u32 %v5792, 30
          %v5794 = vsub.s32 %v5790, %v5793
          %vm5795 = vcmp.lt.s32.totalorder %v5794, 0
          %v5796 = vsub.s32 0, %v5794
          %v5797 = vsel %vm5795, %v5796, %v5794
          %v5798 = vclz %v5797
          %v5799 = vsub.s32 %v5798, 2
          %vm5800 = vcmp.gt.s32.totalorder 0, %v5799
          %v5801 = vsel %vm5800, 0, %v5799
          %v5802 = vsub.s32 32, %v5801
          %v5803 = vshll.u32 %v5794, %v5801
          %v5804 = vshrl.u32 %v5786, %v5802
          %v5805 = vor.u32 %v5803, %v5804
          %v5806 = vsub.s32 4294967266, %v5801
          %v5807 = vadd.s32 %v5806, 127
          %v5808 = vshll.u32 %v5807, 23
          %v5809 = vor.u32 4788187, %v5808
          %v5810 = vand.u32 2147483647, %v5809
          %v5812 = vcvt.s32.f32 %v5805
          %v5813 = vmul.f32 %v5812, %v5810
          %v5814 = vxor.u32 %v5813, 2147483648
          %v5815 = vsel %vm5732, %v5814, %v5813
          %v5816 = vsub.s32 4, %v5792
          %v5817 = vsel %vm5732, %v5816, %v5792
          %v5818 = vsel %vm5731, %v310, %v5815
          %v5819 = vsel %vm5731, 0, %v5817
          %v5820 = vcosq.f32.pop %v5818
          %v5821 = vsinq.f32.pop %v5818
          %vm5822 = vweird.f32 %v310
          %v5823 = vadd.s32 %v5819, 3
          %v5824 = vand.u32 %v5823, 3
          %vm5825 = vcmp.lt.s32.totalorder %v5824, 2
          %vm5826 = vcmp.eq.s32.totalorder %v5824, 0
          %v5827 = vxor.u32 %v5821, 2147483648
          %v5828 = vsel %vm5826, %v5820, %v5827
          %vm5829 = vcmp.eq.s32.totalorder %v5824, 2
          %v5830 = vxor.u32 %v5820, 2147483648
          %v5831 = vsel %vm5829, %v5830, %v5821
          %v5832 = vsel %vm5825, %v5828, %v5831
          %v5833 = vsel %vm5822, nan, %v5832
          %v5834 = vand.u32 2147483647, %v311
          %vm5835 = vcmp.le.f32.partialorder %v5834, 0.7853982
          %vm5836 = vcmp.lt.s32.totalorder %v311, 0
          %v5837 = vand.u32 %v311, 2139095040
          %v5838 = vshrl.u32 %v5837, 23
          %v5839 = vsub.s32 %v5838, 127
          %v5840 = vand.u32 2147483647, %v311
          %v5841 = vand.u32 %v5840, 8388607
          %v5842 = vor.u32 %v5841, 8388608
          %v5843 = vsub.s32 0, %v5842
          %v5844 = vadd.s32 %v5839, 1
          %vm5845 = vcmp.gt.s32.totalorder %v5844, 0
          %v5846 = vsel %vm5845, %v5844, 0
          %v5847 = vshrl.u32 %v5846, 5
          %v5848 = vand.u32 %v5846, 31
          %v5849 = vsub.s32 32, %v5848
          %v5850 = vshrl.u32 683565275, %v5849
          %v5851 = vshll.u32 683565275, %v5848
          %v5852 = vshrl.u32 2475754826, %v5849
          %v5853 = vor.u32 %v5851, %v5852
          %v5854 = vshll.u32 2475754826, %v5848
          %v5855 = vshrl.u32 2131351028, %v5849
          %v5856 = vor.u32 %v5854, %v5855
          %v5857 = vshll.u32 2131351028, %v5848
          %v5858 = vshrl.u32 2102212464, %v5849
          %v5859 = vor.u32 %v5857, %v5858
          %v5860 = vshll.u32 2102212464, %v5848
          %v5861 = vshrl.u32 920167782, %v5849
          %v5862 = vor.u32 %v5860, %v5861
          %v5863 = vshll.u32 920167782, %v5848
          %v5864 = vshrl.u32 1326507024, %v5849
          %v5865 = vor.u32 %v5863, %v5864
          %vm5866 = vcmp.lt.s32.totalorder %v5847, 1
          %vm5867 = vcmp.lt.s32.totalorder %v5847, 2
          %vm5868 = vcmp.lt.s32.totalorder %v5847, 3
          %vm5869 = vcmp.lt.s32.totalorder %v5847, 4
          %v5870 = vsel %vm5866, %v5850, %v5853
          %v5871 = vsel %vm5869, %v5859, 2102212464
          %v5872 = vsel %vm5868, %v5856, %v5871
          %v5873 = vsel %vm5867, %v5870, %v5872
          %v5874 = vsel %vm5866, %v5853, %v5856
          %v5875 = vsel %vm5869, %v5862, 920167782
          %v5876 = vsel %vm5868, %v5859, %v5875
          %v5877 = vsel %vm5867, %v5874, %v5876
          %v5878 = vsel %vm5866, %v5856, %v5859
          %v5879 = vsel %vm5869, %v5865, 1326507024
          %v5880 = vsel %vm5868, %v5862, %v5879
          %v5881 = vsel %vm5867, %v5878, %v5880
          %v5882 = vshll.u32 %v5842, 8
          %v5883 = vmul.u32.u64.compose %v5882, %v5881
          %v5884 = vextract.low.u32 %v5883
          %v5885 = vextract.high.u32 %v5883
          %v5886 = vmul.u32.u64.compose %v5882, %v5877
          %v5887 = vextract.low.u32 %v5886
          %v5888 = vextract.high.u32 %v5886
          %v5889 = vmul.u32 %v5882, %v5873
          %v5890 = vadd.s32 %v5885, %v5887
          %vm5891 = vc.u32 %v5885, %v5887
          %v5892 = vadd.s32 %v5888, 1
          %v5893 = vsel %vm5891, %v5892, %v5888
          %v5894 = vadd.s32 %v5889, %v5893
          %v5895 = vadd.s32 %v5894, 536870912
          %v5896 = vshrl.u32 %v5895, 30
          %v5897 = vshll.u32 %v5896, 30
          %v5898 = vsub.s32 %v5894, %v5897
          %vm5899 = vcmp.lt.s32.totalorder %v5898, 0
          %v5900 = vsub.s32 0, %v5898
          %v5901 = vsel %vm5899, %v5900, %v5898
          %v5902 = vclz %v5901
          %v5903 = vsub.s32 %v5902, 2
          %vm5904 = vcmp.gt.s32.totalorder 0, %v5903
          %v5905 = vsel %vm5904, 0, %v5903
          %v5906 = vsub.s32 32, %v5905
          %v5907 = vshll.u32 %v5898, %v5905
          %v5908 = vshrl.u32 %v5890, %v5906
          %v5909 = vor.u32 %v5907, %v5908
          %v5910 = vsub.s32 4294967266, %v5905
          %v5911 = vadd.s32 %v5910, 127
          %v5912 = vshll.u32 %v5911, 23
          %v5913 = vor.u32 4788187, %v5912
          %v5914 = vand.u32 2147483647, %v5913
          %v5916 = vcvt.s32.f32 %v5909
          %v5917 = vmul.f32 %v5916, %v5914
          %v5918 = vxor.u32 %v5917, 2147483648
          %v5919 = vsel %vm5836, %v5918, %v5917
          %v5920 = vsub.s32 4, %v5896
          %v5921 = vsel %vm5836, %v5920, %v5896
          %v5922 = vsel %vm5835, %v311, %v5919
          %v5923 = vsel %vm5835, 0, %v5921
          %v5924 = vcosq.f32.pop %v5922
          %v5925 = vsinq.f32.pop %v5922
          %vm5926 = vweird.f32 %v311
          %v5927 = vadd.s32 %v5923, 3
          %v5928 = vand.u32 %v5927, 3
          %vm5929 = vcmp.lt.s32.totalorder %v5928, 2
          %vm5930 = vcmp.eq.s32.totalorder %v5928, 0
          %v5931 = vxor.u32 %v5925, 2147483648
          %v5932 = vsel %vm5930, %v5924, %v5931
          %vm5933 = vcmp.eq.s32.totalorder %v5928, 2
          %v5934 = vxor.u32 %v5924, 2147483648
          %v5935 = vsel %vm5933, %v5934, %v5925
          %v5936 = vsel %vm5929, %v5932, %v5935
          %v5937 = vsel %vm5926, nan, %v5936
          %v5938 = vand.u32 2147483647, %v312
          %vm5939 = vcmp.le.f32.partialorder %v5938, 0.7853982
          %vm5940 = vcmp.lt.s32.totalorder %v312, 0
          %v5941 = vand.u32 %v312, 2139095040
          %v5942 = vshrl.u32 %v5941, 23
          %v5943 = vsub.s32 %v5942, 127
          %v5944 = vand.u32 2147483647, %v312
          %v5945 = vand.u32 %v5944, 8388607
          %v5946 = vor.u32 %v5945, 8388608
          %v5947 = vsub.s32 0, %v5946
          %v5948 = vadd.s32 %v5943, 1
          %vm5949 = vcmp.gt.s32.totalorder %v5948, 0
          %v5950 = vsel %vm5949, %v5948, 0
          %v5951 = vshrl.u32 %v5950, 5
          %v5952 = vand.u32 %v5950, 31
          %v5953 = vsub.s32 32, %v5952
          %v5954 = vshrl.u32 683565275, %v5953
          %v5955 = vshll.u32 683565275, %v5952
          %v5956 = vshrl.u32 2475754826, %v5953
          %v5957 = vor.u32 %v5955, %v5956
          %v5958 = vshll.u32 2475754826, %v5952
          %v5959 = vshrl.u32 2131351028, %v5953
          %v5960 = vor.u32 %v5958, %v5959
          %v5961 = vshll.u32 2131351028, %v5952
          %v5962 = vshrl.u32 2102212464, %v5953
          %v5963 = vor.u32 %v5961, %v5962
          %v5964 = vshll.u32 2102212464, %v5952
          %v5965 = vshrl.u32 920167782, %v5953
          %v5966 = vor.u32 %v5964, %v5965
          %v5967 = vshll.u32 920167782, %v5952
          %v5968 = vshrl.u32 1326507024, %v5953
          %v5969 = vor.u32 %v5967, %v5968
          %vm5970 = vcmp.lt.s32.totalorder %v5951, 1
          %vm5971 = vcmp.lt.s32.totalorder %v5951, 2
          %vm5972 = vcmp.lt.s32.totalorder %v5951, 3
          %vm5973 = vcmp.lt.s32.totalorder %v5951, 4
          %v5974 = vsel %vm5970, %v5954, %v5957
          %v5975 = vsel %vm5973, %v5963, 2102212464
          %v5976 = vsel %vm5972, %v5960, %v5975
          %v5977 = vsel %vm5971, %v5974, %v5976
          %v5978 = vsel %vm5970, %v5957, %v5960
          %v5979 = vsel %vm5973, %v5966, 920167782
          %v5980 = vsel %vm5972, %v5963, %v5979
          %v5981 = vsel %vm5971, %v5978, %v5980
          %v5982 = vsel %vm5970, %v5960, %v5963
          %v5983 = vsel %vm5973, %v5969, 1326507024
          %v5984 = vsel %vm5972, %v5966, %v5983
          %v5985 = vsel %vm5971, %v5982, %v5984
          %v5986 = vshll.u32 %v5946, 8
          %v5987 = vmul.u32.u64.compose %v5986, %v5985
          %v5988 = vextract.low.u32 %v5987
          %v5989 = vextract.high.u32 %v5987
          %v5990 = vmul.u32.u64.compose %v5986, %v5981
          %v5991 = vextract.low.u32 %v5990
          %v5992 = vextract.high.u32 %v5990
          %v5993 = vmul.u32 %v5986, %v5977
          %v5994 = vadd.s32 %v5989, %v5991
          %vm5995 = vc.u32 %v5989, %v5991
          %v5996 = vadd.s32 %v5992, 1
          %v5997 = vsel %vm5995, %v5996, %v5992
          %v5998 = vadd.s32 %v5993, %v5997
          %v5999 = vadd.s32 %v5998, 536870912
          %v6000 = vshrl.u32 %v5999, 30
          %v6001 = vshll.u32 %v6000, 30
          %v6002 = vsub.s32 %v5998, %v6001
          %vm6003 = vcmp.lt.s32.totalorder %v6002, 0
          %v6004 = vsub.s32 0, %v6002
          %v6005 = vsel %vm6003, %v6004, %v6002
          %v6006 = vclz %v6005
          %v6007 = vsub.s32 %v6006, 2
          %vm6008 = vcmp.gt.s32.totalorder 0, %v6007
          %v6009 = vsel %vm6008, 0, %v6007
          %v6010 = vsub.s32 32, %v6009
          %v6011 = vshll.u32 %v6002, %v6009
          %v6012 = vshrl.u32 %v5994, %v6010
          %v6013 = vor.u32 %v6011, %v6012
          %v6014 = vsub.s32 4294967266, %v6009
          %v6015 = vadd.s32 %v6014, 127
          %v6016 = vshll.u32 %v6015, 23
          %v6017 = vor.u32 4788187, %v6016
          %v6018 = vand.u32 2147483647, %v6017
          %v6020 = vcvt.s32.f32 %v6013
          %v6021 = vmul.f32 %v6020, %v6018
          %v6022 = vxor.u32 %v6021, 2147483648
          %v6023 = vsel %vm5940, %v6022, %v6021
          %v6024 = vsub.s32 4, %v6000
          %v6025 = vsel %vm5940, %v6024, %v6000
          %v6026 = vsel %vm5939, %v312, %v6023
          %v6027 = vsel %vm5939, 0, %v6025
          %v6028 = vcosq.f32.pop %v6026
          %v6029 = vsinq.f32.pop %v6026
          %vm6030 = vweird.f32 %v312
          %v6031 = vadd.s32 %v6027, 3
          %v6032 = vand.u32 %v6031, 3
          %vm6033 = vcmp.lt.s32.totalorder %v6032, 2
          %vm6034 = vcmp.eq.s32.totalorder %v6032, 0
          %v6035 = vxor.u32 %v6029, 2147483648
          %v6036 = vsel %vm6034, %v6028, %v6035
          %vm6037 = vcmp.eq.s32.totalorder %v6032, 2
          %v6038 = vxor.u32 %v6028, 2147483648
          %v6039 = vsel %vm6037, %v6038, %v6029
          %v6040 = vsel %vm6033, %v6036, %v6039
          %v6041 = vsel %vm6030, nan, %v6040
          %v6042 = vand.u32 2147483647, %v313
          %vm6043 = vcmp.le.f32.partialorder %v6042, 0.7853982
          %vm6044 = vcmp.lt.s32.totalorder %v313, 0
          %v6045 = vand.u32 %v313, 2139095040
          %v6046 = vshrl.u32 %v6045, 23
          %v6047 = vsub.s32 %v6046, 127
          %v6048 = vand.u32 2147483647, %v313
          %v6049 = vand.u32 %v6048, 8388607
          %v6050 = vor.u32 %v6049, 8388608
          %v6051 = vsub.s32 0, %v6050
          %v6052 = vadd.s32 %v6047, 1
          %vm6053 = vcmp.gt.s32.totalorder %v6052, 0
          %v6054 = vsel %vm6053, %v6052, 0
          %v6055 = vshrl.u32 %v6054, 5
          %v6056 = vand.u32 %v6054, 31
          %v6057 = vsub.s32 32, %v6056
          %v6058 = vshrl.u32 683565275, %v6057
          %v6059 = vshll.u32 683565275, %v6056
          %v6060 = vshrl.u32 2475754826, %v6057
          %v6061 = vor.u32 %v6059, %v6060
          %v6062 = vshll.u32 2475754826, %v6056
          %v6063 = vshrl.u32 2131351028, %v6057
          %v6064 = vor.u32 %v6062, %v6063
          %v6065 = vshll.u32 2131351028, %v6056
          %v6066 = vshrl.u32 2102212464, %v6057
          %v6067 = vor.u32 %v6065, %v6066
          %v6068 = vshll.u32 2102212464, %v6056
          %v6069 = vshrl.u32 920167782, %v6057
          %v6070 = vor.u32 %v6068, %v6069
          %v6071 = vshll.u32 920167782, %v6056
          %v6072 = vshrl.u32 1326507024, %v6057
          %v6073 = vor.u32 %v6071, %v6072
          %vm6074 = vcmp.lt.s32.totalorder %v6055, 1
          %vm6075 = vcmp.lt.s32.totalorder %v6055, 2
          %vm6076 = vcmp.lt.s32.totalorder %v6055, 3
          %vm6077 = vcmp.lt.s32.totalorder %v6055, 4
          %v6078 = vsel %vm6074, %v6058, %v6061
          %v6079 = vsel %vm6077, %v6067, 2102212464
          %v6080 = vsel %vm6076, %v6064, %v6079
          %v6081 = vsel %vm6075, %v6078, %v6080
          %v6082 = vsel %vm6074, %v6061, %v6064
          %v6083 = vsel %vm6077, %v6070, 920167782
          %v6084 = vsel %vm6076, %v6067, %v6083
          %v6085 = vsel %vm6075, %v6082, %v6084
          %v6086 = vsel %vm6074, %v6064, %v6067
          %v6087 = vsel %vm6077, %v6073, 1326507024
          %v6088 = vsel %vm6076, %v6070, %v6087
          %v6089 = vsel %vm6075, %v6086, %v6088
          %v6090 = vshll.u32 %v6050, 8
          %v6091 = vmul.u32.u64.compose %v6090, %v6089
          %v6092 = vextract.low.u32 %v6091
          %v6093 = vextract.high.u32 %v6091
          %v6094 = vmul.u32.u64.compose %v6090, %v6085
          %v6095 = vextract.low.u32 %v6094
          %v6096 = vextract.high.u32 %v6094
          %v6097 = vmul.u32 %v6090, %v6081
          %v6098 = vadd.s32 %v6093, %v6095
          %vm6099 = vc.u32 %v6093, %v6095
          %v6100 = vadd.s32 %v6096, 1
          %v6101 = vsel %vm6099, %v6100, %v6096
          %v6102 = vadd.s32 %v6097, %v6101
          %v6103 = vadd.s32 %v6102, 536870912
          %v6104 = vshrl.u32 %v6103, 30
          %v6105 = vshll.u32 %v6104, 30
          %v6106 = vsub.s32 %v6102, %v6105
          %vm6107 = vcmp.lt.s32.totalorder %v6106, 0
          %v6108 = vsub.s32 0, %v6106
          %v6109 = vsel %vm6107, %v6108, %v6106
          %v6110 = vclz %v6109
          %v6111 = vsub.s32 %v6110, 2
          %vm6112 = vcmp.gt.s32.totalorder 0, %v6111
          %v6113 = vsel %vm6112, 0, %v6111
          %v6114 = vsub.s32 32, %v6113
          %v6115 = vshll.u32 %v6106, %v6113
          %v6116 = vshrl.u32 %v6098, %v6114
          %v6117 = vor.u32 %v6115, %v6116
          %v6118 = vsub.s32 4294967266, %v6113
          %v6119 = vadd.s32 %v6118, 127
          %v6120 = vshll.u32 %v6119, 23
          %v6121 = vor.u32 4788187, %v6120
          %v6122 = vand.u32 2147483647, %v6121
          %v6124 = vcvt.s32.f32 %v6117
          %v6125 = vmul.f32 %v6124, %v6122
          %v6126 = vxor.u32 %v6125, 2147483648
          %v6127 = vsel %vm6044, %v6126, %v6125
          %v6128 = vsub.s32 4, %v6104
          %v6129 = vsel %vm6044, %v6128, %v6104
          %v6130 = vsel %vm6043, %v313, %v6127
          %v6131 = vsel %vm6043, 0, %v6129
          %v6132 = vcosq.f32.pop %v6130
          %v6133 = vsinq.f32.pop %v6130
          %vm6134 = vweird.f32 %v313
          %v6135 = vadd.s32 %v6131, 3
          %v6136 = vand.u32 %v6135, 3
          %vm6137 = vcmp.lt.s32.totalorder %v6136, 2
          %vm6138 = vcmp.eq.s32.totalorder %v6136, 0
          %v6139 = vxor.u32 %v6133, 2147483648
          %v6140 = vsel %vm6138, %v6132, %v6139
          %vm6141 = vcmp.eq.s32.totalorder %v6136, 2
          %v6142 = vxor.u32 %v6132, 2147483648
          %v6143 = vsel %vm6141, %v6142, %v6133
          %v6144 = vsel %vm6137, %v6140, %v6143
          %v6145 = vsel %vm6134, nan, %v6144
          %v6146 = vand.u32 2147483647, %v314
          %vm6147 = vcmp.le.f32.partialorder %v6146, 0.7853982
          %vm6148 = vcmp.lt.s32.totalorder %v314, 0
          %v6149 = vand.u32 %v314, 2139095040
          %v6150 = vshrl.u32 %v6149, 23
          %v6151 = vsub.s32 %v6150, 127
          %v6152 = vand.u32 2147483647, %v314
          %v6153 = vand.u32 %v6152, 8388607
          %v6154 = vor.u32 %v6153, 8388608
          %v6155 = vsub.s32 0, %v6154
          %v6156 = vadd.s32 %v6151, 1
          %vm6157 = vcmp.gt.s32.totalorder %v6156, 0
          %v6158 = vsel %vm6157, %v6156, 0
          %v6159 = vshrl.u32 %v6158, 5
          %v6160 = vand.u32 %v6158, 31
          %v6161 = vsub.s32 32, %v6160
          %v6162 = vshrl.u32 683565275, %v6161
          %v6163 = vshll.u32 683565275, %v6160
          %v6164 = vshrl.u32 2475754826, %v6161
          %v6165 = vor.u32 %v6163, %v6164
          %v6166 = vshll.u32 2475754826, %v6160
          %v6167 = vshrl.u32 2131351028, %v6161
          %v6168 = vor.u32 %v6166, %v6167
          %v6169 = vshll.u32 2131351028, %v6160
          %v6170 = vshrl.u32 2102212464, %v6161
          %v6171 = vor.u32 %v6169, %v6170
          %v6172 = vshll.u32 2102212464, %v6160
          %v6173 = vshrl.u32 920167782, %v6161
          %v6174 = vor.u32 %v6172, %v6173
          %v6175 = vshll.u32 920167782, %v6160
          %v6176 = vshrl.u32 1326507024, %v6161
          %v6177 = vor.u32 %v6175, %v6176
          %vm6178 = vcmp.lt.s32.totalorder %v6159, 1
          %vm6179 = vcmp.lt.s32.totalorder %v6159, 2
          %vm6180 = vcmp.lt.s32.totalorder %v6159, 3
          %vm6181 = vcmp.lt.s32.totalorder %v6159, 4
          %v6182 = vsel %vm6178, %v6162, %v6165
          %v6183 = vsel %vm6181, %v6171, 2102212464
          %v6184 = vsel %vm6180, %v6168, %v6183
          %v6185 = vsel %vm6179, %v6182, %v6184
          %v6186 = vsel %vm6178, %v6165, %v6168
          %v6187 = vsel %vm6181, %v6174, 920167782
          %v6188 = vsel %vm6180, %v6171, %v6187
          %v6189 = vsel %vm6179, %v6186, %v6188
          %v6190 = vsel %vm6178, %v6168, %v6171
          %v6191 = vsel %vm6181, %v6177, 1326507024
          %v6192 = vsel %vm6180, %v6174, %v6191
          %v6193 = vsel %vm6179, %v6190, %v6192
          %v6194 = vshll.u32 %v6154, 8
          %v6195 = vmul.u32.u64.compose %v6194, %v6193
          %v6196 = vextract.low.u32 %v6195
          %v6197 = vextract.high.u32 %v6195
          %v6198 = vmul.u32.u64.compose %v6194, %v6189
          %v6199 = vextract.low.u32 %v6198
          %v6200 = vextract.high.u32 %v6198
          %v6201 = vmul.u32 %v6194, %v6185
          %v6202 = vadd.s32 %v6197, %v6199
          %vm6203 = vc.u32 %v6197, %v6199
          %v6204 = vadd.s32 %v6200, 1
          %v6205 = vsel %vm6203, %v6204, %v6200
          %v6206 = vadd.s32 %v6201, %v6205
          %v6207 = vadd.s32 %v6206, 536870912
          %v6208 = vshrl.u32 %v6207, 30
          %v6209 = vshll.u32 %v6208, 30
          %v6210 = vsub.s32 %v6206, %v6209
          %vm6211 = vcmp.lt.s32.totalorder %v6210, 0
          %v6212 = vsub.s32 0, %v6210
          %v6213 = vsel %vm6211, %v6212, %v6210
          %v6214 = vclz %v6213
          %v6215 = vsub.s32 %v6214, 2
          %vm6216 = vcmp.gt.s32.totalorder 0, %v6215
          %v6217 = vsel %vm6216, 0, %v6215
          %v6218 = vsub.s32 32, %v6217
          %v6219 = vshll.u32 %v6210, %v6217
          %v6220 = vshrl.u32 %v6202, %v6218
          %v6221 = vor.u32 %v6219, %v6220
          %v6222 = vsub.s32 4294967266, %v6217
          %v6223 = vadd.s32 %v6222, 127
          %v6224 = vshll.u32 %v6223, 23
          %v6225 = vor.u32 4788187, %v6224
          %v6226 = vand.u32 2147483647, %v6225
          %v6228 = vcvt.s32.f32 %v6221
          %v6229 = vmul.f32 %v6228, %v6226
          %v6230 = vxor.u32 %v6229, 2147483648
          %v6231 = vsel %vm6148, %v6230, %v6229
          %v6232 = vsub.s32 4, %v6208
          %v6233 = vsel %vm6148, %v6232, %v6208
          %v6234 = vsel %vm6147, %v314, %v6231
          %v6235 = vsel %vm6147, 0, %v6233
          %v6236 = vcosq.f32.pop %v6234
          %v6237 = vsinq.f32.pop %v6234
          %vm6238 = vweird.f32 %v314
          %v6239 = vadd.s32 %v6235, 3
          %v6240 = vand.u32 %v6239, 3
          %vm6241 = vcmp.lt.s32.totalorder %v6240, 2
          %vm6242 = vcmp.eq.s32.totalorder %v6240, 0
          %v6243 = vxor.u32 %v6237, 2147483648
          %v6244 = vsel %vm6242, %v6236, %v6243
          %vm6245 = vcmp.eq.s32.totalorder %v6240, 2
          %v6246 = vxor.u32 %v6236, 2147483648
          %v6247 = vsel %vm6245, %v6246, %v6237
          %v6248 = vsel %vm6241, %v6244, %v6247
          %v6249 = vsel %vm6238, nan, %v6248
          %v6250 = vand.u32 2147483647, %v315
          %vm6251 = vcmp.le.f32.partialorder %v6250, 0.7853982
          %vm6252 = vcmp.lt.s32.totalorder %v315, 0
          %v6253 = vand.u32 %v315, 2139095040
          %v6254 = vshrl.u32 %v6253, 23
          %v6255 = vsub.s32 %v6254, 127
          %v6256 = vand.u32 2147483647, %v315
          %v6257 = vand.u32 %v6256, 8388607
          %v6258 = vor.u32 %v6257, 8388608
          %v6259 = vsub.s32 0, %v6258
          %v6260 = vadd.s32 %v6255, 1
          %vm6261 = vcmp.gt.s32.totalorder %v6260, 0
          %v6262 = vsel %vm6261, %v6260, 0
          %v6263 = vshrl.u32 %v6262, 5
          %v6264 = vand.u32 %v6262, 31
          %v6265 = vsub.s32 32, %v6264
          %v6266 = vshrl.u32 683565275, %v6265
          %v6267 = vshll.u32 683565275, %v6264
          %v6268 = vshrl.u32 2475754826, %v6265
          %v6269 = vor.u32 %v6267, %v6268
          %v6270 = vshll.u32 2475754826, %v6264
          %v6271 = vshrl.u32 2131351028, %v6265
          %v6272 = vor.u32 %v6270, %v6271
          %v6273 = vshll.u32 2131351028, %v6264
          %v6274 = vshrl.u32 2102212464, %v6265
          %v6275 = vor.u32 %v6273, %v6274
          %v6276 = vshll.u32 2102212464, %v6264
          %v6277 = vshrl.u32 920167782, %v6265
          %v6278 = vor.u32 %v6276, %v6277
          %v6279 = vshll.u32 920167782, %v6264
          %v6280 = vshrl.u32 1326507024, %v6265
          %v6281 = vor.u32 %v6279, %v6280
          %vm6282 = vcmp.lt.s32.totalorder %v6263, 1
          %vm6283 = vcmp.lt.s32.totalorder %v6263, 2
          %vm6284 = vcmp.lt.s32.totalorder %v6263, 3
          %vm6285 = vcmp.lt.s32.totalorder %v6263, 4
          %v6286 = vsel %vm6282, %v6266, %v6269
          %v6287 = vsel %vm6285, %v6275, 2102212464
          %v6288 = vsel %vm6284, %v6272, %v6287
          %v6289 = vsel %vm6283, %v6286, %v6288
          %v6290 = vsel %vm6282, %v6269, %v6272
          %v6291 = vsel %vm6285, %v6278, 920167782
          %v6292 = vsel %vm6284, %v6275, %v6291
          %v6293 = vsel %vm6283, %v6290, %v6292
          %v6294 = vsel %vm6282, %v6272, %v6275
          %v6295 = vsel %vm6285, %v6281, 1326507024
          %v6296 = vsel %vm6284, %v6278, %v6295
          %v6297 = vsel %vm6283, %v6294, %v6296
          %v6298 = vshll.u32 %v6258, 8
          %v6299 = vmul.u32.u64.compose %v6298, %v6297
          %v6300 = vextract.low.u32 %v6299
          %v6301 = vextract.high.u32 %v6299
          %v6302 = vmul.u32.u64.compose %v6298, %v6293
          %v6303 = vextract.low.u32 %v6302
          %v6304 = vextract.high.u32 %v6302
          %v6305 = vmul.u32 %v6298, %v6289
          %v6306 = vadd.s32 %v6301, %v6303
          %vm6307 = vc.u32 %v6301, %v6303
          %v6308 = vadd.s32 %v6304, 1
          %v6309 = vsel %vm6307, %v6308, %v6304
          %v6310 = vadd.s32 %v6305, %v6309
          %v6311 = vadd.s32 %v6310, 536870912
          %v6312 = vshrl.u32 %v6311, 30
          %v6313 = vshll.u32 %v6312, 30
          %v6314 = vsub.s32 %v6310, %v6313
          %vm6315 = vcmp.lt.s32.totalorder %v6314, 0
          %v6316 = vsub.s32 0, %v6314
          %v6317 = vsel %vm6315, %v6316, %v6314
          %v6318 = vclz %v6317
          %v6319 = vsub.s32 %v6318, 2
          %vm6320 = vcmp.gt.s32.totalorder 0, %v6319
          %v6321 = vsel %vm6320, 0, %v6319
          %v6322 = vsub.s32 32, %v6321
          %v6323 = vshll.u32 %v6314, %v6321
          %v6324 = vshrl.u32 %v6306, %v6322
          %v6325 = vor.u32 %v6323, %v6324
          %v6326 = vsub.s32 4294967266, %v6321
          %v6327 = vadd.s32 %v6326, 127
          %v6328 = vshll.u32 %v6327, 23
          %v6329 = vor.u32 4788187, %v6328
          %v6330 = vand.u32 2147483647, %v6329
          %v6332 = vcvt.s32.f32 %v6325
          %v6333 = vmul.f32 %v6332, %v6330
          %v6334 = vxor.u32 %v6333, 2147483648
          %v6335 = vsel %vm6252, %v6334, %v6333
          %v6336 = vsub.s32 4, %v6312
          %v6337 = vsel %vm6252, %v6336, %v6312
          %v6338 = vsel %vm6251, %v315, %v6335
          %v6339 = vsel %vm6251, 0, %v6337
          %v6340 = vcosq.f32.pop %v6338
          %v6341 = vsinq.f32.pop %v6338
          %vm6342 = vweird.f32 %v315
          %v6343 = vadd.s32 %v6339, 3
          %v6344 = vand.u32 %v6343, 3
          %vm6345 = vcmp.lt.s32.totalorder %v6344, 2
          %vm6346 = vcmp.eq.s32.totalorder %v6344, 0
          %v6347 = vxor.u32 %v6341, 2147483648
          %v6348 = vsel %vm6346, %v6340, %v6347
          %vm6349 = vcmp.eq.s32.totalorder %v6344, 2
          %v6350 = vxor.u32 %v6340, 2147483648
          %v6351 = vsel %vm6349, %v6350, %v6341
          %v6352 = vsel %vm6345, %v6348, %v6351
          %v6353 = vsel %vm6342, nan, %v6352
          %v6354 = vand.u32 2147483647, %v316
          %vm6355 = vcmp.le.f32.partialorder %v6354, 0.7853982
          %vm6356 = vcmp.lt.s32.totalorder %v316, 0
          %v6357 = vand.u32 %v316, 2139095040
          %v6358 = vshrl.u32 %v6357, 23
          %v6359 = vsub.s32 %v6358, 127
          %v6360 = vand.u32 2147483647, %v316
          %v6361 = vand.u32 %v6360, 8388607
          %v6362 = vor.u32 %v6361, 8388608
          %v6363 = vsub.s32 0, %v6362
          %v6364 = vadd.s32 %v6359, 1
          %vm6365 = vcmp.gt.s32.totalorder %v6364, 0
          %v6366 = vsel %vm6365, %v6364, 0
          %v6367 = vshrl.u32 %v6366, 5
          %v6368 = vand.u32 %v6366, 31
          %v6369 = vsub.s32 32, %v6368
          %v6370 = vshrl.u32 683565275, %v6369
          %v6371 = vshll.u32 683565275, %v6368
          %v6372 = vshrl.u32 2475754826, %v6369
          %v6373 = vor.u32 %v6371, %v6372
          %v6374 = vshll.u32 2475754826, %v6368
          %v6375 = vshrl.u32 2131351028, %v6369
          %v6376 = vor.u32 %v6374, %v6375
          %v6377 = vshll.u32 2131351028, %v6368
          %v6378 = vshrl.u32 2102212464, %v6369
          %v6379 = vor.u32 %v6377, %v6378
          %v6380 = vshll.u32 2102212464, %v6368
          %v6381 = vshrl.u32 920167782, %v6369
          %v6382 = vor.u32 %v6380, %v6381
          %v6383 = vshll.u32 920167782, %v6368
          %v6384 = vshrl.u32 1326507024, %v6369
          %v6385 = vor.u32 %v6383, %v6384
          %vm6386 = vcmp.lt.s32.totalorder %v6367, 1
          %vm6387 = vcmp.lt.s32.totalorder %v6367, 2
          %vm6388 = vcmp.lt.s32.totalorder %v6367, 3
          %vm6389 = vcmp.lt.s32.totalorder %v6367, 4
          %v6390 = vsel %vm6386, %v6370, %v6373
          %v6391 = vsel %vm6389, %v6379, 2102212464
          %v6392 = vsel %vm6388, %v6376, %v6391
          %v6393 = vsel %vm6387, %v6390, %v6392
          %v6394 = vsel %vm6386, %v6373, %v6376
          %v6395 = vsel %vm6389, %v6382, 920167782
          %v6396 = vsel %vm6388, %v6379, %v6395
          %v6397 = vsel %vm6387, %v6394, %v6396
          %v6398 = vsel %vm6386, %v6376, %v6379
          %v6399 = vsel %vm6389, %v6385, 1326507024
          %v6400 = vsel %vm6388, %v6382, %v6399
          %v6401 = vsel %vm6387, %v6398, %v6400
          %v6402 = vshll.u32 %v6362, 8
          %v6403 = vmul.u32.u64.compose %v6402, %v6401
          %v6404 = vextract.low.u32 %v6403
          %v6405 = vextract.high.u32 %v6403
          %v6406 = vmul.u32.u64.compose %v6402, %v6397
          %v6407 = vextract.low.u32 %v6406
          %v6408 = vextract.high.u32 %v6406
          %v6409 = vmul.u32 %v6402, %v6393
          %v6410 = vadd.s32 %v6405, %v6407
          %vm6411 = vc.u32 %v6405, %v6407
          %v6412 = vadd.s32 %v6408, 1
          %v6413 = vsel %vm6411, %v6412, %v6408
          %v6414 = vadd.s32 %v6409, %v6413
          %v6415 = vadd.s32 %v6414, 536870912
          %v6416 = vshrl.u32 %v6415, 30
          %v6417 = vshll.u32 %v6416, 30
          %v6418 = vsub.s32 %v6414, %v6417
          %vm6419 = vcmp.lt.s32.totalorder %v6418, 0
          %v6420 = vsub.s32 0, %v6418
          %v6421 = vsel %vm6419, %v6420, %v6418
          %v6422 = vclz %v6421
          %v6423 = vsub.s32 %v6422, 2
          %vm6424 = vcmp.gt.s32.totalorder 0, %v6423
          %v6425 = vsel %vm6424, 0, %v6423
          %v6426 = vsub.s32 32, %v6425
          %v6427 = vshll.u32 %v6418, %v6425
          %v6428 = vshrl.u32 %v6410, %v6426
          %v6429 = vor.u32 %v6427, %v6428
          %v6430 = vsub.s32 4294967266, %v6425
          %v6431 = vadd.s32 %v6430, 127
          %v6432 = vshll.u32 %v6431, 23
          %v6433 = vor.u32 4788187, %v6432
          %v6434 = vand.u32 2147483647, %v6433
          %v6436 = vcvt.s32.f32 %v6429
          %v6437 = vmul.f32 %v6436, %v6434
          %v6438 = vxor.u32 %v6437, 2147483648
          %v6439 = vsel %vm6356, %v6438, %v6437
          %v6440 = vsub.s32 4, %v6416
          %v6441 = vsel %vm6356, %v6440, %v6416
          %v6442 = vsel %vm6355, %v316, %v6439
          %v6443 = vsel %vm6355, 0, %v6441
          %v6444 = vcosq.f32.pop %v6442
          %v6445 = vsinq.f32.pop %v6442
          %vm6446 = vweird.f32 %v316
          %v6447 = vadd.s32 %v6443, 3
          %v6448 = vand.u32 %v6447, 3
          %vm6449 = vcmp.lt.s32.totalorder %v6448, 2
          %vm6450 = vcmp.eq.s32.totalorder %v6448, 0
          %v6451 = vxor.u32 %v6445, 2147483648
          %v6452 = vsel %vm6450, %v6444, %v6451
          %vm6453 = vcmp.eq.s32.totalorder %v6448, 2
          %v6454 = vxor.u32 %v6444, 2147483648
          %v6455 = vsel %vm6453, %v6454, %v6445
          %v6456 = vsel %vm6449, %v6452, %v6455
          %v6457 = vsel %vm6446, nan, %v6456
          %v6458 = vand.u32 2147483647, %v317
          %vm6459 = vcmp.le.f32.partialorder %v6458, 0.7853982
          %vm6460 = vcmp.lt.s32.totalorder %v317, 0
          %v6461 = vand.u32 %v317, 2139095040
          %v6462 = vshrl.u32 %v6461, 23
          %v6463 = vsub.s32 %v6462, 127
          %v6464 = vand.u32 2147483647, %v317
          %v6465 = vand.u32 %v6464, 8388607
          %v6466 = vor.u32 %v6465, 8388608
          %v6467 = vsub.s32 0, %v6466
          %v6468 = vadd.s32 %v6463, 1
          %vm6469 = vcmp.gt.s32.totalorder %v6468, 0
          %v6470 = vsel %vm6469, %v6468, 0
          %v6471 = vshrl.u32 %v6470, 5
          %v6472 = vand.u32 %v6470, 31
          %v6473 = vsub.s32 32, %v6472
          %v6474 = vshrl.u32 683565275, %v6473
          %v6475 = vshll.u32 683565275, %v6472
          %v6476 = vshrl.u32 2475754826, %v6473
          %v6477 = vor.u32 %v6475, %v6476
          %v6478 = vshll.u32 2475754826, %v6472
          %v6479 = vshrl.u32 2131351028, %v6473
          %v6480 = vor.u32 %v6478, %v6479
          %v6481 = vshll.u32 2131351028, %v6472
          %v6482 = vshrl.u32 2102212464, %v6473
          %v6483 = vor.u32 %v6481, %v6482
          %v6484 = vshll.u32 2102212464, %v6472
          %v6485 = vshrl.u32 920167782, %v6473
          %v6486 = vor.u32 %v6484, %v6485
          %v6487 = vshll.u32 920167782, %v6472
          %v6488 = vshrl.u32 1326507024, %v6473
          %v6489 = vor.u32 %v6487, %v6488
          %vm6490 = vcmp.lt.s32.totalorder %v6471, 1
          %vm6491 = vcmp.lt.s32.totalorder %v6471, 2
          %vm6492 = vcmp.lt.s32.totalorder %v6471, 3
          %vm6493 = vcmp.lt.s32.totalorder %v6471, 4
          %v6494 = vsel %vm6490, %v6474, %v6477
          %v6495 = vsel %vm6493, %v6483, 2102212464
          %v6496 = vsel %vm6492, %v6480, %v6495
          %v6497 = vsel %vm6491, %v6494, %v6496
          %v6498 = vsel %vm6490, %v6477, %v6480
          %v6499 = vsel %vm6493, %v6486, 920167782
          %v6500 = vsel %vm6492, %v6483, %v6499
          %v6501 = vsel %vm6491, %v6498, %v6500
          %v6502 = vsel %vm6490, %v6480, %v6483
          %v6503 = vsel %vm6493, %v6489, 1326507024
          %v6504 = vsel %vm6492, %v6486, %v6503
          %v6505 = vsel %vm6491, %v6502, %v6504
          %v6506 = vshll.u32 %v6466, 8
          %v6507 = vmul.u32.u64.compose %v6506, %v6505
          %v6508 = vextract.low.u32 %v6507
          %v6509 = vextract.high.u32 %v6507
          %v6510 = vmul.u32.u64.compose %v6506, %v6501
          %v6511 = vextract.low.u32 %v6510
          %v6512 = vextract.high.u32 %v6510
          %v6513 = vmul.u32 %v6506, %v6497
          %v6514 = vadd.s32 %v6509, %v6511
          %vm6515 = vc.u32 %v6509, %v6511
          %v6516 = vadd.s32 %v6512, 1
          %v6517 = vsel %vm6515, %v6516, %v6512
          %v6518 = vadd.s32 %v6513, %v6517
          %v6519 = vadd.s32 %v6518, 536870912
          %v6520 = vshrl.u32 %v6519, 30
          %v6521 = vshll.u32 %v6520, 30
          %v6522 = vsub.s32 %v6518, %v6521
          %vm6523 = vcmp.lt.s32.totalorder %v6522, 0
          %v6524 = vsub.s32 0, %v6522
          %v6525 = vsel %vm6523, %v6524, %v6522
          %v6526 = vclz %v6525
          %v6527 = vsub.s32 %v6526, 2
          %vm6528 = vcmp.gt.s32.totalorder 0, %v6527
          %v6529 = vsel %vm6528, 0, %v6527
          %v6530 = vsub.s32 32, %v6529
          %v6531 = vshll.u32 %v6522, %v6529
          %v6532 = vshrl.u32 %v6514, %v6530
          %v6533 = vor.u32 %v6531, %v6532
          %v6534 = vsub.s32 4294967266, %v6529
          %v6535 = vadd.s32 %v6534, 127
          %v6536 = vshll.u32 %v6535, 23
          %v6537 = vor.u32 4788187, %v6536
          %v6538 = vand.u32 2147483647, %v6537
          %v6540 = vcvt.s32.f32 %v6533
          %v6541 = vmul.f32 %v6540, %v6538
          %v6542 = vxor.u32 %v6541, 2147483648
          %v6543 = vsel %vm6460, %v6542, %v6541
          %v6544 = vsub.s32 4, %v6520
          %v6545 = vsel %vm6460, %v6544, %v6520
          %v6546 = vsel %vm6459, %v317, %v6543
          %v6547 = vsel %vm6459, 0, %v6545
          %v6548 = vcosq.f32.pop %v6546
          %v6549 = vsinq.f32.pop %v6546
          %vm6550 = vweird.f32 %v317
          %v6551 = vadd.s32 %v6547, 3
          %v6552 = vand.u32 %v6551, 3
          %vm6553 = vcmp.lt.s32.totalorder %v6552, 2
          %vm6554 = vcmp.eq.s32.totalorder %v6552, 0
          %v6555 = vxor.u32 %v6549, 2147483648
          %v6556 = vsel %vm6554, %v6548, %v6555
          %vm6557 = vcmp.eq.s32.totalorder %v6552, 2
          %v6558 = vxor.u32 %v6548, 2147483648
          %v6559 = vsel %vm6557, %v6558, %v6549
          %v6560 = vsel %vm6553, %v6556, %v6559
          %v6561 = vsel %vm6550, nan, %v6560
          %v6562 = vand.u32 2147483647, %v318
          %vm6563 = vcmp.le.f32.partialorder %v6562, 0.7853982
          %vm6564 = vcmp.lt.s32.totalorder %v318, 0
          %v6565 = vand.u32 %v318, 2139095040
          %v6566 = vshrl.u32 %v6565, 23
          %v6567 = vsub.s32 %v6566, 127
          %v6568 = vand.u32 2147483647, %v318
          %v6569 = vand.u32 %v6568, 8388607
          %v6570 = vor.u32 %v6569, 8388608
          %v6571 = vsub.s32 0, %v6570
          %v6572 = vadd.s32 %v6567, 1
          %vm6573 = vcmp.gt.s32.totalorder %v6572, 0
          %v6574 = vsel %vm6573, %v6572, 0
          %v6575 = vshrl.u32 %v6574, 5
          %v6576 = vand.u32 %v6574, 31
          %v6577 = vsub.s32 32, %v6576
          %v6578 = vshrl.u32 683565275, %v6577
          %v6579 = vshll.u32 683565275, %v6576
          %v6580 = vshrl.u32 2475754826, %v6577
          %v6581 = vor.u32 %v6579, %v6580
          %v6582 = vshll.u32 2475754826, %v6576
          %v6583 = vshrl.u32 2131351028, %v6577
          %v6584 = vor.u32 %v6582, %v6583
          %v6585 = vshll.u32 2131351028, %v6576
          %v6586 = vshrl.u32 2102212464, %v6577
          %v6587 = vor.u32 %v6585, %v6586
          %v6588 = vshll.u32 2102212464, %v6576
          %v6589 = vshrl.u32 920167782, %v6577
          %v6590 = vor.u32 %v6588, %v6589
          %v6591 = vshll.u32 920167782, %v6576
          %v6592 = vshrl.u32 1326507024, %v6577
          %v6593 = vor.u32 %v6591, %v6592
          %vm6594 = vcmp.lt.s32.totalorder %v6575, 1
          %vm6595 = vcmp.lt.s32.totalorder %v6575, 2
          %vm6596 = vcmp.lt.s32.totalorder %v6575, 3
          %vm6597 = vcmp.lt.s32.totalorder %v6575, 4
          %v6598 = vsel %vm6594, %v6578, %v6581
          %v6599 = vsel %vm6597, %v6587, 2102212464
          %v6600 = vsel %vm6596, %v6584, %v6599
          %v6601 = vsel %vm6595, %v6598, %v6600
          %v6602 = vsel %vm6594, %v6581, %v6584
          %v6603 = vsel %vm6597, %v6590, 920167782
          %v6604 = vsel %vm6596, %v6587, %v6603
          %v6605 = vsel %vm6595, %v6602, %v6604
          %v6606 = vsel %vm6594, %v6584, %v6587
          %v6607 = vsel %vm6597, %v6593, 1326507024
          %v6608 = vsel %vm6596, %v6590, %v6607
          %v6609 = vsel %vm6595, %v6606, %v6608
          %v6610 = vshll.u32 %v6570, 8
          %v6611 = vmul.u32.u64.compose %v6610, %v6609
          %v6612 = vextract.low.u32 %v6611
          %v6613 = vextract.high.u32 %v6611
          %v6614 = vmul.u32.u64.compose %v6610, %v6605
          %v6615 = vextract.low.u32 %v6614
          %v6616 = vextract.high.u32 %v6614
          %v6617 = vmul.u32 %v6610, %v6601
          %v6618 = vadd.s32 %v6613, %v6615
          %vm6619 = vc.u32 %v6613, %v6615
          %v6620 = vadd.s32 %v6616, 1
          %v6621 = vsel %vm6619, %v6620, %v6616
          %v6622 = vadd.s32 %v6617, %v6621
          %v6623 = vadd.s32 %v6622, 536870912
          %v6624 = vshrl.u32 %v6623, 30
          %v6625 = vshll.u32 %v6624, 30
          %v6626 = vsub.s32 %v6622, %v6625
          %vm6627 = vcmp.lt.s32.totalorder %v6626, 0
          %v6628 = vsub.s32 0, %v6626
          %v6629 = vsel %vm6627, %v6628, %v6626
          %v6630 = vclz %v6629
          %v6631 = vsub.s32 %v6630, 2
          %vm6632 = vcmp.gt.s32.totalorder 0, %v6631
          %v6633 = vsel %vm6632, 0, %v6631
          %v6634 = vsub.s32 32, %v6633
          %v6635 = vshll.u32 %v6626, %v6633
          %v6636 = vshrl.u32 %v6618, %v6634
          %v6637 = vor.u32 %v6635, %v6636
          %v6638 = vsub.s32 4294967266, %v6633
          %v6639 = vadd.s32 %v6638, 127
          %v6640 = vshll.u32 %v6639, 23
          %v6641 = vor.u32 4788187, %v6640
          %v6642 = vand.u32 2147483647, %v6641
          %v6644 = vcvt.s32.f32 %v6637
          %v6645 = vmul.f32 %v6644, %v6642
          %v6646 = vxor.u32 %v6645, 2147483648
          %v6647 = vsel %vm6564, %v6646, %v6645
          %v6648 = vsub.s32 4, %v6624
          %v6649 = vsel %vm6564, %v6648, %v6624
          %v6650 = vsel %vm6563, %v318, %v6647
          %v6651 = vsel %vm6563, 0, %v6649
          %v6652 = vcosq.f32.pop %v6650
          %v6653 = vsinq.f32.pop %v6650
          %vm6654 = vweird.f32 %v318
          %v6655 = vadd.s32 %v6651, 3
          %v6656 = vand.u32 %v6655, 3
          %vm6657 = vcmp.lt.s32.totalorder %v6656, 2
          %vm6658 = vcmp.eq.s32.totalorder %v6656, 0
          %v6659 = vxor.u32 %v6653, 2147483648
          %v6660 = vsel %vm6658, %v6652, %v6659
          %vm6661 = vcmp.eq.s32.totalorder %v6656, 2
          %v6662 = vxor.u32 %v6652, 2147483648
          %v6663 = vsel %vm6661, %v6662, %v6653
          %v6664 = vsel %vm6657, %v6660, %v6663
          %v6665 = vsel %vm6654, nan, %v6664
          %v6666 = vand.u32 2147483647, %v319
          %vm6667 = vcmp.le.f32.partialorder %v6666, 0.7853982
          %vm6668 = vcmp.lt.s32.totalorder %v319, 0
          %v6669 = vand.u32 %v319, 2139095040
          %v6670 = vshrl.u32 %v6669, 23
          %v6671 = vsub.s32 %v6670, 127
          %v6672 = vand.u32 2147483647, %v319
          %v6673 = vand.u32 %v6672, 8388607
          %v6674 = vor.u32 %v6673, 8388608
          %v6675 = vsub.s32 0, %v6674
          %v6676 = vadd.s32 %v6671, 1
          %vm6677 = vcmp.gt.s32.totalorder %v6676, 0
          %v6678 = vsel %vm6677, %v6676, 0
          %v6679 = vshrl.u32 %v6678, 5
          %v6680 = vand.u32 %v6678, 31
          %v6681 = vsub.s32 32, %v6680
          %v6682 = vshrl.u32 683565275, %v6681
          %v6683 = vshll.u32 683565275, %v6680
          %v6684 = vshrl.u32 2475754826, %v6681
          %v6685 = vor.u32 %v6683, %v6684
          %v6686 = vshll.u32 2475754826, %v6680
          %v6687 = vshrl.u32 2131351028, %v6681
          %v6688 = vor.u32 %v6686, %v6687
          %v6689 = vshll.u32 2131351028, %v6680
          %v6690 = vshrl.u32 2102212464, %v6681
          %v6691 = vor.u32 %v6689, %v6690
          %v6692 = vshll.u32 2102212464, %v6680
          %v6693 = vshrl.u32 920167782, %v6681
          %v6694 = vor.u32 %v6692, %v6693
          %v6695 = vshll.u32 920167782, %v6680
          %v6696 = vshrl.u32 1326507024, %v6681
          %v6697 = vor.u32 %v6695, %v6696
          %vm6698 = vcmp.lt.s32.totalorder %v6679, 1
          %vm6699 = vcmp.lt.s32.totalorder %v6679, 2
          %vm6700 = vcmp.lt.s32.totalorder %v6679, 3
          %vm6701 = vcmp.lt.s32.totalorder %v6679, 4
          %v6702 = vsel %vm6698, %v6682, %v6685
          %v6703 = vsel %vm6701, %v6691, 2102212464
          %v6704 = vsel %vm6700, %v6688, %v6703
          %v6705 = vsel %vm6699, %v6702, %v6704
          %v6706 = vsel %vm6698, %v6685, %v6688
          %v6707 = vsel %vm6701, %v6694, 920167782
          %v6708 = vsel %vm6700, %v6691, %v6707
          %v6709 = vsel %vm6699, %v6706, %v6708
          %v6710 = vsel %vm6698, %v6688, %v6691
          %v6711 = vsel %vm6701, %v6697, 1326507024
          %v6712 = vsel %vm6700, %v6694, %v6711
          %v6713 = vsel %vm6699, %v6710, %v6712
          %v6714 = vshll.u32 %v6674, 8
          %v6715 = vmul.u32.u64.compose %v6714, %v6713
          %v6716 = vextract.low.u32 %v6715
          %v6717 = vextract.high.u32 %v6715
          %v6718 = vmul.u32.u64.compose %v6714, %v6709
          %v6719 = vextract.low.u32 %v6718
          %v6720 = vextract.high.u32 %v6718
          %v6721 = vmul.u32 %v6714, %v6705
          %v6722 = vadd.s32 %v6717, %v6719
          %vm6723 = vc.u32 %v6717, %v6719
          %v6724 = vadd.s32 %v6720, 1
          %v6725 = vsel %vm6723, %v6724, %v6720
          %v6726 = vadd.s32 %v6721, %v6725
          %v6727 = vadd.s32 %v6726, 536870912
          %v6728 = vshrl.u32 %v6727, 30
          %v6729 = vshll.u32 %v6728, 30
          %v6730 = vsub.s32 %v6726, %v6729
          %vm6731 = vcmp.lt.s32.totalorder %v6730, 0
          %v6732 = vsub.s32 0, %v6730
          %v6733 = vsel %vm6731, %v6732, %v6730
          %v6734 = vclz %v6733
          %v6735 = vsub.s32 %v6734, 2
          %vm6736 = vcmp.gt.s32.totalorder 0, %v6735
          %v6737 = vsel %vm6736, 0, %v6735
          %v6738 = vsub.s32 32, %v6737
          %v6739 = vshll.u32 %v6730, %v6737
          %v6740 = vshrl.u32 %v6722, %v6738
          %v6741 = vor.u32 %v6739, %v6740
          %v6742 = vsub.s32 4294967266, %v6737
          %v6743 = vadd.s32 %v6742, 127
          %v6744 = vshll.u32 %v6743, 23
          %v6745 = vor.u32 4788187, %v6744
          %v6746 = vand.u32 2147483647, %v6745
          %v6748 = vcvt.s32.f32 %v6741
          %v6749 = vmul.f32 %v6748, %v6746
          %v6750 = vxor.u32 %v6749, 2147483648
          %v6751 = vsel %vm6668, %v6750, %v6749
          %v6752 = vsub.s32 4, %v6728
          %v6753 = vsel %vm6668, %v6752, %v6728
          %v6754 = vsel %vm6667, %v319, %v6751
          %v6755 = vsel %vm6667, 0, %v6753
          %v6756 = vcosq.f32.pop %v6754
          %v6757 = vsinq.f32.pop %v6754
          %vm6758 = vweird.f32 %v319
          %v6759 = vadd.s32 %v6755, 3
          %v6760 = vand.u32 %v6759, 3
          %vm6761 = vcmp.lt.s32.totalorder %v6760, 2
          %vm6762 = vcmp.eq.s32.totalorder %v6760, 0
          %v6763 = vxor.u32 %v6757, 2147483648
          %v6764 = vsel %vm6762, %v6756, %v6763
          %vm6765 = vcmp.eq.s32.totalorder %v6760, 2
          %v6766 = vxor.u32 %v6756, 2147483648
          %v6767 = vsel %vm6765, %v6766, %v6757
          %v6768 = vsel %vm6761, %v6764, %v6767
          %v6769 = vsel %vm6758, nan, %v6768
          %v6770 = vand.u32 2147483647, %v320
          %vm6771 = vcmp.le.f32.partialorder %v6770, 0.7853982
          %vm6772 = vcmp.lt.s32.totalorder %v320, 0
          %v6773 = vand.u32 %v320, 2139095040
          %v6774 = vshrl.u32 %v6773, 23
          %v6775 = vsub.s32 %v6774, 127
          %v6776 = vand.u32 2147483647, %v320
          %v6777 = vand.u32 %v6776, 8388607
          %v6778 = vor.u32 %v6777, 8388608
          %v6779 = vsub.s32 0, %v6778
          %v6780 = vadd.s32 %v6775, 1
          %vm6781 = vcmp.gt.s32.totalorder %v6780, 0
          %v6782 = vsel %vm6781, %v6780, 0
          %v6783 = vshrl.u32 %v6782, 5
          %v6784 = vand.u32 %v6782, 31
          %v6785 = vsub.s32 32, %v6784
          %v6786 = vshrl.u32 683565275, %v6785
          %v6787 = vshll.u32 683565275, %v6784
          %v6788 = vshrl.u32 2475754826, %v6785
          %v6789 = vor.u32 %v6787, %v6788
          %v6790 = vshll.u32 2475754826, %v6784
          %v6791 = vshrl.u32 2131351028, %v6785
          %v6792 = vor.u32 %v6790, %v6791
          %v6793 = vshll.u32 2131351028, %v6784
          %v6794 = vshrl.u32 2102212464, %v6785
          %v6795 = vor.u32 %v6793, %v6794
          %v6796 = vshll.u32 2102212464, %v6784
          %v6797 = vshrl.u32 920167782, %v6785
          %v6798 = vor.u32 %v6796, %v6797
          %v6799 = vshll.u32 920167782, %v6784
          %v6800 = vshrl.u32 1326507024, %v6785
          %v6801 = vor.u32 %v6799, %v6800
          %vm6802 = vcmp.lt.s32.totalorder %v6783, 1
          %vm6803 = vcmp.lt.s32.totalorder %v6783, 2
          %vm6804 = vcmp.lt.s32.totalorder %v6783, 3
          %vm6805 = vcmp.lt.s32.totalorder %v6783, 4
          %v6806 = vsel %vm6802, %v6786, %v6789
          %v6807 = vsel %vm6805, %v6795, 2102212464
          %v6808 = vsel %vm6804, %v6792, %v6807
          %v6809 = vsel %vm6803, %v6806, %v6808
          %v6810 = vsel %vm6802, %v6789, %v6792
          %v6811 = vsel %vm6805, %v6798, 920167782
          %v6812 = vsel %vm6804, %v6795, %v6811
          %v6813 = vsel %vm6803, %v6810, %v6812
          %v6814 = vsel %vm6802, %v6792, %v6795
          %v6815 = vsel %vm6805, %v6801, 1326507024
          %v6816 = vsel %vm6804, %v6798, %v6815
          %v6817 = vsel %vm6803, %v6814, %v6816
          %v6818 = vshll.u32 %v6778, 8
          %v6819 = vmul.u32.u64.compose %v6818, %v6817
          %v6820 = vextract.low.u32 %v6819
          %v6821 = vextract.high.u32 %v6819
          %v6822 = vmul.u32.u64.compose %v6818, %v6813
          %v6823 = vextract.low.u32 %v6822
          %v6824 = vextract.high.u32 %v6822
          %v6825 = vmul.u32 %v6818, %v6809
          %v6826 = vadd.s32 %v6821, %v6823
          %vm6827 = vc.u32 %v6821, %v6823
          %v6828 = vadd.s32 %v6824, 1
          %v6829 = vsel %vm6827, %v6828, %v6824
          %v6830 = vadd.s32 %v6825, %v6829
          %v6831 = vadd.s32 %v6830, 536870912
          %v6832 = vshrl.u32 %v6831, 30
          %v6833 = vshll.u32 %v6832, 30
          %v6834 = vsub.s32 %v6830, %v6833
          %vm6835 = vcmp.lt.s32.totalorder %v6834, 0
          %v6836 = vsub.s32 0, %v6834
          %v6837 = vsel %vm6835, %v6836, %v6834
          %v6838 = vclz %v6837
          %v6839 = vsub.s32 %v6838, 2
          %vm6840 = vcmp.gt.s32.totalorder 0, %v6839
          %v6841 = vsel %vm6840, 0, %v6839
          %v6842 = vsub.s32 32, %v6841
          %v6843 = vshll.u32 %v6834, %v6841
          %v6844 = vshrl.u32 %v6826, %v6842
          %v6845 = vor.u32 %v6843, %v6844
          %v6846 = vsub.s32 4294967266, %v6841
          %v6847 = vadd.s32 %v6846, 127
          %v6848 = vshll.u32 %v6847, 23
          %v6849 = vor.u32 4788187, %v6848
          %v6850 = vand.u32 2147483647, %v6849
          %v6852 = vcvt.s32.f32 %v6845
          %v6853 = vmul.f32 %v6852, %v6850
          %v6854 = vxor.u32 %v6853, 2147483648
          %v6855 = vsel %vm6772, %v6854, %v6853
          %v6856 = vsub.s32 4, %v6832
          %v6857 = vsel %vm6772, %v6856, %v6832
          %v6858 = vsel %vm6771, %v320, %v6855
          %v6859 = vsel %vm6771, 0, %v6857
          %v6860 = vcosq.f32.pop %v6858
          %v6861 = vsinq.f32.pop %v6858
          %vm6862 = vweird.f32 %v320
          %v6863 = vadd.s32 %v6859, 3
          %v6864 = vand.u32 %v6863, 3
          %vm6865 = vcmp.lt.s32.totalorder %v6864, 2
          %vm6866 = vcmp.eq.s32.totalorder %v6864, 0
          %v6867 = vxor.u32 %v6861, 2147483648
          %v6868 = vsel %vm6866, %v6860, %v6867
          %vm6869 = vcmp.eq.s32.totalorder %v6864, 2
          %v6870 = vxor.u32 %v6860, 2147483648
          %v6871 = vsel %vm6869, %v6870, %v6861
          %v6872 = vsel %vm6865, %v6868, %v6871
          %v6873 = vsel %vm6862, nan, %v6872
          %v6874 = vand.u32 2147483647, %v321
          %vm6875 = vcmp.le.f32.partialorder %v6874, 0.7853982
          %vm6876 = vcmp.lt.s32.totalorder %v321, 0
          %v6877 = vand.u32 %v321, 2139095040
          %v6878 = vshrl.u32 %v6877, 23
          %v6879 = vsub.s32 %v6878, 127
          %v6880 = vand.u32 2147483647, %v321
          %v6881 = vand.u32 %v6880, 8388607
          %v6882 = vor.u32 %v6881, 8388608
          %v6883 = vsub.s32 0, %v6882
          %v6884 = vadd.s32 %v6879, 1
          %vm6885 = vcmp.gt.s32.totalorder %v6884, 0
          %v6886 = vsel %vm6885, %v6884, 0
          %v6887 = vshrl.u32 %v6886, 5
          %v6888 = vand.u32 %v6886, 31
          %v6889 = vsub.s32 32, %v6888
          %v6890 = vshrl.u32 683565275, %v6889
          %v6891 = vshll.u32 683565275, %v6888
          %v6892 = vshrl.u32 2475754826, %v6889
          %v6893 = vor.u32 %v6891, %v6892
          %v6894 = vshll.u32 2475754826, %v6888
          %v6895 = vshrl.u32 2131351028, %v6889
          %v6896 = vor.u32 %v6894, %v6895
          %v6897 = vshll.u32 2131351028, %v6888
          %v6898 = vshrl.u32 2102212464, %v6889
          %v6899 = vor.u32 %v6897, %v6898
          %v6900 = vshll.u32 2102212464, %v6888
          %v6901 = vshrl.u32 920167782, %v6889
          %v6902 = vor.u32 %v6900, %v6901
          %v6903 = vshll.u32 920167782, %v6888
          %v6904 = vshrl.u32 1326507024, %v6889
          %v6905 = vor.u32 %v6903, %v6904
          %vm6906 = vcmp.lt.s32.totalorder %v6887, 1
          %vm6907 = vcmp.lt.s32.totalorder %v6887, 2
          %vm6908 = vcmp.lt.s32.totalorder %v6887, 3
          %vm6909 = vcmp.lt.s32.totalorder %v6887, 4
          %v6910 = vsel %vm6906, %v6890, %v6893
          %v6911 = vsel %vm6909, %v6899, 2102212464
          %v6912 = vsel %vm6908, %v6896, %v6911
          %v6913 = vsel %vm6907, %v6910, %v6912
          %v6914 = vsel %vm6906, %v6893, %v6896
          %v6915 = vsel %vm6909, %v6902, 920167782
          %v6916 = vsel %vm6908, %v6899, %v6915
          %v6917 = vsel %vm6907, %v6914, %v6916
          %v6918 = vsel %vm6906, %v6896, %v6899
          %v6919 = vsel %vm6909, %v6905, 1326507024
          %v6920 = vsel %vm6908, %v6902, %v6919
          %v6921 = vsel %vm6907, %v6918, %v6920
          %v6922 = vshll.u32 %v6882, 8
          %v6923 = vmul.u32.u64.compose %v6922, %v6921
          %v6924 = vextract.low.u32 %v6923
          %v6925 = vextract.high.u32 %v6923
          %v6926 = vmul.u32.u64.compose %v6922, %v6917
          %v6927 = vextract.low.u32 %v6926
          %v6928 = vextract.high.u32 %v6926
          %v6929 = vmul.u32 %v6922, %v6913
          %v6930 = vadd.s32 %v6925, %v6927
          %vm6931 = vc.u32 %v6925, %v6927
          %v6932 = vadd.s32 %v6928, 1
          %v6933 = vsel %vm6931, %v6932, %v6928
          %v6934 = vadd.s32 %v6929, %v6933
          %v6935 = vadd.s32 %v6934, 536870912
          %v6936 = vshrl.u32 %v6935, 30
          %v6937 = vshll.u32 %v6936, 30
          %v6938 = vsub.s32 %v6934, %v6937
          %vm6939 = vcmp.lt.s32.totalorder %v6938, 0
          %v6940 = vsub.s32 0, %v6938
          %v6941 = vsel %vm6939, %v6940, %v6938
          %v6942 = vclz %v6941
          %v6943 = vsub.s32 %v6942, 2
          %vm6944 = vcmp.gt.s32.totalorder 0, %v6943
          %v6945 = vsel %vm6944, 0, %v6943
          %v6946 = vsub.s32 32, %v6945
          %v6947 = vshll.u32 %v6938, %v6945
          %v6948 = vshrl.u32 %v6930, %v6946
          %v6949 = vor.u32 %v6947, %v6948
          %v6950 = vsub.s32 4294967266, %v6945
          %v6951 = vadd.s32 %v6950, 127
          %v6952 = vshll.u32 %v6951, 23
          %v6953 = vor.u32 4788187, %v6952
          %v6954 = vand.u32 2147483647, %v6953
          %v6956 = vcvt.s32.f32 %v6949
          %v6957 = vmul.f32 %v6956, %v6954
          %v6958 = vxor.u32 %v6957, 2147483648
          %v6959 = vsel %vm6876, %v6958, %v6957
          %v6960 = vsub.s32 4, %v6936
          %v6961 = vsel %vm6876, %v6960, %v6936
          %v6962 = vsel %vm6875, %v321, %v6959
          %v6963 = vsel %vm6875, 0, %v6961
          %v6964 = vcosq.f32.pop %v6962
          %v6965 = vsinq.f32.pop %v6962
          %vm6966 = vweird.f32 %v321
          %v6967 = vadd.s32 %v6963, 3
          %v6968 = vand.u32 %v6967, 3
          %vm6969 = vcmp.lt.s32.totalorder %v6968, 2
          %vm6970 = vcmp.eq.s32.totalorder %v6968, 0
          %v6971 = vxor.u32 %v6965, 2147483648
          %v6972 = vsel %vm6970, %v6964, %v6971
          %vm6973 = vcmp.eq.s32.totalorder %v6968, 2
          %v6974 = vxor.u32 %v6964, 2147483648
          %v6975 = vsel %vm6973, %v6974, %v6965
          %v6976 = vsel %vm6969, %v6972, %v6975
          %v6977 = vsel %vm6966, nan, %v6976
          %6978 = vst [vmem:[#allocation2 + $0x10] sm:$0xff] %v3753
          %6979 = vst [vmem:[#allocation2 + $0x18] sm:$0xff] %v3857
          %6980 = vst [vmem:[#allocation2 + $0x30] sm:$0xff] %v3961
          %6981 = vst [vmem:[#allocation2 + $0x38] sm:$0xff] %v4065
          %6982 = vst [vmem:[#allocation2 + $0x50] sm:$0xff] %v4169
          %6983 = vst [vmem:[#allocation2 + $0x58] sm:$0xff] %v4273
          %6984 = vst [vmem:[#allocation2 + $0x70] sm:$0xff] %v4377
          %6985 = vst [vmem:[#allocation2 + $0x78] sm:$0xff] %v4481
          %6986 = vst [vmem:[#allocation2 + $0x90] sm:$0xff] %v4585
          %6987 = vst [vmem:[#allocation2 + $0x98] sm:$0xff] %v4689
          %6988 = vst [vmem:[#allocation2 + $0xb0] sm:$0xff] %v4793
          %6989 = vst [vmem:[#allocation2 + $0xb8] sm:$0xff] %v4897
          %6990 = vst [vmem:[#allocation2 + $0xd0] sm:$0xff] %v5001
          %6991 = vst [vmem:[#allocation2 + $0xd8] sm:$0xff] %v5105
          %6992 = vst [vmem:[#allocation2 + $0xf0] sm:$0xff] %v5209
          %6993 = vst [vmem:[#allocation2 + $0xf8] sm:$0xff] %v5313
          %6994 = vst [vmem:[#allocation2 + $0x110] sm:$0xff] %v5417
          %6995 = vst [vmem:[#allocation2 + $0x118] sm:$0xff] %v5521
          %6996 = vst [vmem:[#allocation2 + $0x130] sm:$0xff] %v5625
          %6997 = vst [vmem:[#allocation2 + $0x138] sm:$0xff] %v5729
          %6998 = vst [vmem:[#allocation2 + $0x150] sm:$0xff] %v5833
          %6999 = vst [vmem:[#allocation2 + $0x158] sm:$0xff] %v5937
          %7000 = vst [vmem:[#allocation2 + $0x170] sm:$0xff] %v6041
          %7001 = vst [vmem:[#allocation2 + $0x178] sm:$0xff] %v6145
          %7002 = vst [vmem:[#allocation2 + $0x190] sm:$0xff] %v6249
          %7003 = vst [vmem:[#allocation2 + $0x198] sm:$0xff] %v6353
          %7004 = vst [vmem:[#allocation2 + $0x1b0] sm:$0xff] %v6457
          %7005 = vst [vmem:[#allocation2 + $0x1b8] sm:$0xff] %v6561
          %7006 = vst [vmem:[#allocation2 + $0x1d0] sm:$0xff] %v6665
          %7007 = vst [vmem:[#allocation2 + $0x1d8] sm:$0xff] %v6769
          %7008 = vst [vmem:[#allocation2 + $0x1f0] sm:$0xff] %v6873
          %7009 = vst [vmem:[#allocation2 + $0x1f8] sm:$0xff] %v6977
        $region48: #{tpu_custom_call.1} parent=31 // pred_fallthru
          _
        %v7010 = vld [vmem:[#allocation2] sm:$0xff]
        %v7011 = vld [vmem:[#allocation2 + $0x8] sm:$0xff]
        %v7012 = vld [vmem:[#allocation2 + $0x10] sm:$0xff]
        %v7013 = vld [vmem:[#allocation2 + $0x18] sm:$0xff]
        %v7014 = vld [vmem:[#allocation2 + $0x20] sm:$0xff]
        %v7015 = vld [vmem:[#allocation2 + $0x28] sm:$0xff]
        %v7016 = vld [vmem:[#allocation2 + $0x30] sm:$0xff]
        %v7017 = vld [vmem:[#allocation2 + $0x38] sm:$0xff]
        %v7018 = vld [vmem:[#allocation2 + $0x40] sm:$0xff]
        %v7019 = vld [vmem:[#allocation2 + $0x48] sm:$0xff]
        %v7020 = vld [vmem:[#allocation2 + $0x50] sm:$0xff]
        %v7021 = vld [vmem:[#allocation2 + $0x58] sm:$0xff]
        %v7022 = vld [vmem:[#allocation2 + $0x60] sm:$0xff]
        %v7023 = vld [vmem:[#allocation2 + $0x68] sm:$0xff]
        %v7024 = vld [vmem:[#allocation2 + $0x70] sm:$0xff]
        %v7025 = vld [vmem:[#allocation2 + $0x78] sm:$0xff]
        %v7026 = vld [vmem:[#allocation2 + $0x80] sm:$0xff]
        %v7027 = vld [vmem:[#allocation2 + $0x88] sm:$0xff]
        %v7028 = vld [vmem:[#allocation2 + $0x90] sm:$0xff]
        %v7029 = vld [vmem:[#allocation2 + $0x98] sm:$0xff]
        %v7030 = vld [vmem:[#allocation2 + $0xa0] sm:$0xff]
        %v7031 = vld [vmem:[#allocation2 + $0xa8] sm:$0xff]
        %v7032 = vld [vmem:[#allocation2 + $0xb0] sm:$0xff]
        %v7033 = vld [vmem:[#allocation2 + $0xb8] sm:$0xff]
        %v7034 = vld [vmem:[#allocation2 + $0xc0] sm:$0xff]
        %v7035 = vld [vmem:[#allocation2 + $0xc8] sm:$0xff]
        %v7036 = vld [vmem:[#allocation2 + $0xd0] sm:$0xff]
        %v7037 = vld [vmem:[#allocation2 + $0xd8] sm:$0xff]
        %v7038 = vld [vmem:[#allocation2 + $0xe0] sm:$0xff]
        %v7039 = vld [vmem:[#allocation2 + $0xe8] sm:$0xff]
        %v7040 = vld [vmem:[#allocation2 + $0xf0] sm:$0xff]
        %v7041 = vld [vmem:[#allocation2 + $0xf8] sm:$0xff]
        %v7042 = vld [vmem:[#allocation2 + $0x100] sm:$0xff]
        %v7043 = vld [vmem:[#allocation2 + $0x108] sm:$0xff]
        %v7044 = vld [vmem:[#allocation2 + $0x110] sm:$0xff]
        %v7045 = vld [vmem:[#allocation2 + $0x118] sm:$0xff]
        %v7046 = vld [vmem:[#allocation2 + $0x120] sm:$0xff]
        %v7047 = vld [vmem:[#allocation2 + $0x128] sm:$0xff]
        %v7048 = vld [vmem:[#allocation2 + $0x130] sm:$0xff]
        %v7049 = vld [vmem:[#allocation2 + $0x138] sm:$0xff]
        %v7050 = vld [vmem:[#allocation2 + $0x140] sm:$0xff]
        %v7051 = vld [vmem:[#allocation2 + $0x148] sm:$0xff]
        %v7052 = vld [vmem:[#allocation2 + $0x150] sm:$0xff]
        %v7053 = vld [vmem:[#allocation2 + $0x158] sm:$0xff]
        %v7054 = vld [vmem:[#allocation2 + $0x160] sm:$0xff]
        %v7055 = vld [vmem:[#allocation2 + $0x168] sm:$0xff]
        %v7056 = vld [vmem:[#allocation2 + $0x170] sm:$0xff]
        %v7057 = vld [vmem:[#allocation2 + $0x178] sm:$0xff]
        %v7058 = vld [vmem:[#allocation2 + $0x180] sm:$0xff]
        %v7059 = vld [vmem:[#allocation2 + $0x188] sm:$0xff]
        %v7060 = vld [vmem:[#allocation2 + $0x190] sm:$0xff]
        %v7061 = vld [vmem:[#allocation2 + $0x198] sm:$0xff]
        %v7062 = vld [vmem:[#allocation2 + $0x1a0] sm:$0xff]
        %v7063 = vld [vmem:[#allocation2 + $0x1a8] sm:$0xff]
        %v7064 = vld [vmem:[#allocation2 + $0x1b0] sm:$0xff]
        %v7065 = vld [vmem:[#allocation2 + $0x1b8] sm:$0xff]
        %v7066 = vld [vmem:[#allocation2 + $0x1c0] sm:$0xff]
        %v7067 = vld [vmem:[#allocation2 + $0x1c8] sm:$0xff]
        %v7068 = vld [vmem:[#allocation2 + $0x1d0] sm:$0xff]
        %v7069 = vld [vmem:[#allocation2 + $0x1d8] sm:$0xff]
        %v7070 = vld [vmem:[#allocation2 + $0x1e0] sm:$0xff]
        %v7071 = vld [vmem:[#allocation2 + $0x1e8] sm:$0xff]
        %v7072 = vld [vmem:[#allocation2 + $0x1f0] sm:$0xff]
        %v7073 = vld [vmem:[#allocation2 + $0x1f8] sm:$0xff]
        %v7074 = vld [vmem:[%s242] sm:$0xff]
        %v7075 = vld [vmem:[%s242 + $0x8] sm:$0xff]
        %v7076 = vld [vmem:[%s242 + $0x10] sm:$0xff]
        %v7077 = vld [vmem:[%s242 + $0x18] sm:$0xff]
        %v7078 = vld [vmem:[%s242 + $0x20] sm:$0xff]
        %v7079 = vld [vmem:[%s242 + $0x28] sm:$0xff]
        %v7080 = vld [vmem:[%s242 + $0x30] sm:$0xff]
        %v7081 = vld [vmem:[%s242 + $0x38] sm:$0xff]
        %v7082 = vld [vmem:[%s242 + $0x40] sm:$0xff]
        %v7083 = vld [vmem:[%s242 + $0x48] sm:$0xff]
        %v7084 = vld [vmem:[%s242 + $0x50] sm:$0xff]
        %v7085 = vld [vmem:[%s242 + $0x58] sm:$0xff]
        %v7086 = vld [vmem:[%s242 + $0x60] sm:$0xff]
        %v7087 = vld [vmem:[%s242 + $0x68] sm:$0xff]
        %v7088 = vld [vmem:[%s242 + $0x70] sm:$0xff]
        %v7089 = vld [vmem:[%s242 + $0x78] sm:$0xff]
        %v7090 = vld [vmem:[%s242 + $0x80] sm:$0xff]
        %v7091 = vld [vmem:[%s242 + $0x88] sm:$0xff]
        %v7092 = vld [vmem:[%s242 + $0x90] sm:$0xff]
        %v7093 = vld [vmem:[%s242 + $0x98] sm:$0xff]
        %v7094 = vld [vmem:[%s242 + $0xa0] sm:$0xff]
        %v7095 = vld [vmem:[%s242 + $0xa8] sm:$0xff]
        %v7096 = vld [vmem:[%s242 + $0xb0] sm:$0xff]
        %v7097 = vld [vmem:[%s242 + $0xb8] sm:$0xff]
        %v7098 = vld [vmem:[%s242 + $0xc0] sm:$0xff]
        %v7099 = vld [vmem:[%s242 + $0xc8] sm:$0xff]
        %v7100 = vld [vmem:[%s242 + $0xd0] sm:$0xff]
        %v7101 = vld [vmem:[%s242 + $0xd8] sm:$0xff]
        %v7102 = vld [vmem:[%s242 + $0xe0] sm:$0xff]
        %v7103 = vld [vmem:[%s242 + $0xe8] sm:$0xff]
        %v7104 = vld [vmem:[%s242 + $0xf0] sm:$0xff]
        %v7105 = vld [vmem:[%s242 + $0xf8] sm:$0xff]
        %v7106 = vld [vmem:[%s242 + $0x100] sm:$0xff]
        %v7107 = vld [vmem:[%s242 + $0x108] sm:$0xff]
        %v7108 = vld [vmem:[%s242 + $0x110] sm:$0xff]
        %v7109 = vld [vmem:[%s242 + $0x118] sm:$0xff]
        %v7110 = vld [vmem:[%s242 + $0x120] sm:$0xff]
        %v7111 = vld [vmem:[%s242 + $0x128] sm:$0xff]
        %v7112 = vld [vmem:[%s242 + $0x130] sm:$0xff]
        %v7113 = vld [vmem:[%s242 + $0x138] sm:$0xff]
        %v7114 = vld [vmem:[%s242 + $0x140] sm:$0xff]
        %v7115 = vld [vmem:[%s242 + $0x148] sm:$0xff]
        %v7116 = vld [vmem:[%s242 + $0x150] sm:$0xff]
        %v7117 = vld [vmem:[%s242 + $0x158] sm:$0xff]
        %v7118 = vld [vmem:[%s242 + $0x160] sm:$0xff]
        %v7119 = vld [vmem:[%s242 + $0x168] sm:$0xff]
        %v7120 = vld [vmem:[%s242 + $0x170] sm:$0xff]
        %v7121 = vld [vmem:[%s242 + $0x178] sm:$0xff]
        %v7122 = vld [vmem:[%s242 + $0x180] sm:$0xff]
        %v7123 = vld [vmem:[%s242 + $0x188] sm:$0xff]
        %v7124 = vld [vmem:[%s242 + $0x190] sm:$0xff]
        %v7125 = vld [vmem:[%s242 + $0x198] sm:$0xff]
        %v7126 = vld [vmem:[%s242 + $0x1a0] sm:$0xff]
        %v7127 = vld [vmem:[%s242 + $0x1a8] sm:$0xff]
        %v7128 = vld [vmem:[%s242 + $0x1b0] sm:$0xff]
        %v7129 = vld [vmem:[%s242 + $0x1b8] sm:$0xff]
        %v7130 = vld [vmem:[%s242 + $0x1c0] sm:$0xff]
        %v7131 = vld [vmem:[%s242 + $0x1c8] sm:$0xff]
        %v7132 = vld [vmem:[%s242 + $0x1d0] sm:$0xff]
        %v7133 = vld [vmem:[%s242 + $0x1d8] sm:$0xff]
        %v7134 = vld [vmem:[%s242 + $0x1e0] sm:$0xff]
        %v7135 = vld [vmem:[%s242 + $0x1e8] sm:$0xff]
        %v7136 = vld [vmem:[%s242 + $0x1f0] sm:$0xff]
        %v7137 = vld [vmem:[%s242 + $0x1f8] sm:$0xff]
        %7138 = vmatprep.subr.mxu0 0.0
        %7139 = vmatpush1.msra.mxu0 %v7074
        %7140 = vmatprep.subr.mxu0 0.0
        %7141 = vmatpush1.msra.mxu0 %v7075
        %7142 = vmatprep.subr.mxu0 0.0
        %7143 = vmatpush1.msra.mxu0 %v7076
        %7144 = vmatprep.subr.mxu0 0.0
        %7145 = vmatpush1.msra.mxu0 %v7077
        %7146 = vmatprep.subr.mxu0 0.0
        %7147 = vmatpush1.msra.mxu0 %v7078
        %7148 = vmatprep.subr.mxu0 0.0
        %7149 = vmatpush1.msra.mxu0 %v7079
        %7150 = vmatprep.subr.mxu0 0.0
        %7151 = vmatpush1.msra.mxu0 %v7080
        %7152 = vmatprep.subr.mxu0 0.0
        %7153 = vmatpush1.msra.mxu0 %v7081
        %7154 = vmatprep.subr.mxu0 0.0
        %7155 = vmatpush1.msra.mxu0 %v7082
        %7156 = vmatprep.subr.mxu0 0.0
        %7157 = vmatpush1.msra.mxu0 %v7083
        %7158 = vmatprep.subr.mxu0 0.0
        %7159 = vmatpush1.msra.mxu0 %v7084
        %7160 = vmatprep.subr.mxu0 0.0
        %7161 = vmatpush1.msra.mxu0 %v7085
        %7162 = vmatprep.subr.mxu0 0.0
        %7163 = vmatpush1.msra.mxu0 %v7086
        %7164 = vmatprep.subr.mxu0 0.0
        %7165 = vmatpush1.msra.mxu0 %v7087
        %7166 = vmatprep.subr.mxu0 0.0
        %7167 = vmatpush1.msra.mxu0 %v7088
        %7168 = vmatprep.subr.mxu0 0.0
        %7169 = vmatpush1.msra.mxu0 %v7089
        %7170 = vmatprep.subr.mxu0 0.0
        %7171 = vmatpush1.msra.mxu0 %v7090
        %7172 = vmatprep.subr.mxu0 0.0
        %7173 = vmatpush1.msra.mxu0 %v7091
        %7174 = vmatprep.subr.mxu0 0.0
        %7175 = vmatpush1.msra.mxu0 %v7092
        %7176 = vmatprep.subr.mxu0 0.0
        %7177 = vmatpush1.msra.mxu0 %v7093
        %7178 = vmatprep.subr.mxu0 0.0
        %7179 = vmatpush1.msra.mxu0 %v7094
        %7180 = vmatprep.subr.mxu0 0.0
        %7181 = vmatpush1.msra.mxu0 %v7095
        %7182 = vmatprep.subr.mxu0 0.0
        %7183 = vmatpush1.msra.mxu0 %v7096
        %7184 = vmatprep.subr.mxu0 0.0
        %7185 = vmatpush1.msra.mxu0 %v7097
        %7186 = vmatprep.subr.mxu0 0.0
        %7187 = vmatpush1.msra.mxu0 %v7098
        %7188 = vmatprep.subr.mxu0 0.0
        %7189 = vmatpush1.msra.mxu0 %v7099
        %7190 = vmatprep.subr.mxu0 0.0
        %7191 = vmatpush1.msra.mxu0 %v7100
        %7192 = vmatprep.subr.mxu0 0.0
        %7193 = vmatpush1.msra.mxu0 %v7101
        %7194 = vmatprep.subr.mxu0 0.0
        %7195 = vmatpush1.msra.mxu0 %v7102
        %7196 = vmatprep.subr.mxu0 0.0
        %7197 = vmatpush1.msra.mxu0 %v7103
        %7198 = vmatprep.subr.mxu0 0.0
        %7199 = vmatpush1.msra.mxu0 %v7104
        %7200 = vmatprep.subr.mxu0 0.0
        %7201 = vmatpush1.msra.mxu0 %v7105
        %7202 = vmatprep.mubr.f32.mxu0 %v7011
        %7203 = vmatmul.mubr.f32.gmra.mrb[0].mxu0 %v7010
        %v7204 = vpop.f32.mrb[0].mxu0
        %v7205 = vadd.f32 0.0, %v7204
        %v7206 = vpop.f32.mrb[0].mxu0
        %7207 = vmatprep.mubr.f32.mxu0 %v7015
        %7208 = vmatmul.mubr.f32.gmra.mrb[0].mxu0 %v7014
        %v7209 = vpop.f32.mrb[0].mxu0
        %v7210 = vadd.f32 0.0, %v7209
        %v7211 = vpop.f32.mrb[0].mxu0
        %7212 = vmatprep.mubr.f32.mxu0 %v7019
        %7213 = vmatmul.mubr.f32.gmra.mrb[0].mxu0 %v7018
        %v7214 = vpop.f32.mrb[0].mxu0
        %v7215 = vadd.f32 0.0, %v7214
        %v7216 = vpop.f32.mrb[0].mxu0
        %7217 = vmatprep.mubr.f32.mxu0 %v7023
        %7218 = vmatmul.mubr.f32.gmra.mrb[0].mxu0 %v7022
        %v7219 = vpop.f32.mrb[0].mxu0
        %v7220 = vadd.f32 0.0, %v7219
        %v7221 = vpop.f32.mrb[0].mxu0
        %7222 = vmatprep.mubr.f32.mxu0 %v7027
        %7223 = vmatmul.mubr.f32.gmra.mrb[0].mxu0 %v7026
        %v7224 = vpop.f32.mrb[0].mxu0
        %v7225 = vadd.f32 0.0, %v7224
        %v7226 = vpop.f32.mrb[0].mxu0
        %7227 = vmatprep.mubr.f32.mxu0 %v7031
        %7228 = vmatmul.mubr.f32.gmra.mrb[0].mxu0 %v7030
        %v7229 = vpop.f32.mrb[0].mxu0
        %v7230 = vadd.f32 0.0, %v7229
        %v7231 = vpop.f32.mrb[0].mxu0
        %7232 = vmatprep.mubr.f32.mxu0 %v7035
        %7233 = vmatmul.mubr.f32.gmra.mrb[0].mxu0 %v7034
        %v7234 = vpop.f32.mrb[0].mxu0
        %v7235 = vadd.f32 0.0, %v7234
        %v7236 = vpop.f32.mrb[0].mxu0
        %7237 = vmatprep.mubr.f32.mxu0 %v7039
        %7238 = vmatmul.mubr.f32.gmra.mrb[0].mxu0 %v7038
        %v7239 = vpop.f32.mrb[0].mxu0
        %v7240 = vadd.f32 0.0, %v7239
        %v7241 = vpop.f32.mrb[0].mxu0
        %7242 = vmatprep.mubr.f32.mxu0 %v7043
        %7243 = vmatmul.mubr.f32.gmra.mrb[0].mxu0 %v7042
        %v7244 = vpop.f32.mrb[0].mxu0
        %v7245 = vadd.f32 0.0, %v7244
        %v7246 = vpop.f32.mrb[0].mxu0
        %7247 = vmatprep.mubr.f32.mxu0 %v7047
        %7248 = vmatmul.mubr.f32.gmra.mrb[0].mxu0 %v7046
        %v7249 = vpop.f32.mrb[0].mxu0
        %v7250 = vadd.f32 0.0, %v7249
        %v7251 = vpop.f32.mrb[0].mxu0
        %7252 = vmatprep.mubr.f32.mxu0 %v7051
        %7253 = vmatmul.mubr.f32.gmra.mrb[0].mxu0 %v7050
        %v7254 = vpop.f32.mrb[0].mxu0
        %v7255 = vadd.f32 0.0, %v7254
        %v7256 = vpop.f32.mrb[0].mxu0
        %7257 = vmatprep.mubr.f32.mxu0 %v7055
        %7258 = vmatmul.mubr.f32.gmra.mrb[0].mxu0 %v7054
        %v7259 = vpop.f32.mrb[0].mxu0
        %v7260 = vadd.f32 0.0, %v7259
        %v7261 = vpop.f32.mrb[0].mxu0
        %7262 = vmatprep.mubr.f32.mxu0 %v7059
        %7263 = vmatmul.mubr.f32.gmra.mrb[0].mxu0 %v7058
        %v7264 = vpop.f32.mrb[0].mxu0
        %v7265 = vadd.f32 0.0, %v7264
        %v7266 = vpop.f32.mrb[0].mxu0
        %7267 = vmatprep.mubr.f32.mxu0 %v7063
        %7268 = vmatmul.mubr.f32.gmra.mrb[0].mxu0 %v7062
        %v7269 = vpop.f32.mrb[0].mxu0
        %v7270 = vadd.f32 0.0, %v7269
        %v7271 = vpop.f32.mrb[0].mxu0
        %7272 = vmatprep.mubr.f32.mxu0 %v7067
        %7273 = vmatmul.mubr.f32.gmra.mrb[0].mxu0 %v7066
        %v7274 = vpop.f32.mrb[0].mxu0
        %v7275 = vadd.f32 0.0, %v7274
        %v7276 = vpop.f32.mrb[0].mxu0
        %7277 = vmatprep.mubr.f32.mxu0 %v7071
        %7278 = vmatmul.mubr.f32.gmra.mrb[0].mxu0 %v7070
        %v7279 = vpop.f32.mrb[0].mxu0
        %v7280 = vadd.f32 0.0, %v7279
        %v7281 = vpop.f32.mrb[0].mxu0
        %7282 = vdwg.mxu0
        %7283 = vmatprep.subr.mxu0 0.0
        %7284 = vmatpush1.msra.mxu0 %v7106
        %7285 = vmatprep.subr.mxu0 0.0
        %7286 = vmatpush1.msra.mxu0 %v7107
        %7287 = vmatprep.subr.mxu0 0.0
        %7288 = vmatpush1.msra.mxu0 %v7108
        %7289 = vmatprep.subr.mxu0 0.0
        %7290 = vmatpush1.msra.mxu0 %v7109
        %7291 = vmatprep.subr.mxu0 0.0
        %7292 = vmatpush1.msra.mxu0 %v7110
        %7293 = vmatprep.subr.mxu0 0.0
        %7294 = vmatpush1.msra.mxu0 %v7111
        %7295 = vmatprep.subr.mxu0 0.0
        %7296 = vmatpush1.msra.mxu0 %v7112
        %7297 = vmatprep.subr.mxu0 0.0
        %7298 = vmatpush1.msra.mxu0 %v7113
        %7299 = vmatprep.subr.mxu0 0.0
        %7300 = vmatpush1.msra.mxu0 %v7114
        %7301 = vmatprep.subr.mxu0 0.0
        %7302 = vmatpush1.msra.mxu0 %v7115
        %7303 = vmatprep.subr.mxu0 0.0
        %7304 = vmatpush1.msra.mxu0 %v7116
        %7305 = vmatprep.subr.mxu0 0.0
        %7306 = vmatpush1.msra.mxu0 %v7117
        %7307 = vmatprep.subr.mxu0 0.0
        %7308 = vmatpush1.msra.mxu0 %v7118
        %7309 = vmatprep.subr.mxu0 0.0
        %7310 = vmatpush1.msra.mxu0 %v7119
        %7311 = vmatprep.subr.mxu0 0.0
        %7312 = vmatpush1.msra.mxu0 %v7120
        %7313 = vmatprep.subr.mxu0 0.0
        %7314 = vmatpush1.msra.mxu0 %v7121
        %7315 = vmatprep.subr.mxu0 0.0
        %7316 = vmatpush1.msra.mxu0 %v7122
        %7317 = vmatprep.subr.mxu0 0.0
        %7318 = vmatpush1.msra.mxu0 %v7123
        %7319 = vmatprep.subr.mxu0 0.0
        %7320 = vmatpush1.msra.mxu0 %v7124
        %7321 = vmatprep.subr.mxu0 0.0
        %7322 = vmatpush1.msra.mxu0 %v7125
        %7323 = vmatprep.subr.mxu0 0.0
        %7324 = vmatpush1.msra.mxu0 %v7126
        %7325 = vmatprep.subr.mxu0 0.0
        %7326 = vmatpush1.msra.mxu0 %v7127
        %7327 = vmatprep.subr.mxu0 0.0
        %7328 = vmatpush1.msra.mxu0 %v7128
        %7329 = vmatprep.subr.mxu0 0.0
        %7330 = vmatpush1.msra.mxu0 %v7129
        %7331 = vmatprep.subr.mxu0 0.0
        %7332 = vmatpush1.msra.mxu0 %v7130
        %7333 = vmatprep.subr.mxu0 0.0
        %7334 = vmatpush1.msra.mxu0 %v7131
        %7335 = vmatprep.subr.mxu0 0.0
        %7336 = vmatpush1.msra.mxu0 %v7132
        %7337 = vmatprep.subr.mxu0 0.0
        %7338 = vmatpush1.msra.mxu0 %v7133
        %7339 = vmatprep.subr.mxu0 0.0
        %7340 = vmatpush1.msra.mxu0 %v7134
        %7341 = vmatprep.subr.mxu0 0.0
        %7342 = vmatpush1.msra.mxu0 %v7135
        %7343 = vmatprep.subr.mxu0 0.0
        %7344 = vmatpush1.msra.mxu0 %v7136
        %7345 = vmatprep.subr.mxu0 0.0
        %7346 = vmatpush1.msra.mxu0 %v7137
        %7347 = vmatprep.mubr.f32.mxu0 %v7013
        %7348 = vmatmul.mubr.f32.gmra.mrb[0].mxu0 %v7012
        %v7349 = vpop.f32.mrb[0].mxu0
        %v7350 = vadd.f32 %v7205, %v7349
        %v7351 = vpop.f32.mrb[0].mxu0
        %7352 = vmatprep.mubr.f32.mxu0 %v7017
        %7353 = vmatmul.mubr.f32.gmra.mrb[0].mxu0 %v7016
        %v7354 = vpop.f32.mrb[0].mxu0
        %v7355 = vadd.f32 %v7210, %v7354
        %v7356 = vpop.f32.mrb[0].mxu0
        %7357 = vmatprep.mubr.f32.mxu0 %v7021
        %7358 = vmatmul.mubr.f32.gmra.mrb[0].mxu0 %v7020
        %v7359 = vpop.f32.mrb[0].mxu0
        %v7360 = vadd.f32 %v7215, %v7359
        %v7361 = vpop.f32.mrb[0].mxu0
        %7362 = vmatprep.mubr.f32.mxu0 %v7025
        %7363 = vmatmul.mubr.f32.gmra.mrb[0].mxu0 %v7024
        %v7364 = vpop.f32.mrb[0].mxu0
        %v7365 = vadd.f32 %v7220, %v7364
        %v7366 = vpop.f32.mrb[0].mxu0
        %7367 = vmatprep.mubr.f32.mxu0 %v7029
        %7368 = vmatmul.mubr.f32.gmra.mrb[0].mxu0 %v7028
        %v7369 = vpop.f32.mrb[0].mxu0
        %v7370 = vadd.f32 %v7225, %v7369
        %v7371 = vpop.f32.mrb[0].mxu0
        %7372 = vmatprep.mubr.f32.mxu0 %v7033
        %7373 = vmatmul.mubr.f32.gmra.mrb[0].mxu0 %v7032
        %v7374 = vpop.f32.mrb[0].mxu0
        %v7375 = vadd.f32 %v7230, %v7374
        %v7376 = vpop.f32.mrb[0].mxu0
        %7377 = vmatprep.mubr.f32.mxu0 %v7037
        %7378 = vmatmul.mubr.f32.gmra.mrb[0].mxu0 %v7036
        %v7379 = vpop.f32.mrb[0].mxu0
        %v7380 = vadd.f32 %v7235, %v7379
        %v7381 = vpop.f32.mrb[0].mxu0
        %7382 = vmatprep.mubr.f32.mxu0 %v7041
        %7383 = vmatmul.mubr.f32.gmra.mrb[0].mxu0 %v7040
        %v7384 = vpop.f32.mrb[0].mxu0
        %v7385 = vadd.f32 %v7240, %v7384
        %v7386 = vpop.f32.mrb[0].mxu0
        %7387 = vmatprep.mubr.f32.mxu0 %v7045
        %7388 = vmatmul.mubr.f32.gmra.mrb[0].mxu0 %v7044
        %v7389 = vpop.f32.mrb[0].mxu0
        %v7390 = vadd.f32 %v7245, %v7389
        %v7391 = vpop.f32.mrb[0].mxu0
        %7392 = vmatprep.mubr.f32.mxu0 %v7049
        %7393 = vmatmul.mubr.f32.gmra.mrb[0].mxu0 %v7048
        %v7394 = vpop.f32.mrb[0].mxu0
        %v7395 = vadd.f32 %v7250, %v7394
        %v7396 = vpop.f32.mrb[0].mxu0
        %7397 = vmatprep.mubr.f32.mxu0 %v7053
        %7398 = vmatmul.mubr.f32.gmra.mrb[0].mxu0 %v7052
        %v7399 = vpop.f32.mrb[0].mxu0
        %v7400 = vadd.f32 %v7255, %v7399
        %v7401 = vpop.f32.mrb[0].mxu0
        %7402 = vmatprep.mubr.f32.mxu0 %v7057
        %7403 = vmatmul.mubr.f32.gmra.mrb[0].mxu0 %v7056
        %v7404 = vpop.f32.mrb[0].mxu0
        %v7405 = vadd.f32 %v7260, %v7404
        %v7406 = vpop.f32.mrb[0].mxu0
        %7407 = vmatprep.mubr.f32.mxu0 %v7061
        %7408 = vmatmul.mubr.f32.gmra.mrb[0].mxu0 %v7060
        %v7409 = vpop.f32.mrb[0].mxu0
        %v7410 = vadd.f32 %v7265, %v7409
        %v7411 = vpop.f32.mrb[0].mxu0
        %7412 = vmatprep.mubr.f32.mxu0 %v7065
        %7413 = vmatmul.mubr.f32.gmra.mrb[0].mxu0 %v7064
        %v7414 = vpop.f32.mrb[0].mxu0
        %v7415 = vadd.f32 %v7270, %v7414
        %v7416 = vpop.f32.mrb[0].mxu0
        %7417 = vmatprep.mubr.f32.mxu0 %v7069
        %7418 = vmatmul.mubr.f32.gmra.mrb[0].mxu0 %v7068
        %v7419 = vpop.f32.mrb[0].mxu0
        %v7420 = vadd.f32 %v7275, %v7419
        %v7421 = vpop.f32.mrb[0].mxu0
        %7422 = vmatprep.mubr.f32.mxu0 %v7073
        %7423 = vmatmul.mubr.f32.gmra.mrb[0].mxu0 %v7072
        %v7424 = vpop.f32.mrb[0].mxu0
        %v7425 = vadd.f32 %v7280, %v7424
        %v7426 = vpop.f32.mrb[0].mxu0
        %7427 = vdwg.mxu0
        %v7428 = vld [vmem:[%s251] sm:$0xff]
        %v7429 = vld [vmem:[%s251 + $0x8] sm:$0xff]
        %v7430 = vld [vmem:[%s251 + $0x10] sm:$0xff]
        %v7431 = vld [vmem:[%s251 + $0x18] sm:$0xff]
        %v7432 = vld [vmem:[%s251 + $0x20] sm:$0xff]
        %v7433 = vld [vmem:[%s251 + $0x28] sm:$0xff]
        %v7434 = vld [vmem:[%s251 + $0x30] sm:$0xff]
        %v7435 = vld [vmem:[%s251 + $0x38] sm:$0xff]
        %v7436 = vld [vmem:[%s251 + $0x40] sm:$0xff]
        %v7437 = vld [vmem:[%s251 + $0x48] sm:$0xff]
        %v7438 = vld [vmem:[%s251 + $0x50] sm:$0xff]
        %v7439 = vld [vmem:[%s251 + $0x58] sm:$0xff]
        %v7440 = vld [vmem:[%s251 + $0x60] sm:$0xff]
        %v7441 = vld [vmem:[%s251 + $0x68] sm:$0xff]
        %v7442 = vld [vmem:[%s251 + $0x70] sm:$0xff]
        %v7443 = vld [vmem:[%s251 + $0x78] sm:$0xff]
        %v7444 = vld [vmem:[%s251 + $0x80] sm:$0xff]
        %v7445 = vld [vmem:[%s251 + $0x88] sm:$0xff]
        %v7446 = vld [vmem:[%s251 + $0x90] sm:$0xff]
        %v7447 = vld [vmem:[%s251 + $0x98] sm:$0xff]
        %v7448 = vld [vmem:[%s251 + $0xa0] sm:$0xff]
        %v7449 = vld [vmem:[%s251 + $0xa8] sm:$0xff]
        %v7450 = vld [vmem:[%s251 + $0xb0] sm:$0xff]
        %v7451 = vld [vmem:[%s251 + $0xb8] sm:$0xff]
        %v7452 = vld [vmem:[%s251 + $0xc0] sm:$0xff]
        %v7453 = vld [vmem:[%s251 + $0xc8] sm:$0xff]
        %v7454 = vld [vmem:[%s251 + $0xd0] sm:$0xff]
        %v7455 = vld [vmem:[%s251 + $0xd8] sm:$0xff]
        %v7456 = vld [vmem:[%s251 + $0xe0] sm:$0xff]
        %v7457 = vld [vmem:[%s251 + $0xe8] sm:$0xff]
        %v7458 = vld [vmem:[%s251 + $0xf0] sm:$0xff]
        %v7459 = vld [vmem:[%s251 + $0xf8] sm:$0xff]
        %v7460 = vld [vmem:[%s251 + $0x100] sm:$0xff]
        %v7461 = vld [vmem:[%s251 + $0x108] sm:$0xff]
        %v7462 = vld [vmem:[%s251 + $0x110] sm:$0xff]
        %v7463 = vld [vmem:[%s251 + $0x118] sm:$0xff]
        %v7464 = vld [vmem:[%s251 + $0x120] sm:$0xff]
        %v7465 = vld [vmem:[%s251 + $0x128] sm:$0xff]
        %v7466 = vld [vmem:[%s251 + $0x130] sm:$0xff]
        %v7467 = vld [vmem:[%s251 + $0x138] sm:$0xff]
        %v7468 = vld [vmem:[%s251 + $0x140] sm:$0xff]
        %v7469 = vld [vmem:[%s251 + $0x148] sm:$0xff]
        %v7470 = vld [vmem:[%s251 + $0x150] sm:$0xff]
        %v7471 = vld [vmem:[%s251 + $0x158] sm:$0xff]
        %v7472 = vld [vmem:[%s251 + $0x160] sm:$0xff]
        %v7473 = vld [vmem:[%s251 + $0x168] sm:$0xff]
        %v7474 = vld [vmem:[%s251 + $0x170] sm:$0xff]
        %v7475 = vld [vmem:[%s251 + $0x178] sm:$0xff]
        %v7476 = vld [vmem:[%s251 + $0x180] sm:$0xff]
        %v7477 = vld [vmem:[%s251 + $0x188] sm:$0xff]
        %v7478 = vld [vmem:[%s251 + $0x190] sm:$0xff]
        %v7479 = vld [vmem:[%s251 + $0x198] sm:$0xff]
        %v7480 = vld [vmem:[%s251 + $0x1a0] sm:$0xff]
        %v7481 = vld [vmem:[%s251 + $0x1a8] sm:$0xff]
        %v7482 = vld [vmem:[%s251 + $0x1b0] sm:$0xff]
        %v7483 = vld [vmem:[%s251 + $0x1b8] sm:$0xff]
        %v7484 = vld [vmem:[%s251 + $0x1c0] sm:$0xff]
        %v7485 = vld [vmem:[%s251 + $0x1c8] sm:$0xff]
        %v7486 = vld [vmem:[%s251 + $0x1d0] sm:$0xff]
        %v7487 = vld [vmem:[%s251 + $0x1d8] sm:$0xff]
        %v7488 = vld [vmem:[%s251 + $0x1e0] sm:$0xff]
        %v7489 = vld [vmem:[%s251 + $0x1e8] sm:$0xff]
        %v7490 = vld [vmem:[%s251 + $0x1f0] sm:$0xff]
        %v7491 = vld [vmem:[%s251 + $0x1f8] sm:$0xff]
        %7492 = vmatprep.subr.mxu0 0.0
        %7493 = vmatpush1.msra.mxu0 %v7428
        %7494 = vmatprep.subr.mxu0 0.0
        %7495 = vmatpush1.msra.mxu0 %v7429
        %7496 = vmatprep.subr.mxu0 0.0
        %7497 = vmatpush1.msra.mxu0 %v7430
        %7498 = vmatprep.subr.mxu0 0.0
        %7499 = vmatpush1.msra.mxu0 %v7431
        %7500 = vmatprep.subr.mxu0 0.0
        %7501 = vmatpush1.msra.mxu0 %v7432
        %7502 = vmatprep.subr.mxu0 0.0
        %7503 = vmatpush1.msra.mxu0 %v7433
        %7504 = vmatprep.subr.mxu0 0.0
        %7505 = vmatpush1.msra.mxu0 %v7434
        %7506 = vmatprep.subr.mxu0 0.0
        %7507 = vmatpush1.msra.mxu0 %v7435
        %7508 = vmatprep.subr.mxu0 0.0
        %7509 = vmatpush1.msra.mxu0 %v7436
        %7510 = vmatprep.subr.mxu0 0.0
        %7511 = vmatpush1.msra.mxu0 %v7437
        %7512 = vmatprep.subr.mxu0 0.0
        %7513 = vmatpush1.msra.mxu0 %v7438
        %7514 = vmatprep.subr.mxu0 0.0
        %7515 = vmatpush1.msra.mxu0 %v7439
        %7516 = vmatprep.subr.mxu0 0.0
        %7517 = vmatpush1.msra.mxu0 %v7440
        %7518 = vmatprep.subr.mxu0 0.0
        %7519 = vmatpush1.msra.mxu0 %v7441
        %7520 = vmatprep.subr.mxu0 0.0
        %7521 = vmatpush1.msra.mxu0 %v7442
        %7522 = vmatprep.subr.mxu0 0.0
        %7523 = vmatpush1.msra.mxu0 %v7443
        %7524 = vmatprep.subr.mxu0 0.0
        %7525 = vmatpush1.msra.mxu0 %v7444
        %7526 = vmatprep.subr.mxu0 0.0
        %7527 = vmatpush1.msra.mxu0 %v7445
        %7528 = vmatprep.subr.mxu0 0.0
        %7529 = vmatpush1.msra.mxu0 %v7446
        %7530 = vmatprep.subr.mxu0 0.0
        %7531 = vmatpush1.msra.mxu0 %v7447
        %7532 = vmatprep.subr.mxu0 0.0
        %7533 = vmatpush1.msra.mxu0 %v7448
        %7534 = vmatprep.subr.mxu0 0.0
        %7535 = vmatpush1.msra.mxu0 %v7449
        %7536 = vmatprep.subr.mxu0 0.0
        %7537 = vmatpush1.msra.mxu0 %v7450
        %7538 = vmatprep.subr.mxu0 0.0
        %7539 = vmatpush1.msra.mxu0 %v7451
        %7540 = vmatprep.subr.mxu0 0.0
        %7541 = vmatpush1.msra.mxu0 %v7452
        %7542 = vmatprep.subr.mxu0 0.0
        %7543 = vmatpush1.msra.mxu0 %v7453
        %7544 = vmatprep.subr.mxu0 0.0
        %7545 = vmatpush1.msra.mxu0 %v7454
        %7546 = vmatprep.subr.mxu0 0.0
        %7547 = vmatpush1.msra.mxu0 %v7455
        %7548 = vmatprep.subr.mxu0 0.0
        %7549 = vmatpush1.msra.mxu0 %v7456
        %7550 = vmatprep.subr.mxu0 0.0
        %7551 = vmatpush1.msra.mxu0 %v7457
        %7552 = vmatprep.subr.mxu0 0.0
        %7553 = vmatpush1.msra.mxu0 %v7458
        %7554 = vmatprep.subr.mxu0 0.0
        %7555 = vmatpush1.msra.mxu0 %v7459
        %7556 = vmatprep.mubr.f32.mxu0 %v7011
        %7557 = vmatmul.mubr.f32.gmra.mrb[0].mxu0 %v7010
        %v7558 = vpop.f32.mrb[0].mxu0
        %v7559 = vadd.f32 0.0, %v7558
        %v7560 = vpop.f32.mrb[0].mxu0
        %7561 = vmatprep.mubr.f32.mxu0 %v7015
        %7562 = vmatmul.mubr.f32.gmra.mrb[0].mxu0 %v7014
        %v7563 = vpop.f32.mrb[0].mxu0
        %v7564 = vadd.f32 0.0, %v7563
        %v7565 = vpop.f32.mrb[0].mxu0
        %7566 = vmatprep.mubr.f32.mxu0 %v7019
        %7567 = vmatmul.mubr.f32.gmra.mrb[0].mxu0 %v7018
        %v7568 = vpop.f32.mrb[0].mxu0
        %v7569 = vadd.f32 0.0, %v7568
        %v7570 = vpop.f32.mrb[0].mxu0
        %7571 = vmatprep.mubr.f32.mxu0 %v7023
        %7572 = vmatmul.mubr.f32.gmra.mrb[0].mxu0 %v7022
        %v7573 = vpop.f32.mrb[0].mxu0
        %v7574 = vadd.f32 0.0, %v7573
        %v7575 = vpop.f32.mrb[0].mxu0
        %7576 = vmatprep.mubr.f32.mxu0 %v7027
        %7577 = vmatmul.mubr.f32.gmra.mrb[0].mxu0 %v7026
        %v7578 = vpop.f32.mrb[0].mxu0
        %v7579 = vadd.f32 0.0, %v7578
        %v7580 = vpop.f32.mrb[0].mxu0
        %7581 = vmatprep.mubr.f32.mxu0 %v7031
        %7582 = vmatmul.mubr.f32.gmra.mrb[0].mxu0 %v7030
        %v7583 = vpop.f32.mrb[0].mxu0
        %v7584 = vadd.f32 0.0, %v7583
        %v7585 = vpop.f32.mrb[0].mxu0
        %7586 = vmatprep.mubr.f32.mxu0 %v7035
        %7587 = vmatmul.mubr.f32.gmra.mrb[0].mxu0 %v7034
        %v7588 = vpop.f32.mrb[0].mxu0
        %v7589 = vadd.f32 0.0, %v7588
        %v7590 = vpop.f32.mrb[0].mxu0
        %7591 = vmatprep.mubr.f32.mxu0 %v7039
        %7592 = vmatmul.mubr.f32.gmra.mrb[0].mxu0 %v7038
        %v7593 = vpop.f32.mrb[0].mxu0
        %v7594 = vadd.f32 0.0, %v7593
        %v7595 = vpop.f32.mrb[0].mxu0
        %7596 = vmatprep.mubr.f32.mxu0 %v7043
        %7597 = vmatmul.mubr.f32.gmra.mrb[0].mxu0 %v7042
        %v7598 = vpop.f32.mrb[0].mxu0
        %v7599 = vadd.f32 0.0, %v7598
        %v7600 = vpop.f32.mrb[0].mxu0
        %7601 = vmatprep.mubr.f32.mxu0 %v7047
        %7602 = vmatmul.mubr.f32.gmra.mrb[0].mxu0 %v7046
        %v7603 = vpop.f32.mrb[0].mxu0
        %v7604 = vadd.f32 0.0, %v7603
        %v7605 = vpop.f32.mrb[0].mxu0
        %7606 = vmatprep.mubr.f32.mxu0 %v7051
        %7607 = vmatmul.mubr.f32.gmra.mrb[0].mxu0 %v7050
        %v7608 = vpop.f32.mrb[0].mxu0
        %v7609 = vadd.f32 0.0, %v7608
        %v7610 = vpop.f32.mrb[0].mxu0
        %7611 = vmatprep.mubr.f32.mxu0 %v7055
        %7612 = vmatmul.mubr.f32.gmra.mrb[0].mxu0 %v7054
        %v7613 = vpop.f32.mrb[0].mxu0
        %v7614 = vadd.f32 0.0, %v7613
        %v7615 = vpop.f32.mrb[0].mxu0
        %7616 = vmatprep.mubr.f32.mxu0 %v7059
        %7617 = vmatmul.mubr.f32.gmra.mrb[0].mxu0 %v7058
        %v7618 = vpop.f32.mrb[0].mxu0
        %v7619 = vadd.f32 0.0, %v7618
        %v7620 = vpop.f32.mrb[0].mxu0
        %7621 = vmatprep.mubr.f32.mxu0 %v7063
        %7622 = vmatmul.mubr.f32.gmra.mrb[0].mxu0 %v7062
        %v7623 = vpop.f32.mrb[0].mxu0
        %v7624 = vadd.f32 0.0, %v7623
        %v7625 = vpop.f32.mrb[0].mxu0
        %7626 = vmatprep.mubr.f32.mxu0 %v7067
        %7627 = vmatmul.mubr.f32.gmra.mrb[0].mxu0 %v7066
        %v7628 = vpop.f32.mrb[0].mxu0
        %v7629 = vadd.f32 0.0, %v7628
        %v7630 = vpop.f32.mrb[0].mxu0
        %7631 = vmatprep.mubr.f32.mxu0 %v7071
        %7632 = vmatmul.mubr.f32.gmra.mrb[0].mxu0 %v7070
        %v7633 = vpop.f32.mrb[0].mxu0
        %v7634 = vadd.f32 0.0, %v7633
        %v7635 = vpop.f32.mrb[0].mxu0
        %7636 = vdwg.mxu0
        %7637 = vmatprep.subr.mxu0 0.0
        %7638 = vmatpush1.msra.mxu0 %v7460
        %7639 = vmatprep.subr.mxu0 0.0
        %7640 = vmatpush1.msra.mxu0 %v7461
        %7641 = vmatprep.subr.mxu0 0.0
        %7642 = vmatpush1.msra.mxu0 %v7462
        %7643 = vmatprep.subr.mxu0 0.0
        %7644 = vmatpush1.msra.mxu0 %v7463
        %7645 = vmatprep.subr.mxu0 0.0
        %7646 = vmatpush1.msra.mxu0 %v7464
        %7647 = vmatprep.subr.mxu0 0.0
        %7648 = vmatpush1.msra.mxu0 %v7465
        %7649 = vmatprep.subr.mxu0 0.0
        %7650 = vmatpush1.msra.mxu0 %v7466
        %7651 = vmatprep.subr.mxu0 0.0
        %7652 = vmatpush1.msra.mxu0 %v7467
        %7653 = vmatprep.subr.mxu0 0.0
        %7654 = vmatpush1.msra.mxu0 %v7468
        %7655 = vmatprep.subr.mxu0 0.0
        %7656 = vmatpush1.msra.mxu0 %v7469
        %7657 = vmatprep.subr.mxu0 0.0
        %7658 = vmatpush1.msra.mxu0 %v7470
        %7659 = vmatprep.subr.mxu0 0.0
        %7660 = vmatpush1.msra.mxu0 %v7471
        %7661 = vmatprep.subr.mxu0 0.0
        %7662 = vmatpush1.msra.mxu0 %v7472
        %7663 = vmatprep.subr.mxu0 0.0
        %7664 = vmatpush1.msra.mxu0 %v7473
        %7665 = vmatprep.subr.mxu0 0.0
        %7666 = vmatpush1.msra.mxu0 %v7474
        %7667 = vmatprep.subr.mxu0 0.0
        %7668 = vmatpush1.msra.mxu0 %v7475
        %7669 = vmatprep.subr.mxu0 0.0
        %7670 = vmatpush1.msra.mxu0 %v7476
        %7671 = vmatprep.subr.mxu0 0.0
        %7672 = vmatpush1.msra.mxu0 %v7477
        %7673 = vmatprep.subr.mxu0 0.0
        %7674 = vmatpush1.msra.mxu0 %v7478
        %7675 = vmatprep.subr.mxu0 0.0
        %7676 = vmatpush1.msra.mxu0 %v7479
        %7677 = vmatprep.subr.mxu0 0.0
        %7678 = vmatpush1.msra.mxu0 %v7480
        %7679 = vmatprep.subr.mxu0 0.0
        %7680 = vmatpush1.msra.mxu0 %v7481
        %7681 = vmatprep.subr.mxu0 0.0
        %7682 = vmatpush1.msra.mxu0 %v7482
        %7683 = vmatprep.subr.mxu0 0.0
        %7684 = vmatpush1.msra.mxu0 %v7483
        %7685 = vmatprep.subr.mxu0 0.0
        %7686 = vmatpush1.msra.mxu0 %v7484
        %7687 = vmatprep.subr.mxu0 0.0
        %7688 = vmatpush1.msra.mxu0 %v7485
        %7689 = vmatprep.subr.mxu0 0.0
        %7690 = vmatpush1.msra.mxu0 %v7486
        %7691 = vmatprep.subr.mxu0 0.0
        %7692 = vmatpush1.msra.mxu0 %v7487
        %7693 = vmatprep.subr.mxu0 0.0
        %7694 = vmatpush1.msra.mxu0 %v7488
        %7695 = vmatprep.subr.mxu0 0.0
        %7696 = vmatpush1.msra.mxu0 %v7489
        %7697 = vmatprep.subr.mxu0 0.0
        %7698 = vmatpush1.msra.mxu0 %v7490
        %7699 = vmatprep.subr.mxu0 0.0
        %7700 = vmatpush1.msra.mxu0 %v7491
        %7701 = vmatprep.mubr.f32.mxu0 %v7013
        %7702 = vmatmul.mubr.f32.gmra.mrb[0].mxu0 %v7012
        %v7703 = vpop.f32.mrb[0].mxu0
        %v7704 = vadd.f32 %v7559, %v7703
        %v7705 = vpop.f32.mrb[0].mxu0
        %7706 = vmatprep.mubr.f32.mxu0 %v7017
        %7707 = vmatmul.mubr.f32.gmra.mrb[0].mxu0 %v7016
        %v7708 = vpop.f32.mrb[0].mxu0
        %v7709 = vadd.f32 %v7564, %v7708
        %v7710 = vpop.f32.mrb[0].mxu0
        %7711 = vmatprep.mubr.f32.mxu0 %v7021
        %7712 = vmatmul.mubr.f32.gmra.mrb[0].mxu0 %v7020
        %v7713 = vpop.f32.mrb[0].mxu0
        %v7714 = vadd.f32 %v7569, %v7713
        %v7715 = vpop.f32.mrb[0].mxu0
        %7716 = vmatprep.mubr.f32.mxu0 %v7025
        %7717 = vmatmul.mubr.f32.gmra.mrb[0].mxu0 %v7024
        %v7718 = vpop.f32.mrb[0].mxu0
        %v7719 = vadd.f32 %v7574, %v7718
        %v7720 = vpop.f32.mrb[0].mxu0
        %7721 = vmatprep.mubr.f32.mxu0 %v7029
        %7722 = vmatmul.mubr.f32.gmra.mrb[0].mxu0 %v7028
        %v7723 = vpop.f32.mrb[0].mxu0
        %v7724 = vadd.f32 %v7579, %v7723
        %v7725 = vpop.f32.mrb[0].mxu0
        %7726 = vmatprep.mubr.f32.mxu0 %v7033
        %7727 = vmatmul.mubr.f32.gmra.mrb[0].mxu0 %v7032
        %v7728 = vpop.f32.mrb[0].mxu0
        %v7729 = vadd.f32 %v7584, %v7728
        %v7730 = vpop.f32.mrb[0].mxu0
        %7731 = vmatprep.mubr.f32.mxu0 %v7037
        %7732 = vmatmul.mubr.f32.gmra.mrb[0].mxu0 %v7036
        %v7733 = vpop.f32.mrb[0].mxu0
        %v7734 = vadd.f32 %v7589, %v7733
        %v7735 = vpop.f32.mrb[0].mxu0
        %7736 = vmatprep.mubr.f32.mxu0 %v7041
        %7737 = vmatmul.mubr.f32.gmra.mrb[0].mxu0 %v7040
        %v7738 = vpop.f32.mrb[0].mxu0
        %v7739 = vadd.f32 %v7594, %v7738
        %v7740 = vpop.f32.mrb[0].mxu0
        %7741 = vmatprep.mubr.f32.mxu0 %v7045
        %7742 = vmatmul.mubr.f32.gmra.mrb[0].mxu0 %v7044
        %v7743 = vpop.f32.mrb[0].mxu0
        %v7744 = vadd.f32 %v7599, %v7743
        %v7745 = vpop.f32.mrb[0].mxu0
        %7746 = vmatprep.mubr.f32.mxu0 %v7049
        %7747 = vmatmul.mubr.f32.gmra.mrb[0].mxu0 %v7048
        %v7748 = vpop.f32.mrb[0].mxu0
        %v7749 = vadd.f32 %v7604, %v7748
        %v7750 = vpop.f32.mrb[0].mxu0
        %7751 = vmatprep.mubr.f32.mxu0 %v7053
        %7752 = vmatmul.mubr.f32.gmra.mrb[0].mxu0 %v7052
        %v7753 = vpop.f32.mrb[0].mxu0
        %v7754 = vadd.f32 %v7609, %v7753
        %v7755 = vpop.f32.mrb[0].mxu0
        %7756 = vmatprep.mubr.f32.mxu0 %v7057
        %7757 = vmatmul.mubr.f32.gmra.mrb[0].mxu0 %v7056
        %v7758 = vpop.f32.mrb[0].mxu0
        %v7759 = vadd.f32 %v7614, %v7758
        %v7760 = vpop.f32.mrb[0].mxu0
        %7761 = vmatprep.mubr.f32.mxu0 %v7061
        %7762 = vmatmul.mubr.f32.gmra.mrb[0].mxu0 %v7060
        %v7763 = vpop.f32.mrb[0].mxu0
        %v7764 = vadd.f32 %v7619, %v7763
        %v7765 = vpop.f32.mrb[0].mxu0
        %7766 = vmatprep.mubr.f32.mxu0 %v7065
        %7767 = vmatmul.mubr.f32.gmra.mrb[0].mxu0 %v7064
        %v7768 = vpop.f32.mrb[0].mxu0
        %v7769 = vadd.f32 %v7624, %v7768
        %v7770 = vpop.f32.mrb[0].mxu0
        %7771 = vmatprep.mubr.f32.mxu0 %v7069
        %7772 = vmatmul.mubr.f32.gmra.mrb[0].mxu0 %v7068
        %v7773 = vpop.f32.mrb[0].mxu0
        %v7774 = vadd.f32 %v7629, %v7773
        %v7775 = vpop.f32.mrb[0].mxu0
        %7776 = vmatprep.mubr.f32.mxu0 %v7073
        %7777 = vmatmul.mubr.f32.gmra.mrb[0].mxu0 %v7072
        %v7778 = vpop.f32.mrb[0].mxu0
        %v7779 = vadd.f32 %v7634, %v7778
        %v7780 = vpop.f32.mrb[0].mxu0
        %7781 = vdwg.mxu0
        %v7782 = vmul.f32 %v7350, %v7350
        %v7783 = vmul.f32 %v7355, %v7355
        %v7784 = vmul.f32 %v7360, %v7360
        %v7785 = vmul.f32 %v7365, %v7365
        %v7786 = vmul.f32 %v7370, %v7370
        %v7787 = vmul.f32 %v7375, %v7375
        %v7788 = vmul.f32 %v7380, %v7380
        %v7789 = vmul.f32 %v7385, %v7385
        %v7790 = vmul.f32 %v7390, %v7390
        %v7791 = vmul.f32 %v7395, %v7395
        %v7792 = vmul.f32 %v7400, %v7400
        %v7793 = vmul.f32 %v7405, %v7405
        %v7794 = vmul.f32 %v7410, %v7410
        %v7795 = vmul.f32 %v7415, %v7415
        %v7796 = vmul.f32 %v7420, %v7420
        %v7797 = vmul.f32 %v7425, %v7425
        %v7798 = vmul.f32 %v7704, %v7704
        %v7799 = vmul.f32 %v7709, %v7709
        %v7800 = vmul.f32 %v7714, %v7714
        %v7801 = vmul.f32 %v7719, %v7719
        %v7802 = vmul.f32 %v7724, %v7724
        %v7803 = vmul.f32 %v7729, %v7729
        %v7804 = vmul.f32 %v7734, %v7734
        %v7805 = vmul.f32 %v7739, %v7739
        %v7806 = vmul.f32 %v7744, %v7744
        %v7807 = vmul.f32 %v7749, %v7749
        %v7808 = vmul.f32 %v7754, %v7754
        %v7809 = vmul.f32 %v7759, %v7759
        %v7810 = vmul.f32 %v7764, %v7764
        %v7811 = vmul.f32 %v7769, %v7769
        %v7812 = vmul.f32 %v7774, %v7774
        %v7813 = vmul.f32 %v7779, %v7779
        %v7814 = vadd.f32 %v7782, %v7798
        %v7815 = vadd.f32 %v7783, %v7799
        %v7816 = vadd.f32 %v7784, %v7800
        %v7817 = vadd.f32 %v7785, %v7801
        %v7818 = vadd.f32 %v7786, %v7802
        %v7819 = vadd.f32 %v7787, %v7803
        %v7820 = vadd.f32 %v7788, %v7804
        %v7821 = vadd.f32 %v7789, %v7805
        %v7822 = vadd.f32 %v7790, %v7806
        %v7823 = vadd.f32 %v7791, %v7807
        %v7824 = vadd.f32 %v7792, %v7808
        %v7825 = vadd.f32 %v7793, %v7809
        %v7826 = vadd.f32 %v7794, %v7810
        %v7827 = vadd.f32 %v7795, %v7811
        %v7828 = vadd.f32 %v7796, %v7812
        %v7829 = vadd.f32 %v7797, %v7813
        %v7830 = vrsqrt.pop %v7814
        %v7831 = vmul.f32 %v7814, %v7830
        %vm7832 = vcmp.eq.f32.partialorder %v7814, inf
        %v7833 = vsel %vm7832, %v7814, %v7831
        %vm7834 = vcmp.eq.f32.partialorder %v7814, 0.0
        %v7835 = vand.u32 %v7814, 2147483648
        %v7836 = vsel %vm7834, %v7835, %v7833
        %v7837 = vrsqrt.pop %v7815
        %v7838 = vmul.f32 %v7815, %v7837
        %vm7839 = vcmp.eq.f32.partialorder %v7815, inf
        %v7840 = vsel %vm7839, %v7815, %v7838
        %vm7841 = vcmp.eq.f32.partialorder %v7815, 0.0
        %v7842 = vand.u32 %v7815, 2147483648
        %v7843 = vsel %vm7841, %v7842, %v7840
        %v7844 = vrsqrt.pop %v7816
        %v7845 = vmul.f32 %v7816, %v7844
        %vm7846 = vcmp.eq.f32.partialorder %v7816, inf
        %v7847 = vsel %vm7846, %v7816, %v7845
        %vm7848 = vcmp.eq.f32.partialorder %v7816, 0.0
        %v7849 = vand.u32 %v7816, 2147483648
        %v7850 = vsel %vm7848, %v7849, %v7847
        %v7851 = vrsqrt.pop %v7817
        %v7852 = vmul.f32 %v7817, %v7851
        %vm7853 = vcmp.eq.f32.partialorder %v7817, inf
        %v7854 = vsel %vm7853, %v7817, %v7852
        %vm7855 = vcmp.eq.f32.partialorder %v7817, 0.0
        %v7856 = vand.u32 %v7817, 2147483648
        %v7857 = vsel %vm7855, %v7856, %v7854
        %v7858 = vrsqrt.pop %v7818
        %v7859 = vmul.f32 %v7818, %v7858
        %vm7860 = vcmp.eq.f32.partialorder %v7818, inf
        %v7861 = vsel %vm7860, %v7818, %v7859
        %vm7862 = vcmp.eq.f32.partialorder %v7818, 0.0
        %v7863 = vand.u32 %v7818, 2147483648
        %v7864 = vsel %vm7862, %v7863, %v7861
        %v7865 = vrsqrt.pop %v7819
        %v7866 = vmul.f32 %v7819, %v7865
        %vm7867 = vcmp.eq.f32.partialorder %v7819, inf
        %v7868 = vsel %vm7867, %v7819, %v7866
        %vm7869 = vcmp.eq.f32.partialorder %v7819, 0.0
        %v7870 = vand.u32 %v7819, 2147483648
        %v7871 = vsel %vm7869, %v7870, %v7868
        %v7872 = vrsqrt.pop %v7820
        %v7873 = vmul.f32 %v7820, %v7872
        %vm7874 = vcmp.eq.f32.partialorder %v7820, inf
        %v7875 = vsel %vm7874, %v7820, %v7873
        %vm7876 = vcmp.eq.f32.partialorder %v7820, 0.0
        %v7877 = vand.u32 %v7820, 2147483648
        %v7878 = vsel %vm7876, %v7877, %v7875
        %v7879 = vrsqrt.pop %v7821
        %v7880 = vmul.f32 %v7821, %v7879
        %vm7881 = vcmp.eq.f32.partialorder %v7821, inf
        %v7882 = vsel %vm7881, %v7821, %v7880
        %vm7883 = vcmp.eq.f32.partialorder %v7821, 0.0
        %v7884 = vand.u32 %v7821, 2147483648
        %v7885 = vsel %vm7883, %v7884, %v7882
        %v7886 = vrsqrt.pop %v7822
        %v7887 = vmul.f32 %v7822, %v7886
        %vm7888 = vcmp.eq.f32.partialorder %v7822, inf
        %v7889 = vsel %vm7888, %v7822, %v7887
        %vm7890 = vcmp.eq.f32.partialorder %v7822, 0.0
        %v7891 = vand.u32 %v7822, 2147483648
        %v7892 = vsel %vm7890, %v7891, %v7889
        %v7893 = vrsqrt.pop %v7823
        %v7894 = vmul.f32 %v7823, %v7893
        %vm7895 = vcmp.eq.f32.partialorder %v7823, inf
        %v7896 = vsel %vm7895, %v7823, %v7894
        %vm7897 = vcmp.eq.f32.partialorder %v7823, 0.0
        %v7898 = vand.u32 %v7823, 2147483648
        %v7899 = vsel %vm7897, %v7898, %v7896
        %v7900 = vrsqrt.pop %v7824
        %v7901 = vmul.f32 %v7824, %v7900
        %vm7902 = vcmp.eq.f32.partialorder %v7824, inf
        %v7903 = vsel %vm7902, %v7824, %v7901
        %vm7904 = vcmp.eq.f32.partialorder %v7824, 0.0
        %v7905 = vand.u32 %v7824, 2147483648
        %v7906 = vsel %vm7904, %v7905, %v7903
        %v7907 = vrsqrt.pop %v7825
        %v7908 = vmul.f32 %v7825, %v7907
        %vm7909 = vcmp.eq.f32.partialorder %v7825, inf
        %v7910 = vsel %vm7909, %v7825, %v7908
        %vm7911 = vcmp.eq.f32.partialorder %v7825, 0.0
        %v7912 = vand.u32 %v7825, 2147483648
        %v7913 = vsel %vm7911, %v7912, %v7910
        %v7914 = vrsqrt.pop %v7826
        %v7915 = vmul.f32 %v7826, %v7914
        %vm7916 = vcmp.eq.f32.partialorder %v7826, inf
        %v7917 = vsel %vm7916, %v7826, %v7915
        %vm7918 = vcmp.eq.f32.partialorder %v7826, 0.0
        %v7919 = vand.u32 %v7826, 2147483648
        %v7920 = vsel %vm7918, %v7919, %v7917
        %v7921 = vrsqrt.pop %v7827
        %v7922 = vmul.f32 %v7827, %v7921
        %vm7923 = vcmp.eq.f32.partialorder %v7827, inf
        %v7924 = vsel %vm7923, %v7827, %v7922
        %vm7925 = vcmp.eq.f32.partialorder %v7827, 0.0
        %v7926 = vand.u32 %v7827, 2147483648
        %v7927 = vsel %vm7925, %v7926, %v7924
        %v7928 = vrsqrt.pop %v7828
        %v7929 = vmul.f32 %v7828, %v7928
        %vm7930 = vcmp.eq.f32.partialorder %v7828, inf
        %v7931 = vsel %vm7930, %v7828, %v7929
        %vm7932 = vcmp.eq.f32.partialorder %v7828, 0.0
        %v7933 = vand.u32 %v7828, 2147483648
        %v7934 = vsel %vm7932, %v7933, %v7931
        %v7935 = vrsqrt.pop %v7829
        %v7936 = vmul.f32 %v7829, %v7935
        %vm7937 = vcmp.eq.f32.partialorder %v7829, inf
        %v7938 = vsel %vm7937, %v7829, %v7936
        %vm7939 = vcmp.eq.f32.partialorder %v7829, 0.0
        %v7940 = vand.u32 %v7829, 2147483648
        %v7941 = vsel %vm7939, %v7940, %v7938
        %s7942 = sld [smem:[#allocation4]]
        %v7943 = vstv %s7942
        %v7944 = vmul.f32 %v7943, %v7836
        %v7945 = vmul.f32 %v7943, %v7843
        %v7946 = vmul.f32 %v7943, %v7850
        %v7947 = vmul.f32 %v7943, %v7857
        %v7948 = vmul.f32 %v7943, %v7864
        %v7949 = vmul.f32 %v7943, %v7871
        %v7950 = vmul.f32 %v7943, %v7878
        %v7951 = vmul.f32 %v7943, %v7885
        %v7952 = vmul.f32 %v7943, %v7892
        %v7953 = vmul.f32 %v7943, %v7899
        %v7954 = vmul.f32 %v7943, %v7906
        %v7955 = vmul.f32 %v7943, %v7913
        %v7956 = vmul.f32 %v7943, %v7920
        %v7957 = vmul.f32 %v7943, %v7927
        %v7958 = vmul.f32 %v7943, %v7934
        %v7959 = vmul.f32 %v7943, %v7941
        %7960 = vst [vmem:[%s283] sm:$0xff] %v7944
        %7961 = vst [vmem:[%s283 + $0x8] sm:$0xff] %v7945
        %7962 = vst [vmem:[%s283 + $0x10] sm:$0xff] %v7946
        %7963 = vst [vmem:[%s283 + $0x18] sm:$0xff] %v7947
        %7964 = vst [vmem:[%s283 + $0x20] sm:$0xff] %v7948
        %7965 = vst [vmem:[%s283 + $0x28] sm:$0xff] %v7949
        %7966 = vst [vmem:[%s283 + $0x30] sm:$0xff] %v7950
        %7967 = vst [vmem:[%s283 + $0x38] sm:$0xff] %v7951
        %7968 = vst [vmem:[%s283 + $0x40] sm:$0xff] %v7952
        %7969 = vst [vmem:[%s283 + $0x48] sm:$0xff] %v7953
        %7970 = vst [vmem:[%s283 + $0x50] sm:$0xff] %v7954
        %7971 = vst [vmem:[%s283 + $0x58] sm:$0xff] %v7955
        %7972 = vst [vmem:[%s283 + $0x60] sm:$0xff] %v7956
        %7973 = vst [vmem:[%s283 + $0x68] sm:$0xff] %v7957
        %7974 = vst [vmem:[%s283 + $0x70] sm:$0xff] %v7958
        %7975 = vst [vmem:[%s283 + $0x78] sm:$0xff] %v7959
        %s7976 = sld [smem:[#allocation4 + $0x1]]
        %v7977 = vstv %s7976
        %v7978 = vmul.f32 %v7977, %v7836
        %v7979 = vmul.f32 %v7977, %v7843
        %v7980 = vmul.f32 %v7977, %v7850
        %v7981 = vmul.f32 %v7977, %v7857
        %v7982 = vmul.f32 %v7977, %v7864
        %v7983 = vmul.f32 %v7977, %v7871
        %v7984 = vmul.f32 %v7977, %v7878
        %v7985 = vmul.f32 %v7977, %v7885
        %v7986 = vmul.f32 %v7977, %v7892
        %v7987 = vmul.f32 %v7977, %v7899
        %v7988 = vmul.f32 %v7977, %v7906
        %v7989 = vmul.f32 %v7977, %v7913
        %v7990 = vmul.f32 %v7977, %v7920
        %v7991 = vmul.f32 %v7977, %v7927
        %v7992 = vmul.f32 %v7977, %v7934
        %v7993 = vmul.f32 %v7977, %v7941
        %s7994 = scalar_lea.vmem %s283, 128 [#allocation11]
        %7995 = vst [vmem:[%s7994] sm:$0xff] %v7978
        %7996 = vst [vmem:[%s7994 + $0x8] sm:$0xff] %v7979
        %7997 = vst [vmem:[%s7994 + $0x10] sm:$0xff] %v7980
        %7998 = vst [vmem:[%s7994 + $0x18] sm:$0xff] %v7981
        %7999 = vst [vmem:[%s7994 + $0x20] sm:$0xff] %v7982
        %8000 = vst [vmem:[%s7994 + $0x28] sm:$0xff] %v7983
        %8001 = vst [vmem:[%s7994 + $0x30] sm:$0xff] %v7984
        %8002 = vst [vmem:[%s7994 + $0x38] sm:$0xff] %v7985
        %8003 = vst [vmem:[%s7994 + $0x40] sm:$0xff] %v7986
        %8004 = vst [vmem:[%s7994 + $0x48] sm:$0xff] %v7987
        %8005 = vst [vmem:[%s7994 + $0x50] sm:$0xff] %v7988
        %8006 = vst [vmem:[%s7994 + $0x58] sm:$0xff] %v7989
        %8007 = vst [vmem:[%s7994 + $0x60] sm:$0xff] %v7990
        %8008 = vst [vmem:[%s7994 + $0x68] sm:$0xff] %v7991
        %8009 = vst [vmem:[%s7994 + $0x70] sm:$0xff] %v7992
        %8010 = vst [vmem:[%s7994 + $0x78] sm:$0xff] %v7993
        %s8011 = sld [smem:[#allocation4 + $0x2]]
        %v8012 = vstv %s8011
        %v8013 = vmul.f32 %v8012, %v7836
        %v8014 = vmul.f32 %v8012, %v7843
        %v8015 = vmul.f32 %v8012, %v7850
        %v8016 = vmul.f32 %v8012, %v7857
        %v8017 = vmul.f32 %v8012, %v7864
        %v8018 = vmul.f32 %v8012, %v7871
        %v8019 = vmul.f32 %v8012, %v7878
        %v8020 = vmul.f32 %v8012, %v7885
        %v8021 = vmul.f32 %v8012, %v7892
        %v8022 = vmul.f32 %v8012, %v7899
        %v8023 = vmul.f32 %v8012, %v7906
        %v8024 = vmul.f32 %v8012, %v7913
        %v8025 = vmul.f32 %v8012, %v7920
        %v8026 = vmul.f32 %v8012, %v7927
        %v8027 = vmul.f32 %v8012, %v7934
        %v8028 = vmul.f32 %v8012, %v7941
        %s8029 = scalar_lea.vmem %s283, 256 [#allocation11]
        %8030 = vst [vmem:[%s8029] sm:$0xff] %v8013
        %8031 = vst [vmem:[%s8029 + $0x8] sm:$0xff] %v8014
        %8032 = vst [vmem:[%s8029 + $0x10] sm:$0xff] %v8015
        %8033 = vst [vmem:[%s8029 + $0x18] sm:$0xff] %v8016
        %8034 = vst [vmem:[%s8029 + $0x20] sm:$0xff] %v8017
        %8035 = vst [vmem:[%s8029 + $0x28] sm:$0xff] %v8018
        %8036 = vst [vmem:[%s8029 + $0x30] sm:$0xff] %v8019
        %8037 = vst [vmem:[%s8029 + $0x38] sm:$0xff] %v8020
        %8038 = vst [vmem:[%s8029 + $0x40] sm:$0xff] %v8021
        %8039 = vst [vmem:[%s8029 + $0x48] sm:$0xff] %v8022
        %8040 = vst [vmem:[%s8029 + $0x50] sm:$0xff] %v8023
        %8041 = vst [vmem:[%s8029 + $0x58] sm:$0xff] %v8024
        %8042 = vst [vmem:[%s8029 + $0x60] sm:$0xff] %v8025
        %8043 = vst [vmem:[%s8029 + $0x68] sm:$0xff] %v8026
        %8044 = vst [vmem:[%s8029 + $0x70] sm:$0xff] %v8027
        %8045 = vst [vmem:[%s8029 + $0x78] sm:$0xff] %v8028
        %s8046 = sld [smem:[#allocation4 + $0x3]]
        %v8047 = vstv %s8046
        %v8048 = vmul.f32 %v8047, %v7836
        %v8049 = vmul.f32 %v8047, %v7843
        %v8050 = vmul.f32 %v8047, %v7850
        %v8051 = vmul.f32 %v8047, %v7857
        %v8052 = vmul.f32 %v8047, %v7864
        %v8053 = vmul.f32 %v8047, %v7871
        %v8054 = vmul.f32 %v8047, %v7878
        %v8055 = vmul.f32 %v8047, %v7885
        %v8056 = vmul.f32 %v8047, %v7892
        %v8057 = vmul.f32 %v8047, %v7899
        %v8058 = vmul.f32 %v8047, %v7906
        %v8059 = vmul.f32 %v8047, %v7913
        %v8060 = vmul.f32 %v8047, %v7920
        %v8061 = vmul.f32 %v8047, %v7927
        %v8062 = vmul.f32 %v8047, %v7934
        %v8063 = vmul.f32 %v8047, %v7941
        %s8064 = scalar_lea.vmem %s283, 384 [#allocation11]
        %8065 = vst [vmem:[%s8064] sm:$0xff] %v8048
        %8066 = vst [vmem:[%s8064 + $0x8] sm:$0xff] %v8049
        %8067 = vst [vmem:[%s8064 + $0x10] sm:$0xff] %v8050
        %8068 = vst [vmem:[%s8064 + $0x18] sm:$0xff] %v8051
        %8069 = vst [vmem:[%s8064 + $0x20] sm:$0xff] %v8052
        %8070 = vst [vmem:[%s8064 + $0x28] sm:$0xff] %v8053
        %8071 = vst [vmem:[%s8064 + $0x30] sm:$0xff] %v8054
        %8072 = vst [vmem:[%s8064 + $0x38] sm:$0xff] %v8055
        %8073 = vst [vmem:[%s8064 + $0x40] sm:$0xff] %v8056
        %8074 = vst [vmem:[%s8064 + $0x48] sm:$0xff] %v8057
        %8075 = vst [vmem:[%s8064 + $0x50] sm:$0xff] %v8058
        %8076 = vst [vmem:[%s8064 + $0x58] sm:$0xff] %v8059
        %8077 = vst [vmem:[%s8064 + $0x60] sm:$0xff] %v8060
        %8078 = vst [vmem:[%s8064 + $0x68] sm:$0xff] %v8061
        %8079 = vst [vmem:[%s8064 + $0x70] sm:$0xff] %v8062
        %8080 = vst [vmem:[%s8064 + $0x78] sm:$0xff] %v8063
        %s8081 = sand.u32 %s128, 1
        %s8082 = scalar_lea.sflag [#allocation7], %s8081
        %s8083 = sand.u32 %s128, 1
        %s8084 = smul.addr %s8083, 512
        %s8085 = scalar_lea.vmem [#allocation11], %s8084
        // Predicated region
        $region49: #{tpu_custom_call.1} parent=31 // pred_check
          %p8086 = pneg %p138
        $region50: #{tpu_custom_call.1} parent=31 // pred_check_branch
          %8088 = sbr.rel (%p8086) target = $region52
        $region51: #{tpu_custom_call.1} parent=31 // pred_region
          #allocation13 [shape = 'u32[6]{0}', space=smem, size = 0x18, scoped, tag = 'DMA stride descriptor']
          %s8089 = smul.u32 16, %s32
          %s8091 = ssub.s32 8192, 8192
          %8092 = vsyncadd %s8082, %s8091
          %s8093 = smul.addr %s8089, 2
          %s8094 = sadd.s32 %s33, %s8093
          %s8095 = smul.addr %s8094, 128
          %s8096 = scalar_lea.hbm %s4, %s8095
          %s8098 = sshll.u32 1, 14
          %s8099 = sxor.u32 4294967295, %s8098
          %s8102 = sshll.u32 7, 18
          %s8103 = sxor.u32 4294967295, %s8102
          %s8104 = sand.u32 0, %s8103
          %s8106 = sor.u32 %s8104, 0
          %s8108 = sshll.u32 3, 24
          %s8109 = sxor.u32 4294967295, %s8108
          %s8110 = sand.u32 %s8106, %s8109
          %s8112 = sor.u32 %s8110, 0
          %s8113 = sshll.u32 %s8085, 4
          %s8114 = int_to_ptr.vmem [resolvable:$true] %s8113
          %8120 = sst [smem:[#allocation13]] 2048
          %s8121 = scalar_lea.smem [#allocation13], 1
          %8122 = sst [smem:[%s8121]] 8192
          %s8123 = scalar_lea.smem [#allocation13], 2
          %8124 = sst [smem:[%s8123]] 16
          %s8125 = scalar_lea.smem [#allocation13], 3
          %8126 = sst [smem:[%s8125]] 128
          %s8127 = scalar_lea.smem [#allocation13], 4
          %8128 = sst [smem:[%s8127]] 256
          %s8129 = scalar_lea.smem [#allocation13], 5
          %8130 = sst [smem:[%s8129]] 8
          %8132 = dma.general %s8114, 8192, %s8096, %s8082, [#allocation12], [#allocation13], %s8112, 0
        $region52: #{tpu_custom_call.1} parent=31 // pred_fallthru
          _
      $region32: #{tpu_custom_call.1} parent=5 // pred_fallthru
        _
      %p8133 = scmp.le.s32.totalorder 2, %s23
      // Predicated region
      $region53: #{tpu_custom_call.1} parent=5 // pred_check
        %p8134 = pneg %p8133
      $region54: #{tpu_custom_call.1} parent=5 // pred_check_branch
        %8136 = sbr.rel (%p8134) target = $region56
      $region55: #{tpu_custom_call.1} parent=5 // pred_region
        %s8137 = ssub.s32 %s23, 2
        // Predicated region
        $region57: #{tpu_custom_call.1} parent=55 // pred_check
          %p8138 = pneg %p144
        $region58: #{tpu_custom_call.1} parent=55 // pred_check_branch
          %8140 = sbr.rel (%p8138) target = $region60
        $region59: #{tpu_custom_call.1} parent=55 // pred_region
          %s8141 = sand.u32 %s129, 1
          %s8142 = scalar_lea.sflag [#allocation7], %s8141
          %s8143 = sand.u32 %s129, 1
          %s8144 = smul.addr %s8143, 512
          %s8145 = scalar_lea.vmem [#allocation11], %s8144
          %8146 = dma.done %s8142, 8192
        $region60: #{tpu_custom_call.1} parent=55 // pred_fallthru
          _
      $region56: #{tpu_custom_call.1} parent=5 // pred_fallthru
        _
    $region6: #{tpu_custom_call.1} parent=1 // loop_footer
      %s27 = sadd.s32 1, %s23
    $region7: #{tpu_custom_call.1} parent=1 // loop_footer_branch
      %22 = sbr.rel target = $region3
    $region8: #{tpu_custom_call.1} parent=1 // loop_exit
      _
    %8147 = vsyncpa [#allocation6], 1
    %s8148 = scalar_lea.sflag [#allocation6], 1
    %8149 = vsyncpa %s8148, 1
    %8150 = vsyncpa [#allocation9], 1
    %s8151 = scalar_lea.sflag [#allocation9], 1
    %8152 = vsyncpa %s8151, 1
    %8153 = vsyncpa [#allocation7], 1
    %s8154 = scalar_lea.sflag [#allocation7], 1
    %8155 = vsyncpa %s8154, 1

</llo_original>
